<compile_context>
chip_gen: v6e
topology: v6e:2x2x1
jax: 0.10.0
libtpu: 0.0.40
codegen_flags: <defaults>
</compile_context>

<pallas_src>
import functools

import jax
import jax.numpy as jnp
from jax.experimental import pallas as pl
from jax.experimental.pallas import tpu as pltpu

ALPHA_1 = 1e-3   # defined in the module but unused in forward/build_loss
ALPHA_2 = 1e-4

# MCNN: per-branch conv layers (cin, cout, k); a 2x2 max-pool follows levels 0 and 1.
BRANCH_CFGS = [
    [(1, 16, 9), (16, 32, 7), (32, 16, 7), (16, 8, 7)],
    [(1, 20, 7), (20, 40, 5), (40, 20, 5), (20, 10, 5)],
    [(1, 24, 5), (24, 48, 3), (48, 24, 3), (24, 12, 3)],
]
FUSE_CFG = (30, 1, 1)

_VMEM_LIMIT = 32 * 1024 * 1024       # safe on v5e/v6e (128 MiB) and v7x (64 MiB)
_PATCH_BUF_BUDGET = 8 * 1024 * 1024  # double-buffered bf16 patch blocks stay under this


def _round_up(x, m):
    return (x + m - 1) // m * m


# ----------------------------- Pallas kernels --------------------------------

def _matmul_bias_relu_kernel(p_ref, w_ref, b_ref, o_ref):
    # p: (bm, Ckk_p) bf16, w: (Ckk_p, Cout_p) bf16, b: (1, Cout_p) f32 -> o: (bm, Cout_p) f32
    acc = jnp.dot(p_ref[...], w_ref[...], preferred_element_type=jnp.float32)
    o_ref[...] = jnp.maximum(acc + b_ref[...], 0.0).astype(o_ref.dtype)


def _matmul_bias_relu_fuse_kernel(p_ref, w_ref, b_ref, wf_ref, bf_ref, o_ref):
    # Last branch-level conv + ReLU, then the 1x1 fuse conv (30 -> 1) + ReLU as an f32
    # VPU weighted channel sum; only the (bm, 1) density column is written to HBM.
    acc = jnp.dot(p_ref[...], w_ref[...], preferred_element_type=jnp.float32)
    y = jnp.maximum(acc + b_ref[...], 0.0)
    dm = jnp.sum(y * wf_ref[...], axis=1, keepdims=True) + bf_ref[...]
    o_ref[...] = jnp.maximum(dm, 0.0).astype(o_ref.dtype)


def _maxpool_kernel(x_ref, o_ref):
    # x block: (1, TH, 2, Wo, 2*C)  ->  o block: (1, TH, Wo, C)
    c = o_ref.shape[-1]
    b = x_ref[0]                                    # (TH, 2, Wo, 2C)
    h = jnp.maximum(b[:, 0], b[:, 1])               # pool along H  -> (TH, Wo, 2C)
    o_ref[0] = jnp.maximum(h[..., :c], h[..., c:])  # pool along W  -> (TH, Wo, C)


def _loss_kernel(d_ref, g_ref, o_ref, acc_ref):
    # Row-tiled reduction of 0.5*sum(diff^2) + ALPHA_2*sum(|diff|) with a VMEM accumulator.
    @pl.when(pl.program_id(0) == 0)
    def _():
        acc_ref[...] = jnp.zeros_like(acc_ref)

    diff = d_ref[...] - g_ref[...]
    sq = jnp.sum(jnp.sum(diff * diff, axis=1, keepdims=True), axis=0, keepdims=True)
    ab = jnp.sum(jnp.sum(jnp.abs(diff), axis=1, keepdims=True), axis=0, keepdims=True)
    acc_ref[...] += 0.5 * sq + ALPHA_2 * ab

    @pl.when(pl.program_id(0) == pl.num_programs(0) - 1)
    def _():
        o_ref[...] = acc_ref[...]


# ------------------------------ op wrappers -----------------------------------

def conv_level(x, w, b, fuse_w=None, fuse_b=None):
    """Same-padded conv + bias + ReLU via a lane-dense im2col matmul.

    x: (N,H,W,Cin) f32, w: (K,K,Cin,Cout), b: (Cout,).
    If fuse_w/fuse_b are given, the 1x1 fuse conv (+ReLU) is applied in the kernel
    epilogue and the result is (N,H,W,1); otherwise (N,H,W,Cout).
    """
    # TODO(synk): replace im2col for the first (Cin=1) level with halo-tiled shifted
    # matmuls inside the kernel to avoid the KxK HBM blow-up of the patch matrix.
    N, H, W_, Cin = x.shape
    K = w.shape[0]
    Cout = w.shape[-1]
    pad = (K - 1) // 2

    xp = jnp.pad(x, ((0, 0), (pad, pad), (pad, pad), (0, 0)))
    cols = [xp[:, kh:kh + H, kw:kw + W_, :] for kh in range(K) for kw in range(K)]
    patches = jnp.stack(cols, axis=3).reshape(N * H * W_, K * K * Cin)

    M = N * H * W_
    Ckk = K * K * Cin
    Ckk_p = _round_up(Ckk, 128)     # lane-aligned contraction dim
    Cout_p = _round_up(Cout, 128)   # lane-dense output dim

    # VMEM-budgeted row tile; keep the double-buffered bf16 patch blocks bounded.
    bm = 512
    while bm > 8 and 2 * bm * Ckk_p * 2 > _PATCH_BUF_BUDGET:
        bm //= 2
    if M < bm:
        bm = _round_up(M, 8)
    Mp = _round_up(M, bm)

    patches = jnp.pad(patches.astype(jnp.bfloat16), ((0, Mp - M), (0, Ckk_p - Ckk)))
    wf = jnp.pad(w.reshape(Ckk, Cout).astype(jnp.bfloat16),
                 ((0, Ckk_p - Ckk), (0, Cout_p - Cout)))
    bf = jnp.pad(b.reshape(1, Cout).astype(jnp.float32), ((0, 0), (0, Cout_p - Cout)))

    grid = (Mp // bm,)
    cparams = pltpu.CompilerParams(dimension_semantics=("parallel",),
                                   vmem_limit_bytes=_VMEM_LIMIT)

    if fuse_w is None:
        out = pl.pallas_call(
            _matmul_bias_relu_kernel,
            out_shape=jax.ShapeDtypeStruct((Mp, Cout_p), jnp.float32),
            grid=grid,
            in_specs=[
                pl.BlockSpec((bm, Ckk_p), lambda i: (i, 0)),
                pl.BlockSpec((Ckk_p, Cout_p), lambda i: (0, 0)),
                pl.BlockSpec((1, Cout_p), lambda i: (0, 0)),
            ],
            out_specs=pl.BlockSpec((bm, Cout_p), lambda i: (i, 0)),
            compiler_params=cparams,
        )(patches, wf, bf)
        return out[:M, :Cout].reshape(N, H, W_, Cout)

    wfuse = jnp.pad(fuse_w.reshape(1, Cout).astype(jnp.float32),
                    ((0, 0), (0, Cout_p - Cout)))
    bfuse = fuse_b.reshape(1, 1).astype(jnp.float32)
    out = pl.pallas_call(
        _matmul_bias_relu_fuse_kernel,
        out_shape=jax.ShapeDtypeStruct((Mp, 1), jnp.float32),
        grid=grid,
        in_specs=[
            pl.BlockSpec((bm, Ckk_p), lambda i: (i, 0)),
            pl.BlockSpec((Ckk_p, Cout_p), lambda i: (0, 0)),
            pl.BlockSpec((1, Cout_p), lambda i: (0, 0)),
            pl.BlockSpec((1, Cout_p), lambda i: (0, 0)),
            pl.BlockSpec((1, 1), lambda i: (0, 0)),
        ],
        out_specs=pl.BlockSpec((bm, 1), lambda i: (i, 0)),
        compiler_params=cparams,
    )(patches, wf, bf, wfuse, bfuse)
    return out[:M, :].reshape(N, H, W_, 1)


def maxpool2x2(x):
    """2x2 stride-2 max pool on NHWC (matches nn.MaxPool2d(2) for even H, W).
    Single tiled read of the feature map; 2x2 reduction happens in-kernel."""
    N, H, W_, C = x.shape
    assert H % 2 == 0 and W_ % 2 == 0, "maxpool2x2 requires even spatial dims"
    Ho, Wo = H // 2, W_ // 2
    TH = 1
    for t in (8, 4, 2, 1):
        if Ho % t == 0:
            TH = t
            break
    # Row-major split: (N, H, W, C) -> (N, Ho, 2, Wo, 2*C). Lanes hold the two W
    # neighbours' channels side by side; pooling = major-axis max + lane-slice max.
    x6 = x.reshape(N, Ho, 2, Wo, 2 * C)
    return pl.pallas_call(
        _maxpool_kernel,
        out_shape=jax.ShapeDtypeStruct((N, Ho, Wo, C), x.dtype),
        grid=(N, Ho // TH),
        in_specs=[pl.BlockSpec((1, TH, 2, Wo, 2 * C), lambda n, i: (n, i, 0, 0, 0))],
        out_specs=pl.BlockSpec((1, TH, Wo, C), lambda n, i: (n, i, 0, 0)),
        compiler_params=pltpu.CompilerParams(
            dimension_semantics=("parallel", "parallel")),
    )(x6)


def build_loss(density_map, gt_data):
    """0.5 * MSELoss(size_average=False) + alpha_2 * L1Loss(size_average=False)."""
    d = density_map.reshape(-1).astype(jnp.float32)
    g = gt_data.reshape(-1).astype(jnp.float32)
    L = d.shape[0]
    lanes = 128
    rows = _round_up(max(-(-L // lanes), 1), 8)
    Lp = rows * lanes
    d = jnp.pad(d, (0, Lp - L)).reshape(rows, lanes)   # zero-pad: diff == 0 there
    g = jnp.pad(g, (0, Lp - L)).reshape(rows, lanes)
    br = min(rows, 512)
    Rp = _round_up(rows, br)
    if Rp != rows:
        d = jnp.pad(d, ((0, Rp - rows), (0, 0)))
        g = jnp.pad(g, ((0, Rp - rows), (0, 0)))
    out = pl.pallas_call(
        _loss_kernel,
        out_shape=jax.ShapeDtypeStruct((1, 1), jnp.float32),
        grid=(Rp // br,),
        in_specs=[pl.BlockSpec((br, lanes), lambda i: (i, 0)),
                  pl.BlockSpec((br, lanes), lambda i: (i, 0))],
        out_specs=pl.BlockSpec((1, 1), lambda i: (0, 0)),
        scratch_shapes=[pltpu.VMEM((1, 1), jnp.float32)],
        compiler_params=pltpu.CompilerParams(dimension_semantics=("arbitrary",)),
    )(d, g)
    return out[0, 0]


# ------------------------------- model glue -----------------------------------

def init_params(key):
    """Deterministic synthetic init (normal * 0.01), HWIO weight layout, per-branch."""
    params = {"branches": [], "fuse": None}
    for cfg in BRANCH_CFGS:
        layers = []
        for cin, cout, k in cfg:
            key, wk, bk = jax.random.split(key, 3)
            w = 0.01 * jax.random.normal(wk, (k, k, cin, cout), jnp.float32)
            b = 0.01 * jax.random.normal(bk, (cout,), jnp.float32)
            layers.append((w, b))
        params["branches"].append(layers)
    cin, cout, k = FUSE_CFG
    key, wk, bk = jax.random.split(key, 3)
    params["fuse"] = (0.01 * jax.random.normal(wk, (k, k, cin, cout), jnp.float32),
                      0.01 * jax.random.normal(bk, (cout,), jnp.float32))
    return params


def build_fused_weight(layer_params, share_input):
    """Combine one conv per branch into a single wide conv.

    Smaller kernels are zero-padded (centered) to the level's max K; weights are
    concatenated along Cout, and placed block-diagonally over Cin unless the three
    branches share the same input (first level, Cin=1)."""
    ks = [w.shape[0] for w, _ in layer_params]
    cins = [w.shape[2] for w, _ in layer_params]
    couts = [w.shape[3] for w, _ in layer_params]
    Kmax = max(ks)
    Cin_t = cins[0] if share_input else sum(cins)
    Cout_t = sum(couts)
    Wf = jnp.zeros((Kmax, Kmax, Cin_t, Cout_t), jnp.float32)
    Bf = jnp.zeros((Cout_t,), jnp.float32)
    ci = co = 0
    for (w, b) in layer_params:
        k, _, cin, cout = w.shape
        o = (Kmax - k) // 2
        ci0 = 0 if share_input else ci
        Wf = Wf.at[o:o + k, o:o + k, ci0:ci0 + cin, co:co + cout].set(w)
        Bf = Bf.at[co:co + cout].set(b)
        ci += cin
        co += cout
    return Wf, Bf


def crowd_counter_forward(params, im_data, gt_data=None, is_training=False):
    """im_data: NCHW (PyTorch convention). Returns density_map (NCHW) [and loss]."""
    x = jnp.transpose(im_data, (0, 2, 3, 1)).astype(jnp.float32)   # NCHW -> NHWC
    levels = list(zip(*params["branches"]))   # levels[l] = (branch1_l, branch2_l, branch3_l)

    # Level 0: all branches read the same 1-channel input -> one 60-wide conv.
    W0, B0 = build_fused_weight(levels[0], share_input=True)
    y = conv_level(x, W0, B0)
    y = maxpool2x2(y)
    # Levels 1-3 operate on the channel-concatenated branch features (block-diag weights),
    # so the per-branch concat of the reference model is implicit in the channel order.
    W1, B1 = build_fused_weight(levels[1], share_input=False)
    y = conv_level(y, W1, B1)
    y = maxpool2x2(y)
    W2, B2 = build_fused_weight(levels[2], share_input=False)
    y = conv_level(y, W2, B2)
    # Level 3 output channels are exactly the 30-channel concat; fold the 1x1 fuse conv in.
    W3, B3 = build_fused_weight(levels[3], share_input=False)
    fw, fb = params["fuse"]
    dm = conv_level(y, W3, B3, fuse_w=fw.reshape(-1), fuse_b=fb)   # (N, H/4, W/4, 1)
    density_map = jnp.transpose(dm, (0, 3, 1, 2))                  # NHWC -> NCHW

    if is_training:
        loss = build_loss(density_map, gt_data)
        return density_map, loss
    return density_map


# ---------------------------------- main ---------------------------------------

if __name__ == "__main__":
    key = jax.random.PRNGKey(0)
    pkey, xkey, gkey = jax.random.split(key, 3)

    params = init_params(pkey)

    N, C, H, W = 2, 1, 16, 16
    im_data = jax.random.normal(xkey, (N, C, H, W), jnp.float32)
    gt_data = jax.random.uniform(gkey, (N, 1, H // 4, W // 4), jnp.float32)

    fwd = jax.jit(functools.partial(crowd_counter_forward, is_training=True))
    density_map, loss = fwd(params, im_data, gt_data)
    density_map, loss = jax.block_until_ready((density_map, loss))

    assert density_map.shape == (N, 1, H // 4, W // 4)
    assert density_map.dtype == jnp.float32
    assert loss.shape == ()
    assert bool(jnp.isfinite(loss))
    print("KERNEL_OK")
</pallas_src>

<mosaic_0001>
module attributes {stable_mosaic.version = 11 : i64} {
  func.func @_matmul_bias_relu_kernel(%arg0: i32, %arg1: memref<512x128xbf16, #tpu.memory_space<vmem>>, %arg2: memref<128x128xbf16, #tpu.memory_space<vmem>>, %arg3: memref<1x128xf32, #tpu.memory_space<vmem>>, %arg4: memref<512x128xf32, #tpu.memory_space<vmem>>) attributes {dimension_semantics = [#tpu.dimension_semantics<parallel>], iteration_bounds = array<i64: 1>, scalar_prefetch = 0 : i64, scratch_operands = 0 : i64, tpu.core_type = #tpu.core_type<tc>, window_params = [{transform_indices = @transform_0, window_bounds = array<i64: 512, 128>}, {pipeline_mode = #tpu.pipeline_mode<synchronous>, transform_indices = @transform_1, window_bounds = array<i64: 128, 128>}, {pipeline_mode = #tpu.pipeline_mode<synchronous>, transform_indices = @transform_2, window_bounds = array<i64: 1, 128>}, {transform_indices = @transform_3, window_bounds = array<i64: 512, 128>}]} {
    %c0 = arith.constant 0 : index
    %c0_0 = arith.constant 0 : index
    %0 = vector.load %arg1[%c0, %c0_0] : memref<512x128xbf16, #tpu.memory_space<vmem>>, vector<512x128xbf16>
    %c0_1 = arith.constant 0 : index
    %c0_2 = arith.constant 0 : index
    %1 = vector.load %arg2[%c0_1, %c0_2] : memref<128x128xbf16, #tpu.memory_space<vmem>>, vector<128x128xbf16>
    %cst = arith.constant dense<0.000000e+00> : vector<512x128xf32>
    %2 = tpu.matmul %0, %1, %cst {dimension_numbers = #tpu.dot_dimension_numbers<[1], [0], [0], [1], [0, 0, 1, 1], [], []>} : vector<512x128xbf16>, vector<128x128xbf16>, vector<512x128xf32> -> vector<512x128xf32>
    %c0_3 = arith.constant 0 : index
    %c0_4 = arith.constant 0 : index
    %3 = vector.load %arg3[%c0_3, %c0_4] : memref<1x128xf32, #tpu.memory_space<vmem>>, vector<1x128xf32>
    %4 = vector.broadcast %3 : vector<1x128xf32> to vector<512x128xf32>
    %5 = arith.addf %2, %4 : vector<512x128xf32>
    %cst_5 = arith.constant 0.000000e+00 : f32
    %6 = vector.broadcast %cst_5 : f32 to vector<512x128xf32>
    %7 = arith.maximumf %5, %6 : vector<512x128xf32>
    %c0_6 = arith.constant 0 : index
    %c0_7 = arith.constant 0 : index
    %8 = vector.load %arg4[%c0_6, %c0_7] : memref<512x128xf32, #tpu.memory_space<vmem>>, vector<512x128xf32>
    tpu.vector_store %arg4[%c0_6, %c0_7], %7 {strides = array<i32>} : memref<512x128xf32, #tpu.memory_space<vmem>>, vector<512x128xf32>,
    return
  }
  func.func @transform_0(%arg0: i32) -> (i32, i32) {
    %c0_i32 = arith.constant 0 : i32
    %c0_i32_0 = arith.constant 0 : i32
    return %arg0, %c0_i32 : i32, i32
  }
  func.func @transform_1(%arg0: i32) -> (i32, i32) {
    %c0_i32 = arith.constant 0 : i32
    %c0_i32_0 = arith.constant 0 : i32
    %c0_i32_1 = arith.constant 0 : i32
    return %c0_i32, %c0_i32_0 : i32, i32
  }
  func.func @transform_2(%arg0: i32) -> (i32, i32) {
    %c0_i32 = arith.constant 0 : i32
    %c0_i32_0 = arith.constant 0 : i32
    %c0_i32_1 = arith.constant 0 : i32
    return %c0_i32, %c0_i32_0 : i32, i32
  }
  func.func @transform_3(%arg0: i32) -> (i32, i32) {
    %c0_i32 = arith.constant 0 : i32
    %c0_i32_0 = arith.constant 0 : i32
    return %arg0, %c0_i32 : i32, i32
  }
}

module attributes {stable_mosaic.version = 11 : i64} {
  func.func @_maxpool_kernel(%arg0: i32, %arg1: i32, %arg2: memref<1x8x2x8x120xf32, #tpu.memory_space<vmem>>, %arg3: memref<1x8x8x60xf32, #tpu.memory_space<vmem>>) attributes {dimension_semantics = [#tpu.dimension_semantics<parallel>, #tpu.dimension_semantics<parallel>], iteration_bounds = array<i64: 2, 1>, scalar_prefetch = 0 : i64, scratch_operands = 0 : i64, tpu.core_type = #tpu.core_type<tc>, window_params = [{transform_indices = @transform_0, window_bounds = array<i64: 1, 8, 2, 8, 120>}, {transform_indices = @transform_1, window_bounds = array<i64: 1, 8, 8, 60>}]} {
    %c0 = arith.constant 0 : index
    %c0_0 = arith.constant 0 : index
    %c0_1 = arith.constant 0 : index
    %c0_2 = arith.constant 0 : index
    %c0_3 = arith.constant 0 : index
    %0 = vector.load %arg2[%c0, %c0_0, %c0_1, %c0_2, %c0_3] : memref<1x8x2x8x120xf32, #tpu.memory_space<vmem>>, vector<1x8x2x8x120xf32>
    %1 = vector.shape_cast %0 : vector<1x8x2x8x120xf32> to vector<8x2x8x120xf32>
    %2 = vector.extract_strided_slice %1 {offsets = [0, 0, 0, 0], sizes = [8, 1, 8, 120], strides = [1, 1, 1, 1]} : vector<8x2x8x120xf32> to vector<8x1x8x120xf32>
    %3 = vector.shape_cast %2 : vector<8x1x8x120xf32> to vector<8x8x120xf32>
    %4 = vector.extract_strided_slice %1 {offsets = [0, 1, 0, 0], sizes = [8, 1, 8, 120], strides = [1, 1, 1, 1]} : vector<8x2x8x120xf32> to vector<8x1x8x120xf32>
    %5 = vector.shape_cast %4 : vector<8x1x8x120xf32> to vector<8x8x120xf32>
    %6 = arith.maximumf %3, %5 : vector<8x8x120xf32>
    %7 = vector.extract_strided_slice %6 {offsets = [0, 0, 0], sizes = [8, 8, 60], strides = [1, 1, 1]} : vector<8x8x120xf32> to vector<8x8x60xf32>
    %8 = vector.extract_strided_slice %6 {offsets = [0, 0, 60], sizes = [8, 8, 60], strides = [1, 1, 1]} : vector<8x8x120xf32> to vector<8x8x60xf32>
    %9 = arith.maximumf %7, %8 : vector<8x8x60xf32>
    %c0_4 = arith.constant 0 : index
    %c0_5 = arith.constant 0 : index
    %c0_6 = arith.constant 0 : index
    %c0_7 = arith.constant 0 : index
    %10 = vector.load %arg3[%c0_4, %c0_5, %c0_6, %c0_7] : memref<1x8x8x60xf32, #tpu.memory_space<vmem>>, vector<1x8x8x60xf32>
    %11 = vector.shape_cast %10 : vector<1x8x8x60xf32> to vector<8x8x60xf32>
    %12 = vector.shape_cast %9 : vector<8x8x60xf32> to vector<1x8x8x60xf32>
    tpu.vector_store %arg3[%c0_4, %c0_5, %c0_6, %c0_7], %12 {strides = array<i32>} : memref<1x8x8x60xf32, #tpu.memory_space<vmem>>, vector<1x8x8x60xf32>,
    return
  }
  func.func @transform_0(%arg0: i32, %arg1: i32) -> (i32, i32, i32, i32, i32) {
    %c0_i32 = arith.constant 0 : i32
    %c0_i32_0 = arith.constant 0 : i32
    %c0_i32_1 = arith.constant 0 : i32
    %c0_i32_2 = arith.constant 0 : i32
    return %arg0, %arg1, %c0_i32, %c0_i32_0, %c0_i32_1 : i32, i32, i32, i32, i32
  }
  func.func @transform_1(%arg0: i32, %arg1: i32) -> (i32, i32, i32, i32) {
    %c0_i32 = arith.constant 0 : i32
    %c0_i32_0 = arith.constant 0 : i32
    %c0_i32_1 = arith.constant 0 : i32
    return %arg0, %arg1, %c0_i32, %c0_i32_0 : i32, i32, i32, i32
  }
}

module attributes {stable_mosaic.version = 11 : i64} {
  func.func @_matmul_bias_relu_kernel(%arg0: i32, %arg1: memref<128x2944xbf16, #tpu.memory_space<vmem>>, %arg2: memref<2944x128xbf16, #tpu.memory_space<vmem>>, %arg3: memref<1x128xf32, #tpu.memory_space<vmem>>, %arg4: memref<128x128xf32, #tpu.memory_space<vmem>>) attributes {dimension_semantics = [#tpu.dimension_semantics<parallel>], iteration_bounds = array<i64: 1>, scalar_prefetch = 0 : i64, scratch_operands = 0 : i64, tpu.core_type = #tpu.core_type<tc>, window_params = [{transform_indices = @transform_0, window_bounds = array<i64: 128, 2944>}, {pipeline_mode = #tpu.pipeline_mode<synchronous>, transform_indices = @transform_1, window_bounds = array<i64: 2944, 128>}, {pipeline_mode = #tpu.pipeline_mode<synchronous>, transform_indices = @transform_2, window_bounds = array<i64: 1, 128>}, {transform_indices = @transform_3, window_bounds = array<i64: 128, 128>}]} {
    %c0 = arith.constant 0 : index
    %c0_0 = arith.constant 0 : index
    %0 = vector.load %arg1[%c0, %c0_0] : memref<128x2944xbf16, #tpu.memory_space<vmem>>, vector<128x2944xbf16>
    %c0_1 = arith.constant 0 : index
    %c0_2 = arith.constant 0 : index
    %1 = vector.load %arg2[%c0_1, %c0_2] : memref<2944x128xbf16, #tpu.memory_space<vmem>>, vector<2944x128xbf16>
    %cst = arith.constant dense<0.000000e+00> : vector<128x128xf32>
    %2 = tpu.matmul %0, %1, %cst {dimension_numbers = #tpu.dot_dimension_numbers<[1], [0], [0], [1], [0, 0, 1, 1], [], []>} : vector<128x2944xbf16>, vector<2944x128xbf16>, vector<128x128xf32> -> vector<128x128xf32>
    %c0_3 = arith.constant 0 : index
    %c0_4 = arith.constant 0 : index
    %3 = vector.load %arg3[%c0_3, %c0_4] : memref<1x128xf32, #tpu.memory_space<vmem>>, vector<1x128xf32>
    %4 = vector.broadcast %3 : vector<1x128xf32> to vector<128x128xf32>
    %5 = arith.addf %2, %4 : vector<128x128xf32>
    %cst_5 = arith.constant 0.000000e+00 : f32
    %6 = vector.broadcast %cst_5 : f32 to vector<128x128xf32>
    %7 = arith.maximumf %5, %6 : vector<128x128xf32>
    %c0_6 = arith.constant 0 : index
    %c0_7 = arith.constant 0 : index
    %8 = vector.load %arg4[%c0_6, %c0_7] : memref<128x128xf32, #tpu.memory_space<vmem>>, vector<128x128xf32>
    tpu.vector_store %arg4[%c0_6, %c0_7], %7 {strides = array<i32>} : memref<128x128xf32, #tpu.memory_space<vmem>>, vector<128x128xf32>,
    return
  }
  func.func @transform_0(%arg0: i32) -> (i32, i32) {
    %c0_i32 = arith.constant 0 : i32
    %c0_i32_0 = arith.constant 0 : i32
    return %arg0, %c0_i32 : i32, i32
  }
  func.func @transform_1(%arg0: i32) -> (i32, i32) {
    %c0_i32 = arith.constant 0 : i32
    %c0_i32_0 = arith.constant 0 : i32
    %c0_i32_1 = arith.constant 0 : i32
    return %c0_i32, %c0_i32_0 : i32, i32
  }
  func.func @transform_2(%arg0: i32) -> (i32, i32) {
    %c0_i32 = arith.constant 0 : i32
    %c0_i32_0 = arith.constant 0 : i32
    %c0_i32_1 = arith.constant 0 : i32
    return %c0_i32, %c0_i32_0 : i32, i32
  }
  func.func @transform_3(%arg0: i32) -> (i32, i32) {
    %c0_i32 = arith.constant 0 : i32
    %c0_i32_0 = arith.constant 0 : i32
    return %arg0, %c0_i32 : i32, i32
  }
}

module attributes {stable_mosaic.version = 11 : i64} {
  func.func @_maxpool_kernel(%arg0: i32, %arg1: i32, %arg2: memref<1x4x2x4x240xf32, #tpu.memory_space<vmem>>, %arg3: memref<1x4x4x120xf32, #tpu.memory_space<vmem>>) attributes {dimension_semantics = [#tpu.dimension_semantics<parallel>, #tpu.dimension_semantics<parallel>], iteration_bounds = array<i64: 2, 1>, scalar_prefetch = 0 : i64, scratch_operands = 0 : i64, tpu.core_type = #tpu.core_type<tc>, window_params = [{transform_indices = @transform_0, window_bounds = array<i64: 1, 4, 2, 4, 240>}, {transform_indices = @transform_1, window_bounds = array<i64: 1, 4, 4, 120>}]} {
    %c0 = arith.constant 0 : index
    %c0_0 = arith.constant 0 : index
    %c0_1 = arith.constant 0 : index
    %c0_2 = arith.constant 0 : index
    %c0_3 = arith.constant 0 : index
    %0 = vector.load %arg2[%c0, %c0_0, %c0_1, %c0_2, %c0_3] : memref<1x4x2x4x240xf32, #tpu.memory_space<vmem>>, vector<1x4x2x4x240xf32>
    %1 = vector.shape_cast %0 : vector<1x4x2x4x240xf32> to vector<4x2x4x240xf32>
    %2 = vector.extract_strided_slice %1 {offsets = [0, 0, 0, 0], sizes = [4, 1, 4, 240], strides = [1, 1, 1, 1]} : vector<4x2x4x240xf32> to vector<4x1x4x240xf32>
    %3 = vector.shape_cast %2 : vector<4x1x4x240xf32> to vector<4x4x240xf32>
    %4 = vector.extract_strided_slice %1 {offsets = [0, 1, 0, 0], sizes = [4, 1, 4, 240], strides = [1, 1, 1, 1]} : vector<4x2x4x240xf32> to vector<4x1x4x240xf32>
    %5 = vector.shape_cast %4 : vector<4x1x4x240xf32> to vector<4x4x240xf32>
    %6 = arith.maximumf %3, %5 : vector<4x4x240xf32>
    %7 = vector.extract_strided_slice %6 {offsets = [0, 0, 0], sizes = [4, 4, 120], strides = [1, 1, 1]} : vector<4x4x240xf32> to vector<4x4x120xf32>
    %8 = vector.extract_strided_slice %6 {offsets = [0, 0, 120], sizes = [4, 4, 120], strides = [1, 1, 1]} : vector<4x4x240xf32> to vector<4x4x120xf32>
    %9 = arith.maximumf %7, %8 : vector<4x4x120xf32>
    %c0_4 = arith.constant 0 : index
    %c0_5 = arith.constant 0 : index
    %c0_6 = arith.constant 0 : index
    %c0_7 = arith.constant 0 : index
    %10 = vector.load %arg3[%c0_4, %c0_5, %c0_6, %c0_7] : memref<1x4x4x120xf32, #tpu.memory_space<vmem>>, vector<1x4x4x120xf32>
    %11 = vector.shape_cast %10 : vector<1x4x4x120xf32> to vector<4x4x120xf32>
    %12 = vector.shape_cast %9 : vector<4x4x120xf32> to vector<1x4x4x120xf32>
    tpu.vector_store %arg3[%c0_4, %c0_5, %c0_6, %c0_7], %12 {strides = array<i32>} : memref<1x4x4x120xf32, #tpu.memory_space<vmem>>, vector<1x4x4x120xf32>,
    return
  }
  func.func @transform_0(%arg0: i32, %arg1: i32) -> (i32, i32, i32, i32, i32) {
    %c0_i32 = arith.constant 0 : i32
    %c0_i32_0 = arith.constant 0 : i32
    %c0_i32_1 = arith.constant 0 : i32
    %c0_i32_2 = arith.constant 0 : i32
    return %arg0, %arg1, %c0_i32, %c0_i32_0, %c0_i32_1 : i32, i32, i32, i32, i32
  }
  func.func @transform_1(%arg0: i32, %arg1: i32) -> (i32, i32, i32, i32) {
    %c0_i32 = arith.constant 0 : i32
    %c0_i32_0 = arith.constant 0 : i32
    %c0_i32_1 = arith.constant 0 : i32
    return %arg0, %arg1, %c0_i32, %c0_i32_0 : i32, i32, i32, i32
  }
}

module attributes {stable_mosaic.version = 11 : i64} {
  func.func @_matmul_bias_relu_kernel(%arg0: i32, %arg1: memref<32x5888xbf16, #tpu.memory_space<vmem>>, %arg2: memref<5888x128xbf16, #tpu.memory_space<vmem>>, %arg3: memref<1x128xf32, #tpu.memory_space<vmem>>, %arg4: memref<32x128xf32, #tpu.memory_space<vmem>>) attributes {dimension_semantics = [#tpu.dimension_semantics<parallel>], iteration_bounds = array<i64: 1>, scalar_prefetch = 0 : i64, scratch_operands = 0 : i64, tpu.core_type = #tpu.core_type<tc>, window_params = [{transform_indices = @transform_0, window_bounds = array<i64: 32, 5888>}, {pipeline_mode = #tpu.pipeline_mode<synchronous>, transform_indices = @transform_1, window_bounds = array<i64: 5888, 128>}, {pipeline_mode = #tpu.pipeline_mode<synchronous>, transform_indices = @transform_2, window_bounds = array<i64: 1, 128>}, {transform_indices = @transform_3, window_bounds = array<i64: 32, 128>}]} {
    %c0 = arith.constant 0 : index
    %c0_0 = arith.constant 0 : index
    %0 = vector.load %arg1[%c0, %c0_0] : memref<32x5888xbf16, #tpu.memory_space<vmem>>, vector<32x5888xbf16>
    %c0_1 = arith.constant 0 : index
    %c0_2 = arith.constant 0 : index
    %1 = vector.load %arg2[%c0_1, %c0_2] : memref<5888x128xbf16, #tpu.memory_space<vmem>>, vector<5888x128xbf16>
    %cst = arith.constant dense<0.000000e+00> : vector<32x128xf32>
    %2 = tpu.matmul %0, %1, %cst {dimension_numbers = #tpu.dot_dimension_numbers<[1], [0], [0], [1], [0, 0, 1, 1], [], []>} : vector<32x5888xbf16>, vector<5888x128xbf16>, vector<32x128xf32> -> vector<32x128xf32>
    %c0_3 = arith.constant 0 : index
    %c0_4 = arith.constant 0 : index
    %3 = vector.load %arg3[%c0_3, %c0_4] : memref<1x128xf32, #tpu.memory_space<vmem>>, vector<1x128xf32>
    %4 = vector.broadcast %3 : vector<1x128xf32> to vector<32x128xf32>
    %5 = arith.addf %2, %4 : vector<32x128xf32>
    %cst_5 = arith.constant 0.000000e+00 : f32
    %6 = vector.broadcast %cst_5 : f32 to vector<32x128xf32>
    %7 = arith.maximumf %5, %6 : vector<32x128xf32>
    %c0_6 = arith.constant 0 : index
    %c0_7 = arith.constant 0 : index
    %8 = vector.load %arg4[%c0_6, %c0_7] : memref<32x128xf32, #tpu.memory_space<vmem>>, vector<32x128xf32>
    tpu.vector_store %arg4[%c0_6, %c0_7], %7 {strides = array<i32>} : memref<32x128xf32, #tpu.memory_space<vmem>>, vector<32x128xf32>,
    return
  }
  func.func @transform_0(%arg0: i32) -> (i32, i32) {
    %c0_i32 = arith.constant 0 : i32
    %c0_i32_0 = arith.constant 0 : i32
    return %arg0, %c0_i32 : i32, i32
  }
  func.func @transform_1(%arg0: i32) -> (i32, i32) {
    %c0_i32 = arith.constant 0 : i32
    %c0_i32_0 = arith.constant 0 : i32
    %c0_i32_1 = arith.constant 0 : i32
    return %c0_i32, %c0_i32_0 : i32, i32
  }
  func.func @transform_2(%arg0: i32) -> (i32, i32) {
    %c0_i32 = arith.constant 0 : i32
    %c0_i32_0 = arith.constant 0 : i32
    %c0_i32_1 = arith.constant 0 : i32
    return %c0_i32, %c0_i32_0 : i32, i32
  }
  func.func @transform_3(%arg0: i32) -> (i32, i32) {
    %c0_i32 = arith.constant 0 : i32
    %c0_i32_0 = arith.constant 0 : i32
    return %arg0, %c0_i32 : i32, i32
  }
}

module attributes {stable_mosaic.version = 11 : i64} {
  func.func @_matmul_bias_relu_fuse_kernel(%arg0: i32, %arg1: memref<32x2944xbf16, #tpu.memory_space<vmem>>, %arg2: memref<2944x128xbf16, #tpu.memory_space<vmem>>, %arg3: memref<1x128xf32, #tpu.memory_space<vmem>>, %arg4: memref<1x128xf32, #tpu.memory_space<vmem>>, %arg5: memref<1x1xf32, #tpu.memory_space<vmem>>, %arg6: memref<32x1xf32, #tpu.memory_space<vmem>>) attributes {dimension_semantics = [#tpu.dimension_semantics<parallel>], iteration_bounds = array<i64: 1>, scalar_prefetch = 0 : i64, scratch_operands = 0 : i64, tpu.core_type = #tpu.core_type<tc>, window_params = [{transform_indices = @transform_0, window_bounds = array<i64: 32, 2944>}, {pipeline_mode = #tpu.pipeline_mode<synchronous>, transform_indices = @transform_1, window_bounds = array<i64: 2944, 128>}, {pipeline_mode = #tpu.pipeline_mode<synchronous>, transform_indices = @transform_2, window_bounds = array<i64: 1, 128>}, {pipeline_mode = #tpu.pipeline_mode<synchronous>, transform_indices = @transform_3, window_bounds = array<i64: 1, 128>}, {pipeline_mode = #tpu.pipeline_mode<synchronous>, transform_indices = @transform_4, window_bounds = array<i64: 1, 1>}, {transform_indices = @transform_5, window_bounds = array<i64: 32, 1>}]} {
    %c0 = arith.constant 0 : index
    %c0_0 = arith.constant 0 : index
    %0 = vector.load %arg1[%c0, %c0_0] : memref<32x2944xbf16, #tpu.memory_space<vmem>>, vector<32x2944xbf16>
    %c0_1 = arith.constant 0 : index
    %c0_2 = arith.constant 0 : index
    %1 = vector.load %arg2[%c0_1, %c0_2] : memref<2944x128xbf16, #tpu.memory_space<vmem>>, vector<2944x128xbf16>
    %cst = arith.constant dense<0.000000e+00> : vector<32x128xf32>
    %2 = tpu.matmul %0, %1, %cst {dimension_numbers = #tpu.dot_dimension_numbers<[1], [0], [0], [1], [0, 0, 1, 1], [], []>} : vector<32x2944xbf16>, vector<2944x128xbf16>, vector<32x128xf32> -> vector<32x128xf32>
    %c0_3 = arith.constant 0 : index
    %c0_4 = arith.constant 0 : index
    %3 = vector.load %arg3[%c0_3, %c0_4] : memref<1x128xf32, #tpu.memory_space<vmem>>, vector<1x128xf32>
    %4 = vector.broadcast %3 : vector<1x128xf32> to vector<32x128xf32>
    %5 = arith.addf %2, %4 : vector<32x128xf32>
    %cst_5 = arith.constant 0.000000e+00 : f32
    %6 = vector.broadcast %cst_5 : f32 to vector<32x128xf32>
    %7 = arith.maximumf %5, %6 : vector<32x128xf32>
    %c0_6 = arith.constant 0 : index
    %c0_7 = arith.constant 0 : index
    %8 = vector.load %arg4[%c0_6, %c0_7] : memref<1x128xf32, #tpu.memory_space<vmem>>, vector<1x128xf32>
    %9 = vector.broadcast %8 : vector<1x128xf32> to vector<32x128xf32>
    %10 = arith.mulf %7, %9 : vector<32x128xf32>
    %cst_8 = arith.constant dense<0.000000e+00> : vector<32xf32>
    %11 = vector.multi_reduction <add>, %10, %cst_8 [1] : vector<32x128xf32> to vector<32xf32>
    %12 = vector.shape_cast %11 : vector<32xf32> to vector<32x1xf32>
    %c0_9 = arith.constant 0 : index
    %c0_10 = arith.constant 0 : index
    %13 = vector.load %arg5[%c0_9, %c0_10] : memref<1x1xf32, #tpu.memory_space<vmem>>, vector<1x1xf32>
    %14 = vector.broadcast %13 : vector<1x1xf32> to vector<32x1xf32>
    %15 = arith.addf %12, %14 : vector<32x1xf32>
    %cst_11 = arith.constant 0.000000e+00 : f32
    %16 = vector.broadcast %cst_11 : f32 to vector<32x1xf32>
    %17 = arith.maximumf %15, %16 : vector<32x1xf32>
    %c0_12 = arith.constant 0 : index
    %c0_13 = arith.constant 0 : index
    %18 = vector.load %arg6[%c0_12, %c0_13] : memref<32x1xf32, #tpu.memory_space<vmem>>, vector<32x1xf32>
    tpu.vector_store %arg6[%c0_12, %c0_13], %17 {strides = array<i32>} : memref<32x1xf32, #tpu.memory_space<vmem>>, vector<32x1xf32>,
    return
  }
  func.func @transform_0(%arg0: i32) -> (i32, i32) {
    %c0_i32 = arith.constant 0 : i32
    %c0_i32_0 = arith.constant 0 : i32
    return %arg0, %c0_i32 : i32, i32
  }
  func.func @transform_1(%arg0: i32) -> (i32, i32) {
    %c0_i32 = arith.constant 0 : i32
    %c0_i32_0 = arith.constant 0 : i32
    %c0_i32_1 = arith.constant 0 : i32
    return %c0_i32, %c0_i32_0 : i32, i32
  }
  func.func @transform_2(%arg0: i32) -> (i32, i32) {
    %c0_i32 = arith.constant 0 : i32
    %c0_i32_0 = arith.constant 0 : i32
    %c0_i32_1 = arith.constant 0 : i32
    return %c0_i32, %c0_i32_0 : i32, i32
  }
  func.func @transform_3(%arg0: i32) -> (i32, i32) {
    %c0_i32 = arith.constant 0 : i32
    %c0_i32_0 = arith.constant 0 : i32
    %c0_i32_1 = arith.constant 0 : i32
    return %c0_i32, %c0_i32_0 : i32, i32
  }
  func.func @transform_4(%arg0: i32) -> (i32, i32) {
    %c0_i32 = arith.constant 0 : i32
    %c0_i32_0 = arith.constant 0 : i32
    %c0_i32_1 = arith.constant 0 : i32
    return %c0_i32, %c0_i32_0 : i32, i32
  }
  func.func @transform_5(%arg0: i32) -> (i32, i32) {
    %c0_i32 = arith.constant 0 : i32
    %c0_i32_0 = arith.constant 0 : i32
    return %arg0, %c0_i32 : i32, i32
  }
}

module attributes {stable_mosaic.version = 11 : i64} {
  func.func @_loss_kernel(%arg0: i32, %arg1: memref<8x128xf32, #tpu.memory_space<vmem>>, %arg2: memref<8x128xf32, #tpu.memory_space<vmem>>, %arg3: memref<1x1xf32, #tpu.memory_space<vmem>>, %arg4: memref<1x1xf32, #tpu.memory_space<vmem>>) attributes {dimension_semantics = [#tpu.dimension_semantics<arbitrary>], iteration_bounds = array<i64: 1>, scalar_prefetch = 0 : i64, scratch_operands = 1 : i64, tpu.core_type = #tpu.core_type<tc>, window_params = [{transform_indices = @transform_0, window_bounds = array<i64: 8, 128>}, {transform_indices = @transform_1, window_bounds = array<i64: 8, 128>}, {pipeline_mode = #tpu.pipeline_mode<synchronous>, transform_indices = @transform_2, window_bounds = array<i64: 1, 1>}]} {
    %c0_i32 = arith.constant 0 : i32
    %0 = arith.cmpi eq, %arg0, %c0_i32 : i32
    %1 = arith.extui %0 : i1 to i32
    %c0_i32_0 = arith.constant 0 : i32
    %2 = arith.cmpi ne, %1, %c0_i32_0 : i32
    scf.if %2 {
      %cst_15 = arith.constant 0.000000e+00 : f32
      %27 = vector.broadcast %cst_15 : f32 to vector<1x1xf32>
      %c0_16 = arith.constant 0 : index
      %c0_17 = arith.constant 0 : index
      %28 = vector.load %arg4[%c0_16, %c0_17] : memref<1x1xf32, #tpu.memory_space<vmem>>, vector<1x1xf32>
      tpu.vector_store %arg4[%c0_16, %c0_17], %27 {strides = array<i32>} : memref<1x1xf32, #tpu.memory_space<vmem>>, vector<1x1xf32>,
    } else {
    }
    %c0 = arith.constant 0 : index
    %c0_1 = arith.constant 0 : index
    %3 = vector.load %arg1[%c0, %c0_1] : memref<8x128xf32, #tpu.memory_space<vmem>>, vector<8x128xf32>
    %c0_2 = arith.constant 0 : index
    %c0_3 = arith.constant 0 : index
    %4 = vector.load %arg2[%c0_2, %c0_3] : memref<8x128xf32, #tpu.memory_space<vmem>>, vector<8x128xf32>
    %5 = arith.subf %3, %4 : vector<8x128xf32>
    %6 = arith.mulf %5, %5 : vector<8x128xf32>
    %cst = arith.constant dense<0.000000e+00> : vector<8xf32>
    %7 = vector.multi_reduction <add>, %6, %cst [1] : vector<8x128xf32> to vector<8xf32>
    %8 = vector.shape_cast %7 : vector<8xf32> to vector<8x1xf32>
    %cst_4 = arith.constant dense<0.000000e+00> : vector<1xf32>
    %9 = vector.multi_reduction <add>, %8, %cst_4 [0] : vector<8x1xf32> to vector<1xf32>
    %10 = vector.shape_cast %9 : vector<1xf32> to vector<1x1xf32>
    %11 = math.absf %5 : vector<8x128xf32>
    %cst_5 = arith.constant dense<0.000000e+00> : vector<8xf32>
    %12 = vector.multi_reduction <add>, %11, %cst_5 [1] : vector<8x128xf32> to vector<8xf32>
    %13 = vector.shape_cast %12 : vector<8xf32> to vector<8x1xf32>
    %cst_6 = arith.constant dense<0.000000e+00> : vector<1xf32>
    %14 = vector.multi_reduction <add>, %13, %cst_6 [0] : vector<8x1xf32> to vector<1xf32>
    %15 = vector.shape_cast %14 : vector<1xf32> to vector<1x1xf32>
    %c0_7 = arith.constant 0 : index
    %c0_8 = arith.constant 0 : index
    %16 = vector.load %arg4[%c0_7, %c0_8] : memref<1x1xf32, #tpu.memory_space<vmem>>, vector<1x1xf32>
    %cst_9 = arith.constant 5.000000e-01 : f32
    %17 = vector.broadcast %cst_9 : f32 to vector<1x1xf32>
    %18 = arith.mulf %17, %10 : vector<1x1xf32>
    %cst_10 = arith.constant 9.99999974E-5 : f32
    %19 = vector.broadcast %cst_10 : f32 to vector<1x1xf32>
    %20 = arith.mulf %19, %15 : vector<1x1xf32>
    %21 = arith.addf %18, %20 : vector<1x1xf32>
    %22 = arith.addf %16, %21 : vector<1x1xf32>
    %c0_11 = arith.constant 0 : index
    %c0_12 = arith.constant 0 : index
    %23 = vector.load %arg4[%c0_11, %c0_12] : memref<1x1xf32, #tpu.memory_space<vmem>>, vector<1x1xf32>
    tpu.vector_store %arg4[%c0_11, %c0_12], %22 {strides = array<i32>} : memref<1x1xf32, #tpu.memory_space<vmem>>, vector<1x1xf32>,
    %c0_i32_13 = arith.constant 0 : i32
    %24 = arith.cmpi eq, %arg0, %c0_i32_13 : i32
    %25 = arith.extui %24 : i1 to i32
    %c0_i32_14 = arith.constant 0 : i32
    %26 = arith.cmpi ne, %25, %c0_i32_14 : i32
    scf.if %26 {
      %c0_15 = arith.constant 0 : index
      %c0_16 = arith.constant 0 : index
      %27 = vector.load %arg4[%c0_15, %c0_16] : memref<1x1xf32, #tpu.memory_space<vmem>>, vector<1x1xf32>
      %c0_17 = arith.constant 0 : index
      %c0_18 = arith.constant 0 : index
      %28 = vector.load %arg3[%c0_17, %c0_18] : memref<1x1xf32, #tpu.memory_space<vmem>>, vector<1x1xf32>
      tpu.vector_store %arg3[%c0_17, %c0_18], %27 {strides = array<i32>} : memref<1x1xf32, #tpu.memory_space<vmem>>, vector<1x1xf32>,
    } else {
    }
    return
  }
  func.func @transform_0(%arg0: i32) -> (i32, i32) {
    %c0_i32 = arith.constant 0 : i32
    %c0_i32_0 = arith.constant 0 : i32
    return %arg0, %c0_i32 : i32, i32
  }
  func.func @transform_1(%arg0: i32) -> (i32, i32) {
    %c0_i32 = arith.constant 0 : i32
    %c0_i32_0 = arith.constant 0 : i32
    return %arg0, %c0_i32 : i32, i32
  }
  func.func @transform_2(%arg0: i32) -> (i32, i32) {
    %c0_i32 = arith.constant 0 : i32
    %c0_i32_0 = arith.constant 0 : i32
    %c0_i32_1 = arith.constant 0 : i32
    return %c0_i32, %c0_i32_0 : i32, i32
  }
}

</mosaic_0001>

<llo_original>
// kernel: crowd_counter_forward.8
$region0: #{crowd_counter_forward.8}
  #allocation0 [shape = 'u32[]', space=smem, size = 0x4, offset = 0x4, fixed_abs, tag = 'smem constant byte address 0x4 - core index']
  #allocation1 [shape = 'u32[144,128]{1,0:T(1,128)}', space=vmem, size = 0x12000, scoped, tag = 'internal scratch']
  %s0 = inlined_call_operand.vmem [shape: f32[2,8,2,8,120], index: 0, kind: input, shape index: {}]
  %s1 = inlined_call_operand.vmem [shape: f32[2,8,8,60], index: 1, kind: output, shape index: {}]
  %s2 = sld [smem:[#allocation0]]
  $region37: #{crowd_counter_forward.8} parent=0
    _
  %s4 = ssub.s32 1, %s2
  %s5 = scalar_select 0, %s4, %s2
  loop: start=0, step=1, limit=4
  $region2: #{crowd_counter_forward.8} parent=0 // loop_pre_header
    _
  $region3: #{crowd_counter_forward.8} parent=0 // loop_header
    %s7 = sphi 0, %s11
    %p8 = scmp.ge.s32.totalorder %s7, 4
    %s14 = sphi 0, %s26
    %s15 = sphi 0, %s22
    %s16 = sphi 0, %s14
    %s17 = sphi 0, %s15
    %s18 = sphi 0, %s16
    %s19 = sphi 0, %s17
    %s31 = sphi 0, %s33
    %s34 = sphi 0, %s31
    %s35 = sphi 0, %s34
    %s51 = sphi 0, %s35
    %s59 = sphi 0, %s61
    %s62 = sphi 0, %s59
    %s63 = sphi 0, %s62
    %s79 = sphi 0, %s63
  $region4: #{crowd_counter_forward.8} parent=0 // loop_header_branch
    %10 = sbr.rel (%p8) target = $region8
  $region5: #{crowd_counter_forward.8} parent=0 // loop_body
    %s12 = ssub.s32 %s7, 1
    %s13 = ssub.s32 %s7, 2
    %s20 = sadd.s32 1, %s15
    %p21 = scmp.ge.s32.totalorder %s20, 1
    %s22 = scalar_select %p21, 0, %s20
    %s23 = sadd.s32 1, %s14
    %s24 = scalar_select %p21, %s23, %s14
    %p25 = scmp.ge.s32.totalorder %s24, 2
    %s26 = scalar_select %p25, 0, %s24
    %s27 = ssub.s32 %s14, %s26
    %s28 = ssub.s32 %s15, %s22
    %s29 = sor.u32 %s27, %s28
    %p30 = scmp.eq.s32.totalorder %s29, 0
    %s32 = sadd.s32 %s31, 1
    %s33 = scalar_select %p30, %s31, %s32
    %p36 = pneg %p30
    %p37 = scmp.eq.s32.totalorder %s7, 1
    %p38 = por %p36, %p37
    %p39 = scmp.ne.s32.totalorder %s31, %s34
    %p40 = scmp.eq.s32.totalorder %s7, 0
    %p41 = por %p39, %p40
    %p42 = scmp.ne.s32.totalorder %s31, %s34
    %p43 = scmp.eq.s32.totalorder %s12, 1
    %p44 = por %p42, %p43
    %p45 = scmp.ne.s32.totalorder %s34, %s35
    %p46 = scmp.eq.s32.totalorder %s12, 0
    %p47 = por %p45, %p46
    %p48 = scmp.ne.s32.totalorder %s34, %s35
    %p49 = scmp.eq.s32.totalorder %s13, 1
    %p50 = por %p48, %p49
    %p52 = scmp.ne.s32.totalorder %s35, %s51
    %p53 = scmp.eq.s32.totalorder %s13, 0
    %p54 = por %p52, %p53
    %s55 = ssub.s32 %s14, %s26
    %s56 = ssub.s32 %s15, %s22
    %s57 = sor.u32 %s55, %s56
    %p58 = scmp.eq.s32.totalorder %s57, 0
    %s60 = sadd.s32 %s59, 1
    %s61 = scalar_select %p58, %s59, %s60
    %p64 = pneg %p58
    %p65 = scmp.eq.s32.totalorder %s7, 1
    %p66 = por %p64, %p65
    %p67 = scmp.ne.s32.totalorder %s59, %s62
    %p68 = scmp.eq.s32.totalorder %s7, 0
    %p69 = por %p67, %p68
    %p70 = scmp.ne.s32.totalorder %s59, %s62
    %p71 = scmp.eq.s32.totalorder %s12, 1
    %p72 = por %p70, %p71
    %p73 = scmp.ne.s32.totalorder %s62, %s63
    %p74 = scmp.eq.s32.totalorder %s12, 0
    %p75 = por %p73, %p74
    %p76 = scmp.ne.s32.totalorder %s62, %s63
    %p77 = scmp.eq.s32.totalorder %s13, 1
    %p78 = por %p76, %p77
    %p80 = scmp.ne.s32.totalorder %s63, %s79
    %p81 = scmp.eq.s32.totalorder %s13, 0
    %p82 = por %p80, %p81
    %p83 = scmp.le.s32.totalorder 1, %s7
    %p84 = scmp.lt.s32.totalorder %s7, 3
    %p85 = pnand %p83, %p84
    %p86 = pneg %p85
    // Predicated region
    $region9: #{crowd_counter_forward.8} parent=5 // pred_check
      _
    $region10: #{crowd_counter_forward.8} parent=5 // pred_check_branch
      %88 = sbr.rel (%p85) target = $region12
    $region11: #{crowd_counter_forward.8} parent=5 // pred_region
      %s89 = ssub.s32 %s7, 1
    $region12: #{crowd_counter_forward.8} parent=5 // pred_fallthru
      _
    %p90 = scmp.lt.s32.totalorder %s7, 2
    // Predicated region
    $region13: #{crowd_counter_forward.8} parent=5 // pred_check
      %p91 = pneg %p90
    $region14: #{crowd_counter_forward.8} parent=5 // pred_check_branch
      %93 = sbr.rel (%p91) target = $region16
    $region15: #{crowd_counter_forward.8} parent=5 // pred_region
      // Predicated region
      $region17: #{crowd_counter_forward.8} parent=15 // pred_check
        %p94 = pneg %p41
      $region18: #{crowd_counter_forward.8} parent=15 // pred_check_branch
        %96 = sbr.rel (%p94) target = $region20
      $region19: #{crowd_counter_forward.8} parent=15 // pred_region
        %s97 = smul.u32 8, %s15
        %p98 = scmp.lt.s32.totalorder %s14, 1
        %s99 = scalar_select %p98, %s14, 1
        %p100 = scmp.lt.s32.totalorder %s97, 7
        %s101 = scalar_select %p100, %s97, 7
        %s102 = smul.addr %s101, 2
        %s103 = smul.addr %s99, 16
        %s104 = sadd.s32 %s102, %s103
        %s105 = smul.addr %s104, 8
        %s106 = scalar_lea.vmem %s0, %s105
        %s107 = smul.u32 8, %s15
      $region20: #{crowd_counter_forward.8} parent=15 // pred_fallthru
        _
    $region16: #{crowd_counter_forward.8} parent=5 // pred_fallthru
      _
    %p108 = scmp.le.s32.totalorder 1, %s7
    %p109 = scmp.lt.s32.totalorder %s7, 3
    %p110 = pnand %p108, %p109
    %p111 = pneg %p110
    // Predicated region
    $region21: #{crowd_counter_forward.8} parent=5 // pred_check
      _
    $region22: #{crowd_counter_forward.8} parent=5 // pred_check_branch
      %113 = sbr.rel (%p110) target = $region24
    $region23: #{crowd_counter_forward.8} parent=5 // pred_region
      %s114 = ssub.s32 %s7, 1
      %s115 = smul.u32 8, %s17
      %p116 = scmp.lt.s32.totalorder %s16, 1
      %s117 = scalar_select %p116, %s16, 1
      %p118 = scmp.lt.s32.totalorder %s115, 7
      %s119 = scalar_select %p118, %s115, 7
      %s120 = smul.addr %s119, 2
      %s121 = smul.addr %s117, 16
      %s122 = sadd.s32 %s120, %s121
      %s123 = smul.addr %s122, 8
      %s124 = scalar_lea.vmem %s0, %s123
      %p125 = pneg %p47
      %p126 = pneg %p44
      %p127 = pneg %p75
      %p128 = pneg %p72
      %s129 = smul.u32 8, %s17
      %p130 = scmp.lt.s32.totalorder %s16, 1
      %s131 = scalar_select %p130, %s16, 1
      %p132 = scmp.lt.s32.totalorder %s129, 7
      %s133 = scalar_select %p132, %s129, 7
      %s134 = smul.addr %s131, 8
      %s135 = sadd.s32 %s133, %s134
      %s136 = smul.addr %s135, 8
      %s137 = scalar_lea.vmem %s1, %s136
      %s138 = smul.u32 8, %s17
      %p139 = scmp.lt.s32.totalorder %s16, 1
      %s140 = scalar_select %p139, %s16, 1
      %p141 = scmp.lt.s32.totalorder %s138, 7
      %s142 = scalar_select %p141, %s138, 7
      %s143 = smul.addr %s142, 2
      %s144 = smul.addr %s140, 16
      %s145 = sadd.s32 %s143, %s144
      %s146 = smul.addr %s145, 8
      %s147 = scalar_lea.vmem %s0, %s146
      %s148 = smul.u32 8, %s17
      %s149 = smul.u32 8, %s17
      %p150 = scmp.lt.s32.totalorder %s16, 1
      %s151 = scalar_select %p150, %s16, 1
      %p152 = scmp.lt.s32.totalorder %s149, 7
      %s153 = scalar_select %p152, %s149, 7
      %s154 = smul.addr %s151, 8
      %s155 = sadd.s32 %s153, %s154
      %s156 = smul.addr %s155, 8
      %s157 = scalar_lea.vmem %s1, %s156
      %s158 = smul.u32 8, %s17
      %v159 = vld [vmem:[%s147] sm:$0xff]
      %v160 = vld [vmem:[%s147 + $0x8] sm:$0xff]
      %v161 = vld [vmem:[%s147 + $0x10] sm:$0xff]
      %v162 = vld [vmem:[%s147 + $0x18] sm:$0xff]
      %v163 = vld [vmem:[%s147 + $0x20] sm:$0xff]
      %v164 = vld [vmem:[%s147 + $0x28] sm:$0xff]
      %v165 = vld [vmem:[%s147 + $0x30] sm:$0xff]
      %v166 = vld [vmem:[%s147 + $0x38] sm:$0xff]
      %v167 = vld [vmem:[%s147 + $0x40] sm:$0xff]
      %v168 = vld [vmem:[%s147 + $0x48] sm:$0xff]
      %v169 = vld [vmem:[%s147 + $0x50] sm:$0xff]
      %v170 = vld [vmem:[%s147 + $0x58] sm:$0xff]
      %v171 = vld [vmem:[%s147 + $0x60] sm:$0xff]
      %v172 = vld [vmem:[%s147 + $0x68] sm:$0xff]
      %v173 = vld [vmem:[%s147 + $0x70] sm:$0xff]
      %v174 = vld [vmem:[%s147 + $0x78] sm:$0xff]
      %v175 = vmax.f32 %v159, %v160
      %v176 = vmax.f32 %v161, %v162
      %v177 = vmax.f32 %v163, %v164
      %v178 = vmax.f32 %v165, %v166
      %v179 = vmax.f32 %v167, %v168
      %v180 = vmax.f32 %v169, %v170
      %v181 = vmax.f32 %v171, %v172
      %v182 = vmax.f32 %v173, %v174
      %191 = vrot.lane.b32.xlu0 %v175, 68
      %v192 = vpop.permute.xlu0 %191
      %193 = vrot.lane.b32.xlu0 %v176, 68
      %v194 = vpop.permute.xlu0 %193
      %195 = vrot.lane.b32.xlu0 %v177, 68
      %v196 = vpop.permute.xlu0 %195
      %197 = vrot.lane.b32.xlu0 %v178, 68
      %v198 = vpop.permute.xlu0 %197
      %199 = vrot.lane.b32.xlu0 %v179, 68
      %v200 = vpop.permute.xlu0 %199
      %201 = vrot.lane.b32.xlu0 %v180, 68
      %v202 = vpop.permute.xlu0 %201
      %203 = vrot.lane.b32.xlu0 %v181, 68
      %v204 = vpop.permute.xlu0 %203
      %205 = vrot.lane.b32.xlu0 %v182, 68
      %v206 = vpop.permute.xlu0 %205
      %v215 = vmax.f32 %v175, %v192
      %v216 = vmax.f32 %v176, %v194
      %v217 = vmax.f32 %v177, %v196
      %v218 = vmax.f32 %v178, %v198
      %v219 = vmax.f32 %v179, %v200
      %v220 = vmax.f32 %v180, %v202
      %v221 = vmax.f32 %v181, %v204
      %v222 = vmax.f32 %v182, %v206
      %vm223 = vcmask 490496
      %224 = vst.msk [vmem:[%s157] sm:$0xff] %vm223, %v215
      %225 = vst.msk [vmem:[%s157 + $0x8] sm:$0xff] %vm223, %v216
      %226 = vst.msk [vmem:[%s157 + $0x10] sm:$0xff] %vm223, %v217
      %227 = vst.msk [vmem:[%s157 + $0x18] sm:$0xff] %vm223, %v218
      %228 = vst.msk [vmem:[%s157 + $0x20] sm:$0xff] %vm223, %v219
      %229 = vst.msk [vmem:[%s157 + $0x28] sm:$0xff] %vm223, %v220
      %230 = vst.msk [vmem:[%s157 + $0x30] sm:$0xff] %vm223, %v221
      %231 = vst.msk [vmem:[%s157 + $0x38] sm:$0xff] %vm223, %v222
      %s232 = smul.u32 8, %s17
      %p233 = scmp.lt.s32.totalorder %s16, 1
      %s234 = scalar_select %p233, %s16, 1
      %p235 = scmp.lt.s32.totalorder %s232, 7
      %s236 = scalar_select %p235, %s232, 7
      %s237 = smul.addr %s234, 8
      %s238 = sadd.s32 %s236, %s237
      %s239 = smul.addr %s238, 8
      %s240 = scalar_lea.vmem %s1, %s239
      // Predicated region
      $region25: #{crowd_counter_forward.8} parent=23 // pred_check
        %p241 = pneg %p72
      $region26: #{crowd_counter_forward.8} parent=23 // pred_check_branch
        %243 = sbr.rel (%p241) target = $region28
      $region27: #{crowd_counter_forward.8} parent=23 // pred_region
        %s244 = smul.u32 8, %s17
      $region28: #{crowd_counter_forward.8} parent=23 // pred_fallthru
        _
    $region24: #{crowd_counter_forward.8} parent=5 // pred_fallthru
      _
    %p245 = scmp.le.s32.totalorder 2, %s7
    // Predicated region
    $region29: #{crowd_counter_forward.8} parent=5 // pred_check
      %p246 = pneg %p245
    $region30: #{crowd_counter_forward.8} parent=5 // pred_check_branch
      %248 = sbr.rel (%p246) target = $region32
    $region31: #{crowd_counter_forward.8} parent=5 // pred_region
      %s249 = ssub.s32 %s7, 2
      // Predicated region
      $region33: #{crowd_counter_forward.8} parent=31 // pred_check
        %p250 = pneg %p78
      $region34: #{crowd_counter_forward.8} parent=31 // pred_check_branch
        %252 = sbr.rel (%p250) target = $region36
      $region35: #{crowd_counter_forward.8} parent=31 // pred_region
        %s253 = smul.u32 8, %s19
        %p254 = scmp.lt.s32.totalorder %s18, 1
        %s255 = scalar_select %p254, %s18, 1
        %p256 = scmp.lt.s32.totalorder %s253, 7
        %s257 = scalar_select %p256, %s253, 7
        %s258 = smul.addr %s255, 8
        %s259 = sadd.s32 %s257, %s258
        %s260 = smul.addr %s259, 8
        %s261 = scalar_lea.vmem %s1, %s260
      $region36: #{crowd_counter_forward.8} parent=31 // pred_fallthru
        _
    $region32: #{crowd_counter_forward.8} parent=5 // pred_fallthru
      _
  $region6: #{crowd_counter_forward.8} parent=0 // loop_footer
    %s11 = sadd.s32 1, %s7
  $region7: #{crowd_counter_forward.8} parent=0 // loop_footer_branch
    %6 = sbr.rel target = $region3
  $region8: #{crowd_counter_forward.8} parent=0 // loop_exit
    _

// kernel: crowd_counter_forward.7
$region0: #{crowd_counter_forward.7}
  #allocation0 [shape = 'u32[]', space=smem, size = 0x4, offset = 0x4, fixed_abs, tag = 'smem constant byte address 0x4 - core index']
  #allocation1 [shape = 'u32[144,128]{1,0:T(1,128)}', space=vmem, size = 0x12000, scoped, tag = 'internal scratch']
  %s0 = inlined_call_operand.vmem [shape: bf16[512,128], index: 0, kind: input, shape index: {}]
  %s1 = inlined_call_operand.vmem [shape: bf16[128,128], index: 1, kind: input, shape index: {}]
  %s2 = inlined_call_operand.vmem [shape: f32[1,128], index: 2, kind: input, shape index: {}]
  %s3 = inlined_call_operand.vmem [shape: f32[512,128], index: 3, kind: output, shape index: {}]
  %s4 = sld [smem:[#allocation0]]
  $region22: #{crowd_counter_forward.7} parent=0
    _
  %s6 = ssub.s32 1, %s4
  %s7 = scalar_select 0, %s6, %s4
  // Predicated region
  $region2: #{crowd_counter_forward.7} parent=0 // pred_check
    _
  $region3: #{crowd_counter_forward.7} parent=0 // pred_check_branch
    %9 = sbr.rel (0) target = $region5
  $region4: #{crowd_counter_forward.7} parent=0 // pred_region
    _
  $region5: #{crowd_counter_forward.7} parent=0 // pred_fallthru
    _
  // Predicated region
  $region6: #{crowd_counter_forward.7} parent=0 // pred_check
    _
  $region7: #{crowd_counter_forward.7} parent=0 // pred_check_branch
    %11 = sbr.rel (0) target = $region9
  $region8: #{crowd_counter_forward.7} parent=0 // pred_region
    _
  $region9: #{crowd_counter_forward.7} parent=0 // pred_fallthru
    _
  // Predicated region
  $region10: #{crowd_counter_forward.7} parent=0 // pred_check
    _
  $region11: #{crowd_counter_forward.7} parent=0 // pred_check_branch
    %13 = sbr.rel (0) target = $region13
  $region12: #{crowd_counter_forward.7} parent=0 // pred_region
    _
  $region13: #{crowd_counter_forward.7} parent=0 // pred_fallthru
    _
  %v15 = vld [vmem:[%s0] sm:$0xf]
  %v16 = vld [vmem:[%s0 + $0x4] sm:$0xf]
  %v17 = vld [vmem:[%s0 + $0x8] sm:$0xf]
  %v18 = vld [vmem:[%s0 + $0xc] sm:$0xf]
  %v19 = vld [vmem:[%s0 + $0x10] sm:$0xf]
  %v20 = vld [vmem:[%s0 + $0x14] sm:$0xf]
  %v21 = vld [vmem:[%s0 + $0x18] sm:$0xf]
  %v22 = vld [vmem:[%s0 + $0x1c] sm:$0xf]
  %v23 = vld [vmem:[%s0 + $0x20] sm:$0xf]
  %v24 = vld [vmem:[%s0 + $0x24] sm:$0xf]
  %v25 = vld [vmem:[%s0 + $0x28] sm:$0xf]
  %v26 = vld [vmem:[%s0 + $0x2c] sm:$0xf]
  %v27 = vld [vmem:[%s0 + $0x30] sm:$0xf]
  %v28 = vld [vmem:[%s0 + $0x34] sm:$0xf]
  %v29 = vld [vmem:[%s0 + $0x38] sm:$0xf]
  %v30 = vld [vmem:[%s0 + $0x3c] sm:$0xf]
  %v31 = vld [vmem:[%s0 + $0x40] sm:$0xf]
  %v32 = vld [vmem:[%s0 + $0x44] sm:$0xf]
  %v33 = vld [vmem:[%s0 + $0x48] sm:$0xf]
  %v34 = vld [vmem:[%s0 + $0x4c] sm:$0xf]
  %v35 = vld [vmem:[%s0 + $0x50] sm:$0xf]
  %v36 = vld [vmem:[%s0 + $0x54] sm:$0xf]
  %v37 = vld [vmem:[%s0 + $0x58] sm:$0xf]
  %v38 = vld [vmem:[%s0 + $0x5c] sm:$0xf]
  %v39 = vld [vmem:[%s0 + $0x60] sm:$0xf]
  %v40 = vld [vmem:[%s0 + $0x64] sm:$0xf]
  %v41 = vld [vmem:[%s0 + $0x68] sm:$0xf]
  %v42 = vld [vmem:[%s0 + $0x6c] sm:$0xf]
  %v43 = vld [vmem:[%s0 + $0x70] sm:$0xf]
  %v44 = vld [vmem:[%s0 + $0x74] sm:$0xf]
  %v45 = vld [vmem:[%s0 + $0x78] sm:$0xf]
  %v46 = vld [vmem:[%s0 + $0x7c] sm:$0xf]
  %v47 = vld [vmem:[%s0 + $0x80] sm:$0xf]
  %v48 = vld [vmem:[%s0 + $0x84] sm:$0xf]
  %v49 = vld [vmem:[%s0 + $0x88] sm:$0xf]
  %v50 = vld [vmem:[%s0 + $0x8c] sm:$0xf]
  %v51 = vld [vmem:[%s0 + $0x90] sm:$0xf]
  %v52 = vld [vmem:[%s0 + $0x94] sm:$0xf]
  %v53 = vld [vmem:[%s0 + $0x98] sm:$0xf]
  %v54 = vld [vmem:[%s0 + $0x9c] sm:$0xf]
  %v55 = vld [vmem:[%s0 + $0xa0] sm:$0xf]
  %v56 = vld [vmem:[%s0 + $0xa4] sm:$0xf]
  %v57 = vld [vmem:[%s0 + $0xa8] sm:$0xf]
  %v58 = vld [vmem:[%s0 + $0xac] sm:$0xf]
  %v59 = vld [vmem:[%s0 + $0xb0] sm:$0xf]
  %v60 = vld [vmem:[%s0 + $0xb4] sm:$0xf]
  %v61 = vld [vmem:[%s0 + $0xb8] sm:$0xf]
  %v62 = vld [vmem:[%s0 + $0xbc] sm:$0xf]
  %v63 = vld [vmem:[%s0 + $0xc0] sm:$0xf]
  %v64 = vld [vmem:[%s0 + $0xc4] sm:$0xf]
  %v65 = vld [vmem:[%s0 + $0xc8] sm:$0xf]
  %v66 = vld [vmem:[%s0 + $0xcc] sm:$0xf]
  %v67 = vld [vmem:[%s0 + $0xd0] sm:$0xf]
  %v68 = vld [vmem:[%s0 + $0xd4] sm:$0xf]
  %v69 = vld [vmem:[%s0 + $0xd8] sm:$0xf]
  %v70 = vld [vmem:[%s0 + $0xdc] sm:$0xf]
  %v71 = vld [vmem:[%s0 + $0xe0] sm:$0xf]
  %v72 = vld [vmem:[%s0 + $0xe4] sm:$0xf]
  %v73 = vld [vmem:[%s0 + $0xe8] sm:$0xf]
  %v74 = vld [vmem:[%s0 + $0xec] sm:$0xf]
  %v75 = vld [vmem:[%s0 + $0xf0] sm:$0xf]
  %v76 = vld [vmem:[%s0 + $0xf4] sm:$0xf]
  %v77 = vld [vmem:[%s0 + $0xf8] sm:$0xf]
  %v78 = vld [vmem:[%s0 + $0xfc] sm:$0xf]
  %v79 = vld [vmem:[%s1] sm:$0xf]
  %v80 = vld [vmem:[%s1 + $0x4] sm:$0xf]
  %v81 = vld [vmem:[%s1 + $0x8] sm:$0xf]
  %v82 = vld [vmem:[%s1 + $0xc] sm:$0xf]
  %v83 = vld [vmem:[%s1 + $0x10] sm:$0xf]
  %v84 = vld [vmem:[%s1 + $0x14] sm:$0xf]
  %v85 = vld [vmem:[%s1 + $0x18] sm:$0xf]
  %v86 = vld [vmem:[%s1 + $0x1c] sm:$0xf]
  %v87 = vld [vmem:[%s1 + $0x20] sm:$0xf]
  %v88 = vld [vmem:[%s1 + $0x24] sm:$0xf]
  %v89 = vld [vmem:[%s1 + $0x28] sm:$0xf]
  %v90 = vld [vmem:[%s1 + $0x2c] sm:$0xf]
  %v91 = vld [vmem:[%s1 + $0x30] sm:$0xf]
  %v92 = vld [vmem:[%s1 + $0x34] sm:$0xf]
  %v93 = vld [vmem:[%s1 + $0x38] sm:$0xf]
  %v94 = vld [vmem:[%s1 + $0x3c] sm:$0xf]
  %v95 = vld [vmem:[%s2] sm:$0x1]
  %v97 = vlaneseq
  %v98 = vshrl.u32 %v97, 7
  %v99 = vsub.s32 0, %v98
  %v100 = vrot.slane %v95, %v99
  %v166 = vunpack.c.l.b16 %v15
  %v167 = vunpack.c.l.b16 %v16
  %v168 = vunpack.c.l.b16 %v17
  %v169 = vunpack.c.l.b16 %v18
  %v170 = vunpack.c.l.b16 %v19
  %v171 = vunpack.c.l.b16 %v20
  %v172 = vunpack.c.l.b16 %v21
  %v173 = vunpack.c.l.b16 %v22
  %v174 = vunpack.c.l.b16 %v23
  %v175 = vunpack.c.l.b16 %v24
  %v176 = vunpack.c.l.b16 %v25
  %v177 = vunpack.c.l.b16 %v26
  %v178 = vunpack.c.l.b16 %v27
  %v179 = vunpack.c.l.b16 %v28
  %v180 = vunpack.c.l.b16 %v29
  %v181 = vunpack.c.l.b16 %v30
  %v182 = vunpack.c.l.b16 %v31
  %v183 = vunpack.c.l.b16 %v32
  %v184 = vunpack.c.l.b16 %v33
  %v185 = vunpack.c.l.b16 %v34
  %v186 = vunpack.c.l.b16 %v35
  %v187 = vunpack.c.l.b16 %v36
  %v188 = vunpack.c.l.b16 %v37
  %v189 = vunpack.c.l.b16 %v38
  %v190 = vunpack.c.l.b16 %v39
  %v191 = vunpack.c.l.b16 %v40
  %v192 = vunpack.c.l.b16 %v41
  %v193 = vunpack.c.l.b16 %v42
  %v194 = vunpack.c.l.b16 %v43
  %v195 = vunpack.c.l.b16 %v44
  %v196 = vunpack.c.l.b16 %v45
  %v197 = vunpack.c.l.b16 %v46
  %v198 = vunpack.c.l.b16 %v47
  %v199 = vunpack.c.l.b16 %v48
  %v200 = vunpack.c.l.b16 %v49
  %v201 = vunpack.c.l.b16 %v50
  %v202 = vunpack.c.l.b16 %v51
  %v203 = vunpack.c.l.b16 %v52
  %v204 = vunpack.c.l.b16 %v53
  %v205 = vunpack.c.l.b16 %v54
  %v206 = vunpack.c.l.b16 %v55
  %v207 = vunpack.c.l.b16 %v56
  %v208 = vunpack.c.l.b16 %v57
  %v209 = vunpack.c.l.b16 %v58
  %v210 = vunpack.c.l.b16 %v59
  %v211 = vunpack.c.l.b16 %v60
  %v212 = vunpack.c.l.b16 %v61
  %v213 = vunpack.c.l.b16 %v62
  %v214 = vunpack.c.l.b16 %v63
  %v215 = vunpack.c.l.b16 %v64
  %v216 = vunpack.c.l.b16 %v65
  %v217 = vunpack.c.l.b16 %v66
  %v218 = vunpack.c.l.b16 %v67
  %v219 = vunpack.c.l.b16 %v68
  %v220 = vunpack.c.l.b16 %v69
  %v221 = vunpack.c.l.b16 %v70
  %v222 = vunpack.c.l.b16 %v71
  %v223 = vunpack.c.l.b16 %v72
  %v224 = vunpack.c.l.b16 %v73
  %v225 = vunpack.c.l.b16 %v74
  %v226 = vunpack.c.l.b16 %v75
  %v227 = vunpack.c.l.b16 %v76
  %v228 = vunpack.c.l.b16 %v77
  %v229 = vunpack.c.l.b16 %v78
  %v230 = vpack.c.b16 %v167, %v166
  %v231 = vpack.c.b16 %v169, %v168
  %v232 = vpack.c.b16 %v171, %v170
  %v233 = vpack.c.b16 %v173, %v172
  %v234 = vpack.c.b16 %v175, %v174
  %v235 = vpack.c.b16 %v177, %v176
  %v236 = vpack.c.b16 %v179, %v178
  %v237 = vpack.c.b16 %v181, %v180
  %v238 = vpack.c.b16 %v183, %v182
  %v239 = vpack.c.b16 %v185, %v184
  %v240 = vpack.c.b16 %v187, %v186
  %v241 = vpack.c.b16 %v189, %v188
  %v242 = vpack.c.b16 %v191, %v190
  %v243 = vpack.c.b16 %v193, %v192
  %v244 = vpack.c.b16 %v195, %v194
  %v245 = vpack.c.b16 %v197, %v196
  %v246 = vpack.c.b16 %v199, %v198
  %v247 = vpack.c.b16 %v201, %v200
  %v248 = vpack.c.b16 %v203, %v202
  %v249 = vpack.c.b16 %v205, %v204
  %v250 = vpack.c.b16 %v207, %v206
  %v251 = vpack.c.b16 %v209, %v208
  %v252 = vpack.c.b16 %v211, %v210
  %v253 = vpack.c.b16 %v213, %v212
  %v254 = vpack.c.b16 %v215, %v214
  %v255 = vpack.c.b16 %v217, %v216
  %v256 = vpack.c.b16 %v219, %v218
  %v257 = vpack.c.b16 %v221, %v220
  %v258 = vpack.c.b16 %v223, %v222
  %v259 = vpack.c.b16 %v225, %v224
  %v260 = vpack.c.b16 %v227, %v226
  %v261 = vpack.c.b16 %v229, %v228
  %v310 = vunpack.c.l.b16 %v79
  %v311 = vunpack.c.l.b16 %v80
  %v312 = vunpack.c.l.b16 %v81
  %v313 = vunpack.c.l.b16 %v82
  %v314 = vunpack.c.l.b16 %v83
  %v315 = vunpack.c.l.b16 %v84
  %v316 = vunpack.c.l.b16 %v85
  %v317 = vunpack.c.l.b16 %v86
  %v318 = vunpack.c.l.b16 %v87
  %v319 = vunpack.c.l.b16 %v88
  %v320 = vunpack.c.l.b16 %v89
  %v321 = vunpack.c.l.b16 %v90
  %v322 = vunpack.c.l.b16 %v91
  %v323 = vunpack.c.l.b16 %v92
  %v324 = vunpack.c.l.b16 %v93
  %v325 = vunpack.c.l.b16 %v94
  %v326 = vpack.c.b16 %v311, %v310
  %v327 = vpack.c.b16 %v313, %v312
  %v328 = vpack.c.b16 %v315, %v314
  %v329 = vpack.c.b16 %v317, %v316
  %v330 = vpack.c.b16 %v319, %v318
  %v331 = vpack.c.b16 %v321, %v320
  %v332 = vpack.c.b16 %v323, %v322
  %v333 = vpack.c.b16 %v325, %v324
  %342 = vmatprep.subr.bf16.mxu0 0
  %343 = vmatpush1.bf16.msra.mxu0 %v333
  %344 = vmatprep.subr.bf16.mxu0 0
  %345 = vmatpush1.bf16.msra.mxu0 %v332
  %346 = vmatprep.subr.bf16.mxu0 0
  %347 = vmatpush1.bf16.msra.mxu0 %v331
  %348 = vmatprep.subr.bf16.mxu0 0
  %349 = vmatpush1.bf16.msra.mxu0 %v330
  %350 = vmatprep.subr.bf16.mxu0 0
  %351 = vmatpush1.bf16.msra.mxu0 %v329
  %352 = vmatprep.subr.bf16.mxu0 0
  %353 = vmatpush1.bf16.msra.mxu0 %v328
  %354 = vmatprep.subr.bf16.mxu0 0
  %355 = vmatpush1.bf16.msra.mxu0 %v327
  %356 = vmatprep.subr.bf16.mxu0 0
  %357 = vmatpush1.bf16.msra.mxu0 %v326
  %358 = vmatprep.subr.bf16.mxu0 0
  %359 = vmatpush2.bf16.msra.mxu0 0
  %360 = vmatprep.subr.bf16.mxu0 0
  %361 = vmatpush2.bf16.msra.mxu0 0
  %362 = vmatprep.subr.bf16.mxu0 0
  %363 = vmatpush2.bf16.msra.mxu0 0
  %364 = vmatprep.subr.bf16.mxu0 0
  %365 = vmatpush2.bf16.msra.mxu0 0
  %366 = vmatprep.subr.bf16.mxu0 0
  %367 = vmatpush2.bf16.msra.mxu0 0
  %368 = vmatprep.subr.bf16.mxu0 0
  %369 = vmatpush2.bf16.msra.mxu0 0
  %370 = vmatprep.subr.bf16.mxu0 0
  %371 = vmatpush2.bf16.msra.mxu0 0
  %372 = vmatprep.subr.bf16.mxu0 0
  %373 = vmatpush2.bf16.msra.mxu0 0
  %374 = vmatprep.mubr.bf16.mxu0 0
  %375 = vmatmul.mubr.bf16.gmra.mxu0 %v230
  %v376 = vpop.f32.mrf.mxu0
  %v377 = vadd.f32 %v100, %v376
  %v378 = vpop.f32.mrf.mxu0
  %v379 = vpop.f32.mrf.mxu0
  %v380 = vadd.f32 %v100, %v379
  %v381 = vpop.f32.mrf.mxu0
  %382 = vmatprep.mubr.bf16.mxu0 0
  %383 = vmatmul.mubr.bf16.gmra.mxu0 %v231
  %v384 = vpop.f32.mrf.mxu0
  %v385 = vadd.f32 %v100, %v384
  %v386 = vpop.f32.mrf.mxu0
  %v387 = vpop.f32.mrf.mxu0
  %v388 = vadd.f32 %v100, %v387
  %v389 = vpop.f32.mrf.mxu0
  %390 = vmatprep.mubr.bf16.mxu0 0
  %391 = vmatmul.mubr.bf16.gmra.mxu0 %v232
  %v392 = vpop.f32.mrf.mxu0
  %v393 = vadd.f32 %v100, %v392
  %v394 = vpop.f32.mrf.mxu0
  %v395 = vpop.f32.mrf.mxu0
  %v396 = vadd.f32 %v100, %v395
  %v397 = vpop.f32.mrf.mxu0
  %398 = vmatprep.mubr.bf16.mxu0 0
  %399 = vmatmul.mubr.bf16.gmra.mxu0 %v233
  %v400 = vpop.f32.mrf.mxu0
  %v401 = vadd.f32 %v100, %v400
  %v402 = vpop.f32.mrf.mxu0
  %v403 = vpop.f32.mrf.mxu0
  %v404 = vadd.f32 %v100, %v403
  %v405 = vpop.f32.mrf.mxu0
  %406 = vmatprep.mubr.bf16.mxu0 0
  %407 = vmatmul.mubr.bf16.gmra.mxu0 %v234
  %v408 = vpop.f32.mrf.mxu0
  %v409 = vadd.f32 %v100, %v408
  %v410 = vpop.f32.mrf.mxu0
  %v411 = vpop.f32.mrf.mxu0
  %v412 = vadd.f32 %v100, %v411
  %v413 = vpop.f32.mrf.mxu0
  %414 = vmatprep.mubr.bf16.mxu0 0
  %415 = vmatmul.mubr.bf16.gmra.mxu0 %v235
  %v416 = vpop.f32.mrf.mxu0
  %v417 = vadd.f32 %v100, %v416
  %v418 = vpop.f32.mrf.mxu0
  %v419 = vpop.f32.mrf.mxu0
  %v420 = vadd.f32 %v100, %v419
  %v421 = vpop.f32.mrf.mxu0
  %422 = vmatprep.mubr.bf16.mxu0 0
  %423 = vmatmul.mubr.bf16.gmra.mxu0 %v236
  %v424 = vpop.f32.mrf.mxu0
  %v425 = vadd.f32 %v100, %v424
  %v426 = vpop.f32.mrf.mxu0
  %v427 = vpop.f32.mrf.mxu0
  %v428 = vadd.f32 %v100, %v427
  %v429 = vpop.f32.mrf.mxu0
  %430 = vmatprep.mubr.bf16.mxu0 0
  %431 = vmatmul.mubr.bf16.gmra.mxu0 %v237
  %v432 = vpop.f32.mrf.mxu0
  %v433 = vadd.f32 %v100, %v432
  %v434 = vpop.f32.mrf.mxu0
  %v435 = vpop.f32.mrf.mxu0
  %v436 = vadd.f32 %v100, %v435
  %v437 = vpop.f32.mrf.mxu0
  %438 = vmatprep.mubr.bf16.mxu0 0
  %439 = vmatmul.mubr.bf16.gmra.mxu0 %v238
  %v440 = vpop.f32.mrf.mxu0
  %v441 = vadd.f32 %v100, %v440
  %v442 = vpop.f32.mrf.mxu0
  %v443 = vpop.f32.mrf.mxu0
  %v444 = vadd.f32 %v100, %v443
  %v445 = vpop.f32.mrf.mxu0
  %446 = vmatprep.mubr.bf16.mxu0 0
  %447 = vmatmul.mubr.bf16.gmra.mxu0 %v239
  %v448 = vpop.f32.mrf.mxu0
  %v449 = vadd.f32 %v100, %v448
  %v450 = vpop.f32.mrf.mxu0
  %v451 = vpop.f32.mrf.mxu0
  %v452 = vadd.f32 %v100, %v451
  %v453 = vpop.f32.mrf.mxu0
  %454 = vmatprep.mubr.bf16.mxu0 0
  %455 = vmatmul.mubr.bf16.gmra.mxu0 %v240
  %v456 = vpop.f32.mrf.mxu0
  %v457 = vadd.f32 %v100, %v456
  %v458 = vpop.f32.mrf.mxu0
  %v459 = vpop.f32.mrf.mxu0
  %v460 = vadd.f32 %v100, %v459
  %v461 = vpop.f32.mrf.mxu0
  %462 = vmatprep.mubr.bf16.mxu0 0
  %463 = vmatmul.mubr.bf16.gmra.mxu0 %v241
  %v464 = vpop.f32.mrf.mxu0
  %v465 = vadd.f32 %v100, %v464
  %v466 = vpop.f32.mrf.mxu0
  %v467 = vpop.f32.mrf.mxu0
  %v468 = vadd.f32 %v100, %v467
  %v469 = vpop.f32.mrf.mxu0
  %470 = vmatprep.mubr.bf16.mxu0 0
  %471 = vmatmul.mubr.bf16.gmra.mxu0 %v242
  %v472 = vpop.f32.mrf.mxu0
  %v473 = vadd.f32 %v100, %v472
  %v474 = vpop.f32.mrf.mxu0
  %v475 = vpop.f32.mrf.mxu0
  %v476 = vadd.f32 %v100, %v475
  %v477 = vpop.f32.mrf.mxu0
  %478 = vmatprep.mubr.bf16.mxu0 0
  %479 = vmatmul.mubr.bf16.gmra.mxu0 %v243
  %v480 = vpop.f32.mrf.mxu0
  %v481 = vadd.f32 %v100, %v480
  %v482 = vpop.f32.mrf.mxu0
  %v483 = vpop.f32.mrf.mxu0
  %v484 = vadd.f32 %v100, %v483
  %v485 = vpop.f32.mrf.mxu0
  %486 = vmatprep.mubr.bf16.mxu0 0
  %487 = vmatmul.mubr.bf16.gmra.mxu0 %v244
  %v488 = vpop.f32.mrf.mxu0
  %v489 = vadd.f32 %v100, %v488
  %v490 = vpop.f32.mrf.mxu0
  %v491 = vpop.f32.mrf.mxu0
  %v492 = vadd.f32 %v100, %v491
  %v493 = vpop.f32.mrf.mxu0
  %494 = vmatprep.mubr.bf16.mxu0 0
  %495 = vmatmul.mubr.bf16.gmra.mxu0 %v245
  %v496 = vpop.f32.mrf.mxu0
  %v497 = vadd.f32 %v100, %v496
  %v498 = vpop.f32.mrf.mxu0
  %v499 = vpop.f32.mrf.mxu0
  %v500 = vadd.f32 %v100, %v499
  %v501 = vpop.f32.mrf.mxu0
  %502 = vmatprep.mubr.bf16.mxu0 0
  %503 = vmatmul.mubr.bf16.gmra.mxu0 %v246
  %v504 = vpop.f32.mrf.mxu0
  %v505 = vadd.f32 %v100, %v504
  %v506 = vpop.f32.mrf.mxu0
  %v507 = vpop.f32.mrf.mxu0
  %v508 = vadd.f32 %v100, %v507
  %v509 = vpop.f32.mrf.mxu0
  %510 = vmatprep.mubr.bf16.mxu0 0
  %511 = vmatmul.mubr.bf16.gmra.mxu0 %v247
  %v512 = vpop.f32.mrf.mxu0
  %v513 = vadd.f32 %v100, %v512
  %v514 = vpop.f32.mrf.mxu0
  %v515 = vpop.f32.mrf.mxu0
  %v516 = vadd.f32 %v100, %v515
  %v517 = vpop.f32.mrf.mxu0
  %518 = vmatprep.mubr.bf16.mxu0 0
  %519 = vmatmul.mubr.bf16.gmra.mxu0 %v248
  %v520 = vpop.f32.mrf.mxu0
  %v521 = vadd.f32 %v100, %v520
  %v522 = vpop.f32.mrf.mxu0
  %v523 = vpop.f32.mrf.mxu0
  %v524 = vadd.f32 %v100, %v523
  %v525 = vpop.f32.mrf.mxu0
  %526 = vmatprep.mubr.bf16.mxu0 0
  %527 = vmatmul.mubr.bf16.gmra.mxu0 %v249
  %v528 = vpop.f32.mrf.mxu0
  %v529 = vadd.f32 %v100, %v528
  %v530 = vpop.f32.mrf.mxu0
  %v531 = vpop.f32.mrf.mxu0
  %v532 = vadd.f32 %v100, %v531
  %v533 = vpop.f32.mrf.mxu0
  %534 = vmatprep.mubr.bf16.mxu0 0
  %535 = vmatmul.mubr.bf16.gmra.mxu0 %v250
  %v536 = vpop.f32.mrf.mxu0
  %v537 = vadd.f32 %v100, %v536
  %v538 = vpop.f32.mrf.mxu0
  %v539 = vpop.f32.mrf.mxu0
  %v540 = vadd.f32 %v100, %v539
  %v541 = vpop.f32.mrf.mxu0
  %542 = vmatprep.mubr.bf16.mxu0 0
  %543 = vmatmul.mubr.bf16.gmra.mxu0 %v251
  %v544 = vpop.f32.mrf.mxu0
  %v545 = vadd.f32 %v100, %v544
  %v546 = vpop.f32.mrf.mxu0
  %v547 = vpop.f32.mrf.mxu0
  %v548 = vadd.f32 %v100, %v547
  %v549 = vpop.f32.mrf.mxu0
  %550 = vmatprep.mubr.bf16.mxu0 0
  %551 = vmatmul.mubr.bf16.gmra.mxu0 %v252
  %v552 = vpop.f32.mrf.mxu0
  %v553 = vadd.f32 %v100, %v552
  %v554 = vpop.f32.mrf.mxu0
  %v555 = vpop.f32.mrf.mxu0
  %v556 = vadd.f32 %v100, %v555
  %v557 = vpop.f32.mrf.mxu0
  %558 = vmatprep.mubr.bf16.mxu0 0
  %559 = vmatmul.mubr.bf16.gmra.mxu0 %v253
  %v560 = vpop.f32.mrf.mxu0
  %v561 = vadd.f32 %v100, %v560
  %v562 = vpop.f32.mrf.mxu0
  %v563 = vpop.f32.mrf.mxu0
  %v564 = vadd.f32 %v100, %v563
  %v565 = vpop.f32.mrf.mxu0
  %566 = vmatprep.mubr.bf16.mxu0 0
  %567 = vmatmul.mubr.bf16.gmra.mxu0 %v254
  %v568 = vpop.f32.mrf.mxu0
  %v569 = vadd.f32 %v100, %v568
  %v570 = vpop.f32.mrf.mxu0
  %v571 = vpop.f32.mrf.mxu0
  %v572 = vadd.f32 %v100, %v571
  %v573 = vpop.f32.mrf.mxu0
  %574 = vmatprep.mubr.bf16.mxu0 0
  %575 = vmatmul.mubr.bf16.gmra.mxu0 %v255
  %v576 = vpop.f32.mrf.mxu0
  %v577 = vadd.f32 %v100, %v576
  %v578 = vpop.f32.mrf.mxu0
  %v579 = vpop.f32.mrf.mxu0
  %v580 = vadd.f32 %v100, %v579
  %v581 = vpop.f32.mrf.mxu0
  %582 = vmatprep.mubr.bf16.mxu0 0
  %583 = vmatmul.mubr.bf16.gmra.mxu0 %v256
  %v584 = vpop.f32.mrf.mxu0
  %v585 = vadd.f32 %v100, %v584
  %v586 = vpop.f32.mrf.mxu0
  %v587 = vpop.f32.mrf.mxu0
  %v588 = vadd.f32 %v100, %v587
  %v589 = vpop.f32.mrf.mxu0
  %590 = vmatprep.mubr.bf16.mxu0 0
  %591 = vmatmul.mubr.bf16.gmra.mxu0 %v257
  %v592 = vpop.f32.mrf.mxu0
  %v593 = vadd.f32 %v100, %v592
  %v594 = vpop.f32.mrf.mxu0
  %v595 = vpop.f32.mrf.mxu0
  %v596 = vadd.f32 %v100, %v595
  %v597 = vpop.f32.mrf.mxu0
  %598 = vmatprep.mubr.bf16.mxu0 0
  %599 = vmatmul.mubr.bf16.gmra.mxu0 %v258
  %v600 = vpop.f32.mrf.mxu0
  %v601 = vadd.f32 %v100, %v600
  %v602 = vpop.f32.mrf.mxu0
  %v603 = vpop.f32.mrf.mxu0
  %v604 = vadd.f32 %v100, %v603
  %v605 = vpop.f32.mrf.mxu0
  %606 = vmatprep.mubr.bf16.mxu0 0
  %607 = vmatmul.mubr.bf16.gmra.mxu0 %v259
  %v608 = vpop.f32.mrf.mxu0
  %v609 = vadd.f32 %v100, %v608
  %v610 = vpop.f32.mrf.mxu0
  %v611 = vpop.f32.mrf.mxu0
  %v612 = vadd.f32 %v100, %v611
  %v613 = vpop.f32.mrf.mxu0
  %614 = vmatprep.mubr.bf16.mxu0 0
  %615 = vmatmul.mubr.bf16.gmra.mxu0 %v260
  %v616 = vpop.f32.mrf.mxu0
  %v617 = vadd.f32 %v100, %v616
  %v618 = vpop.f32.mrf.mxu0
  %v619 = vpop.f32.mrf.mxu0
  %v620 = vadd.f32 %v100, %v619
  %v621 = vpop.f32.mrf.mxu0
  %622 = vmatprep.mubr.bf16.mxu0 0
  %623 = vmatmul.mubr.bf16.gmra.mxu0 %v261
  %v624 = vpop.f32.mrf.mxu0
  %v625 = vadd.f32 %v100, %v624
  %v626 = vpop.f32.mrf.mxu0
  %v627 = vpop.f32.mrf.mxu0
  %v628 = vadd.f32 %v100, %v627
  %v629 = vpop.f32.mrf.mxu0
  %630 = vdwg.mxu0
  %v631 = vmax.f32 %v377, 0.0
  %v632 = vmax.f32 %v380, 0.0
  %v633 = vmax.f32 %v385, 0.0
  %v634 = vmax.f32 %v388, 0.0
  %v635 = vmax.f32 %v393, 0.0
  %v636 = vmax.f32 %v396, 0.0
  %v637 = vmax.f32 %v401, 0.0
  %v638 = vmax.f32 %v404, 0.0
  %v639 = vmax.f32 %v409, 0.0
  %v640 = vmax.f32 %v412, 0.0
  %v641 = vmax.f32 %v417, 0.0
  %v642 = vmax.f32 %v420, 0.0
  %v643 = vmax.f32 %v425, 0.0
  %v644 = vmax.f32 %v428, 0.0
  %v645 = vmax.f32 %v433, 0.0
  %v646 = vmax.f32 %v436, 0.0
  %v647 = vmax.f32 %v441, 0.0
  %v648 = vmax.f32 %v444, 0.0
  %v649 = vmax.f32 %v449, 0.0
  %v650 = vmax.f32 %v452, 0.0
  %v651 = vmax.f32 %v457, 0.0
  %v652 = vmax.f32 %v460, 0.0
  %v653 = vmax.f32 %v465, 0.0
  %v654 = vmax.f32 %v468, 0.0
  %v655 = vmax.f32 %v473, 0.0
  %v656 = vmax.f32 %v476, 0.0
  %v657 = vmax.f32 %v481, 0.0
  %v658 = vmax.f32 %v484, 0.0
  %v659 = vmax.f32 %v489, 0.0
  %v660 = vmax.f32 %v492, 0.0
  %v661 = vmax.f32 %v497, 0.0
  %v662 = vmax.f32 %v500, 0.0
  %v663 = vmax.f32 %v505, 0.0
  %v664 = vmax.f32 %v508, 0.0
  %v665 = vmax.f32 %v513, 0.0
  %v666 = vmax.f32 %v516, 0.0
  %v667 = vmax.f32 %v521, 0.0
  %v668 = vmax.f32 %v524, 0.0
  %v669 = vmax.f32 %v529, 0.0
  %v670 = vmax.f32 %v532, 0.0
  %v671 = vmax.f32 %v537, 0.0
  %v672 = vmax.f32 %v540, 0.0
  %v673 = vmax.f32 %v545, 0.0
  %v674 = vmax.f32 %v548, 0.0
  %v675 = vmax.f32 %v553, 0.0
  %v676 = vmax.f32 %v556, 0.0
  %v677 = vmax.f32 %v561, 0.0
  %v678 = vmax.f32 %v564, 0.0
  %v679 = vmax.f32 %v569, 0.0
  %v680 = vmax.f32 %v572, 0.0
  %v681 = vmax.f32 %v577, 0.0
  %v682 = vmax.f32 %v580, 0.0
  %v683 = vmax.f32 %v585, 0.0
  %v684 = vmax.f32 %v588, 0.0
  %v685 = vmax.f32 %v593, 0.0
  %v686 = vmax.f32 %v596, 0.0
  %v687 = vmax.f32 %v601, 0.0
  %v688 = vmax.f32 %v604, 0.0
  %v689 = vmax.f32 %v609, 0.0
  %v690 = vmax.f32 %v612, 0.0
  %v691 = vmax.f32 %v617, 0.0
  %v692 = vmax.f32 %v620, 0.0
  %v693 = vmax.f32 %v625, 0.0
  %v694 = vmax.f32 %v628, 0.0
  %695 = vst [vmem:[%s3] sm:$0xff] %v631
  %696 = vst [vmem:[%s3 + $0x8] sm:$0xff] %v632
  %697 = vst [vmem:[%s3 + $0x10] sm:$0xff] %v633
  %698 = vst [vmem:[%s3 + $0x18] sm:$0xff] %v634
  %699 = vst [vmem:[%s3 + $0x20] sm:$0xff] %v635
  %700 = vst [vmem:[%s3 + $0x28] sm:$0xff] %v636
  %701 = vst [vmem:[%s3 + $0x30] sm:$0xff] %v637
  %702 = vst [vmem:[%s3 + $0x38] sm:$0xff] %v638
  %703 = vst [vmem:[%s3 + $0x40] sm:$0xff] %v639
  %704 = vst [vmem:[%s3 + $0x48] sm:$0xff] %v640
  %705 = vst [vmem:[%s3 + $0x50] sm:$0xff] %v641
  %706 = vst [vmem:[%s3 + $0x58] sm:$0xff] %v642
  %707 = vst [vmem:[%s3 + $0x60] sm:$0xff] %v643
  %708 = vst [vmem:[%s3 + $0x68] sm:$0xff] %v644
  %709 = vst [vmem:[%s3 + $0x70] sm:$0xff] %v645
  %710 = vst [vmem:[%s3 + $0x78] sm:$0xff] %v646
  %711 = vst [vmem:[%s3 + $0x80] sm:$0xff] %v647
  %712 = vst [vmem:[%s3 + $0x88] sm:$0xff] %v648
  %713 = vst [vmem:[%s3 + $0x90] sm:$0xff] %v649
  %714 = vst [vmem:[%s3 + $0x98] sm:$0xff] %v650
  %715 = vst [vmem:[%s3 + $0xa0] sm:$0xff] %v651
  %716 = vst [vmem:[%s3 + $0xa8] sm:$0xff] %v652
  %717 = vst [vmem:[%s3 + $0xb0] sm:$0xff] %v653
  %718 = vst [vmem:[%s3 + $0xb8] sm:$0xff] %v654
  %719 = vst [vmem:[%s3 + $0xc0] sm:$0xff] %v655
  %720 = vst [vmem:[%s3 + $0xc8] sm:$0xff] %v656
  %721 = vst [vmem:[%s3 + $0xd0] sm:$0xff] %v657
  %722 = vst [vmem:[%s3 + $0xd8] sm:$0xff] %v658
  %723 = vst [vmem:[%s3 + $0xe0] sm:$0xff] %v659
  %724 = vst [vmem:[%s3 + $0xe8] sm:$0xff] %v660
  %725 = vst [vmem:[%s3 + $0xf0] sm:$0xff] %v661
  %726 = vst [vmem:[%s3 + $0xf8] sm:$0xff] %v662
  %727 = vst [vmem:[%s3 + $0x100] sm:$0xff] %v663
  %728 = vst [vmem:[%s3 + $0x108] sm:$0xff] %v664
  %729 = vst [vmem:[%s3 + $0x110] sm:$0xff] %v665
  %730 = vst [vmem:[%s3 + $0x118] sm:$0xff] %v666
  %731 = vst [vmem:[%s3 + $0x120] sm:$0xff] %v667
  %732 = vst [vmem:[%s3 + $0x128] sm:$0xff] %v668
  %733 = vst [vmem:[%s3 + $0x130] sm:$0xff] %v669
  %734 = vst [vmem:[%s3 + $0x138] sm:$0xff] %v670
  %735 = vst [vmem:[%s3 + $0x140] sm:$0xff] %v671
  %736 = vst [vmem:[%s3 + $0x148] sm:$0xff] %v672
  %737 = vst [vmem:[%s3 + $0x150] sm:$0xff] %v673
  %738 = vst [vmem:[%s3 + $0x158] sm:$0xff] %v674
  %739 = vst [vmem:[%s3 + $0x160] sm:$0xff] %v675
  %740 = vst [vmem:[%s3 + $0x168] sm:$0xff] %v676
  %741 = vst [vmem:[%s3 + $0x170] sm:$0xff] %v677
  %742 = vst [vmem:[%s3 + $0x178] sm:$0xff] %v678
  %743 = vst [vmem:[%s3 + $0x180] sm:$0xff] %v679
  %744 = vst [vmem:[%s3 + $0x188] sm:$0xff] %v680
  %745 = vst [vmem:[%s3 + $0x190] sm:$0xff] %v681
  %746 = vst [vmem:[%s3 + $0x198] sm:$0xff] %v682
  %747 = vst [vmem:[%s3 + $0x1a0] sm:$0xff] %v683
  %748 = vst [vmem:[%s3 + $0x1a8] sm:$0xff] %v684
  %749 = vst [vmem:[%s3 + $0x1b0] sm:$0xff] %v685
  %750 = vst [vmem:[%s3 + $0x1b8] sm:$0xff] %v686
  %751 = vst [vmem:[%s3 + $0x1c0] sm:$0xff] %v687
  %752 = vst [vmem:[%s3 + $0x1c8] sm:$0xff] %v688
  %753 = vst [vmem:[%s3 + $0x1d0] sm:$0xff] %v689
  %754 = vst [vmem:[%s3 + $0x1d8] sm:$0xff] %v690
  %755 = vst [vmem:[%s3 + $0x1e0] sm:$0xff] %v691
  %756 = vst [vmem:[%s3 + $0x1e8] sm:$0xff] %v692
  %757 = vst [vmem:[%s3 + $0x1f0] sm:$0xff] %v693
  %758 = vst [vmem:[%s3 + $0x1f8] sm:$0xff] %v694
  // Predicated region
  $region14: #{crowd_counter_forward.7} parent=0 // pred_check
    _
  $region15: #{crowd_counter_forward.7} parent=0 // pred_check_branch
    %760 = sbr.rel (0) target = $region17
  $region16: #{crowd_counter_forward.7} parent=0 // pred_region
    _
  $region17: #{crowd_counter_forward.7} parent=0 // pred_fallthru
    _
  // Predicated region
  $region18: #{crowd_counter_forward.7} parent=0 // pred_check
    _
  $region19: #{crowd_counter_forward.7} parent=0 // pred_check_branch
    %762 = sbr.rel (0) target = $region21
  $region20: #{crowd_counter_forward.7} parent=0 // pred_region
    _
  $region21: #{crowd_counter_forward.7} parent=0 // pred_fallthru
    _

// kernel: crowd_counter_forward.10
$region0: #{crowd_counter_forward.10}
  #allocation0 [shape = 'u32[]', space=smem, size = 0x4, offset = 0x4, fixed_abs, tag = 'smem constant byte address 0x4 - core index']
  #allocation1 [shape = 'u32[144,128]{1,0:T(1,128)}', space=vmem, size = 0x12000, scoped, tag = 'internal scratch']
  %s0 = inlined_call_operand.vmem [shape: f32[2,4,2,4,240], index: 0, kind: input, shape index: {}]
  %s1 = inlined_call_operand.vmem [shape: f32[2,4,4,120], index: 1, kind: output, shape index: {}]
  %s2 = sld [smem:[#allocation0]]
  $region37: #{crowd_counter_forward.10} parent=0
    _
  %s4 = ssub.s32 1, %s2
  %s5 = scalar_select 0, %s4, %s2
  loop: start=0, step=1, limit=4
  $region2: #{crowd_counter_forward.10} parent=0 // loop_pre_header
    _
  $region3: #{crowd_counter_forward.10} parent=0 // loop_header
    %s7 = sphi 0, %s11
    %p8 = scmp.ge.s32.totalorder %s7, 4
    %s14 = sphi 0, %s26
    %s15 = sphi 0, %s22
    %s16 = sphi 0, %s14
    %s17 = sphi 0, %s15
    %s18 = sphi 0, %s16
    %s19 = sphi 0, %s17
    %s31 = sphi 0, %s33
    %s34 = sphi 0, %s31
    %s35 = sphi 0, %s34
    %s51 = sphi 0, %s35
    %s59 = sphi 0, %s61
    %s62 = sphi 0, %s59
    %s63 = sphi 0, %s62
    %s79 = sphi 0, %s63
  $region4: #{crowd_counter_forward.10} parent=0 // loop_header_branch
    %10 = sbr.rel (%p8) target = $region8
  $region5: #{crowd_counter_forward.10} parent=0 // loop_body
    %s12 = ssub.s32 %s7, 1
    %s13 = ssub.s32 %s7, 2
    %s20 = sadd.s32 1, %s15
    %p21 = scmp.ge.s32.totalorder %s20, 1
    %s22 = scalar_select %p21, 0, %s20
    %s23 = sadd.s32 1, %s14
    %s24 = scalar_select %p21, %s23, %s14
    %p25 = scmp.ge.s32.totalorder %s24, 2
    %s26 = scalar_select %p25, 0, %s24
    %s27 = ssub.s32 %s14, %s26
    %s28 = ssub.s32 %s15, %s22
    %s29 = sor.u32 %s27, %s28
    %p30 = scmp.eq.s32.totalorder %s29, 0
    %s32 = sadd.s32 %s31, 1
    %s33 = scalar_select %p30, %s31, %s32
    %p36 = pneg %p30
    %p37 = scmp.eq.s32.totalorder %s7, 1
    %p38 = por %p36, %p37
    %p39 = scmp.ne.s32.totalorder %s31, %s34
    %p40 = scmp.eq.s32.totalorder %s7, 0
    %p41 = por %p39, %p40
    %p42 = scmp.ne.s32.totalorder %s31, %s34
    %p43 = scmp.eq.s32.totalorder %s12, 1
    %p44 = por %p42, %p43
    %p45 = scmp.ne.s32.totalorder %s34, %s35
    %p46 = scmp.eq.s32.totalorder %s12, 0
    %p47 = por %p45, %p46
    %p48 = scmp.ne.s32.totalorder %s34, %s35
    %p49 = scmp.eq.s32.totalorder %s13, 1
    %p50 = por %p48, %p49
    %p52 = scmp.ne.s32.totalorder %s35, %s51
    %p53 = scmp.eq.s32.totalorder %s13, 0
    %p54 = por %p52, %p53
    %s55 = ssub.s32 %s14, %s26
    %s56 = ssub.s32 %s15, %s22
    %s57 = sor.u32 %s55, %s56
    %p58 = scmp.eq.s32.totalorder %s57, 0
    %s60 = sadd.s32 %s59, 1
    %s61 = scalar_select %p58, %s59, %s60
    %p64 = pneg %p58
    %p65 = scmp.eq.s32.totalorder %s7, 1
    %p66 = por %p64, %p65
    %p67 = scmp.ne.s32.totalorder %s59, %s62
    %p68 = scmp.eq.s32.totalorder %s7, 0
    %p69 = por %p67, %p68
    %p70 = scmp.ne.s32.totalorder %s59, %s62
    %p71 = scmp.eq.s32.totalorder %s12, 1
    %p72 = por %p70, %p71
    %p73 = scmp.ne.s32.totalorder %s62, %s63
    %p74 = scmp.eq.s32.totalorder %s12, 0
    %p75 = por %p73, %p74
    %p76 = scmp.ne.s32.totalorder %s62, %s63
    %p77 = scmp.eq.s32.totalorder %s13, 1
    %p78 = por %p76, %p77
    %p80 = scmp.ne.s32.totalorder %s63, %s79
    %p81 = scmp.eq.s32.totalorder %s13, 0
    %p82 = por %p80, %p81
    %p83 = scmp.le.s32.totalorder 1, %s7
    %p84 = scmp.lt.s32.totalorder %s7, 3
    %p85 = pnand %p83, %p84
    %p86 = pneg %p85
    // Predicated region
    $region9: #{crowd_counter_forward.10} parent=5 // pred_check
      _
    $region10: #{crowd_counter_forward.10} parent=5 // pred_check_branch
      %88 = sbr.rel (%p85) target = $region12
    $region11: #{crowd_counter_forward.10} parent=5 // pred_region
      %s89 = ssub.s32 %s7, 1
    $region12: #{crowd_counter_forward.10} parent=5 // pred_fallthru
      _
    %p90 = scmp.lt.s32.totalorder %s7, 2
    // Predicated region
    $region13: #{crowd_counter_forward.10} parent=5 // pred_check
      %p91 = pneg %p90
    $region14: #{crowd_counter_forward.10} parent=5 // pred_check_branch
      %93 = sbr.rel (%p91) target = $region16
    $region15: #{crowd_counter_forward.10} parent=5 // pred_region
      // Predicated region
      $region17: #{crowd_counter_forward.10} parent=15 // pred_check
        %p94 = pneg %p41
      $region18: #{crowd_counter_forward.10} parent=15 // pred_check_branch
        %96 = sbr.rel (%p94) target = $region20
      $region19: #{crowd_counter_forward.10} parent=15 // pred_region
        %s97 = smul.u32 4, %s15
        %p98 = scmp.lt.s32.totalorder %s14, 1
        %s99 = scalar_select %p98, %s14, 1
        %p100 = scmp.lt.s32.totalorder %s97, 3
        %s101 = scalar_select %p100, %s97, 3
        %s102 = smul.addr %s101, 4
        %s103 = smul.addr %s99, 16
        %s104 = sadd.s32 %s102, %s103
        %s105 = smul.addr %s104, 4
        %s106 = scalar_lea.vmem %s0, %s105
        %s107 = smul.u32 4, %s15
      $region20: #{crowd_counter_forward.10} parent=15 // pred_fallthru
        _
    $region16: #{crowd_counter_forward.10} parent=5 // pred_fallthru
      _
    %p108 = scmp.le.s32.totalorder 1, %s7
    %p109 = scmp.lt.s32.totalorder %s7, 3
    %p110 = pnand %p108, %p109
    %p111 = pneg %p110
    // Predicated region
    $region21: #{crowd_counter_forward.10} parent=5 // pred_check
      _
    $region22: #{crowd_counter_forward.10} parent=5 // pred_check_branch
      %113 = sbr.rel (%p110) target = $region24
    $region23: #{crowd_counter_forward.10} parent=5 // pred_region
      %s114 = ssub.s32 %s7, 1
      %s115 = smul.u32 4, %s17
      %p116 = scmp.lt.s32.totalorder %s16, 1
      %s117 = scalar_select %p116, %s16, 1
      %p118 = scmp.lt.s32.totalorder %s115, 3
      %s119 = scalar_select %p118, %s115, 3
      %s120 = smul.addr %s119, 4
      %s121 = smul.addr %s117, 16
      %s122 = sadd.s32 %s120, %s121
      %s123 = smul.addr %s122, 4
      %s124 = scalar_lea.vmem %s0, %s123
      %p125 = pneg %p47
      %p126 = pneg %p44
      %p127 = pneg %p75
      %p128 = pneg %p72
      %s129 = smul.u32 4, %s17
      %p130 = scmp.lt.s32.totalorder %s16, 1
      %s131 = scalar_select %p130, %s16, 1
      %p132 = scmp.lt.s32.totalorder %s129, 3
      %s133 = scalar_select %p132, %s129, 3
      %s134 = smul.addr %s131, 4
      %s135 = sadd.s32 %s133, %s134
      %s136 = smul.addr %s135, 4
      %s137 = scalar_lea.vmem %s1, %s136
      %s138 = smul.u32 4, %s17
      %p139 = scmp.lt.s32.totalorder %s16, 1
      %s140 = scalar_select %p139, %s16, 1
      %p141 = scmp.lt.s32.totalorder %s138, 3
      %s142 = scalar_select %p141, %s138, 3
      %s143 = smul.addr %s142, 4
      %s144 = smul.addr %s140, 16
      %s145 = sadd.s32 %s143, %s144
      %s146 = smul.addr %s145, 4
      %s147 = scalar_lea.vmem %s0, %s146
      %s148 = smul.u32 4, %s17
      %s149 = smul.u32 4, %s17
      %p150 = scmp.lt.s32.totalorder %s16, 1
      %s151 = scalar_select %p150, %s16, 1
      %p152 = scmp.lt.s32.totalorder %s149, 3
      %s153 = scalar_select %p152, %s149, 3
      %s154 = smul.addr %s151, 4
      %s155 = sadd.s32 %s153, %s154
      %s156 = smul.addr %s155, 4
      %s157 = scalar_lea.vmem %s1, %s156
      %s158 = smul.u32 4, %s17
      %v159 = vld [vmem:[%s147] sm:$0xff]
      %v160 = vld [vmem:[%s147 + $0x8] sm:$0xff]
      %v161 = vld [vmem:[%s147 + $0x10] sm:$0xff]
      %v162 = vld [vmem:[%s147 + $0x18] sm:$0xff]
      %v163 = vld [vmem:[%s147 + $0x20] sm:$0xff]
      %v164 = vld [vmem:[%s147 + $0x28] sm:$0xff]
      %v165 = vld [vmem:[%s147 + $0x30] sm:$0xff]
      %v166 = vld [vmem:[%s147 + $0x38] sm:$0xff]
      %v167 = vmax.f32 %v159, %v160
      %v168 = vmax.f32 %v161, %v162
      %v169 = vmax.f32 %v163, %v164
      %v170 = vmax.f32 %v165, %v166
      %175 = vrot.lane.b32.xlu0 %v167, 8
      %v176 = vpop.permute.xlu0 %175
      %177 = vrot.lane.b32.xlu0 %v168, 8
      %v178 = vpop.permute.xlu0 %177
      %179 = vrot.lane.b32.xlu0 %v169, 8
      %v180 = vpop.permute.xlu0 %179
      %181 = vrot.lane.b32.xlu0 %v170, 8
      %v182 = vpop.permute.xlu0 %181
      %v183 = vrot.slane %v176, 4
      %v184 = vrot.slane %v178, 4
      %v185 = vrot.slane %v180, 4
      %v186 = vrot.slane %v182, 4
      %vm187 = vcmask 64512
      %v188 = vsel %vm187, %v176, %v183
      %v189 = vsel %vm187, %v178, %v184
      %v190 = vsel %vm187, %v180, %v185
      %v191 = vsel %vm187, %v182, %v186
      %v196 = vmax.f32 %v167, %v188
      %v197 = vmax.f32 %v168, %v189
      %v198 = vmax.f32 %v169, %v190
      %v199 = vmax.f32 %v170, %v191
      %vm200 = vcmask 977920
      %201 = vst.msk [vmem:[%s157] sm:$0xf] %vm200, %v196
      %202 = vst.msk [vmem:[%s157 + $0x4] sm:$0xf] %vm200, %v197
      %203 = vst.msk [vmem:[%s157 + $0x8] sm:$0xf] %vm200, %v198
      %204 = vst.msk [vmem:[%s157 + $0xc] sm:$0xf] %vm200, %v199
      %s205 = smul.u32 4, %s17
      %p206 = scmp.lt.s32.totalorder %s16, 1
      %s207 = scalar_select %p206, %s16, 1
      %p208 = scmp.lt.s32.totalorder %s205, 3
      %s209 = scalar_select %p208, %s205, 3
      %s210 = smul.addr %s207, 4
      %s211 = sadd.s32 %s209, %s210
      %s212 = smul.addr %s211, 4
      %s213 = scalar_lea.vmem %s1, %s212
      // Predicated region
      $region25: #{crowd_counter_forward.10} parent=23 // pred_check
        %p214 = pneg %p72
      $region26: #{crowd_counter_forward.10} parent=23 // pred_check_branch
        %216 = sbr.rel (%p214) target = $region28
      $region27: #{crowd_counter_forward.10} parent=23 // pred_region
        %s217 = smul.u32 4, %s17
      $region28: #{crowd_counter_forward.10} parent=23 // pred_fallthru
        _
    $region24: #{crowd_counter_forward.10} parent=5 // pred_fallthru
      _
    %p218 = scmp.le.s32.totalorder 2, %s7
    // Predicated region
    $region29: #{crowd_counter_forward.10} parent=5 // pred_check
      %p219 = pneg %p218
    $region30: #{crowd_counter_forward.10} parent=5 // pred_check_branch
      %221 = sbr.rel (%p219) target = $region32
    $region31: #{crowd_counter_forward.10} parent=5 // pred_region
      %s222 = ssub.s32 %s7, 2
      // Predicated region
      $region33: #{crowd_counter_forward.10} parent=31 // pred_check
        %p223 = pneg %p78
      $region34: #{crowd_counter_forward.10} parent=31 // pred_check_branch
        %225 = sbr.rel (%p223) target = $region36
      $region35: #{crowd_counter_forward.10} parent=31 // pred_region
        %s226 = smul.u32 4, %s19
        %p227 = scmp.lt.s32.totalorder %s18, 1
        %s228 = scalar_select %p227, %s18, 1
        %p229 = scmp.lt.s32.totalorder %s226, 3
        %s230 = scalar_select %p229, %s226, 3
        %s231 = smul.addr %s228, 4
        %s232 = sadd.s32 %s230, %s231
        %s233 = smul.addr %s232, 4
        %s234 = scalar_lea.vmem %s1, %s233
      $region36: #{crowd_counter_forward.10} parent=31 // pred_fallthru
        _
    $region32: #{crowd_counter_forward.10} parent=5 // pred_fallthru
      _
  $region6: #{crowd_counter_forward.10} parent=0 // loop_footer
    %s11 = sadd.s32 1, %s7
  $region7: #{crowd_counter_forward.10} parent=0 // loop_footer_branch
    %6 = sbr.rel target = $region3
  $region8: #{crowd_counter_forward.10} parent=0 // loop_exit
    _

// kernel: crowd_counter_forward.9
$region0: #{crowd_counter_forward.9}
  #allocation0 [shape = 'u32[]', space=smem, size = 0x4, offset = 0x4, fixed_abs, tag = 'smem constant byte address 0x4 - core index']
  #allocation1 [shape = 'u32[144,128]{1,0:T(1,128)}', space=vmem, size = 0x12000, scoped, tag = 'internal scratch']
  %s0 = inlined_call_operand.vmem [shape: bf16[128,2944], index: 0, kind: input, shape index: {}]
  %s1 = inlined_call_operand.vmem [shape: bf16[2944,128], index: 1, kind: input, shape index: {}]
  %s2 = inlined_call_operand.vmem [shape: f32[1,128], index: 2, kind: input, shape index: {}]
  %s3 = inlined_call_operand.vmem [shape: f32[128,128], index: 3, kind: output, shape index: {}]
  %s4 = sld [smem:[#allocation0]]
  $region22: #{crowd_counter_forward.9} parent=0
    _
  %s6 = ssub.s32 1, %s4
  %s7 = scalar_select 0, %s6, %s4
  // Predicated region
  $region2: #{crowd_counter_forward.9} parent=0 // pred_check
    _
  $region3: #{crowd_counter_forward.9} parent=0 // pred_check_branch
    %9 = sbr.rel (0) target = $region5
  $region4: #{crowd_counter_forward.9} parent=0 // pred_region
    _
  $region5: #{crowd_counter_forward.9} parent=0 // pred_fallthru
    _
  // Predicated region
  $region6: #{crowd_counter_forward.9} parent=0 // pred_check
    _
  $region7: #{crowd_counter_forward.9} parent=0 // pred_check_branch
    %11 = sbr.rel (0) target = $region9
  $region8: #{crowd_counter_forward.9} parent=0 // pred_region
    _
  $region9: #{crowd_counter_forward.9} parent=0 // pred_fallthru
    _
  // Predicated region
  $region10: #{crowd_counter_forward.9} parent=0 // pred_check
    _
  $region11: #{crowd_counter_forward.9} parent=0 // pred_check_branch
    %13 = sbr.rel (0) target = $region13
  $region12: #{crowd_counter_forward.9} parent=0 // pred_region
    _
  $region13: #{crowd_counter_forward.9} parent=0 // pred_fallthru
    _
  %v15 = vld [vmem:[%s0] sm:$0xff]
  %v16 = vld [vmem:[%s0 + $0x8] sm:$0xff]
  %v17 = vld [vmem:[%s0 + $0x10] sm:$0xff]
  %v18 = vld [vmem:[%s0 + $0x18] sm:$0xff]
  %v19 = vld [vmem:[%s0 + $0x20] sm:$0xff]
  %v20 = vld [vmem:[%s0 + $0x28] sm:$0xff]
  %v21 = vld [vmem:[%s0 + $0x30] sm:$0xff]
  %v22 = vld [vmem:[%s0 + $0x38] sm:$0xff]
  %v23 = vld [vmem:[%s0 + $0x40] sm:$0xff]
  %v24 = vld [vmem:[%s0 + $0x48] sm:$0xff]
  %v25 = vld [vmem:[%s0 + $0x50] sm:$0xff]
  %v26 = vld [vmem:[%s0 + $0x58] sm:$0xf]
  %v27 = vld [vmem:[%s0 + $0x5c] sm:$0xff]
  %v28 = vld [vmem:[%s0 + $0x64] sm:$0xff]
  %v29 = vld [vmem:[%s0 + $0x6c] sm:$0xff]
  %v30 = vld [vmem:[%s0 + $0x74] sm:$0xff]
  %v31 = vld [vmem:[%s0 + $0x7c] sm:$0xff]
  %v32 = vld [vmem:[%s0 + $0x84] sm:$0xff]
  %v33 = vld [vmem:[%s0 + $0x8c] sm:$0xff]
  %v34 = vld [vmem:[%s0 + $0x94] sm:$0xff]
  %v35 = vld [vmem:[%s0 + $0x9c] sm:$0xff]
  %v36 = vld [vmem:[%s0 + $0xa4] sm:$0xff]
  %v37 = vld [vmem:[%s0 + $0xac] sm:$0xff]
  %v38 = vld [vmem:[%s0 + $0xb4] sm:$0xf]
  %v39 = vld [vmem:[%s0 + $0xb8] sm:$0xff]
  %v40 = vld [vmem:[%s0 + $0xc0] sm:$0xff]
  %v41 = vld [vmem:[%s0 + $0xc8] sm:$0xff]
  %v42 = vld [vmem:[%s0 + $0xd0] sm:$0xff]
  %v43 = vld [vmem:[%s0 + $0xd8] sm:$0xff]
  %v44 = vld [vmem:[%s0 + $0xe0] sm:$0xff]
  %v45 = vld [vmem:[%s0 + $0xe8] sm:$0xff]
  %v46 = vld [vmem:[%s0 + $0xf0] sm:$0xff]
  %v47 = vld [vmem:[%s0 + $0xf8] sm:$0xff]
  %v48 = vld [vmem:[%s0 + $0x100] sm:$0xff]
  %v49 = vld [vmem:[%s0 + $0x108] sm:$0xff]
  %v50 = vld [vmem:[%s0 + $0x110] sm:$0xf]
  %v51 = vld [vmem:[%s0 + $0x114] sm:$0xff]
  %v52 = vld [vmem:[%s0 + $0x11c] sm:$0xff]
  %v53 = vld [vmem:[%s0 + $0x124] sm:$0xff]
  %v54 = vld [vmem:[%s0 + $0x12c] sm:$0xff]
  %v55 = vld [vmem:[%s0 + $0x134] sm:$0xff]
  %v56 = vld [vmem:[%s0 + $0x13c] sm:$0xff]
  %v57 = vld [vmem:[%s0 + $0x144] sm:$0xff]
  %v58 = vld [vmem:[%s0 + $0x14c] sm:$0xff]
  %v59 = vld [vmem:[%s0 + $0x154] sm:$0xff]
  %v60 = vld [vmem:[%s0 + $0x15c] sm:$0xff]
  %v61 = vld [vmem:[%s0 + $0x164] sm:$0xff]
  %v62 = vld [vmem:[%s0 + $0x16c] sm:$0xf]
  %v63 = vld [vmem:[%s0 + $0x170] sm:$0xff]
  %v64 = vld [vmem:[%s0 + $0x178] sm:$0xff]
  %v65 = vld [vmem:[%s0 + $0x180] sm:$0xff]
  %v66 = vld [vmem:[%s0 + $0x188] sm:$0xff]
  %v67 = vld [vmem:[%s0 + $0x190] sm:$0xff]
  %v68 = vld [vmem:[%s0 + $0x198] sm:$0xff]
  %v69 = vld [vmem:[%s0 + $0x1a0] sm:$0xff]
  %v70 = vld [vmem:[%s0 + $0x1a8] sm:$0xff]
  %v71 = vld [vmem:[%s0 + $0x1b0] sm:$0xff]
  %v72 = vld [vmem:[%s0 + $0x1b8] sm:$0xff]
  %v73 = vld [vmem:[%s0 + $0x1c0] sm:$0xff]
  %v74 = vld [vmem:[%s0 + $0x1c8] sm:$0xf]
  %v75 = vld [vmem:[%s0 + $0x1cc] sm:$0xff]
  %v76 = vld [vmem:[%s0 + $0x1d4] sm:$0xff]
  %v77 = vld [vmem:[%s0 + $0x1dc] sm:$0xff]
  %v78 = vld [vmem:[%s0 + $0x1e4] sm:$0xff]
  %v79 = vld [vmem:[%s0 + $0x1ec] sm:$0xff]
  %v80 = vld [vmem:[%s0 + $0x1f4] sm:$0xff]
  %v81 = vld [vmem:[%s0 + $0x1fc] sm:$0xff]
  %v82 = vld [vmem:[%s0 + $0x204] sm:$0xff]
  %v83 = vld [vmem:[%s0 + $0x20c] sm:$0xff]
  %v84 = vld [vmem:[%s0 + $0x214] sm:$0xff]
  %v85 = vld [vmem:[%s0 + $0x21c] sm:$0xff]
  %v86 = vld [vmem:[%s0 + $0x224] sm:$0xf]
  %v87 = vld [vmem:[%s0 + $0x228] sm:$0xff]
  %v88 = vld [vmem:[%s0 + $0x230] sm:$0xff]
  %v89 = vld [vmem:[%s0 + $0x238] sm:$0xff]
  %v90 = vld [vmem:[%s0 + $0x240] sm:$0xff]
  %v91 = vld [vmem:[%s0 + $0x248] sm:$0xff]
  %v92 = vld [vmem:[%s0 + $0x250] sm:$0xff]
  %v93 = vld [vmem:[%s0 + $0x258] sm:$0xff]
  %v94 = vld [vmem:[%s0 + $0x260] sm:$0xff]
  %v95 = vld [vmem:[%s0 + $0x268] sm:$0xff]
  %v96 = vld [vmem:[%s0 + $0x270] sm:$0xff]
  %v97 = vld [vmem:[%s0 + $0x278] sm:$0xff]
  %v98 = vld [vmem:[%s0 + $0x280] sm:$0xf]
  %v99 = vld [vmem:[%s0 + $0x284] sm:$0xff]
  %v100 = vld [vmem:[%s0 + $0x28c] sm:$0xff]
  %v101 = vld [vmem:[%s0 + $0x294] sm:$0xff]
  %v102 = vld [vmem:[%s0 + $0x29c] sm:$0xff]
  %v103 = vld [vmem:[%s0 + $0x2a4] sm:$0xff]
  %v104 = vld [vmem:[%s0 + $0x2ac] sm:$0xff]
  %v105 = vld [vmem:[%s0 + $0x2b4] sm:$0xff]
  %v106 = vld [vmem:[%s0 + $0x2bc] sm:$0xff]
  %v107 = vld [vmem:[%s0 + $0x2c4] sm:$0xff]
  %v108 = vld [vmem:[%s0 + $0x2cc] sm:$0xff]
  %v109 = vld [vmem:[%s0 + $0x2d4] sm:$0xff]
  %v110 = vld [vmem:[%s0 + $0x2dc] sm:$0xf]
  %v111 = vld [vmem:[%s0 + $0x2e0] sm:$0xff]
  %v112 = vld [vmem:[%s0 + $0x2e8] sm:$0xff]
  %v113 = vld [vmem:[%s0 + $0x2f0] sm:$0xff]
  %v114 = vld [vmem:[%s0 + $0x2f8] sm:$0xff]
  %v115 = vld [vmem:[%s0 + $0x300] sm:$0xff]
  %v116 = vld [vmem:[%s0 + $0x308] sm:$0xff]
  %v117 = vld [vmem:[%s0 + $0x310] sm:$0xff]
  %v118 = vld [vmem:[%s0 + $0x318] sm:$0xff]
  %v119 = vld [vmem:[%s0 + $0x320] sm:$0xff]
  %v120 = vld [vmem:[%s0 + $0x328] sm:$0xff]
  %v121 = vld [vmem:[%s0 + $0x330] sm:$0xff]
  %v122 = vld [vmem:[%s0 + $0x338] sm:$0xf]
  %v123 = vld [vmem:[%s0 + $0x33c] sm:$0xff]
  %v124 = vld [vmem:[%s0 + $0x344] sm:$0xff]
  %v125 = vld [vmem:[%s0 + $0x34c] sm:$0xff]
  %v126 = vld [vmem:[%s0 + $0x354] sm:$0xff]
  %v127 = vld [vmem:[%s0 + $0x35c] sm:$0xff]
  %v128 = vld [vmem:[%s0 + $0x364] sm:$0xff]
  %v129 = vld [vmem:[%s0 + $0x36c] sm:$0xff]
  %v130 = vld [vmem:[%s0 + $0x374] sm:$0xff]
  %v131 = vld [vmem:[%s0 + $0x37c] sm:$0xff]
  %v132 = vld [vmem:[%s0 + $0x384] sm:$0xff]
  %v133 = vld [vmem:[%s0 + $0x38c] sm:$0xff]
  %v134 = vld [vmem:[%s0 + $0x394] sm:$0xf]
  %v135 = vld [vmem:[%s0 + $0x398] sm:$0xff]
  %v136 = vld [vmem:[%s0 + $0x3a0] sm:$0xff]
  %v137 = vld [vmem:[%s0 + $0x3a8] sm:$0xff]
  %v138 = vld [vmem:[%s0 + $0x3b0] sm:$0xff]
  %v139 = vld [vmem:[%s0 + $0x3b8] sm:$0xff]
  %v140 = vld [vmem:[%s0 + $0x3c0] sm:$0xff]
  %v141 = vld [vmem:[%s0 + $0x3c8] sm:$0xff]
  %v142 = vld [vmem:[%s0 + $0x3d0] sm:$0xff]
  %v143 = vld [vmem:[%s0 + $0x3d8] sm:$0xff]
  %v144 = vld [vmem:[%s0 + $0x3e0] sm:$0xff]
  %v145 = vld [vmem:[%s0 + $0x3e8] sm:$0xff]
  %v146 = vld [vmem:[%s0 + $0x3f0] sm:$0xf]
  %v147 = vld [vmem:[%s0 + $0x3f4] sm:$0xff]
  %v148 = vld [vmem:[%s0 + $0x3fc] sm:$0xff]
  %v149 = vld [vmem:[%s0 + $0x404] sm:$0xff]
  %v150 = vld [vmem:[%s0 + $0x40c] sm:$0xff]
  %v151 = vld [vmem:[%s0 + $0x414] sm:$0xff]
  %v152 = vld [vmem:[%s0 + $0x41c] sm:$0xff]
  %v153 = vld [vmem:[%s0 + $0x424] sm:$0xff]
  %v154 = vld [vmem:[%s0 + $0x42c] sm:$0xff]
  %v155 = vld [vmem:[%s0 + $0x434] sm:$0xff]
  %v156 = vld [vmem:[%s0 + $0x43c] sm:$0xff]
  %v157 = vld [vmem:[%s0 + $0x444] sm:$0xff]
  %v158 = vld [vmem:[%s0 + $0x44c] sm:$0xf]
  %v159 = vld [vmem:[%s0 + $0x450] sm:$0xff]
  %v160 = vld [vmem:[%s0 + $0x458] sm:$0xff]
  %v161 = vld [vmem:[%s0 + $0x460] sm:$0xff]
  %v162 = vld [vmem:[%s0 + $0x468] sm:$0xff]
  %v163 = vld [vmem:[%s0 + $0x470] sm:$0xff]
  %v164 = vld [vmem:[%s0 + $0x478] sm:$0xff]
  %v165 = vld [vmem:[%s0 + $0x480] sm:$0xff]
  %v166 = vld [vmem:[%s0 + $0x488] sm:$0xff]
  %v167 = vld [vmem:[%s0 + $0x490] sm:$0xff]
  %v168 = vld [vmem:[%s0 + $0x498] sm:$0xff]
  %v169 = vld [vmem:[%s0 + $0x4a0] sm:$0xff]
  %v170 = vld [vmem:[%s0 + $0x4a8] sm:$0xf]
  %v171 = vld [vmem:[%s0 + $0x4ac] sm:$0xff]
  %v172 = vld [vmem:[%s0 + $0x4b4] sm:$0xff]
  %v173 = vld [vmem:[%s0 + $0x4bc] sm:$0xff]
  %v174 = vld [vmem:[%s0 + $0x4c4] sm:$0xff]
  %v175 = vld [vmem:[%s0 + $0x4cc] sm:$0xff]
  %v176 = vld [vmem:[%s0 + $0x4d4] sm:$0xff]
  %v177 = vld [vmem:[%s0 + $0x4dc] sm:$0xff]
  %v178 = vld [vmem:[%s0 + $0x4e4] sm:$0xff]
  %v179 = vld [vmem:[%s0 + $0x4ec] sm:$0xff]
  %v180 = vld [vmem:[%s0 + $0x4f4] sm:$0xff]
  %v181 = vld [vmem:[%s0 + $0x4fc] sm:$0xff]
  %v182 = vld [vmem:[%s0 + $0x504] sm:$0xf]
  %v183 = vld [vmem:[%s0 + $0x508] sm:$0xff]
  %v184 = vld [vmem:[%s0 + $0x510] sm:$0xff]
  %v185 = vld [vmem:[%s0 + $0x518] sm:$0xff]
  %v186 = vld [vmem:[%s0 + $0x520] sm:$0xff]
  %v187 = vld [vmem:[%s0 + $0x528] sm:$0xff]
  %v188 = vld [vmem:[%s0 + $0x530] sm:$0xff]
  %v189 = vld [vmem:[%s0 + $0x538] sm:$0xff]
  %v190 = vld [vmem:[%s0 + $0x540] sm:$0xff]
  %v191 = vld [vmem:[%s0 + $0x548] sm:$0xff]
  %v192 = vld [vmem:[%s0 + $0x550] sm:$0xff]
  %v193 = vld [vmem:[%s0 + $0x558] sm:$0xff]
  %v194 = vld [vmem:[%s0 + $0x560] sm:$0xf]
  %v195 = vld [vmem:[%s0 + $0x564] sm:$0xff]
  %v196 = vld [vmem:[%s0 + $0x56c] sm:$0xff]
  %v197 = vld [vmem:[%s0 + $0x574] sm:$0xff]
  %v198 = vld [vmem:[%s0 + $0x57c] sm:$0xff]
  %v199 = vld [vmem:[%s0 + $0x584] sm:$0xff]
  %v200 = vld [vmem:[%s0 + $0x58c] sm:$0xff]
  %v201 = vld [vmem:[%s0 + $0x594] sm:$0xff]
  %v202 = vld [vmem:[%s0 + $0x59c] sm:$0xff]
  %v203 = vld [vmem:[%s0 + $0x5a4] sm:$0xff]
  %v204 = vld [vmem:[%s0 + $0x5ac] sm:$0xff]
  %v205 = vld [vmem:[%s0 + $0x5b4] sm:$0xff]
  %v206 = vld [vmem:[%s0 + $0x5bc] sm:$0xf]
  %v207 = vld [vmem:[%s1] sm:$0xf]
  %v208 = vld [vmem:[%s1 + $0x4] sm:$0xf]
  %v209 = vld [vmem:[%s1 + $0x8] sm:$0xf]
  %v210 = vld [vmem:[%s1 + $0xc] sm:$0xf]
  %v211 = vld [vmem:[%s1 + $0x10] sm:$0xf]
  %v212 = vld [vmem:[%s1 + $0x14] sm:$0xf]
  %v213 = vld [vmem:[%s1 + $0x18] sm:$0xf]
  %v214 = vld [vmem:[%s1 + $0x1c] sm:$0xf]
  %v215 = vld [vmem:[%s1 + $0x20] sm:$0xf]
  %v216 = vld [vmem:[%s1 + $0x24] sm:$0xf]
  %v217 = vld [vmem:[%s1 + $0x28] sm:$0xf]
  %v218 = vld [vmem:[%s1 + $0x2c] sm:$0xf]
  %v219 = vld [vmem:[%s1 + $0x30] sm:$0xf]
  %v220 = vld [vmem:[%s1 + $0x34] sm:$0xf]
  %v221 = vld [vmem:[%s1 + $0x38] sm:$0xf]
  %v222 = vld [vmem:[%s1 + $0x3c] sm:$0xf]
  %v223 = vld [vmem:[%s1 + $0x40] sm:$0xf]
  %v224 = vld [vmem:[%s1 + $0x44] sm:$0xf]
  %v225 = vld [vmem:[%s1 + $0x48] sm:$0xf]
  %v226 = vld [vmem:[%s1 + $0x4c] sm:$0xf]
  %v227 = vld [vmem:[%s1 + $0x50] sm:$0xf]
  %v228 = vld [vmem:[%s1 + $0x54] sm:$0xf]
  %v229 = vld [vmem:[%s1 + $0x58] sm:$0xf]
  %v230 = vld [vmem:[%s1 + $0x5c] sm:$0xf]
  %v231 = vld [vmem:[%s1 + $0x60] sm:$0xf]
  %v232 = vld [vmem:[%s1 + $0x64] sm:$0xf]
  %v233 = vld [vmem:[%s1 + $0x68] sm:$0xf]
  %v234 = vld [vmem:[%s1 + $0x6c] sm:$0xf]
  %v235 = vld [vmem:[%s1 + $0x70] sm:$0xf]
  %v236 = vld [vmem:[%s1 + $0x74] sm:$0xf]
  %v237 = vld [vmem:[%s1 + $0x78] sm:$0xf]
  %v238 = vld [vmem:[%s1 + $0x7c] sm:$0xf]
  %v239 = vld [vmem:[%s1 + $0x80] sm:$0xf]
  %v240 = vld [vmem:[%s1 + $0x84] sm:$0xf]
  %v241 = vld [vmem:[%s1 + $0x88] sm:$0xf]
  %v242 = vld [vmem:[%s1 + $0x8c] sm:$0xf]
  %v243 = vld [vmem:[%s1 + $0x90] sm:$0xf]
  %v244 = vld [vmem:[%s1 + $0x94] sm:$0xf]
  %v245 = vld [vmem:[%s1 + $0x98] sm:$0xf]
  %v246 = vld [vmem:[%s1 + $0x9c] sm:$0xf]
  %v247 = vld [vmem:[%s1 + $0xa0] sm:$0xf]
  %v248 = vld [vmem:[%s1 + $0xa4] sm:$0xf]
  %v249 = vld [vmem:[%s1 + $0xa8] sm:$0xf]
  %v250 = vld [vmem:[%s1 + $0xac] sm:$0xf]
  %v251 = vld [vmem:[%s1 + $0xb0] sm:$0xf]
  %v252 = vld [vmem:[%s1 + $0xb4] sm:$0xf]
  %v253 = vld [vmem:[%s1 + $0xb8] sm:$0xf]
  %v254 = vld [vmem:[%s1 + $0xbc] sm:$0xf]
  %v255 = vld [vmem:[%s1 + $0xc0] sm:$0xf]
  %v256 = vld [vmem:[%s1 + $0xc4] sm:$0xf]
  %v257 = vld [vmem:[%s1 + $0xc8] sm:$0xf]
  %v258 = vld [vmem:[%s1 + $0xcc] sm:$0xf]
  %v259 = vld [vmem:[%s1 + $0xd0] sm:$0xf]
  %v260 = vld [vmem:[%s1 + $0xd4] sm:$0xf]
  %v261 = vld [vmem:[%s1 + $0xd8] sm:$0xf]
  %v262 = vld [vmem:[%s1 + $0xdc] sm:$0xf]
  %v263 = vld [vmem:[%s1 + $0xe0] sm:$0xf]
  %v264 = vld [vmem:[%s1 + $0xe4] sm:$0xf]
  %v265 = vld [vmem:[%s1 + $0xe8] sm:$0xf]
  %v266 = vld [vmem:[%s1 + $0xec] sm:$0xf]
  %v267 = vld [vmem:[%s1 + $0xf0] sm:$0xf]
  %v268 = vld [vmem:[%s1 + $0xf4] sm:$0xf]
  %v269 = vld [vmem:[%s1 + $0xf8] sm:$0xf]
  %v270 = vld [vmem:[%s1 + $0xfc] sm:$0xf]
  %v271 = vld [vmem:[%s1 + $0x100] sm:$0xf]
  %v272 = vld [vmem:[%s1 + $0x104] sm:$0xf]
  %v273 = vld [vmem:[%s1 + $0x108] sm:$0xf]
  %v274 = vld [vmem:[%s1 + $0x10c] sm:$0xf]
  %v275 = vld [vmem:[%s1 + $0x110] sm:$0xf]
  %v276 = vld [vmem:[%s1 + $0x114] sm:$0xf]
  %v277 = vld [vmem:[%s1 + $0x118] sm:$0xf]
  %v278 = vld [vmem:[%s1 + $0x11c] sm:$0xf]
  %v279 = vld [vmem:[%s1 + $0x120] sm:$0xf]
  %v280 = vld [vmem:[%s1 + $0x124] sm:$0xf]
  %v281 = vld [vmem:[%s1 + $0x128] sm:$0xf]
  %v282 = vld [vmem:[%s1 + $0x12c] sm:$0xf]
  %v283 = vld [vmem:[%s1 + $0x130] sm:$0xf]
  %v284 = vld [vmem:[%s1 + $0x134] sm:$0xf]
  %v285 = vld [vmem:[%s1 + $0x138] sm:$0xf]
  %v286 = vld [vmem:[%s1 + $0x13c] sm:$0xf]
  %v287 = vld [vmem:[%s1 + $0x140] sm:$0xf]
  %v288 = vld [vmem:[%s1 + $0x144] sm:$0xf]
  %v289 = vld [vmem:[%s1 + $0x148] sm:$0xf]
  %v290 = vld [vmem:[%s1 + $0x14c] sm:$0xf]
  %v291 = vld [vmem:[%s1 + $0x150] sm:$0xf]
  %v292 = vld [vmem:[%s1 + $0x154] sm:$0xf]
  %v293 = vld [vmem:[%s1 + $0x158] sm:$0xf]
  %v294 = vld [vmem:[%s1 + $0x15c] sm:$0xf]
  %v295 = vld [vmem:[%s1 + $0x160] sm:$0xf]
  %v296 = vld [vmem:[%s1 + $0x164] sm:$0xf]
  %v297 = vld [vmem:[%s1 + $0x168] sm:$0xf]
  %v298 = vld [vmem:[%s1 + $0x16c] sm:$0xf]
  %v299 = vld [vmem:[%s1 + $0x170] sm:$0xf]
  %v300 = vld [vmem:[%s1 + $0x174] sm:$0xf]
  %v301 = vld [vmem:[%s1 + $0x178] sm:$0xf]
  %v302 = vld [vmem:[%s1 + $0x17c] sm:$0xf]
  %v303 = vld [vmem:[%s1 + $0x180] sm:$0xf]
  %v304 = vld [vmem:[%s1 + $0x184] sm:$0xf]
  %v305 = vld [vmem:[%s1 + $0x188] sm:$0xf]
  %v306 = vld [vmem:[%s1 + $0x18c] sm:$0xf]
  %v307 = vld [vmem:[%s1 + $0x190] sm:$0xf]
  %v308 = vld [vmem:[%s1 + $0x194] sm:$0xf]
  %v309 = vld [vmem:[%s1 + $0x198] sm:$0xf]
  %v310 = vld [vmem:[%s1 + $0x19c] sm:$0xf]
  %v311 = vld [vmem:[%s1 + $0x1a0] sm:$0xf]
  %v312 = vld [vmem:[%s1 + $0x1a4] sm:$0xf]
  %v313 = vld [vmem:[%s1 + $0x1a8] sm:$0xf]
  %v314 = vld [vmem:[%s1 + $0x1ac] sm:$0xf]
  %v315 = vld [vmem:[%s1 + $0x1b0] sm:$0xf]
  %v316 = vld [vmem:[%s1 + $0x1b4] sm:$0xf]
  %v317 = vld [vmem:[%s1 + $0x1b8] sm:$0xf]
  %v318 = vld [vmem:[%s1 + $0x1bc] sm:$0xf]
  %v319 = vld [vmem:[%s1 + $0x1c0] sm:$0xf]
  %v320 = vld [vmem:[%s1 + $0x1c4] sm:$0xf]
  %v321 = vld [vmem:[%s1 + $0x1c8] sm:$0xf]
  %v322 = vld [vmem:[%s1 + $0x1cc] sm:$0xf]
  %v323 = vld [vmem:[%s1 + $0x1d0] sm:$0xf]
  %v324 = vld [vmem:[%s1 + $0x1d4] sm:$0xf]
  %v325 = vld [vmem:[%s1 + $0x1d8] sm:$0xf]
  %v326 = vld [vmem:[%s1 + $0x1dc] sm:$0xf]
  %v327 = vld [vmem:[%s1 + $0x1e0] sm:$0xf]
  %v328 = vld [vmem:[%s1 + $0x1e4] sm:$0xf]
  %v329 = vld [vmem:[%s1 + $0x1e8] sm:$0xf]
  %v330 = vld [vmem:[%s1 + $0x1ec] sm:$0xf]
  %v331 = vld [vmem:[%s1 + $0x1f0] sm:$0xf]
  %v332 = vld [vmem:[%s1 + $0x1f4] sm:$0xf]
  %v333 = vld [vmem:[%s1 + $0x1f8] sm:$0xf]
  %v334 = vld [vmem:[%s1 + $0x1fc] sm:$0xf]
  %v335 = vld [vmem:[%s1 + $0x200] sm:$0xf]
  %v336 = vld [vmem:[%s1 + $0x204] sm:$0xf]
  %v337 = vld [vmem:[%s1 + $0x208] sm:$0xf]
  %v338 = vld [vmem:[%s1 + $0x20c] sm:$0xf]
  %v339 = vld [vmem:[%s1 + $0x210] sm:$0xf]
  %v340 = vld [vmem:[%s1 + $0x214] sm:$0xf]
  %v341 = vld [vmem:[%s1 + $0x218] sm:$0xf]
  %v342 = vld [vmem:[%s1 + $0x21c] sm:$0xf]
  %v343 = vld [vmem:[%s1 + $0x220] sm:$0xf]
  %v344 = vld [vmem:[%s1 + $0x224] sm:$0xf]
  %v345 = vld [vmem:[%s1 + $0x228] sm:$0xf]
  %v346 = vld [vmem:[%s1 + $0x22c] sm:$0xf]
  %v347 = vld [vmem:[%s1 + $0x230] sm:$0xf]
  %v348 = vld [vmem:[%s1 + $0x234] sm:$0xf]
  %v349 = vld [vmem:[%s1 + $0x238] sm:$0xf]
  %v350 = vld [vmem:[%s1 + $0x23c] sm:$0xf]
  %v351 = vld [vmem:[%s1 + $0x240] sm:$0xf]
  %v352 = vld [vmem:[%s1 + $0x244] sm:$0xf]
  %v353 = vld [vmem:[%s1 + $0x248] sm:$0xf]
  %v354 = vld [vmem:[%s1 + $0x24c] sm:$0xf]
  %v355 = vld [vmem:[%s1 + $0x250] sm:$0xf]
  %v356 = vld [vmem:[%s1 + $0x254] sm:$0xf]
  %v357 = vld [vmem:[%s1 + $0x258] sm:$0xf]
  %v358 = vld [vmem:[%s1 + $0x25c] sm:$0xf]
  %v359 = vld [vmem:[%s1 + $0x260] sm:$0xf]
  %v360 = vld [vmem:[%s1 + $0x264] sm:$0xf]
  %v361 = vld [vmem:[%s1 + $0x268] sm:$0xf]
  %v362 = vld [vmem:[%s1 + $0x26c] sm:$0xf]
  %v363 = vld [vmem:[%s1 + $0x270] sm:$0xf]
  %v364 = vld [vmem:[%s1 + $0x274] sm:$0xf]
  %v365 = vld [vmem:[%s1 + $0x278] sm:$0xf]
  %v366 = vld [vmem:[%s1 + $0x27c] sm:$0xf]
  %v367 = vld [vmem:[%s1 + $0x280] sm:$0xf]
  %v368 = vld [vmem:[%s1 + $0x284] sm:$0xf]
  %v369 = vld [vmem:[%s1 + $0x288] sm:$0xf]
  %v370 = vld [vmem:[%s1 + $0x28c] sm:$0xf]
  %v371 = vld [vmem:[%s1 + $0x290] sm:$0xf]
  %v372 = vld [vmem:[%s1 + $0x294] sm:$0xf]
  %v373 = vld [vmem:[%s1 + $0x298] sm:$0xf]
  %v374 = vld [vmem:[%s1 + $0x29c] sm:$0xf]
  %v375 = vld [vmem:[%s1 + $0x2a0] sm:$0xf]
  %v376 = vld [vmem:[%s1 + $0x2a4] sm:$0xf]
  %v377 = vld [vmem:[%s1 + $0x2a8] sm:$0xf]
  %v378 = vld [vmem:[%s1 + $0x2ac] sm:$0xf]
  %v379 = vld [vmem:[%s1 + $0x2b0] sm:$0xf]
  %v380 = vld [vmem:[%s1 + $0x2b4] sm:$0xf]
  %v381 = vld [vmem:[%s1 + $0x2b8] sm:$0xf]
  %v382 = vld [vmem:[%s1 + $0x2bc] sm:$0xf]
  %v383 = vld [vmem:[%s1 + $0x2c0] sm:$0xf]
  %v384 = vld [vmem:[%s1 + $0x2c4] sm:$0xf]
  %v385 = vld [vmem:[%s1 + $0x2c8] sm:$0xf]
  %v386 = vld [vmem:[%s1 + $0x2cc] sm:$0xf]
  %v387 = vld [vmem:[%s1 + $0x2d0] sm:$0xf]
  %v388 = vld [vmem:[%s1 + $0x2d4] sm:$0xf]
  %v389 = vld [vmem:[%s1 + $0x2d8] sm:$0xf]
  %v390 = vld [vmem:[%s1 + $0x2dc] sm:$0xf]
  %v391 = vld [vmem:[%s1 + $0x2e0] sm:$0xf]
  %v392 = vld [vmem:[%s1 + $0x2e4] sm:$0xf]
  %v393 = vld [vmem:[%s1 + $0x2e8] sm:$0xf]
  %v394 = vld [vmem:[%s1 + $0x2ec] sm:$0xf]
  %v395 = vld [vmem:[%s1 + $0x2f0] sm:$0xf]
  %v396 = vld [vmem:[%s1 + $0x2f4] sm:$0xf]
  %v397 = vld [vmem:[%s1 + $0x2f8] sm:$0xf]
  %v398 = vld [vmem:[%s1 + $0x2fc] sm:$0xf]
  %v399 = vld [vmem:[%s1 + $0x300] sm:$0xf]
  %v400 = vld [vmem:[%s1 + $0x304] sm:$0xf]
  %v401 = vld [vmem:[%s1 + $0x308] sm:$0xf]
  %v402 = vld [vmem:[%s1 + $0x30c] sm:$0xf]
  %v403 = vld [vmem:[%s1 + $0x310] sm:$0xf]
  %v404 = vld [vmem:[%s1 + $0x314] sm:$0xf]
  %v405 = vld [vmem:[%s1 + $0x318] sm:$0xf]
  %v406 = vld [vmem:[%s1 + $0x31c] sm:$0xf]
  %v407 = vld [vmem:[%s1 + $0x320] sm:$0xf]
  %v408 = vld [vmem:[%s1 + $0x324] sm:$0xf]
  %v409 = vld [vmem:[%s1 + $0x328] sm:$0xf]
  %v410 = vld [vmem:[%s1 + $0x32c] sm:$0xf]
  %v411 = vld [vmem:[%s1 + $0x330] sm:$0xf]
  %v412 = vld [vmem:[%s1 + $0x334] sm:$0xf]
  %v413 = vld [vmem:[%s1 + $0x338] sm:$0xf]
  %v414 = vld [vmem:[%s1 + $0x33c] sm:$0xf]
  %v415 = vld [vmem:[%s1 + $0x340] sm:$0xf]
  %v416 = vld [vmem:[%s1 + $0x344] sm:$0xf]
  %v417 = vld [vmem:[%s1 + $0x348] sm:$0xf]
  %v418 = vld [vmem:[%s1 + $0x34c] sm:$0xf]
  %v419 = vld [vmem:[%s1 + $0x350] sm:$0xf]
  %v420 = vld [vmem:[%s1 + $0x354] sm:$0xf]
  %v421 = vld [vmem:[%s1 + $0x358] sm:$0xf]
  %v422 = vld [vmem:[%s1 + $0x35c] sm:$0xf]
  %v423 = vld [vmem:[%s1 + $0x360] sm:$0xf]
  %v424 = vld [vmem:[%s1 + $0x364] sm:$0xf]
  %v425 = vld [vmem:[%s1 + $0x368] sm:$0xf]
  %v426 = vld [vmem:[%s1 + $0x36c] sm:$0xf]
  %v427 = vld [vmem:[%s1 + $0x370] sm:$0xf]
  %v428 = vld [vmem:[%s1 + $0x374] sm:$0xf]
  %v429 = vld [vmem:[%s1 + $0x378] sm:$0xf]
  %v430 = vld [vmem:[%s1 + $0x37c] sm:$0xf]
  %v431 = vld [vmem:[%s1 + $0x380] sm:$0xf]
  %v432 = vld [vmem:[%s1 + $0x384] sm:$0xf]
  %v433 = vld [vmem:[%s1 + $0x388] sm:$0xf]
  %v434 = vld [vmem:[%s1 + $0x38c] sm:$0xf]
  %v435 = vld [vmem:[%s1 + $0x390] sm:$0xf]
  %v436 = vld [vmem:[%s1 + $0x394] sm:$0xf]
  %v437 = vld [vmem:[%s1 + $0x398] sm:$0xf]
  %v438 = vld [vmem:[%s1 + $0x39c] sm:$0xf]
  %v439 = vld [vmem:[%s1 + $0x3a0] sm:$0xf]
  %v440 = vld [vmem:[%s1 + $0x3a4] sm:$0xf]
  %v441 = vld [vmem:[%s1 + $0x3a8] sm:$0xf]
  %v442 = vld [vmem:[%s1 + $0x3ac] sm:$0xf]
  %v443 = vld [vmem:[%s1 + $0x3b0] sm:$0xf]
  %v444 = vld [vmem:[%s1 + $0x3b4] sm:$0xf]
  %v445 = vld [vmem:[%s1 + $0x3b8] sm:$0xf]
  %v446 = vld [vmem:[%s1 + $0x3bc] sm:$0xf]
  %v447 = vld [vmem:[%s1 + $0x3c0] sm:$0xf]
  %v448 = vld [vmem:[%s1 + $0x3c4] sm:$0xf]
  %v449 = vld [vmem:[%s1 + $0x3c8] sm:$0xf]
  %v450 = vld [vmem:[%s1 + $0x3cc] sm:$0xf]
  %v451 = vld [vmem:[%s1 + $0x3d0] sm:$0xf]
  %v452 = vld [vmem:[%s1 + $0x3d4] sm:$0xf]
  %v453 = vld [vmem:[%s1 + $0x3d8] sm:$0xf]
  %v454 = vld [vmem:[%s1 + $0x3dc] sm:$0xf]
  %v455 = vld [vmem:[%s1 + $0x3e0] sm:$0xf]
  %v456 = vld [vmem:[%s1 + $0x3e4] sm:$0xf]
  %v457 = vld [vmem:[%s1 + $0x3e8] sm:$0xf]
  %v458 = vld [vmem:[%s1 + $0x3ec] sm:$0xf]
  %v459 = vld [vmem:[%s1 + $0x3f0] sm:$0xf]
  %v460 = vld [vmem:[%s1 + $0x3f4] sm:$0xf]
  %v461 = vld [vmem:[%s1 + $0x3f8] sm:$0xf]
  %v462 = vld [vmem:[%s1 + $0x3fc] sm:$0xf]
  %v463 = vld [vmem:[%s1 + $0x400] sm:$0xf]
  %v464 = vld [vmem:[%s1 + $0x404] sm:$0xf]
  %v465 = vld [vmem:[%s1 + $0x408] sm:$0xf]
  %v466 = vld [vmem:[%s1 + $0x40c] sm:$0xf]
  %v467 = vld [vmem:[%s1 + $0x410] sm:$0xf]
  %v468 = vld [vmem:[%s1 + $0x414] sm:$0xf]
  %v469 = vld [vmem:[%s1 + $0x418] sm:$0xf]
  %v470 = vld [vmem:[%s1 + $0x41c] sm:$0xf]
  %v471 = vld [vmem:[%s1 + $0x420] sm:$0xf]
  %v472 = vld [vmem:[%s1 + $0x424] sm:$0xf]
  %v473 = vld [vmem:[%s1 + $0x428] sm:$0xf]
  %v474 = vld [vmem:[%s1 + $0x42c] sm:$0xf]
  %v475 = vld [vmem:[%s1 + $0x430] sm:$0xf]
  %v476 = vld [vmem:[%s1 + $0x434] sm:$0xf]
  %v477 = vld [vmem:[%s1 + $0x438] sm:$0xf]
  %v478 = vld [vmem:[%s1 + $0x43c] sm:$0xf]
  %v479 = vld [vmem:[%s1 + $0x440] sm:$0xf]
  %v480 = vld [vmem:[%s1 + $0x444] sm:$0xf]
  %v481 = vld [vmem:[%s1 + $0x448] sm:$0xf]
  %v482 = vld [vmem:[%s1 + $0x44c] sm:$0xf]
  %v483 = vld [vmem:[%s1 + $0x450] sm:$0xf]
  %v484 = vld [vmem:[%s1 + $0x454] sm:$0xf]
  %v485 = vld [vmem:[%s1 + $0x458] sm:$0xf]
  %v486 = vld [vmem:[%s1 + $0x45c] sm:$0xf]
  %v487 = vld [vmem:[%s1 + $0x460] sm:$0xf]
  %v488 = vld [vmem:[%s1 + $0x464] sm:$0xf]
  %v489 = vld [vmem:[%s1 + $0x468] sm:$0xf]
  %v490 = vld [vmem:[%s1 + $0x46c] sm:$0xf]
  %v491 = vld [vmem:[%s1 + $0x470] sm:$0xf]
  %v492 = vld [vmem:[%s1 + $0x474] sm:$0xf]
  %v493 = vld [vmem:[%s1 + $0x478] sm:$0xf]
  %v494 = vld [vmem:[%s1 + $0x47c] sm:$0xf]
  %v495 = vld [vmem:[%s1 + $0x480] sm:$0xf]
  %v496 = vld [vmem:[%s1 + $0x484] sm:$0xf]
  %v497 = vld [vmem:[%s1 + $0x488] sm:$0xf]
  %v498 = vld [vmem:[%s1 + $0x48c] sm:$0xf]
  %v499 = vld [vmem:[%s1 + $0x490] sm:$0xf]
  %v500 = vld [vmem:[%s1 + $0x494] sm:$0xf]
  %v501 = vld [vmem:[%s1 + $0x498] sm:$0xf]
  %v502 = vld [vmem:[%s1 + $0x49c] sm:$0xf]
  %v503 = vld [vmem:[%s1 + $0x4a0] sm:$0xf]
  %v504 = vld [vmem:[%s1 + $0x4a4] sm:$0xf]
  %v505 = vld [vmem:[%s1 + $0x4a8] sm:$0xf]
  %v506 = vld [vmem:[%s1 + $0x4ac] sm:$0xf]
  %v507 = vld [vmem:[%s1 + $0x4b0] sm:$0xf]
  %v508 = vld [vmem:[%s1 + $0x4b4] sm:$0xf]
  %v509 = vld [vmem:[%s1 + $0x4b8] sm:$0xf]
  %v510 = vld [vmem:[%s1 + $0x4bc] sm:$0xf]
  %v511 = vld [vmem:[%s1 + $0x4c0] sm:$0xf]
  %v512 = vld [vmem:[%s1 + $0x4c4] sm:$0xf]
  %v513 = vld [vmem:[%s1 + $0x4c8] sm:$0xf]
  %v514 = vld [vmem:[%s1 + $0x4cc] sm:$0xf]
  %v515 = vld [vmem:[%s1 + $0x4d0] sm:$0xf]
  %v516 = vld [vmem:[%s1 + $0x4d4] sm:$0xf]
  %v517 = vld [vmem:[%s1 + $0x4d8] sm:$0xf]
  %v518 = vld [vmem:[%s1 + $0x4dc] sm:$0xf]
  %v519 = vld [vmem:[%s1 + $0x4e0] sm:$0xf]
  %v520 = vld [vmem:[%s1 + $0x4e4] sm:$0xf]
  %v521 = vld [vmem:[%s1 + $0x4e8] sm:$0xf]
  %v522 = vld [vmem:[%s1 + $0x4ec] sm:$0xf]
  %v523 = vld [vmem:[%s1 + $0x4f0] sm:$0xf]
  %v524 = vld [vmem:[%s1 + $0x4f4] sm:$0xf]
  %v525 = vld [vmem:[%s1 + $0x4f8] sm:$0xf]
  %v526 = vld [vmem:[%s1 + $0x4fc] sm:$0xf]
  %v527 = vld [vmem:[%s1 + $0x500] sm:$0xf]
  %v528 = vld [vmem:[%s1 + $0x504] sm:$0xf]
  %v529 = vld [vmem:[%s1 + $0x508] sm:$0xf]
  %v530 = vld [vmem:[%s1 + $0x50c] sm:$0xf]
  %v531 = vld [vmem:[%s1 + $0x510] sm:$0xf]
  %v532 = vld [vmem:[%s1 + $0x514] sm:$0xf]
  %v533 = vld [vmem:[%s1 + $0x518] sm:$0xf]
  %v534 = vld [vmem:[%s1 + $0x51c] sm:$0xf]
  %v535 = vld [vmem:[%s1 + $0x520] sm:$0xf]
  %v536 = vld [vmem:[%s1 + $0x524] sm:$0xf]
  %v537 = vld [vmem:[%s1 + $0x528] sm:$0xf]
  %v538 = vld [vmem:[%s1 + $0x52c] sm:$0xf]
  %v539 = vld [vmem:[%s1 + $0x530] sm:$0xf]
  %v540 = vld [vmem:[%s1 + $0x534] sm:$0xf]
  %v541 = vld [vmem:[%s1 + $0x538] sm:$0xf]
  %v542 = vld [vmem:[%s1 + $0x53c] sm:$0xf]
  %v543 = vld [vmem:[%s1 + $0x540] sm:$0xf]
  %v544 = vld [vmem:[%s1 + $0x544] sm:$0xf]
  %v545 = vld [vmem:[%s1 + $0x548] sm:$0xf]
  %v546 = vld [vmem:[%s1 + $0x54c] sm:$0xf]
  %v547 = vld [vmem:[%s1 + $0x550] sm:$0xf]
  %v548 = vld [vmem:[%s1 + $0x554] sm:$0xf]
  %v549 = vld [vmem:[%s1 + $0x558] sm:$0xf]
  %v550 = vld [vmem:[%s1 + $0x55c] sm:$0xf]
  %v551 = vld [vmem:[%s1 + $0x560] sm:$0xf]
  %v552 = vld [vmem:[%s1 + $0x564] sm:$0xf]
  %v553 = vld [vmem:[%s1 + $0x568] sm:$0xf]
  %v554 = vld [vmem:[%s1 + $0x56c] sm:$0xf]
  %v555 = vld [vmem:[%s1 + $0x570] sm:$0xf]
  %v556 = vld [vmem:[%s1 + $0x574] sm:$0xf]
  %v557 = vld [vmem:[%s1 + $0x578] sm:$0xf]
  %v558 = vld [vmem:[%s1 + $0x57c] sm:$0xf]
  %v559 = vld [vmem:[%s1 + $0x580] sm:$0xf]
  %v560 = vld [vmem:[%s1 + $0x584] sm:$0xf]
  %v561 = vld [vmem:[%s1 + $0x588] sm:$0xf]
  %v562 = vld [vmem:[%s1 + $0x58c] sm:$0xf]
  %v563 = vld [vmem:[%s1 + $0x590] sm:$0xf]
  %v564 = vld [vmem:[%s1 + $0x594] sm:$0xf]
  %v565 = vld [vmem:[%s1 + $0x598] sm:$0xf]
  %v566 = vld [vmem:[%s1 + $0x59c] sm:$0xf]
  %v567 = vld [vmem:[%s1 + $0x5a0] sm:$0xf]
  %v568 = vld [vmem:[%s1 + $0x5a4] sm:$0xf]
  %v569 = vld [vmem:[%s1 + $0x5a8] sm:$0xf]
  %v570 = vld [vmem:[%s1 + $0x5ac] sm:$0xf]
  %v571 = vld [vmem:[%s1 + $0x5b0] sm:$0xf]
  %v572 = vld [vmem:[%s1 + $0x5b4] sm:$0xf]
  %v573 = vld [vmem:[%s1 + $0x5b8] sm:$0xf]
  %v574 = vld [vmem:[%s1 + $0x5bc] sm:$0xf]
  %v575 = vld [vmem:[%s2] sm:$0x1]
  %v577 = vlaneseq
  %v578 = vshrl.u32 %v577, 7
  %v579 = vsub.s32 0, %v578
  %v580 = vrot.slane %v575, %v579
  %v774 = vunpack.c.l.b16 %v15
  %v775 = vunpack.c.h.b16 %v15
  %v776 = vunpack.c.l.b16 %v16
  %v777 = vunpack.c.h.b16 %v16
  %v778 = vunpack.c.l.b16 %v17
  %v779 = vunpack.c.h.b16 %v17
  %v780 = vunpack.c.l.b16 %v18
  %v781 = vunpack.c.h.b16 %v18
  %v782 = vunpack.c.l.b16 %v19
  %v783 = vunpack.c.h.b16 %v19
  %v784 = vunpack.c.l.b16 %v20
  %v785 = vunpack.c.h.b16 %v20
  %v786 = vunpack.c.l.b16 %v21
  %v787 = vunpack.c.h.b16 %v21
  %v788 = vunpack.c.l.b16 %v22
  %v789 = vunpack.c.h.b16 %v22
  %v790 = vunpack.c.l.b16 %v23
  %v791 = vunpack.c.h.b16 %v23
  %v792 = vunpack.c.l.b16 %v24
  %v793 = vunpack.c.h.b16 %v24
  %v794 = vunpack.c.l.b16 %v25
  %v795 = vunpack.c.h.b16 %v25
  %v796 = vunpack.c.l.b16 %v26
  %v797 = vunpack.c.l.b16 %v27
  %v798 = vunpack.c.h.b16 %v27
  %v799 = vunpack.c.l.b16 %v28
  %v800 = vunpack.c.h.b16 %v28
  %v801 = vunpack.c.l.b16 %v29
  %v802 = vunpack.c.h.b16 %v29
  %v803 = vunpack.c.l.b16 %v30
  %v804 = vunpack.c.h.b16 %v30
  %v805 = vunpack.c.l.b16 %v31
  %v806 = vunpack.c.h.b16 %v31
  %v807 = vunpack.c.l.b16 %v32
  %v808 = vunpack.c.h.b16 %v32
  %v809 = vunpack.c.l.b16 %v33
  %v810 = vunpack.c.h.b16 %v33
  %v811 = vunpack.c.l.b16 %v34
  %v812 = vunpack.c.h.b16 %v34
  %v813 = vunpack.c.l.b16 %v35
  %v814 = vunpack.c.h.b16 %v35
  %v815 = vunpack.c.l.b16 %v36
  %v816 = vunpack.c.h.b16 %v36
  %v817 = vunpack.c.l.b16 %v37
  %v818 = vunpack.c.h.b16 %v37
  %v819 = vunpack.c.l.b16 %v38
  %v820 = vunpack.c.l.b16 %v39
  %v821 = vunpack.c.h.b16 %v39
  %v822 = vunpack.c.l.b16 %v40
  %v823 = vunpack.c.h.b16 %v40
  %v824 = vunpack.c.l.b16 %v41
  %v825 = vunpack.c.h.b16 %v41
  %v826 = vunpack.c.l.b16 %v42
  %v827 = vunpack.c.h.b16 %v42
  %v828 = vunpack.c.l.b16 %v43
  %v829 = vunpack.c.h.b16 %v43
  %v830 = vunpack.c.l.b16 %v44
  %v831 = vunpack.c.h.b16 %v44
  %v832 = vunpack.c.l.b16 %v45
  %v833 = vunpack.c.h.b16 %v45
  %v834 = vunpack.c.l.b16 %v46
  %v835 = vunpack.c.h.b16 %v46
  %v836 = vunpack.c.l.b16 %v47
  %v837 = vunpack.c.h.b16 %v47
  %v838 = vunpack.c.l.b16 %v48
  %v839 = vunpack.c.h.b16 %v48
  %v840 = vunpack.c.l.b16 %v49
  %v841 = vunpack.c.h.b16 %v49
  %v842 = vunpack.c.l.b16 %v50
  %v843 = vunpack.c.l.b16 %v51
  %v844 = vunpack.c.h.b16 %v51
  %v845 = vunpack.c.l.b16 %v52
  %v846 = vunpack.c.h.b16 %v52
  %v847 = vunpack.c.l.b16 %v53
  %v848 = vunpack.c.h.b16 %v53
  %v849 = vunpack.c.l.b16 %v54
  %v850 = vunpack.c.h.b16 %v54
  %v851 = vunpack.c.l.b16 %v55
  %v852 = vunpack.c.h.b16 %v55
  %v853 = vunpack.c.l.b16 %v56
  %v854 = vunpack.c.h.b16 %v56
  %v855 = vunpack.c.l.b16 %v57
  %v856 = vunpack.c.h.b16 %v57
  %v857 = vunpack.c.l.b16 %v58
  %v858 = vunpack.c.h.b16 %v58
  %v859 = vunpack.c.l.b16 %v59
  %v860 = vunpack.c.h.b16 %v59
  %v861 = vunpack.c.l.b16 %v60
  %v862 = vunpack.c.h.b16 %v60
  %v863 = vunpack.c.l.b16 %v61
  %v864 = vunpack.c.h.b16 %v61
  %v865 = vunpack.c.l.b16 %v62
  %v866 = vunpack.c.l.b16 %v63
  %v867 = vunpack.c.h.b16 %v63
  %v868 = vunpack.c.l.b16 %v64
  %v869 = vunpack.c.h.b16 %v64
  %v870 = vunpack.c.l.b16 %v65
  %v871 = vunpack.c.h.b16 %v65
  %v872 = vunpack.c.l.b16 %v66
  %v873 = vunpack.c.h.b16 %v66
  %v874 = vunpack.c.l.b16 %v67
  %v875 = vunpack.c.h.b16 %v67
  %v876 = vunpack.c.l.b16 %v68
  %v877 = vunpack.c.h.b16 %v68
  %v878 = vunpack.c.l.b16 %v69
  %v879 = vunpack.c.h.b16 %v69
  %v880 = vunpack.c.l.b16 %v70
  %v881 = vunpack.c.h.b16 %v70
  %v882 = vunpack.c.l.b16 %v71
  %v883 = vunpack.c.h.b16 %v71
  %v884 = vunpack.c.l.b16 %v72
  %v885 = vunpack.c.h.b16 %v72
  %v886 = vunpack.c.l.b16 %v73
  %v887 = vunpack.c.h.b16 %v73
  %v888 = vunpack.c.l.b16 %v74
  %v889 = vunpack.c.l.b16 %v75
  %v890 = vunpack.c.h.b16 %v75
  %v891 = vunpack.c.l.b16 %v76
  %v892 = vunpack.c.h.b16 %v76
  %v893 = vunpack.c.l.b16 %v77
  %v894 = vunpack.c.h.b16 %v77
  %v895 = vunpack.c.l.b16 %v78
  %v896 = vunpack.c.h.b16 %v78
  %v897 = vunpack.c.l.b16 %v79
  %v898 = vunpack.c.h.b16 %v79
  %v899 = vunpack.c.l.b16 %v80
  %v900 = vunpack.c.h.b16 %v80
  %v901 = vunpack.c.l.b16 %v81
  %v902 = vunpack.c.h.b16 %v81
  %v903 = vunpack.c.l.b16 %v82
  %v904 = vunpack.c.h.b16 %v82
  %v905 = vunpack.c.l.b16 %v83
  %v906 = vunpack.c.h.b16 %v83
  %v907 = vunpack.c.l.b16 %v84
  %v908 = vunpack.c.h.b16 %v84
  %v909 = vunpack.c.l.b16 %v85
  %v910 = vunpack.c.h.b16 %v85
  %v911 = vunpack.c.l.b16 %v86
  %v912 = vunpack.c.l.b16 %v87
  %v913 = vunpack.c.h.b16 %v87
  %v914 = vunpack.c.l.b16 %v88
  %v915 = vunpack.c.h.b16 %v88
  %v916 = vunpack.c.l.b16 %v89
  %v917 = vunpack.c.h.b16 %v89
  %v918 = vunpack.c.l.b16 %v90
  %v919 = vunpack.c.h.b16 %v90
  %v920 = vunpack.c.l.b16 %v91
  %v921 = vunpack.c.h.b16 %v91
  %v922 = vunpack.c.l.b16 %v92
  %v923 = vunpack.c.h.b16 %v92
  %v924 = vunpack.c.l.b16 %v93
  %v925 = vunpack.c.h.b16 %v93
  %v926 = vunpack.c.l.b16 %v94
  %v927 = vunpack.c.h.b16 %v94
  %v928 = vunpack.c.l.b16 %v95
  %v929 = vunpack.c.h.b16 %v95
  %v930 = vunpack.c.l.b16 %v96
  %v931 = vunpack.c.h.b16 %v96
  %v932 = vunpack.c.l.b16 %v97
  %v933 = vunpack.c.h.b16 %v97
  %v934 = vunpack.c.l.b16 %v98
  %v935 = vunpack.c.l.b16 %v99
  %v936 = vunpack.c.h.b16 %v99
  %v937 = vunpack.c.l.b16 %v100
  %v938 = vunpack.c.h.b16 %v100
  %v939 = vunpack.c.l.b16 %v101
  %v940 = vunpack.c.h.b16 %v101
  %v941 = vunpack.c.l.b16 %v102
  %v942 = vunpack.c.h.b16 %v102
  %v943 = vunpack.c.l.b16 %v103
  %v944 = vunpack.c.h.b16 %v103
  %v945 = vunpack.c.l.b16 %v104
  %v946 = vunpack.c.h.b16 %v104
  %v947 = vunpack.c.l.b16 %v105
  %v948 = vunpack.c.h.b16 %v105
  %v949 = vunpack.c.l.b16 %v106
  %v950 = vunpack.c.h.b16 %v106
  %v951 = vunpack.c.l.b16 %v107
  %v952 = vunpack.c.h.b16 %v107
  %v953 = vunpack.c.l.b16 %v108
  %v954 = vunpack.c.h.b16 %v108
  %v955 = vunpack.c.l.b16 %v109
  %v956 = vunpack.c.h.b16 %v109
  %v957 = vunpack.c.l.b16 %v110
  %v958 = vunpack.c.l.b16 %v111
  %v959 = vunpack.c.h.b16 %v111
  %v960 = vunpack.c.l.b16 %v112
  %v961 = vunpack.c.h.b16 %v112
  %v962 = vunpack.c.l.b16 %v113
  %v963 = vunpack.c.h.b16 %v113
  %v964 = vunpack.c.l.b16 %v114
  %v965 = vunpack.c.h.b16 %v114
  %v966 = vunpack.c.l.b16 %v115
  %v967 = vunpack.c.h.b16 %v115
  %v968 = vunpack.c.l.b16 %v116
  %v969 = vunpack.c.h.b16 %v116
  %v970 = vunpack.c.l.b16 %v117
  %v971 = vunpack.c.h.b16 %v117
  %v972 = vunpack.c.l.b16 %v118
  %v973 = vunpack.c.h.b16 %v118
  %v974 = vunpack.c.l.b16 %v119
  %v975 = vunpack.c.h.b16 %v119
  %v976 = vunpack.c.l.b16 %v120
  %v977 = vunpack.c.h.b16 %v120
  %v978 = vunpack.c.l.b16 %v121
  %v979 = vunpack.c.h.b16 %v121
  %v980 = vunpack.c.l.b16 %v122
  %v981 = vunpack.c.l.b16 %v123
  %v982 = vunpack.c.h.b16 %v123
  %v983 = vunpack.c.l.b16 %v124
  %v984 = vunpack.c.h.b16 %v124
  %v985 = vunpack.c.l.b16 %v125
  %v986 = vunpack.c.h.b16 %v125
  %v987 = vunpack.c.l.b16 %v126
  %v988 = vunpack.c.h.b16 %v126
  %v989 = vunpack.c.l.b16 %v127
  %v990 = vunpack.c.h.b16 %v127
  %v991 = vunpack.c.l.b16 %v128
  %v992 = vunpack.c.h.b16 %v128
  %v993 = vunpack.c.l.b16 %v129
  %v994 = vunpack.c.h.b16 %v129
  %v995 = vunpack.c.l.b16 %v130
  %v996 = vunpack.c.h.b16 %v130
  %v997 = vunpack.c.l.b16 %v131
  %v998 = vunpack.c.h.b16 %v131
  %v999 = vunpack.c.l.b16 %v132
  %v1000 = vunpack.c.h.b16 %v132
  %v1001 = vunpack.c.l.b16 %v133
  %v1002 = vunpack.c.h.b16 %v133
  %v1003 = vunpack.c.l.b16 %v134
  %v1004 = vunpack.c.l.b16 %v135
  %v1005 = vunpack.c.h.b16 %v135
  %v1006 = vunpack.c.l.b16 %v136
  %v1007 = vunpack.c.h.b16 %v136
  %v1008 = vunpack.c.l.b16 %v137
  %v1009 = vunpack.c.h.b16 %v137
  %v1010 = vunpack.c.l.b16 %v138
  %v1011 = vunpack.c.h.b16 %v138
  %v1012 = vunpack.c.l.b16 %v139
  %v1013 = vunpack.c.h.b16 %v139
  %v1014 = vunpack.c.l.b16 %v140
  %v1015 = vunpack.c.h.b16 %v140
  %v1016 = vunpack.c.l.b16 %v141
  %v1017 = vunpack.c.h.b16 %v141
  %v1018 = vunpack.c.l.b16 %v142
  %v1019 = vunpack.c.h.b16 %v142
  %v1020 = vunpack.c.l.b16 %v143
  %v1021 = vunpack.c.h.b16 %v143
  %v1022 = vunpack.c.l.b16 %v144
  %v1023 = vunpack.c.h.b16 %v144
  %v1024 = vunpack.c.l.b16 %v145
  %v1025 = vunpack.c.h.b16 %v145
  %v1026 = vunpack.c.l.b16 %v146
  %v1027 = vunpack.c.l.b16 %v147
  %v1028 = vunpack.c.h.b16 %v147
  %v1029 = vunpack.c.l.b16 %v148
  %v1030 = vunpack.c.h.b16 %v148
  %v1031 = vunpack.c.l.b16 %v149
  %v1032 = vunpack.c.h.b16 %v149
  %v1033 = vunpack.c.l.b16 %v150
  %v1034 = vunpack.c.h.b16 %v150
  %v1035 = vunpack.c.l.b16 %v151
  %v1036 = vunpack.c.h.b16 %v151
  %v1037 = vunpack.c.l.b16 %v152
  %v1038 = vunpack.c.h.b16 %v152
  %v1039 = vunpack.c.l.b16 %v153
  %v1040 = vunpack.c.h.b16 %v153
  %v1041 = vunpack.c.l.b16 %v154
  %v1042 = vunpack.c.h.b16 %v154
  %v1043 = vunpack.c.l.b16 %v155
  %v1044 = vunpack.c.h.b16 %v155
  %v1045 = vunpack.c.l.b16 %v156
  %v1046 = vunpack.c.h.b16 %v156
  %v1047 = vunpack.c.l.b16 %v157
  %v1048 = vunpack.c.h.b16 %v157
  %v1049 = vunpack.c.l.b16 %v158
  %v1050 = vunpack.c.l.b16 %v159
  %v1051 = vunpack.c.h.b16 %v159
  %v1052 = vunpack.c.l.b16 %v160
  %v1053 = vunpack.c.h.b16 %v160
  %v1054 = vunpack.c.l.b16 %v161
  %v1055 = vunpack.c.h.b16 %v161
  %v1056 = vunpack.c.l.b16 %v162
  %v1057 = vunpack.c.h.b16 %v162
  %v1058 = vunpack.c.l.b16 %v163
  %v1059 = vunpack.c.h.b16 %v163
  %v1060 = vunpack.c.l.b16 %v164
  %v1061 = vunpack.c.h.b16 %v164
  %v1062 = vunpack.c.l.b16 %v165
  %v1063 = vunpack.c.h.b16 %v165
  %v1064 = vunpack.c.l.b16 %v166
  %v1065 = vunpack.c.h.b16 %v166
  %v1066 = vunpack.c.l.b16 %v167
  %v1067 = vunpack.c.h.b16 %v167
  %v1068 = vunpack.c.l.b16 %v168
  %v1069 = vunpack.c.h.b16 %v168
  %v1070 = vunpack.c.l.b16 %v169
  %v1071 = vunpack.c.h.b16 %v169
  %v1072 = vunpack.c.l.b16 %v170
  %v1073 = vunpack.c.l.b16 %v171
  %v1074 = vunpack.c.h.b16 %v171
  %v1075 = vunpack.c.l.b16 %v172
  %v1076 = vunpack.c.h.b16 %v172
  %v1077 = vunpack.c.l.b16 %v173
  %v1078 = vunpack.c.h.b16 %v173
  %v1079 = vunpack.c.l.b16 %v174
  %v1080 = vunpack.c.h.b16 %v174
  %v1081 = vunpack.c.l.b16 %v175
  %v1082 = vunpack.c.h.b16 %v175
  %v1083 = vunpack.c.l.b16 %v176
  %v1084 = vunpack.c.h.b16 %v176
  %v1085 = vunpack.c.l.b16 %v177
  %v1086 = vunpack.c.h.b16 %v177
  %v1087 = vunpack.c.l.b16 %v178
  %v1088 = vunpack.c.h.b16 %v178
  %v1089 = vunpack.c.l.b16 %v179
  %v1090 = vunpack.c.h.b16 %v179
  %v1091 = vunpack.c.l.b16 %v180
  %v1092 = vunpack.c.h.b16 %v180
  %v1093 = vunpack.c.l.b16 %v181
  %v1094 = vunpack.c.h.b16 %v181
  %v1095 = vunpack.c.l.b16 %v182
  %v1096 = vunpack.c.l.b16 %v183
  %v1097 = vunpack.c.h.b16 %v183
  %v1098 = vunpack.c.l.b16 %v184
  %v1099 = vunpack.c.h.b16 %v184
  %v1100 = vunpack.c.l.b16 %v185
  %v1101 = vunpack.c.h.b16 %v185
  %v1102 = vunpack.c.l.b16 %v186
  %v1103 = vunpack.c.h.b16 %v186
  %v1104 = vunpack.c.l.b16 %v187
  %v1105 = vunpack.c.h.b16 %v187
  %v1106 = vunpack.c.l.b16 %v188
  %v1107 = vunpack.c.h.b16 %v188
  %v1108 = vunpack.c.l.b16 %v189
  %v1109 = vunpack.c.h.b16 %v189
  %v1110 = vunpack.c.l.b16 %v190
  %v1111 = vunpack.c.h.b16 %v190
  %v1112 = vunpack.c.l.b16 %v191
  %v1113 = vunpack.c.h.b16 %v191
  %v1114 = vunpack.c.l.b16 %v192
  %v1115 = vunpack.c.h.b16 %v192
  %v1116 = vunpack.c.l.b16 %v193
  %v1117 = vunpack.c.h.b16 %v193
  %v1118 = vunpack.c.l.b16 %v194
  %v1119 = vunpack.c.l.b16 %v195
  %v1120 = vunpack.c.h.b16 %v195
  %v1121 = vunpack.c.l.b16 %v196
  %v1122 = vunpack.c.h.b16 %v196
  %v1123 = vunpack.c.l.b16 %v197
  %v1124 = vunpack.c.h.b16 %v197
  %v1125 = vunpack.c.l.b16 %v198
  %v1126 = vunpack.c.h.b16 %v198
  %v1127 = vunpack.c.l.b16 %v199
  %v1128 = vunpack.c.h.b16 %v199
  %v1129 = vunpack.c.l.b16 %v200
  %v1130 = vunpack.c.h.b16 %v200
  %v1131 = vunpack.c.l.b16 %v201
  %v1132 = vunpack.c.h.b16 %v201
  %v1133 = vunpack.c.l.b16 %v202
  %v1134 = vunpack.c.h.b16 %v202
  %v1135 = vunpack.c.l.b16 %v203
  %v1136 = vunpack.c.h.b16 %v203
  %v1137 = vunpack.c.l.b16 %v204
  %v1138 = vunpack.c.h.b16 %v204
  %v1139 = vunpack.c.l.b16 %v205
  %v1140 = vunpack.c.h.b16 %v205
  %v1141 = vunpack.c.l.b16 %v206
  %v1142 = vpack.c.b16 %v797, %v774
  %v1143 = vpack.c.b16 %v798, %v775
  %v1144 = vpack.c.b16 %v799, %v776
  %v1145 = vpack.c.b16 %v800, %v777
  %v1146 = vpack.c.b16 %v801, %v778
  %v1147 = vpack.c.b16 %v802, %v779
  %v1148 = vpack.c.b16 %v803, %v780
  %v1149 = vpack.c.b16 %v804, %v781
  %v1150 = vpack.c.b16 %v805, %v782
  %v1151 = vpack.c.b16 %v806, %v783
  %v1152 = vpack.c.b16 %v807, %v784
  %v1153 = vpack.c.b16 %v808, %v785
  %v1154 = vpack.c.b16 %v809, %v786
  %v1155 = vpack.c.b16 %v810, %v787
  %v1156 = vpack.c.b16 %v811, %v788
  %v1157 = vpack.c.b16 %v812, %v789
  %v1158 = vpack.c.b16 %v813, %v790
  %v1159 = vpack.c.b16 %v814, %v791
  %v1160 = vpack.c.b16 %v815, %v792
  %v1161 = vpack.c.b16 %v816, %v793
  %v1162 = vpack.c.b16 %v817, %v794
  %v1163 = vpack.c.b16 %v818, %v795
  %v1164 = vpack.c.b16 %v819, %v796
  %v1165 = vpack.c.b16 %v843, %v820
  %v1166 = vpack.c.b16 %v844, %v821
  %v1167 = vpack.c.b16 %v845, %v822
  %v1168 = vpack.c.b16 %v846, %v823
  %v1169 = vpack.c.b16 %v847, %v824
  %v1170 = vpack.c.b16 %v848, %v825
  %v1171 = vpack.c.b16 %v849, %v826
  %v1172 = vpack.c.b16 %v850, %v827
  %v1173 = vpack.c.b16 %v851, %v828
  %v1174 = vpack.c.b16 %v852, %v829
  %v1175 = vpack.c.b16 %v853, %v830
  %v1176 = vpack.c.b16 %v854, %v831
  %v1177 = vpack.c.b16 %v855, %v832
  %v1178 = vpack.c.b16 %v856, %v833
  %v1179 = vpack.c.b16 %v857, %v834
  %v1180 = vpack.c.b16 %v858, %v835
  %v1181 = vpack.c.b16 %v859, %v836
  %v1182 = vpack.c.b16 %v860, %v837
  %v1183 = vpack.c.b16 %v861, %v838
  %v1184 = vpack.c.b16 %v862, %v839
  %v1185 = vpack.c.b16 %v863, %v840
  %v1186 = vpack.c.b16 %v864, %v841
  %v1187 = vpack.c.b16 %v865, %v842
  %v1188 = vpack.c.b16 %v889, %v866
  %v1189 = vpack.c.b16 %v890, %v867
  %v1190 = vpack.c.b16 %v891, %v868
  %v1191 = vpack.c.b16 %v892, %v869
  %v1192 = vpack.c.b16 %v893, %v870
  %v1193 = vpack.c.b16 %v894, %v871
  %v1194 = vpack.c.b16 %v895, %v872
  %v1195 = vpack.c.b16 %v896, %v873
  %v1196 = vpack.c.b16 %v897, %v874
  %v1197 = vpack.c.b16 %v898, %v875
  %v1198 = vpack.c.b16 %v899, %v876
  %v1199 = vpack.c.b16 %v900, %v877
  %v1200 = vpack.c.b16 %v901, %v878
  %v1201 = vpack.c.b16 %v902, %v879
  %v1202 = vpack.c.b16 %v903, %v880
  %v1203 = vpack.c.b16 %v904, %v881
  %v1204 = vpack.c.b16 %v905, %v882
  %v1205 = vpack.c.b16 %v906, %v883
  %v1206 = vpack.c.b16 %v907, %v884
  %v1207 = vpack.c.b16 %v908, %v885
  %v1208 = vpack.c.b16 %v909, %v886
  %v1209 = vpack.c.b16 %v910, %v887
  %v1210 = vpack.c.b16 %v911, %v888
  %v1211 = vpack.c.b16 %v935, %v912
  %v1212 = vpack.c.b16 %v936, %v913
  %v1213 = vpack.c.b16 %v937, %v914
  %v1214 = vpack.c.b16 %v938, %v915
  %v1215 = vpack.c.b16 %v939, %v916
  %v1216 = vpack.c.b16 %v940, %v917
  %v1217 = vpack.c.b16 %v941, %v918
  %v1218 = vpack.c.b16 %v942, %v919
  %v1219 = vpack.c.b16 %v943, %v920
  %v1220 = vpack.c.b16 %v944, %v921
  %v1221 = vpack.c.b16 %v945, %v922
  %v1222 = vpack.c.b16 %v946, %v923
  %v1223 = vpack.c.b16 %v947, %v924
  %v1224 = vpack.c.b16 %v948, %v925
  %v1225 = vpack.c.b16 %v949, %v926
  %v1226 = vpack.c.b16 %v950, %v927
  %v1227 = vpack.c.b16 %v951, %v928
  %v1228 = vpack.c.b16 %v952, %v929
  %v1229 = vpack.c.b16 %v953, %v930
  %v1230 = vpack.c.b16 %v954, %v931
  %v1231 = vpack.c.b16 %v955, %v932
  %v1232 = vpack.c.b16 %v956, %v933
  %v1233 = vpack.c.b16 %v957, %v934
  %v1234 = vpack.c.b16 %v981, %v958
  %v1235 = vpack.c.b16 %v982, %v959
  %v1236 = vpack.c.b16 %v983, %v960
  %v1237 = vpack.c.b16 %v984, %v961
  %v1238 = vpack.c.b16 %v985, %v962
  %v1239 = vpack.c.b16 %v986, %v963
  %v1240 = vpack.c.b16 %v987, %v964
  %v1241 = vpack.c.b16 %v988, %v965
  %v1242 = vpack.c.b16 %v989, %v966
  %v1243 = vpack.c.b16 %v990, %v967
  %v1244 = vpack.c.b16 %v991, %v968
  %v1245 = vpack.c.b16 %v992, %v969
  %v1246 = vpack.c.b16 %v993, %v970
  %v1247 = vpack.c.b16 %v994, %v971
  %v1248 = vpack.c.b16 %v995, %v972
  %v1249 = vpack.c.b16 %v996, %v973
  %v1250 = vpack.c.b16 %v997, %v974
  %v1251 = vpack.c.b16 %v998, %v975
  %v1252 = vpack.c.b16 %v999, %v976
  %v1253 = vpack.c.b16 %v1000, %v977
  %v1254 = vpack.c.b16 %v1001, %v978
  %v1255 = vpack.c.b16 %v1002, %v979
  %v1256 = vpack.c.b16 %v1003, %v980
  %v1257 = vpack.c.b16 %v1027, %v1004
  %v1258 = vpack.c.b16 %v1028, %v1005
  %v1259 = vpack.c.b16 %v1029, %v1006
  %v1260 = vpack.c.b16 %v1030, %v1007
  %v1261 = vpack.c.b16 %v1031, %v1008
  %v1262 = vpack.c.b16 %v1032, %v1009
  %v1263 = vpack.c.b16 %v1033, %v1010
  %v1264 = vpack.c.b16 %v1034, %v1011
  %v1265 = vpack.c.b16 %v1035, %v1012
  %v1266 = vpack.c.b16 %v1036, %v1013
  %v1267 = vpack.c.b16 %v1037, %v1014
  %v1268 = vpack.c.b16 %v1038, %v1015
  %v1269 = vpack.c.b16 %v1039, %v1016
  %v1270 = vpack.c.b16 %v1040, %v1017
  %v1271 = vpack.c.b16 %v1041, %v1018
  %v1272 = vpack.c.b16 %v1042, %v1019
  %v1273 = vpack.c.b16 %v1043, %v1020
  %v1274 = vpack.c.b16 %v1044, %v1021
  %v1275 = vpack.c.b16 %v1045, %v1022
  %v1276 = vpack.c.b16 %v1046, %v1023
  %v1277 = vpack.c.b16 %v1047, %v1024
  %v1278 = vpack.c.b16 %v1048, %v1025
  %v1279 = vpack.c.b16 %v1049, %v1026
  %v1280 = vpack.c.b16 %v1073, %v1050
  %v1281 = vpack.c.b16 %v1074, %v1051
  %v1282 = vpack.c.b16 %v1075, %v1052
  %v1283 = vpack.c.b16 %v1076, %v1053
  %v1284 = vpack.c.b16 %v1077, %v1054
  %v1285 = vpack.c.b16 %v1078, %v1055
  %v1286 = vpack.c.b16 %v1079, %v1056
  %v1287 = vpack.c.b16 %v1080, %v1057
  %v1288 = vpack.c.b16 %v1081, %v1058
  %v1289 = vpack.c.b16 %v1082, %v1059
  %v1290 = vpack.c.b16 %v1083, %v1060
  %v1291 = vpack.c.b16 %v1084, %v1061
  %v1292 = vpack.c.b16 %v1085, %v1062
  %v1293 = vpack.c.b16 %v1086, %v1063
  %v1294 = vpack.c.b16 %v1087, %v1064
  %v1295 = vpack.c.b16 %v1088, %v1065
  %v1296 = vpack.c.b16 %v1089, %v1066
  %v1297 = vpack.c.b16 %v1090, %v1067
  %v1298 = vpack.c.b16 %v1091, %v1068
  %v1299 = vpack.c.b16 %v1092, %v1069
  %v1300 = vpack.c.b16 %v1093, %v1070
  %v1301 = vpack.c.b16 %v1094, %v1071
  %v1302 = vpack.c.b16 %v1095, %v1072
  %v1303 = vpack.c.b16 %v1119, %v1096
  %v1304 = vpack.c.b16 %v1120, %v1097
  %v1305 = vpack.c.b16 %v1121, %v1098
  %v1306 = vpack.c.b16 %v1122, %v1099
  %v1307 = vpack.c.b16 %v1123, %v1100
  %v1308 = vpack.c.b16 %v1124, %v1101
  %v1309 = vpack.c.b16 %v1125, %v1102
  %v1310 = vpack.c.b16 %v1126, %v1103
  %v1311 = vpack.c.b16 %v1127, %v1104
  %v1312 = vpack.c.b16 %v1128, %v1105
  %v1313 = vpack.c.b16 %v1129, %v1106
  %v1314 = vpack.c.b16 %v1130, %v1107
  %v1315 = vpack.c.b16 %v1131, %v1108
  %v1316 = vpack.c.b16 %v1132, %v1109
  %v1317 = vpack.c.b16 %v1133, %v1110
  %v1318 = vpack.c.b16 %v1134, %v1111
  %v1319 = vpack.c.b16 %v1135, %v1112
  %v1320 = vpack.c.b16 %v1136, %v1113
  %v1321 = vpack.c.b16 %v1137, %v1114
  %v1322 = vpack.c.b16 %v1138, %v1115
  %v1323 = vpack.c.b16 %v1139, %v1116
  %v1324 = vpack.c.b16 %v1140, %v1117
  %v1325 = vpack.c.b16 %v1141, %v1118
  %v1878 = vunpack.c.l.b16 %v207
  %v1879 = vunpack.c.l.b16 %v208
  %v1880 = vunpack.c.l.b16 %v209
  %v1881 = vunpack.c.l.b16 %v210
  %v1882 = vunpack.c.l.b16 %v211
  %v1883 = vunpack.c.l.b16 %v212
  %v1884 = vunpack.c.l.b16 %v213
  %v1885 = vunpack.c.l.b16 %v214
  %v1886 = vunpack.c.l.b16 %v215
  %v1887 = vunpack.c.l.b16 %v216
  %v1888 = vunpack.c.l.b16 %v217
  %v1889 = vunpack.c.l.b16 %v218
  %v1890 = vunpack.c.l.b16 %v219
  %v1891 = vunpack.c.l.b16 %v220
  %v1892 = vunpack.c.l.b16 %v221
  %v1893 = vunpack.c.l.b16 %v222
  %v1894 = vunpack.c.l.b16 %v223
  %v1895 = vunpack.c.l.b16 %v224
  %v1896 = vunpack.c.l.b16 %v225
  %v1897 = vunpack.c.l.b16 %v226
  %v1898 = vunpack.c.l.b16 %v227
  %v1899 = vunpack.c.l.b16 %v228
  %v1900 = vunpack.c.l.b16 %v229
  %v1901 = vunpack.c.l.b16 %v230
  %v1902 = vunpack.c.l.b16 %v231
  %v1903 = vunpack.c.l.b16 %v232
  %v1904 = vunpack.c.l.b16 %v233
  %v1905 = vunpack.c.l.b16 %v234
  %v1906 = vunpack.c.l.b16 %v235
  %v1907 = vunpack.c.l.b16 %v236
  %v1908 = vunpack.c.l.b16 %v237
  %v1909 = vunpack.c.l.b16 %v238
  %v1910 = vunpack.c.l.b16 %v239
  %v1911 = vunpack.c.l.b16 %v240
  %v1912 = vunpack.c.l.b16 %v241
  %v1913 = vunpack.c.l.b16 %v242
  %v1914 = vunpack.c.l.b16 %v243
  %v1915 = vunpack.c.l.b16 %v244
  %v1916 = vunpack.c.l.b16 %v245
  %v1917 = vunpack.c.l.b16 %v246
  %v1918 = vunpack.c.l.b16 %v247
  %v1919 = vunpack.c.l.b16 %v248
  %v1920 = vunpack.c.l.b16 %v249
  %v1921 = vunpack.c.l.b16 %v250
  %v1922 = vunpack.c.l.b16 %v251
  %v1923 = vunpack.c.l.b16 %v252
  %v1924 = vunpack.c.l.b16 %v253
  %v1925 = vunpack.c.l.b16 %v254
  %v1926 = vunpack.c.l.b16 %v255
  %v1927 = vunpack.c.l.b16 %v256
  %v1928 = vunpack.c.l.b16 %v257
  %v1929 = vunpack.c.l.b16 %v258
  %v1930 = vunpack.c.l.b16 %v259
  %v1931 = vunpack.c.l.b16 %v260
  %v1932 = vunpack.c.l.b16 %v261
  %v1933 = vunpack.c.l.b16 %v262
  %v1934 = vunpack.c.l.b16 %v263
  %v1935 = vunpack.c.l.b16 %v264
  %v1936 = vunpack.c.l.b16 %v265
  %v1937 = vunpack.c.l.b16 %v266
  %v1938 = vunpack.c.l.b16 %v267
  %v1939 = vunpack.c.l.b16 %v268
  %v1940 = vunpack.c.l.b16 %v269
  %v1941 = vunpack.c.l.b16 %v270
  %v1942 = vunpack.c.l.b16 %v271
  %v1943 = vunpack.c.l.b16 %v272
  %v1944 = vunpack.c.l.b16 %v273
  %v1945 = vunpack.c.l.b16 %v274
  %v1946 = vunpack.c.l.b16 %v275
  %v1947 = vunpack.c.l.b16 %v276
  %v1948 = vunpack.c.l.b16 %v277
  %v1949 = vunpack.c.l.b16 %v278
  %v1950 = vunpack.c.l.b16 %v279
  %v1951 = vunpack.c.l.b16 %v280
  %v1952 = vunpack.c.l.b16 %v281
  %v1953 = vunpack.c.l.b16 %v282
  %v1954 = vunpack.c.l.b16 %v283
  %v1955 = vunpack.c.l.b16 %v284
  %v1956 = vunpack.c.l.b16 %v285
  %v1957 = vunpack.c.l.b16 %v286
  %v1958 = vunpack.c.l.b16 %v287
  %v1959 = vunpack.c.l.b16 %v288
  %v1960 = vunpack.c.l.b16 %v289
  %v1961 = vunpack.c.l.b16 %v290
  %v1962 = vunpack.c.l.b16 %v291
  %v1963 = vunpack.c.l.b16 %v292
  %v1964 = vunpack.c.l.b16 %v293
  %v1965 = vunpack.c.l.b16 %v294
  %v1966 = vunpack.c.l.b16 %v295
  %v1967 = vunpack.c.l.b16 %v296
  %v1968 = vunpack.c.l.b16 %v297
  %v1969 = vunpack.c.l.b16 %v298
  %v1970 = vunpack.c.l.b16 %v299
  %v1971 = vunpack.c.l.b16 %v300
  %v1972 = vunpack.c.l.b16 %v301
  %v1973 = vunpack.c.l.b16 %v302
  %v1974 = vunpack.c.l.b16 %v303
  %v1975 = vunpack.c.l.b16 %v304
  %v1976 = vunpack.c.l.b16 %v305
  %v1977 = vunpack.c.l.b16 %v306
  %v1978 = vunpack.c.l.b16 %v307
  %v1979 = vunpack.c.l.b16 %v308
  %v1980 = vunpack.c.l.b16 %v309
  %v1981 = vunpack.c.l.b16 %v310
  %v1982 = vunpack.c.l.b16 %v311
  %v1983 = vunpack.c.l.b16 %v312
  %v1984 = vunpack.c.l.b16 %v313
  %v1985 = vunpack.c.l.b16 %v314
  %v1986 = vunpack.c.l.b16 %v315
  %v1987 = vunpack.c.l.b16 %v316
  %v1988 = vunpack.c.l.b16 %v317
  %v1989 = vunpack.c.l.b16 %v318
  %v1990 = vunpack.c.l.b16 %v319
  %v1991 = vunpack.c.l.b16 %v320
  %v1992 = vunpack.c.l.b16 %v321
  %v1993 = vunpack.c.l.b16 %v322
  %v1994 = vunpack.c.l.b16 %v323
  %v1995 = vunpack.c.l.b16 %v324
  %v1996 = vunpack.c.l.b16 %v325
  %v1997 = vunpack.c.l.b16 %v326
  %v1998 = vunpack.c.l.b16 %v327
  %v1999 = vunpack.c.l.b16 %v328
  %v2000 = vunpack.c.l.b16 %v329
  %v2001 = vunpack.c.l.b16 %v330
  %v2002 = vunpack.c.l.b16 %v331
  %v2003 = vunpack.c.l.b16 %v332
  %v2004 = vunpack.c.l.b16 %v333
  %v2005 = vunpack.c.l.b16 %v334
  %v2006 = vunpack.c.l.b16 %v335
  %v2007 = vunpack.c.l.b16 %v336
  %v2008 = vunpack.c.l.b16 %v337
  %v2009 = vunpack.c.l.b16 %v338
  %v2010 = vunpack.c.l.b16 %v339
  %v2011 = vunpack.c.l.b16 %v340
  %v2012 = vunpack.c.l.b16 %v341
  %v2013 = vunpack.c.l.b16 %v342
  %v2014 = vunpack.c.l.b16 %v343
  %v2015 = vunpack.c.l.b16 %v344
  %v2016 = vunpack.c.l.b16 %v345
  %v2017 = vunpack.c.l.b16 %v346
  %v2018 = vunpack.c.l.b16 %v347
  %v2019 = vunpack.c.l.b16 %v348
  %v2020 = vunpack.c.l.b16 %v349
  %v2021 = vunpack.c.l.b16 %v350
  %v2022 = vunpack.c.l.b16 %v351
  %v2023 = vunpack.c.l.b16 %v352
  %v2024 = vunpack.c.l.b16 %v353
  %v2025 = vunpack.c.l.b16 %v354
  %v2026 = vunpack.c.l.b16 %v355
  %v2027 = vunpack.c.l.b16 %v356
  %v2028 = vunpack.c.l.b16 %v357
  %v2029 = vunpack.c.l.b16 %v358
  %v2030 = vunpack.c.l.b16 %v359
  %v2031 = vunpack.c.l.b16 %v360
  %v2032 = vunpack.c.l.b16 %v361
  %v2033 = vunpack.c.l.b16 %v362
  %v2034 = vunpack.c.l.b16 %v363
  %v2035 = vunpack.c.l.b16 %v364
  %v2036 = vunpack.c.l.b16 %v365
  %v2037 = vunpack.c.l.b16 %v366
  %v2038 = vunpack.c.l.b16 %v367
  %v2039 = vunpack.c.l.b16 %v368
  %v2040 = vunpack.c.l.b16 %v369
  %v2041 = vunpack.c.l.b16 %v370
  %v2042 = vunpack.c.l.b16 %v371
  %v2043 = vunpack.c.l.b16 %v372
  %v2044 = vunpack.c.l.b16 %v373
  %v2045 = vunpack.c.l.b16 %v374
  %v2046 = vunpack.c.l.b16 %v375
  %v2047 = vunpack.c.l.b16 %v376
  %v2048 = vunpack.c.l.b16 %v377
  %v2049 = vunpack.c.l.b16 %v378
  %v2050 = vunpack.c.l.b16 %v379
  %v2051 = vunpack.c.l.b16 %v380
  %v2052 = vunpack.c.l.b16 %v381
  %v2053 = vunpack.c.l.b16 %v382
  %v2054 = vunpack.c.l.b16 %v383
  %v2055 = vunpack.c.l.b16 %v384
  %v2056 = vunpack.c.l.b16 %v385
  %v2057 = vunpack.c.l.b16 %v386
  %v2058 = vunpack.c.l.b16 %v387
  %v2059 = vunpack.c.l.b16 %v388
  %v2060 = vunpack.c.l.b16 %v389
  %v2061 = vunpack.c.l.b16 %v390
  %v2062 = vunpack.c.l.b16 %v391
  %v2063 = vunpack.c.l.b16 %v392
  %v2064 = vunpack.c.l.b16 %v393
  %v2065 = vunpack.c.l.b16 %v394
  %v2066 = vunpack.c.l.b16 %v395
  %v2067 = vunpack.c.l.b16 %v396
  %v2068 = vunpack.c.l.b16 %v397
  %v2069 = vunpack.c.l.b16 %v398
  %v2070 = vunpack.c.l.b16 %v399
  %v2071 = vunpack.c.l.b16 %v400
  %v2072 = vunpack.c.l.b16 %v401
  %v2073 = vunpack.c.l.b16 %v402
  %v2074 = vunpack.c.l.b16 %v403
  %v2075 = vunpack.c.l.b16 %v404
  %v2076 = vunpack.c.l.b16 %v405
  %v2077 = vunpack.c.l.b16 %v406
  %v2078 = vunpack.c.l.b16 %v407
  %v2079 = vunpack.c.l.b16 %v408
  %v2080 = vunpack.c.l.b16 %v409
  %v2081 = vunpack.c.l.b16 %v410
  %v2082 = vunpack.c.l.b16 %v411
  %v2083 = vunpack.c.l.b16 %v412
  %v2084 = vunpack.c.l.b16 %v413
  %v2085 = vunpack.c.l.b16 %v414
  %v2086 = vunpack.c.l.b16 %v415
  %v2087 = vunpack.c.l.b16 %v416
  %v2088 = vunpack.c.l.b16 %v417
  %v2089 = vunpack.c.l.b16 %v418
  %v2090 = vunpack.c.l.b16 %v419
  %v2091 = vunpack.c.l.b16 %v420
  %v2092 = vunpack.c.l.b16 %v421
  %v2093 = vunpack.c.l.b16 %v422
  %v2094 = vunpack.c.l.b16 %v423
  %v2095 = vunpack.c.l.b16 %v424
  %v2096 = vunpack.c.l.b16 %v425
  %v2097 = vunpack.c.l.b16 %v426
  %v2098 = vunpack.c.l.b16 %v427
  %v2099 = vunpack.c.l.b16 %v428
  %v2100 = vunpack.c.l.b16 %v429
  %v2101 = vunpack.c.l.b16 %v430
  %v2102 = vunpack.c.l.b16 %v431
  %v2103 = vunpack.c.l.b16 %v432
  %v2104 = vunpack.c.l.b16 %v433
  %v2105 = vunpack.c.l.b16 %v434
  %v2106 = vunpack.c.l.b16 %v435
  %v2107 = vunpack.c.l.b16 %v436
  %v2108 = vunpack.c.l.b16 %v437
  %v2109 = vunpack.c.l.b16 %v438
  %v2110 = vunpack.c.l.b16 %v439
  %v2111 = vunpack.c.l.b16 %v440
  %v2112 = vunpack.c.l.b16 %v441
  %v2113 = vunpack.c.l.b16 %v442
  %v2114 = vunpack.c.l.b16 %v443
  %v2115 = vunpack.c.l.b16 %v444
  %v2116 = vunpack.c.l.b16 %v445
  %v2117 = vunpack.c.l.b16 %v446
  %v2118 = vunpack.c.l.b16 %v447
  %v2119 = vunpack.c.l.b16 %v448
  %v2120 = vunpack.c.l.b16 %v449
  %v2121 = vunpack.c.l.b16 %v450
  %v2122 = vunpack.c.l.b16 %v451
  %v2123 = vunpack.c.l.b16 %v452
  %v2124 = vunpack.c.l.b16 %v453
  %v2125 = vunpack.c.l.b16 %v454
  %v2126 = vunpack.c.l.b16 %v455
  %v2127 = vunpack.c.l.b16 %v456
  %v2128 = vunpack.c.l.b16 %v457
  %v2129 = vunpack.c.l.b16 %v458
  %v2130 = vunpack.c.l.b16 %v459
  %v2131 = vunpack.c.l.b16 %v460
  %v2132 = vunpack.c.l.b16 %v461
  %v2133 = vunpack.c.l.b16 %v462
  %v2134 = vunpack.c.l.b16 %v463
  %v2135 = vunpack.c.l.b16 %v464
  %v2136 = vunpack.c.l.b16 %v465
  %v2137 = vunpack.c.l.b16 %v466
  %v2138 = vunpack.c.l.b16 %v467
  %v2139 = vunpack.c.l.b16 %v468
  %v2140 = vunpack.c.l.b16 %v469
  %v2141 = vunpack.c.l.b16 %v470
  %v2142 = vunpack.c.l.b16 %v471
  %v2143 = vunpack.c.l.b16 %v472
  %v2144 = vunpack.c.l.b16 %v473
  %v2145 = vunpack.c.l.b16 %v474
  %v2146 = vunpack.c.l.b16 %v475
  %v2147 = vunpack.c.l.b16 %v476
  %v2148 = vunpack.c.l.b16 %v477
  %v2149 = vunpack.c.l.b16 %v478
  %v2150 = vunpack.c.l.b16 %v479
  %v2151 = vunpack.c.l.b16 %v480
  %v2152 = vunpack.c.l.b16 %v481
  %v2153 = vunpack.c.l.b16 %v482
  %v2154 = vunpack.c.l.b16 %v483
  %v2155 = vunpack.c.l.b16 %v484
  %v2156 = vunpack.c.l.b16 %v485
  %v2157 = vunpack.c.l.b16 %v486
  %v2158 = vunpack.c.l.b16 %v487
  %v2159 = vunpack.c.l.b16 %v488
  %v2160 = vunpack.c.l.b16 %v489
  %v2161 = vunpack.c.l.b16 %v490
  %v2162 = vunpack.c.l.b16 %v491
  %v2163 = vunpack.c.l.b16 %v492
  %v2164 = vunpack.c.l.b16 %v493
  %v2165 = vunpack.c.l.b16 %v494
  %v2166 = vunpack.c.l.b16 %v495
  %v2167 = vunpack.c.l.b16 %v496
  %v2168 = vunpack.c.l.b16 %v497
  %v2169 = vunpack.c.l.b16 %v498
  %v2170 = vunpack.c.l.b16 %v499
  %v2171 = vunpack.c.l.b16 %v500
  %v2172 = vunpack.c.l.b16 %v501
  %v2173 = vunpack.c.l.b16 %v502
  %v2174 = vunpack.c.l.b16 %v503
  %v2175 = vunpack.c.l.b16 %v504
  %v2176 = vunpack.c.l.b16 %v505
  %v2177 = vunpack.c.l.b16 %v506
  %v2178 = vunpack.c.l.b16 %v507
  %v2179 = vunpack.c.l.b16 %v508
  %v2180 = vunpack.c.l.b16 %v509
  %v2181 = vunpack.c.l.b16 %v510
  %v2182 = vunpack.c.l.b16 %v511
  %v2183 = vunpack.c.l.b16 %v512
  %v2184 = vunpack.c.l.b16 %v513
  %v2185 = vunpack.c.l.b16 %v514
  %v2186 = vunpack.c.l.b16 %v515
  %v2187 = vunpack.c.l.b16 %v516
  %v2188 = vunpack.c.l.b16 %v517
  %v2189 = vunpack.c.l.b16 %v518
  %v2190 = vunpack.c.l.b16 %v519
  %v2191 = vunpack.c.l.b16 %v520
  %v2192 = vunpack.c.l.b16 %v521
  %v2193 = vunpack.c.l.b16 %v522
  %v2194 = vunpack.c.l.b16 %v523
  %v2195 = vunpack.c.l.b16 %v524
  %v2196 = vunpack.c.l.b16 %v525
  %v2197 = vunpack.c.l.b16 %v526
  %v2198 = vunpack.c.l.b16 %v527
  %v2199 = vunpack.c.l.b16 %v528
  %v2200 = vunpack.c.l.b16 %v529
  %v2201 = vunpack.c.l.b16 %v530
  %v2202 = vunpack.c.l.b16 %v531
  %v2203 = vunpack.c.l.b16 %v532
  %v2204 = vunpack.c.l.b16 %v533
  %v2205 = vunpack.c.l.b16 %v534
  %v2206 = vunpack.c.l.b16 %v535
  %v2207 = vunpack.c.l.b16 %v536
  %v2208 = vunpack.c.l.b16 %v537
  %v2209 = vunpack.c.l.b16 %v538
  %v2210 = vunpack.c.l.b16 %v539
  %v2211 = vunpack.c.l.b16 %v540
  %v2212 = vunpack.c.l.b16 %v541
  %v2213 = vunpack.c.l.b16 %v542
  %v2214 = vunpack.c.l.b16 %v543
  %v2215 = vunpack.c.l.b16 %v544
  %v2216 = vunpack.c.l.b16 %v545
  %v2217 = vunpack.c.l.b16 %v546
  %v2218 = vunpack.c.l.b16 %v547
  %v2219 = vunpack.c.l.b16 %v548
  %v2220 = vunpack.c.l.b16 %v549
  %v2221 = vunpack.c.l.b16 %v550
  %v2222 = vunpack.c.l.b16 %v551
  %v2223 = vunpack.c.l.b16 %v552
  %v2224 = vunpack.c.l.b16 %v553
  %v2225 = vunpack.c.l.b16 %v554
  %v2226 = vunpack.c.l.b16 %v555
  %v2227 = vunpack.c.l.b16 %v556
  %v2228 = vunpack.c.l.b16 %v557
  %v2229 = vunpack.c.l.b16 %v558
  %v2230 = vunpack.c.l.b16 %v559
  %v2231 = vunpack.c.l.b16 %v560
  %v2232 = vunpack.c.l.b16 %v561
  %v2233 = vunpack.c.l.b16 %v562
  %v2234 = vunpack.c.l.b16 %v563
  %v2235 = vunpack.c.l.b16 %v564
  %v2236 = vunpack.c.l.b16 %v565
  %v2237 = vunpack.c.l.b16 %v566
  %v2238 = vunpack.c.l.b16 %v567
  %v2239 = vunpack.c.l.b16 %v568
  %v2240 = vunpack.c.l.b16 %v569
  %v2241 = vunpack.c.l.b16 %v570
  %v2242 = vunpack.c.l.b16 %v571
  %v2243 = vunpack.c.l.b16 %v572
  %v2244 = vunpack.c.l.b16 %v573
  %v2245 = vunpack.c.l.b16 %v574
  %v2246 = vpack.c.b16 %v1879, %v1878
  %v2247 = vpack.c.b16 %v1881, %v1880
  %v2248 = vpack.c.b16 %v1883, %v1882
  %v2249 = vpack.c.b16 %v1885, %v1884
  %v2250 = vpack.c.b16 %v1887, %v1886
  %v2251 = vpack.c.b16 %v1889, %v1888
  %v2252 = vpack.c.b16 %v1891, %v1890
  %v2253 = vpack.c.b16 %v1893, %v1892
  %v2254 = vpack.c.b16 %v1895, %v1894
  %v2255 = vpack.c.b16 %v1897, %v1896
  %v2256 = vpack.c.b16 %v1899, %v1898
  %v2257 = vpack.c.b16 %v1901, %v1900
  %v2258 = vpack.c.b16 %v1903, %v1902
  %v2259 = vpack.c.b16 %v1905, %v1904
  %v2260 = vpack.c.b16 %v1907, %v1906
  %v2261 = vpack.c.b16 %v1909, %v1908
  %v2262 = vpack.c.b16 %v1911, %v1910
  %v2263 = vpack.c.b16 %v1913, %v1912
  %v2264 = vpack.c.b16 %v1915, %v1914
  %v2265 = vpack.c.b16 %v1917, %v1916
  %v2266 = vpack.c.b16 %v1919, %v1918
  %v2267 = vpack.c.b16 %v1921, %v1920
  %v2268 = vpack.c.b16 %v1923, %v1922
  %v2269 = vpack.c.b16 %v1925, %v1924
  %v2270 = vpack.c.b16 %v1927, %v1926
  %v2271 = vpack.c.b16 %v1929, %v1928
  %v2272 = vpack.c.b16 %v1931, %v1930
  %v2273 = vpack.c.b16 %v1933, %v1932
  %v2274 = vpack.c.b16 %v1935, %v1934
  %v2275 = vpack.c.b16 %v1937, %v1936
  %v2276 = vpack.c.b16 %v1939, %v1938
  %v2277 = vpack.c.b16 %v1941, %v1940
  %v2278 = vpack.c.b16 %v1943, %v1942
  %v2279 = vpack.c.b16 %v1945, %v1944
  %v2280 = vpack.c.b16 %v1947, %v1946
  %v2281 = vpack.c.b16 %v1949, %v1948
  %v2282 = vpack.c.b16 %v1951, %v1950
  %v2283 = vpack.c.b16 %v1953, %v1952
  %v2284 = vpack.c.b16 %v1955, %v1954
  %v2285 = vpack.c.b16 %v1957, %v1956
  %v2286 = vpack.c.b16 %v1959, %v1958
  %v2287 = vpack.c.b16 %v1961, %v1960
  %v2288 = vpack.c.b16 %v1963, %v1962
  %v2289 = vpack.c.b16 %v1965, %v1964
  %v2290 = vpack.c.b16 %v1967, %v1966
  %v2291 = vpack.c.b16 %v1969, %v1968
  %v2292 = vpack.c.b16 %v1971, %v1970
  %v2293 = vpack.c.b16 %v1973, %v1972
  %v2294 = vpack.c.b16 %v1975, %v1974
  %v2295 = vpack.c.b16 %v1977, %v1976
  %v2296 = vpack.c.b16 %v1979, %v1978
  %v2297 = vpack.c.b16 %v1981, %v1980
  %v2298 = vpack.c.b16 %v1983, %v1982
  %v2299 = vpack.c.b16 %v1985, %v1984
  %v2300 = vpack.c.b16 %v1987, %v1986
  %v2301 = vpack.c.b16 %v1989, %v1988
  %v2302 = vpack.c.b16 %v1991, %v1990
  %v2303 = vpack.c.b16 %v1993, %v1992
  %v2304 = vpack.c.b16 %v1995, %v1994
  %v2305 = vpack.c.b16 %v1997, %v1996
  %v2306 = vpack.c.b16 %v1999, %v1998
  %v2307 = vpack.c.b16 %v2001, %v2000
  %v2308 = vpack.c.b16 %v2003, %v2002
  %v2309 = vpack.c.b16 %v2005, %v2004
  %v2310 = vpack.c.b16 %v2007, %v2006
  %v2311 = vpack.c.b16 %v2009, %v2008
  %v2312 = vpack.c.b16 %v2011, %v2010
  %v2313 = vpack.c.b16 %v2013, %v2012
  %v2314 = vpack.c.b16 %v2015, %v2014
  %v2315 = vpack.c.b16 %v2017, %v2016
  %v2316 = vpack.c.b16 %v2019, %v2018
  %v2317 = vpack.c.b16 %v2021, %v2020
  %v2318 = vpack.c.b16 %v2023, %v2022
  %v2319 = vpack.c.b16 %v2025, %v2024
  %v2320 = vpack.c.b16 %v2027, %v2026
  %v2321 = vpack.c.b16 %v2029, %v2028
  %v2322 = vpack.c.b16 %v2031, %v2030
  %v2323 = vpack.c.b16 %v2033, %v2032
  %v2324 = vpack.c.b16 %v2035, %v2034
  %v2325 = vpack.c.b16 %v2037, %v2036
  %v2326 = vpack.c.b16 %v2039, %v2038
  %v2327 = vpack.c.b16 %v2041, %v2040
  %v2328 = vpack.c.b16 %v2043, %v2042
  %v2329 = vpack.c.b16 %v2045, %v2044
  %v2330 = vpack.c.b16 %v2047, %v2046
  %v2331 = vpack.c.b16 %v2049, %v2048
  %v2332 = vpack.c.b16 %v2051, %v2050
  %v2333 = vpack.c.b16 %v2053, %v2052
  %v2334 = vpack.c.b16 %v2055, %v2054
  %v2335 = vpack.c.b16 %v2057, %v2056
  %v2336 = vpack.c.b16 %v2059, %v2058
  %v2337 = vpack.c.b16 %v2061, %v2060
  %v2338 = vpack.c.b16 %v2063, %v2062
  %v2339 = vpack.c.b16 %v2065, %v2064
  %v2340 = vpack.c.b16 %v2067, %v2066
  %v2341 = vpack.c.b16 %v2069, %v2068
  %v2342 = vpack.c.b16 %v2071, %v2070
  %v2343 = vpack.c.b16 %v2073, %v2072
  %v2344 = vpack.c.b16 %v2075, %v2074
  %v2345 = vpack.c.b16 %v2077, %v2076
  %v2346 = vpack.c.b16 %v2079, %v2078
  %v2347 = vpack.c.b16 %v2081, %v2080
  %v2348 = vpack.c.b16 %v2083, %v2082
  %v2349 = vpack.c.b16 %v2085, %v2084
  %v2350 = vpack.c.b16 %v2087, %v2086
  %v2351 = vpack.c.b16 %v2089, %v2088
  %v2352 = vpack.c.b16 %v2091, %v2090
  %v2353 = vpack.c.b16 %v2093, %v2092
  %v2354 = vpack.c.b16 %v2095, %v2094
  %v2355 = vpack.c.b16 %v2097, %v2096
  %v2356 = vpack.c.b16 %v2099, %v2098
  %v2357 = vpack.c.b16 %v2101, %v2100
  %v2358 = vpack.c.b16 %v2103, %v2102
  %v2359 = vpack.c.b16 %v2105, %v2104
  %v2360 = vpack.c.b16 %v2107, %v2106
  %v2361 = vpack.c.b16 %v2109, %v2108
  %v2362 = vpack.c.b16 %v2111, %v2110
  %v2363 = vpack.c.b16 %v2113, %v2112
  %v2364 = vpack.c.b16 %v2115, %v2114
  %v2365 = vpack.c.b16 %v2117, %v2116
  %v2366 = vpack.c.b16 %v2119, %v2118
  %v2367 = vpack.c.b16 %v2121, %v2120
  %v2368 = vpack.c.b16 %v2123, %v2122
  %v2369 = vpack.c.b16 %v2125, %v2124
  %v2370 = vpack.c.b16 %v2127, %v2126
  %v2371 = vpack.c.b16 %v2129, %v2128
  %v2372 = vpack.c.b16 %v2131, %v2130
  %v2373 = vpack.c.b16 %v2133, %v2132
  %v2374 = vpack.c.b16 %v2135, %v2134
  %v2375 = vpack.c.b16 %v2137, %v2136
  %v2376 = vpack.c.b16 %v2139, %v2138
  %v2377 = vpack.c.b16 %v2141, %v2140
  %v2378 = vpack.c.b16 %v2143, %v2142
  %v2379 = vpack.c.b16 %v2145, %v2144
  %v2380 = vpack.c.b16 %v2147, %v2146
  %v2381 = vpack.c.b16 %v2149, %v2148
  %v2382 = vpack.c.b16 %v2151, %v2150
  %v2383 = vpack.c.b16 %v2153, %v2152
  %v2384 = vpack.c.b16 %v2155, %v2154
  %v2385 = vpack.c.b16 %v2157, %v2156
  %v2386 = vpack.c.b16 %v2159, %v2158
  %v2387 = vpack.c.b16 %v2161, %v2160
  %v2388 = vpack.c.b16 %v2163, %v2162
  %v2389 = vpack.c.b16 %v2165, %v2164
  %v2390 = vpack.c.b16 %v2167, %v2166
  %v2391 = vpack.c.b16 %v2169, %v2168
  %v2392 = vpack.c.b16 %v2171, %v2170
  %v2393 = vpack.c.b16 %v2173, %v2172
  %v2394 = vpack.c.b16 %v2175, %v2174
  %v2395 = vpack.c.b16 %v2177, %v2176
  %v2396 = vpack.c.b16 %v2179, %v2178
  %v2397 = vpack.c.b16 %v2181, %v2180
  %v2398 = vpack.c.b16 %v2183, %v2182
  %v2399 = vpack.c.b16 %v2185, %v2184
  %v2400 = vpack.c.b16 %v2187, %v2186
  %v2401 = vpack.c.b16 %v2189, %v2188
  %v2402 = vpack.c.b16 %v2191, %v2190
  %v2403 = vpack.c.b16 %v2193, %v2192
  %v2404 = vpack.c.b16 %v2195, %v2194
  %v2405 = vpack.c.b16 %v2197, %v2196
  %v2406 = vpack.c.b16 %v2199, %v2198
  %v2407 = vpack.c.b16 %v2201, %v2200
  %v2408 = vpack.c.b16 %v2203, %v2202
  %v2409 = vpack.c.b16 %v2205, %v2204
  %v2410 = vpack.c.b16 %v2207, %v2206
  %v2411 = vpack.c.b16 %v2209, %v2208
  %v2412 = vpack.c.b16 %v2211, %v2210
  %v2413 = vpack.c.b16 %v2213, %v2212
  %v2414 = vpack.c.b16 %v2215, %v2214
  %v2415 = vpack.c.b16 %v2217, %v2216
  %v2416 = vpack.c.b16 %v2219, %v2218
  %v2417 = vpack.c.b16 %v2221, %v2220
  %v2418 = vpack.c.b16 %v2223, %v2222
  %v2419 = vpack.c.b16 %v2225, %v2224
  %v2420 = vpack.c.b16 %v2227, %v2226
  %v2421 = vpack.c.b16 %v2229, %v2228
  %v2422 = vpack.c.b16 %v2231, %v2230
  %v2423 = vpack.c.b16 %v2233, %v2232
  %v2424 = vpack.c.b16 %v2235, %v2234
  %v2425 = vpack.c.b16 %v2237, %v2236
  %v2426 = vpack.c.b16 %v2239, %v2238
  %v2427 = vpack.c.b16 %v2241, %v2240
  %v2428 = vpack.c.b16 %v2243, %v2242
  %v2429 = vpack.c.b16 %v2245, %v2244
  %2614 = vmatprep.subr.bf16.mxu0 0
  %2615 = vmatpush1.bf16.msra.mxu0 %v2253
  %2616 = vmatprep.subr.bf16.mxu0 0
  %2617 = vmatpush1.bf16.msra.mxu0 %v2252
  %2618 = vmatprep.subr.bf16.mxu0 0
  %2619 = vmatpush1.bf16.msra.mxu0 %v2251
  %2620 = vmatprep.subr.bf16.mxu0 0
  %2621 = vmatpush1.bf16.msra.mxu0 %v2250
  %2622 = vmatprep.subr.bf16.mxu0 0
  %2623 = vmatpush1.bf16.msra.mxu0 %v2249
  %2624 = vmatprep.subr.bf16.mxu0 0
  %2625 = vmatpush1.bf16.msra.mxu0 %v2248
  %2626 = vmatprep.subr.bf16.mxu0 0
  %2627 = vmatpush1.bf16.msra.mxu0 %v2247
  %2628 = vmatprep.subr.bf16.mxu0 0
  %2629 = vmatpush1.bf16.msra.mxu0 %v2246
  %2630 = vmatprep.subr.bf16.mxu0 0
  %2631 = vmatpush2.bf16.msra.mxu0 %v2261
  %2632 = vmatprep.subr.bf16.mxu0 0
  %2633 = vmatpush2.bf16.msra.mxu0 %v2260
  %2634 = vmatprep.subr.bf16.mxu0 0
  %2635 = vmatpush2.bf16.msra.mxu0 %v2259
  %2636 = vmatprep.subr.bf16.mxu0 0
  %2637 = vmatpush2.bf16.msra.mxu0 %v2258
  %2638 = vmatprep.subr.bf16.mxu0 0
  %2639 = vmatpush2.bf16.msra.mxu0 %v2257
  %2640 = vmatprep.subr.bf16.mxu0 0
  %2641 = vmatpush2.bf16.msra.mxu0 %v2256
  %2642 = vmatprep.subr.bf16.mxu0 0
  %2643 = vmatpush2.bf16.msra.mxu0 %v2255
  %2644 = vmatprep.subr.bf16.mxu0 0
  %2645 = vmatpush2.bf16.msra.mxu0 %v2254
  %2646 = vmatprep.mubr.bf16.mxu0 %v1143
  %2647 = vmatmul.mubr.bf16.gmra.mxu0 %v1142
  %v2648 = vpop.f32.mrf.mxu0
  %v2649 = vadd.f32 %v580, %v2648
  %v2650 = vpop.f32.mrf.mxu0
  %v2651 = vpop.f32.mrf.mxu0
  %v2652 = vadd.f32 %v580, %v2651
  %v2653 = vpop.f32.mrf.mxu0
  %2654 = vmatprep.mubr.bf16.mxu0 %v1166
  %2655 = vmatmul.mubr.bf16.gmra.mxu0 %v1165
  %v2656 = vpop.f32.mrf.mxu0
  %v2657 = vadd.f32 %v580, %v2656
  %v2658 = vpop.f32.mrf.mxu0
  %v2659 = vpop.f32.mrf.mxu0
  %v2660 = vadd.f32 %v580, %v2659
  %v2661 = vpop.f32.mrf.mxu0
  %2662 = vmatprep.mubr.bf16.mxu0 %v1189
  %2663 = vmatmul.mubr.bf16.gmra.mxu0 %v1188
  %v2664 = vpop.f32.mrf.mxu0
  %v2665 = vadd.f32 %v580, %v2664
  %v2666 = vpop.f32.mrf.mxu0
  %v2667 = vpop.f32.mrf.mxu0
  %v2668 = vadd.f32 %v580, %v2667
  %v2669 = vpop.f32.mrf.mxu0
  %2670 = vmatprep.mubr.bf16.mxu0 %v1212
  %2671 = vmatmul.mubr.bf16.gmra.mxu0 %v1211
  %v2672 = vpop.f32.mrf.mxu0
  %v2673 = vadd.f32 %v580, %v2672
  %v2674 = vpop.f32.mrf.mxu0
  %v2675 = vpop.f32.mrf.mxu0
  %v2676 = vadd.f32 %v580, %v2675
  %v2677 = vpop.f32.mrf.mxu0
  %2678 = vmatprep.mubr.bf16.mxu0 %v1235
  %2679 = vmatmul.mubr.bf16.gmra.mxu0 %v1234
  %v2680 = vpop.f32.mrf.mxu0
  %v2681 = vadd.f32 %v580, %v2680
  %v2682 = vpop.f32.mrf.mxu0
  %v2683 = vpop.f32.mrf.mxu0
  %v2684 = vadd.f32 %v580, %v2683
  %v2685 = vpop.f32.mrf.mxu0
  %2686 = vmatprep.mubr.bf16.mxu0 %v1258
  %2687 = vmatmul.mubr.bf16.gmra.mxu0 %v1257
  %v2688 = vpop.f32.mrf.mxu0
  %v2689 = vadd.f32 %v580, %v2688
  %v2690 = vpop.f32.mrf.mxu0
  %v2691 = vpop.f32.mrf.mxu0
  %v2692 = vadd.f32 %v580, %v2691
  %v2693 = vpop.f32.mrf.mxu0
  %2694 = vmatprep.mubr.bf16.mxu0 %v1281
  %2695 = vmatmul.mubr.bf16.gmra.mxu0 %v1280
  %v2696 = vpop.f32.mrf.mxu0
  %v2697 = vadd.f32 %v580, %v2696
  %v2698 = vpop.f32.mrf.mxu0
  %v2699 = vpop.f32.mrf.mxu0
  %v2700 = vadd.f32 %v580, %v2699
  %v2701 = vpop.f32.mrf.mxu0
  %2702 = vmatprep.mubr.bf16.mxu0 %v1304
  %2703 = vmatmul.mubr.bf16.gmra.mxu0 %v1303
  %v2704 = vpop.f32.mrf.mxu0
  %v2705 = vadd.f32 %v580, %v2704
  %v2706 = vpop.f32.mrf.mxu0
  %v2707 = vpop.f32.mrf.mxu0
  %v2708 = vadd.f32 %v580, %v2707
  %v2709 = vpop.f32.mrf.mxu0
  %2710 = vdwg.mxu0
  %2711 = vmatprep.subr.bf16.mxu0 0
  %2712 = vmatpush1.bf16.msra.mxu0 %v2269
  %2713 = vmatprep.subr.bf16.mxu0 0
  %2714 = vmatpush1.bf16.msra.mxu0 %v2268
  %2715 = vmatprep.subr.bf16.mxu0 0
  %2716 = vmatpush1.bf16.msra.mxu0 %v2267
  %2717 = vmatprep.subr.bf16.mxu0 0
  %2718 = vmatpush1.bf16.msra.mxu0 %v2266
  %2719 = vmatprep.subr.bf16.mxu0 0
  %2720 = vmatpush1.bf16.msra.mxu0 %v2265
  %2721 = vmatprep.subr.bf16.mxu0 0
  %2722 = vmatpush1.bf16.msra.mxu0 %v2264
  %2723 = vmatprep.subr.bf16.mxu0 0
  %2724 = vmatpush1.bf16.msra.mxu0 %v2263
  %2725 = vmatprep.subr.bf16.mxu0 0
  %2726 = vmatpush1.bf16.msra.mxu0 %v2262
  %2727 = vmatprep.subr.bf16.mxu0 0
  %2728 = vmatpush2.bf16.msra.mxu0 %v2277
  %2729 = vmatprep.subr.bf16.mxu0 0
  %2730 = vmatpush2.bf16.msra.mxu0 %v2276
  %2731 = vmatprep.subr.bf16.mxu0 0
  %2732 = vmatpush2.bf16.msra.mxu0 %v2275
  %2733 = vmatprep.subr.bf16.mxu0 0
  %2734 = vmatpush2.bf16.msra.mxu0 %v2274
  %2735 = vmatprep.subr.bf16.mxu0 0
  %2736 = vmatpush2.bf16.msra.mxu0 %v2273
  %2737 = vmatprep.subr.bf16.mxu0 0
  %2738 = vmatpush2.bf16.msra.mxu0 %v2272
  %2739 = vmatprep.subr.bf16.mxu0 0
  %2740 = vmatpush2.bf16.msra.mxu0 %v2271
  %2741 = vmatprep.subr.bf16.mxu0 0
  %2742 = vmatpush2.bf16.msra.mxu0 %v2270
  %2743 = vmatprep.mubr.bf16.mxu0 %v1145
  %2744 = vmatmul.mubr.bf16.gmra.mxu0 %v1144
  %v2745 = vpop.f32.mrf.mxu0
  %v2746 = vadd.f32 %v2649, %v2745
  %v2747 = vpop.f32.mrf.mxu0
  %v2748 = vpop.f32.mrf.mxu0
  %v2749 = vadd.f32 %v2652, %v2748
  %v2750 = vpop.f32.mrf.mxu0
  %2751 = vmatprep.mubr.bf16.mxu0 %v1168
  %2752 = vmatmul.mubr.bf16.gmra.mxu0 %v1167
  %v2753 = vpop.f32.mrf.mxu0
  %v2754 = vadd.f32 %v2657, %v2753
  %v2755 = vpop.f32.mrf.mxu0
  %v2756 = vpop.f32.mrf.mxu0
  %v2757 = vadd.f32 %v2660, %v2756
  %v2758 = vpop.f32.mrf.mxu0
  %2759 = vmatprep.mubr.bf16.mxu0 %v1191
  %2760 = vmatmul.mubr.bf16.gmra.mxu0 %v1190
  %v2761 = vpop.f32.mrf.mxu0
  %v2762 = vadd.f32 %v2665, %v2761
  %v2763 = vpop.f32.mrf.mxu0
  %v2764 = vpop.f32.mrf.mxu0
  %v2765 = vadd.f32 %v2668, %v2764
  %v2766 = vpop.f32.mrf.mxu0
  %2767 = vmatprep.mubr.bf16.mxu0 %v1214
  %2768 = vmatmul.mubr.bf16.gmra.mxu0 %v1213
  %v2769 = vpop.f32.mrf.mxu0
  %v2770 = vadd.f32 %v2673, %v2769
  %v2771 = vpop.f32.mrf.mxu0
  %v2772 = vpop.f32.mrf.mxu0
  %v2773 = vadd.f32 %v2676, %v2772
  %v2774 = vpop.f32.mrf.mxu0
  %2775 = vmatprep.mubr.bf16.mxu0 %v1237
  %2776 = vmatmul.mubr.bf16.gmra.mxu0 %v1236
  %v2777 = vpop.f32.mrf.mxu0
  %v2778 = vadd.f32 %v2681, %v2777
  %v2779 = vpop.f32.mrf.mxu0
  %v2780 = vpop.f32.mrf.mxu0
  %v2781 = vadd.f32 %v2684, %v2780
  %v2782 = vpop.f32.mrf.mxu0
  %2783 = vmatprep.mubr.bf16.mxu0 %v1260
  %2784 = vmatmul.mubr.bf16.gmra.mxu0 %v1259
  %v2785 = vpop.f32.mrf.mxu0
  %v2786 = vadd.f32 %v2689, %v2785
  %v2787 = vpop.f32.mrf.mxu0
  %v2788 = vpop.f32.mrf.mxu0
  %v2789 = vadd.f32 %v2692, %v2788
  %v2790 = vpop.f32.mrf.mxu0
  %2791 = vmatprep.mubr.bf16.mxu0 %v1283
  %2792 = vmatmul.mubr.bf16.gmra.mxu0 %v1282
  %v2793 = vpop.f32.mrf.mxu0
  %v2794 = vadd.f32 %v2697, %v2793
  %v2795 = vpop.f32.mrf.mxu0
  %v2796 = vpop.f32.mrf.mxu0
  %v2797 = vadd.f32 %v2700, %v2796
  %v2798 = vpop.f32.mrf.mxu0
  %2799 = vmatprep.mubr.bf16.mxu0 %v1306
  %2800 = vmatmul.mubr.bf16.gmra.mxu0 %v1305
  %v2801 = vpop.f32.mrf.mxu0
  %v2802 = vadd.f32 %v2705, %v2801
  %v2803 = vpop.f32.mrf.mxu0
  %v2804 = vpop.f32.mrf.mxu0
  %v2805 = vadd.f32 %v2708, %v2804
  %v2806 = vpop.f32.mrf.mxu0
  %2807 = vdwg.mxu0
  %2808 = vmatprep.subr.bf16.mxu0 0
  %2809 = vmatpush1.bf16.msra.mxu0 %v2285
  %2810 = vmatprep.subr.bf16.mxu0 0
  %2811 = vmatpush1.bf16.msra.mxu0 %v2284
  %2812 = vmatprep.subr.bf16.mxu0 0
  %2813 = vmatpush1.bf16.msra.mxu0 %v2283
  %2814 = vmatprep.subr.bf16.mxu0 0
  %2815 = vmatpush1.bf16.msra.mxu0 %v2282
  %2816 = vmatprep.subr.bf16.mxu0 0
  %2817 = vmatpush1.bf16.msra.mxu0 %v2281
  %2818 = vmatprep.subr.bf16.mxu0 0
  %2819 = vmatpush1.bf16.msra.mxu0 %v2280
  %2820 = vmatprep.subr.bf16.mxu0 0
  %2821 = vmatpush1.bf16.msra.mxu0 %v2279
  %2822 = vmatprep.subr.bf16.mxu0 0
  %2823 = vmatpush1.bf16.msra.mxu0 %v2278
  %2824 = vmatprep.subr.bf16.mxu0 0
  %2825 = vmatpush2.bf16.msra.mxu0 %v2293
  %2826 = vmatprep.subr.bf16.mxu0 0
  %2827 = vmatpush2.bf16.msra.mxu0 %v2292
  %2828 = vmatprep.subr.bf16.mxu0 0
  %2829 = vmatpush2.bf16.msra.mxu0 %v2291
  %2830 = vmatprep.subr.bf16.mxu0 0
  %2831 = vmatpush2.bf16.msra.mxu0 %v2290
  %2832 = vmatprep.subr.bf16.mxu0 0
  %2833 = vmatpush2.bf16.msra.mxu0 %v2289
  %2834 = vmatprep.subr.bf16.mxu0 0
  %2835 = vmatpush2.bf16.msra.mxu0 %v2288
  %2836 = vmatprep.subr.bf16.mxu0 0
  %2837 = vmatpush2.bf16.msra.mxu0 %v2287
  %2838 = vmatprep.subr.bf16.mxu0 0
  %2839 = vmatpush2.bf16.msra.mxu0 %v2286
  %2840 = vmatprep.mubr.bf16.mxu0 %v1147
  %2841 = vmatmul.mubr.bf16.gmra.mxu0 %v1146
  %v2842 = vpop.f32.mrf.mxu0
  %v2843 = vadd.f32 %v2746, %v2842
  %v2844 = vpop.f32.mrf.mxu0
  %v2845 = vpop.f32.mrf.mxu0
  %v2846 = vadd.f32 %v2749, %v2845
  %v2847 = vpop.f32.mrf.mxu0
  %2848 = vmatprep.mubr.bf16.mxu0 %v1170
  %2849 = vmatmul.mubr.bf16.gmra.mxu0 %v1169
  %v2850 = vpop.f32.mrf.mxu0
  %v2851 = vadd.f32 %v2754, %v2850
  %v2852 = vpop.f32.mrf.mxu0
  %v2853 = vpop.f32.mrf.mxu0
  %v2854 = vadd.f32 %v2757, %v2853
  %v2855 = vpop.f32.mrf.mxu0
  %2856 = vmatprep.mubr.bf16.mxu0 %v1193
  %2857 = vmatmul.mubr.bf16.gmra.mxu0 %v1192
  %v2858 = vpop.f32.mrf.mxu0
  %v2859 = vadd.f32 %v2762, %v2858
  %v2860 = vpop.f32.mrf.mxu0
  %v2861 = vpop.f32.mrf.mxu0
  %v2862 = vadd.f32 %v2765, %v2861
  %v2863 = vpop.f32.mrf.mxu0
  %2864 = vmatprep.mubr.bf16.mxu0 %v1216
  %2865 = vmatmul.mubr.bf16.gmra.mxu0 %v1215
  %v2866 = vpop.f32.mrf.mxu0
  %v2867 = vadd.f32 %v2770, %v2866
  %v2868 = vpop.f32.mrf.mxu0
  %v2869 = vpop.f32.mrf.mxu0
  %v2870 = vadd.f32 %v2773, %v2869
  %v2871 = vpop.f32.mrf.mxu0
  %2872 = vmatprep.mubr.bf16.mxu0 %v1239
  %2873 = vmatmul.mubr.bf16.gmra.mxu0 %v1238
  %v2874 = vpop.f32.mrf.mxu0
  %v2875 = vadd.f32 %v2778, %v2874
  %v2876 = vpop.f32.mrf.mxu0
  %v2877 = vpop.f32.mrf.mxu0
  %v2878 = vadd.f32 %v2781, %v2877
  %v2879 = vpop.f32.mrf.mxu0
  %2880 = vmatprep.mubr.bf16.mxu0 %v1262
  %2881 = vmatmul.mubr.bf16.gmra.mxu0 %v1261
  %v2882 = vpop.f32.mrf.mxu0
  %v2883 = vadd.f32 %v2786, %v2882
  %v2884 = vpop.f32.mrf.mxu0
  %v2885 = vpop.f32.mrf.mxu0
  %v2886 = vadd.f32 %v2789, %v2885
  %v2887 = vpop.f32.mrf.mxu0
  %2888 = vmatprep.mubr.bf16.mxu0 %v1285
  %2889 = vmatmul.mubr.bf16.gmra.mxu0 %v1284
  %v2890 = vpop.f32.mrf.mxu0
  %v2891 = vadd.f32 %v2794, %v2890
  %v2892 = vpop.f32.mrf.mxu0
  %v2893 = vpop.f32.mrf.mxu0
  %v2894 = vadd.f32 %v2797, %v2893
  %v2895 = vpop.f32.mrf.mxu0
  %2896 = vmatprep.mubr.bf16.mxu0 %v1308
  %2897 = vmatmul.mubr.bf16.gmra.mxu0 %v1307
  %v2898 = vpop.f32.mrf.mxu0
  %v2899 = vadd.f32 %v2802, %v2898
  %v2900 = vpop.f32.mrf.mxu0
  %v2901 = vpop.f32.mrf.mxu0
  %v2902 = vadd.f32 %v2805, %v2901
  %v2903 = vpop.f32.mrf.mxu0
  %2904 = vdwg.mxu0
  %2905 = vmatprep.subr.bf16.mxu0 0
  %2906 = vmatpush1.bf16.msra.mxu0 %v2301
  %2907 = vmatprep.subr.bf16.mxu0 0
  %2908 = vmatpush1.bf16.msra.mxu0 %v2300
  %2909 = vmatprep.subr.bf16.mxu0 0
  %2910 = vmatpush1.bf16.msra.mxu0 %v2299
  %2911 = vmatprep.subr.bf16.mxu0 0
  %2912 = vmatpush1.bf16.msra.mxu0 %v2298
  %2913 = vmatprep.subr.bf16.mxu0 0
  %2914 = vmatpush1.bf16.msra.mxu0 %v2297
  %2915 = vmatprep.subr.bf16.mxu0 0
  %2916 = vmatpush1.bf16.msra.mxu0 %v2296
  %2917 = vmatprep.subr.bf16.mxu0 0
  %2918 = vmatpush1.bf16.msra.mxu0 %v2295
  %2919 = vmatprep.subr.bf16.mxu0 0
  %2920 = vmatpush1.bf16.msra.mxu0 %v2294
  %2921 = vmatprep.subr.bf16.mxu0 0
  %2922 = vmatpush2.bf16.msra.mxu0 %v2309
  %2923 = vmatprep.subr.bf16.mxu0 0
  %2924 = vmatpush2.bf16.msra.mxu0 %v2308
  %2925 = vmatprep.subr.bf16.mxu0 0
  %2926 = vmatpush2.bf16.msra.mxu0 %v2307
  %2927 = vmatprep.subr.bf16.mxu0 0
  %2928 = vmatpush2.bf16.msra.mxu0 %v2306
  %2929 = vmatprep.subr.bf16.mxu0 0
  %2930 = vmatpush2.bf16.msra.mxu0 %v2305
  %2931 = vmatprep.subr.bf16.mxu0 0
  %2932 = vmatpush2.bf16.msra.mxu0 %v2304
  %2933 = vmatprep.subr.bf16.mxu0 0
  %2934 = vmatpush2.bf16.msra.mxu0 %v2303
  %2935 = vmatprep.subr.bf16.mxu0 0
  %2936 = vmatpush2.bf16.msra.mxu0 %v2302
  %2937 = vmatprep.mubr.bf16.mxu0 %v1149
  %2938 = vmatmul.mubr.bf16.gmra.mxu0 %v1148
  %v2939 = vpop.f32.mrf.mxu0
  %v2940 = vadd.f32 %v2843, %v2939
  %v2941 = vpop.f32.mrf.mxu0
  %v2942 = vpop.f32.mrf.mxu0
  %v2943 = vadd.f32 %v2846, %v2942
  %v2944 = vpop.f32.mrf.mxu0
  %2945 = vmatprep.mubr.bf16.mxu0 %v1172
  %2946 = vmatmul.mubr.bf16.gmra.mxu0 %v1171
  %v2947 = vpop.f32.mrf.mxu0
  %v2948 = vadd.f32 %v2851, %v2947
  %v2949 = vpop.f32.mrf.mxu0
  %v2950 = vpop.f32.mrf.mxu0
  %v2951 = vadd.f32 %v2854, %v2950
  %v2952 = vpop.f32.mrf.mxu0
  %2953 = vmatprep.mubr.bf16.mxu0 %v1195
  %2954 = vmatmul.mubr.bf16.gmra.mxu0 %v1194
  %v2955 = vpop.f32.mrf.mxu0
  %v2956 = vadd.f32 %v2859, %v2955
  %v2957 = vpop.f32.mrf.mxu0
  %v2958 = vpop.f32.mrf.mxu0
  %v2959 = vadd.f32 %v2862, %v2958
  %v2960 = vpop.f32.mrf.mxu0
  %2961 = vmatprep.mubr.bf16.mxu0 %v1218
  %2962 = vmatmul.mubr.bf16.gmra.mxu0 %v1217
  %v2963 = vpop.f32.mrf.mxu0
  %v2964 = vadd.f32 %v2867, %v2963
  %v2965 = vpop.f32.mrf.mxu0
  %v2966 = vpop.f32.mrf.mxu0
  %v2967 = vadd.f32 %v2870, %v2966
  %v2968 = vpop.f32.mrf.mxu0
  %2969 = vmatprep.mubr.bf16.mxu0 %v1241
  %2970 = vmatmul.mubr.bf16.gmra.mxu0 %v1240
  %v2971 = vpop.f32.mrf.mxu0
  %v2972 = vadd.f32 %v2875, %v2971
  %v2973 = vpop.f32.mrf.mxu0
  %v2974 = vpop.f32.mrf.mxu0
  %v2975 = vadd.f32 %v2878, %v2974
  %v2976 = vpop.f32.mrf.mxu0
  %2977 = vmatprep.mubr.bf16.mxu0 %v1264
  %2978 = vmatmul.mubr.bf16.gmra.mxu0 %v1263
  %v2979 = vpop.f32.mrf.mxu0
  %v2980 = vadd.f32 %v2883, %v2979
  %v2981 = vpop.f32.mrf.mxu0
  %v2982 = vpop.f32.mrf.mxu0
  %v2983 = vadd.f32 %v2886, %v2982
  %v2984 = vpop.f32.mrf.mxu0
  %2985 = vmatprep.mubr.bf16.mxu0 %v1287
  %2986 = vmatmul.mubr.bf16.gmra.mxu0 %v1286
  %v2987 = vpop.f32.mrf.mxu0
  %v2988 = vadd.f32 %v2891, %v2987
  %v2989 = vpop.f32.mrf.mxu0
  %v2990 = vpop.f32.mrf.mxu0
  %v2991 = vadd.f32 %v2894, %v2990
  %v2992 = vpop.f32.mrf.mxu0
  %2993 = vmatprep.mubr.bf16.mxu0 %v1310
  %2994 = vmatmul.mubr.bf16.gmra.mxu0 %v1309
  %v2995 = vpop.f32.mrf.mxu0
  %v2996 = vadd.f32 %v2899, %v2995
  %v2997 = vpop.f32.mrf.mxu0
  %v2998 = vpop.f32.mrf.mxu0
  %v2999 = vadd.f32 %v2902, %v2998
  %v3000 = vpop.f32.mrf.mxu0
  %3001 = vdwg.mxu0
  %3002 = vmatprep.subr.bf16.mxu0 0
  %3003 = vmatpush1.bf16.msra.mxu0 %v2317
  %3004 = vmatprep.subr.bf16.mxu0 0
  %3005 = vmatpush1.bf16.msra.mxu0 %v2316
  %3006 = vmatprep.subr.bf16.mxu0 0
  %3007 = vmatpush1.bf16.msra.mxu0 %v2315
  %3008 = vmatprep.subr.bf16.mxu0 0
  %3009 = vmatpush1.bf16.msra.mxu0 %v2314
  %3010 = vmatprep.subr.bf16.mxu0 0
  %3011 = vmatpush1.bf16.msra.mxu0 %v2313
  %3012 = vmatprep.subr.bf16.mxu0 0
  %3013 = vmatpush1.bf16.msra.mxu0 %v2312
  %3014 = vmatprep.subr.bf16.mxu0 0
  %3015 = vmatpush1.bf16.msra.mxu0 %v2311
  %3016 = vmatprep.subr.bf16.mxu0 0
  %3017 = vmatpush1.bf16.msra.mxu0 %v2310
  %3018 = vmatprep.subr.bf16.mxu0 0
  %3019 = vmatpush2.bf16.msra.mxu0 %v2325
  %3020 = vmatprep.subr.bf16.mxu0 0
  %3021 = vmatpush2.bf16.msra.mxu0 %v2324
  %3022 = vmatprep.subr.bf16.mxu0 0
  %3023 = vmatpush2.bf16.msra.mxu0 %v2323
  %3024 = vmatprep.subr.bf16.mxu0 0
  %3025 = vmatpush2.bf16.msra.mxu0 %v2322
  %3026 = vmatprep.subr.bf16.mxu0 0
  %3027 = vmatpush2.bf16.msra.mxu0 %v2321
  %3028 = vmatprep.subr.bf16.mxu0 0
  %3029 = vmatpush2.bf16.msra.mxu0 %v2320
  %3030 = vmatprep.subr.bf16.mxu0 0
  %3031 = vmatpush2.bf16.msra.mxu0 %v2319
  %3032 = vmatprep.subr.bf16.mxu0 0
  %3033 = vmatpush2.bf16.msra.mxu0 %v2318
  %3034 = vmatprep.mubr.bf16.mxu0 %v1151
  %3035 = vmatmul.mubr.bf16.gmra.mxu0 %v1150
  %v3036 = vpop.f32.mrf.mxu0
  %v3037 = vadd.f32 %v2940, %v3036
  %v3038 = vpop.f32.mrf.mxu0
  %v3039 = vpop.f32.mrf.mxu0
  %v3040 = vadd.f32 %v2943, %v3039
  %v3041 = vpop.f32.mrf.mxu0
  %3042 = vmatprep.mubr.bf16.mxu0 %v1174
  %3043 = vmatmul.mubr.bf16.gmra.mxu0 %v1173
  %v3044 = vpop.f32.mrf.mxu0
  %v3045 = vadd.f32 %v2948, %v3044
  %v3046 = vpop.f32.mrf.mxu0
  %v3047 = vpop.f32.mrf.mxu0
  %v3048 = vadd.f32 %v2951, %v3047
  %v3049 = vpop.f32.mrf.mxu0
  %3050 = vmatprep.mubr.bf16.mxu0 %v1197
  %3051 = vmatmul.mubr.bf16.gmra.mxu0 %v1196
  %v3052 = vpop.f32.mrf.mxu0
  %v3053 = vadd.f32 %v2956, %v3052
  %v3054 = vpop.f32.mrf.mxu0
  %v3055 = vpop.f32.mrf.mxu0
  %v3056 = vadd.f32 %v2959, %v3055
  %v3057 = vpop.f32.mrf.mxu0
  %3058 = vmatprep.mubr.bf16.mxu0 %v1220
  %3059 = vmatmul.mubr.bf16.gmra.mxu0 %v1219
  %v3060 = vpop.f32.mrf.mxu0
  %v3061 = vadd.f32 %v2964, %v3060
  %v3062 = vpop.f32.mrf.mxu0
  %v3063 = vpop.f32.mrf.mxu0
  %v3064 = vadd.f32 %v2967, %v3063
  %v3065 = vpop.f32.mrf.mxu0
  %3066 = vmatprep.mubr.bf16.mxu0 %v1243
  %3067 = vmatmul.mubr.bf16.gmra.mxu0 %v1242
  %v3068 = vpop.f32.mrf.mxu0
  %v3069 = vadd.f32 %v2972, %v3068
  %v3070 = vpop.f32.mrf.mxu0
  %v3071 = vpop.f32.mrf.mxu0
  %v3072 = vadd.f32 %v2975, %v3071
  %v3073 = vpop.f32.mrf.mxu0
  %3074 = vmatprep.mubr.bf16.mxu0 %v1266
  %3075 = vmatmul.mubr.bf16.gmra.mxu0 %v1265
  %v3076 = vpop.f32.mrf.mxu0
  %v3077 = vadd.f32 %v2980, %v3076
  %v3078 = vpop.f32.mrf.mxu0
  %v3079 = vpop.f32.mrf.mxu0
  %v3080 = vadd.f32 %v2983, %v3079
  %v3081 = vpop.f32.mrf.mxu0
  %3082 = vmatprep.mubr.bf16.mxu0 %v1289
  %3083 = vmatmul.mubr.bf16.gmra.mxu0 %v1288
  %v3084 = vpop.f32.mrf.mxu0
  %v3085 = vadd.f32 %v2988, %v3084
  %v3086 = vpop.f32.mrf.mxu0
  %v3087 = vpop.f32.mrf.mxu0
  %v3088 = vadd.f32 %v2991, %v3087
  %v3089 = vpop.f32.mrf.mxu0
  %3090 = vmatprep.mubr.bf16.mxu0 %v1312
  %3091 = vmatmul.mubr.bf16.gmra.mxu0 %v1311
  %v3092 = vpop.f32.mrf.mxu0
  %v3093 = vadd.f32 %v2996, %v3092
  %v3094 = vpop.f32.mrf.mxu0
  %v3095 = vpop.f32.mrf.mxu0
  %v3096 = vadd.f32 %v2999, %v3095
  %v3097 = vpop.f32.mrf.mxu0
  %3098 = vdwg.mxu0
  %3099 = vmatprep.subr.bf16.mxu0 0
  %3100 = vmatpush1.bf16.msra.mxu0 %v2333
  %3101 = vmatprep.subr.bf16.mxu0 0
  %3102 = vmatpush1.bf16.msra.mxu0 %v2332
  %3103 = vmatprep.subr.bf16.mxu0 0
  %3104 = vmatpush1.bf16.msra.mxu0 %v2331
  %3105 = vmatprep.subr.bf16.mxu0 0
  %3106 = vmatpush1.bf16.msra.mxu0 %v2330
  %3107 = vmatprep.subr.bf16.mxu0 0
  %3108 = vmatpush1.bf16.msra.mxu0 %v2329
  %3109 = vmatprep.subr.bf16.mxu0 0
  %3110 = vmatpush1.bf16.msra.mxu0 %v2328
  %3111 = vmatprep.subr.bf16.mxu0 0
  %3112 = vmatpush1.bf16.msra.mxu0 %v2327
  %3113 = vmatprep.subr.bf16.mxu0 0
  %3114 = vmatpush1.bf16.msra.mxu0 %v2326
  %3115 = vmatprep.subr.bf16.mxu0 0
  %3116 = vmatpush2.bf16.msra.mxu0 %v2341
  %3117 = vmatprep.subr.bf16.mxu0 0
  %3118 = vmatpush2.bf16.msra.mxu0 %v2340
  %3119 = vmatprep.subr.bf16.mxu0 0
  %3120 = vmatpush2.bf16.msra.mxu0 %v2339
  %3121 = vmatprep.subr.bf16.mxu0 0
  %3122 = vmatpush2.bf16.msra.mxu0 %v2338
  %3123 = vmatprep.subr.bf16.mxu0 0
  %3124 = vmatpush2.bf16.msra.mxu0 %v2337
  %3125 = vmatprep.subr.bf16.mxu0 0
  %3126 = vmatpush2.bf16.msra.mxu0 %v2336
  %3127 = vmatprep.subr.bf16.mxu0 0
  %3128 = vmatpush2.bf16.msra.mxu0 %v2335
  %3129 = vmatprep.subr.bf16.mxu0 0
  %3130 = vmatpush2.bf16.msra.mxu0 %v2334
  %3131 = vmatprep.mubr.bf16.mxu0 %v1153
  %3132 = vmatmul.mubr.bf16.gmra.mxu0 %v1152
  %v3133 = vpop.f32.mrf.mxu0
  %v3134 = vadd.f32 %v3037, %v3133
  %v3135 = vpop.f32.mrf.mxu0
  %v3136 = vpop.f32.mrf.mxu0
  %v3137 = vadd.f32 %v3040, %v3136
  %v3138 = vpop.f32.mrf.mxu0
  %3139 = vmatprep.mubr.bf16.mxu0 %v1176
  %3140 = vmatmul.mubr.bf16.gmra.mxu0 %v1175
  %v3141 = vpop.f32.mrf.mxu0
  %v3142 = vadd.f32 %v3045, %v3141
  %v3143 = vpop.f32.mrf.mxu0
  %v3144 = vpop.f32.mrf.mxu0
  %v3145 = vadd.f32 %v3048, %v3144
  %v3146 = vpop.f32.mrf.mxu0
  %3147 = vmatprep.mubr.bf16.mxu0 %v1199
  %3148 = vmatmul.mubr.bf16.gmra.mxu0 %v1198
  %v3149 = vpop.f32.mrf.mxu0
  %v3150 = vadd.f32 %v3053, %v3149
  %v3151 = vpop.f32.mrf.mxu0
  %v3152 = vpop.f32.mrf.mxu0
  %v3153 = vadd.f32 %v3056, %v3152
  %v3154 = vpop.f32.mrf.mxu0
  %3155 = vmatprep.mubr.bf16.mxu0 %v1222
  %3156 = vmatmul.mubr.bf16.gmra.mxu0 %v1221
  %v3157 = vpop.f32.mrf.mxu0
  %v3158 = vadd.f32 %v3061, %v3157
  %v3159 = vpop.f32.mrf.mxu0
  %v3160 = vpop.f32.mrf.mxu0
  %v3161 = vadd.f32 %v3064, %v3160
  %v3162 = vpop.f32.mrf.mxu0
  %3163 = vmatprep.mubr.bf16.mxu0 %v1245
  %3164 = vmatmul.mubr.bf16.gmra.mxu0 %v1244
  %v3165 = vpop.f32.mrf.mxu0
  %v3166 = vadd.f32 %v3069, %v3165
  %v3167 = vpop.f32.mrf.mxu0
  %v3168 = vpop.f32.mrf.mxu0
  %v3169 = vadd.f32 %v3072, %v3168
  %v3170 = vpop.f32.mrf.mxu0
  %3171 = vmatprep.mubr.bf16.mxu0 %v1268
  %3172 = vmatmul.mubr.bf16.gmra.mxu0 %v1267
  %v3173 = vpop.f32.mrf.mxu0
  %v3174 = vadd.f32 %v3077, %v3173
  %v3175 = vpop.f32.mrf.mxu0
  %v3176 = vpop.f32.mrf.mxu0
  %v3177 = vadd.f32 %v3080, %v3176
  %v3178 = vpop.f32.mrf.mxu0
  %3179 = vmatprep.mubr.bf16.mxu0 %v1291
  %3180 = vmatmul.mubr.bf16.gmra.mxu0 %v1290
  %v3181 = vpop.f32.mrf.mxu0
  %v3182 = vadd.f32 %v3085, %v3181
  %v3183 = vpop.f32.mrf.mxu0
  %v3184 = vpop.f32.mrf.mxu0
  %v3185 = vadd.f32 %v3088, %v3184
  %v3186 = vpop.f32.mrf.mxu0
  %3187 = vmatprep.mubr.bf16.mxu0 %v1314
  %3188 = vmatmul.mubr.bf16.gmra.mxu0 %v1313
  %v3189 = vpop.f32.mrf.mxu0
  %v3190 = vadd.f32 %v3093, %v3189
  %v3191 = vpop.f32.mrf.mxu0
  %v3192 = vpop.f32.mrf.mxu0
  %v3193 = vadd.f32 %v3096, %v3192
  %v3194 = vpop.f32.mrf.mxu0
  %3195 = vdwg.mxu0
  %3196 = vmatprep.subr.bf16.mxu0 0
  %3197 = vmatpush1.bf16.msra.mxu0 %v2349
  %3198 = vmatprep.subr.bf16.mxu0 0
  %3199 = vmatpush1.bf16.msra.mxu0 %v2348
  %3200 = vmatprep.subr.bf16.mxu0 0
  %3201 = vmatpush1.bf16.msra.mxu0 %v2347
  %3202 = vmatprep.subr.bf16.mxu0 0
  %3203 = vmatpush1.bf16.msra.mxu0 %v2346
  %3204 = vmatprep.subr.bf16.mxu0 0
  %3205 = vmatpush1.bf16.msra.mxu0 %v2345
  %3206 = vmatprep.subr.bf16.mxu0 0
  %3207 = vmatpush1.bf16.msra.mxu0 %v2344
  %3208 = vmatprep.subr.bf16.mxu0 0
  %3209 = vmatpush1.bf16.msra.mxu0 %v2343
  %3210 = vmatprep.subr.bf16.mxu0 0
  %3211 = vmatpush1.bf16.msra.mxu0 %v2342
  %3212 = vmatprep.subr.bf16.mxu0 0
  %3213 = vmatpush2.bf16.msra.mxu0 %v2357
  %3214 = vmatprep.subr.bf16.mxu0 0
  %3215 = vmatpush2.bf16.msra.mxu0 %v2356
  %3216 = vmatprep.subr.bf16.mxu0 0
  %3217 = vmatpush2.bf16.msra.mxu0 %v2355
  %3218 = vmatprep.subr.bf16.mxu0 0
  %3219 = vmatpush2.bf16.msra.mxu0 %v2354
  %3220 = vmatprep.subr.bf16.mxu0 0
  %3221 = vmatpush2.bf16.msra.mxu0 %v2353
  %3222 = vmatprep.subr.bf16.mxu0 0
  %3223 = vmatpush2.bf16.msra.mxu0 %v2352
  %3224 = vmatprep.subr.bf16.mxu0 0
  %3225 = vmatpush2.bf16.msra.mxu0 %v2351
  %3226 = vmatprep.subr.bf16.mxu0 0
  %3227 = vmatpush2.bf16.msra.mxu0 %v2350
  %3228 = vmatprep.mubr.bf16.mxu0 %v1155
  %3229 = vmatmul.mubr.bf16.gmra.mxu0 %v1154
  %v3230 = vpop.f32.mrf.mxu0
  %v3231 = vadd.f32 %v3134, %v3230
  %v3232 = vpop.f32.mrf.mxu0
  %v3233 = vpop.f32.mrf.mxu0
  %v3234 = vadd.f32 %v3137, %v3233
  %v3235 = vpop.f32.mrf.mxu0
  %3236 = vmatprep.mubr.bf16.mxu0 %v1178
  %3237 = vmatmul.mubr.bf16.gmra.mxu0 %v1177
  %v3238 = vpop.f32.mrf.mxu0
  %v3239 = vadd.f32 %v3142, %v3238
  %v3240 = vpop.f32.mrf.mxu0
  %v3241 = vpop.f32.mrf.mxu0
  %v3242 = vadd.f32 %v3145, %v3241
  %v3243 = vpop.f32.mrf.mxu0
  %3244 = vmatprep.mubr.bf16.mxu0 %v1201
  %3245 = vmatmul.mubr.bf16.gmra.mxu0 %v1200
  %v3246 = vpop.f32.mrf.mxu0
  %v3247 = vadd.f32 %v3150, %v3246
  %v3248 = vpop.f32.mrf.mxu0
  %v3249 = vpop.f32.mrf.mxu0
  %v3250 = vadd.f32 %v3153, %v3249
  %v3251 = vpop.f32.mrf.mxu0
  %3252 = vmatprep.mubr.bf16.mxu0 %v1224
  %3253 = vmatmul.mubr.bf16.gmra.mxu0 %v1223
  %v3254 = vpop.f32.mrf.mxu0
  %v3255 = vadd.f32 %v3158, %v3254
  %v3256 = vpop.f32.mrf.mxu0
  %v3257 = vpop.f32.mrf.mxu0
  %v3258 = vadd.f32 %v3161, %v3257
  %v3259 = vpop.f32.mrf.mxu0
  %3260 = vmatprep.mubr.bf16.mxu0 %v1247
  %3261 = vmatmul.mubr.bf16.gmra.mxu0 %v1246
  %v3262 = vpop.f32.mrf.mxu0
  %v3263 = vadd.f32 %v3166, %v3262
  %v3264 = vpop.f32.mrf.mxu0
  %v3265 = vpop.f32.mrf.mxu0
  %v3266 = vadd.f32 %v3169, %v3265
  %v3267 = vpop.f32.mrf.mxu0
  %3268 = vmatprep.mubr.bf16.mxu0 %v1270
  %3269 = vmatmul.mubr.bf16.gmra.mxu0 %v1269
  %v3270 = vpop.f32.mrf.mxu0
  %v3271 = vadd.f32 %v3174, %v3270
  %v3272 = vpop.f32.mrf.mxu0
  %v3273 = vpop.f32.mrf.mxu0
  %v3274 = vadd.f32 %v3177, %v3273
  %v3275 = vpop.f32.mrf.mxu0
  %3276 = vmatprep.mubr.bf16.mxu0 %v1293
  %3277 = vmatmul.mubr.bf16.gmra.mxu0 %v1292
  %v3278 = vpop.f32.mrf.mxu0
  %v3279 = vadd.f32 %v3182, %v3278
  %v3280 = vpop.f32.mrf.mxu0
  %v3281 = vpop.f32.mrf.mxu0
  %v3282 = vadd.f32 %v3185, %v3281
  %v3283 = vpop.f32.mrf.mxu0
  %3284 = vmatprep.mubr.bf16.mxu0 %v1316
  %3285 = vmatmul.mubr.bf16.gmra.mxu0 %v1315
  %v3286 = vpop.f32.mrf.mxu0
  %v3287 = vadd.f32 %v3190, %v3286
  %v3288 = vpop.f32.mrf.mxu0
  %v3289 = vpop.f32.mrf.mxu0
  %v3290 = vadd.f32 %v3193, %v3289
  %v3291 = vpop.f32.mrf.mxu0
  %3292 = vdwg.mxu0
  %3293 = vmatprep.subr.bf16.mxu0 0
  %3294 = vmatpush1.bf16.msra.mxu0 %v2365
  %3295 = vmatprep.subr.bf16.mxu0 0
  %3296 = vmatpush1.bf16.msra.mxu0 %v2364
  %3297 = vmatprep.subr.bf16.mxu0 0
  %3298 = vmatpush1.bf16.msra.mxu0 %v2363
  %3299 = vmatprep.subr.bf16.mxu0 0
  %3300 = vmatpush1.bf16.msra.mxu0 %v2362
  %3301 = vmatprep.subr.bf16.mxu0 0
  %3302 = vmatpush1.bf16.msra.mxu0 %v2361
  %3303 = vmatprep.subr.bf16.mxu0 0
  %3304 = vmatpush1.bf16.msra.mxu0 %v2360
  %3305 = vmatprep.subr.bf16.mxu0 0
  %3306 = vmatpush1.bf16.msra.mxu0 %v2359
  %3307 = vmatprep.subr.bf16.mxu0 0
  %3308 = vmatpush1.bf16.msra.mxu0 %v2358
  %3309 = vmatprep.subr.bf16.mxu0 0
  %3310 = vmatpush2.bf16.msra.mxu0 %v2373
  %3311 = vmatprep.subr.bf16.mxu0 0
  %3312 = vmatpush2.bf16.msra.mxu0 %v2372
  %3313 = vmatprep.subr.bf16.mxu0 0
  %3314 = vmatpush2.bf16.msra.mxu0 %v2371
  %3315 = vmatprep.subr.bf16.mxu0 0
  %3316 = vmatpush2.bf16.msra.mxu0 %v2370
  %3317 = vmatprep.subr.bf16.mxu0 0
  %3318 = vmatpush2.bf16.msra.mxu0 %v2369
  %3319 = vmatprep.subr.bf16.mxu0 0
  %3320 = vmatpush2.bf16.msra.mxu0 %v2368
  %3321 = vmatprep.subr.bf16.mxu0 0
  %3322 = vmatpush2.bf16.msra.mxu0 %v2367
  %3323 = vmatprep.subr.bf16.mxu0 0
  %3324 = vmatpush2.bf16.msra.mxu0 %v2366
  %3325 = vmatprep.mubr.bf16.mxu0 %v1157
  %3326 = vmatmul.mubr.bf16.gmra.mxu0 %v1156
  %v3327 = vpop.f32.mrf.mxu0
  %v3328 = vadd.f32 %v3231, %v3327
  %v3329 = vpop.f32.mrf.mxu0
  %v3330 = vpop.f32.mrf.mxu0
  %v3331 = vadd.f32 %v3234, %v3330
  %v3332 = vpop.f32.mrf.mxu0
  %3333 = vmatprep.mubr.bf16.mxu0 %v1180
  %3334 = vmatmul.mubr.bf16.gmra.mxu0 %v1179
  %v3335 = vpop.f32.mrf.mxu0
  %v3336 = vadd.f32 %v3239, %v3335
  %v3337 = vpop.f32.mrf.mxu0
  %v3338 = vpop.f32.mrf.mxu0
  %v3339 = vadd.f32 %v3242, %v3338
  %v3340 = vpop.f32.mrf.mxu0
  %3341 = vmatprep.mubr.bf16.mxu0 %v1203
  %3342 = vmatmul.mubr.bf16.gmra.mxu0 %v1202
  %v3343 = vpop.f32.mrf.mxu0
  %v3344 = vadd.f32 %v3247, %v3343
  %v3345 = vpop.f32.mrf.mxu0
  %v3346 = vpop.f32.mrf.mxu0
  %v3347 = vadd.f32 %v3250, %v3346
  %v3348 = vpop.f32.mrf.mxu0
  %3349 = vmatprep.mubr.bf16.mxu0 %v1226
  %3350 = vmatmul.mubr.bf16.gmra.mxu0 %v1225
  %v3351 = vpop.f32.mrf.mxu0
  %v3352 = vadd.f32 %v3255, %v3351
  %v3353 = vpop.f32.mrf.mxu0
  %v3354 = vpop.f32.mrf.mxu0
  %v3355 = vadd.f32 %v3258, %v3354
  %v3356 = vpop.f32.mrf.mxu0
  %3357 = vmatprep.mubr.bf16.mxu0 %v1249
  %3358 = vmatmul.mubr.bf16.gmra.mxu0 %v1248
  %v3359 = vpop.f32.mrf.mxu0
  %v3360 = vadd.f32 %v3263, %v3359
  %v3361 = vpop.f32.mrf.mxu0
  %v3362 = vpop.f32.mrf.mxu0
  %v3363 = vadd.f32 %v3266, %v3362
  %v3364 = vpop.f32.mrf.mxu0
  %3365 = vmatprep.mubr.bf16.mxu0 %v1272
  %3366 = vmatmul.mubr.bf16.gmra.mxu0 %v1271
  %v3367 = vpop.f32.mrf.mxu0
  %v3368 = vadd.f32 %v3271, %v3367
  %v3369 = vpop.f32.mrf.mxu0
  %v3370 = vpop.f32.mrf.mxu0
  %v3371 = vadd.f32 %v3274, %v3370
  %v3372 = vpop.f32.mrf.mxu0
  %3373 = vmatprep.mubr.bf16.mxu0 %v1295
  %3374 = vmatmul.mubr.bf16.gmra.mxu0 %v1294
  %v3375 = vpop.f32.mrf.mxu0
  %v3376 = vadd.f32 %v3279, %v3375
  %v3377 = vpop.f32.mrf.mxu0
  %v3378 = vpop.f32.mrf.mxu0
  %v3379 = vadd.f32 %v3282, %v3378
  %v3380 = vpop.f32.mrf.mxu0
  %3381 = vmatprep.mubr.bf16.mxu0 %v1318
  %3382 = vmatmul.mubr.bf16.gmra.mxu0 %v1317
  %v3383 = vpop.f32.mrf.mxu0
  %v3384 = vadd.f32 %v3287, %v3383
  %v3385 = vpop.f32.mrf.mxu0
  %v3386 = vpop.f32.mrf.mxu0
  %v3387 = vadd.f32 %v3290, %v3386
  %v3388 = vpop.f32.mrf.mxu0
  %3389 = vdwg.mxu0
  %3390 = vmatprep.subr.bf16.mxu0 0
  %3391 = vmatpush1.bf16.msra.mxu0 %v2381
  %3392 = vmatprep.subr.bf16.mxu0 0
  %3393 = vmatpush1.bf16.msra.mxu0 %v2380
  %3394 = vmatprep.subr.bf16.mxu0 0
  %3395 = vmatpush1.bf16.msra.mxu0 %v2379
  %3396 = vmatprep.subr.bf16.mxu0 0
  %3397 = vmatpush1.bf16.msra.mxu0 %v2378
  %3398 = vmatprep.subr.bf16.mxu0 0
  %3399 = vmatpush1.bf16.msra.mxu0 %v2377
  %3400 = vmatprep.subr.bf16.mxu0 0
  %3401 = vmatpush1.bf16.msra.mxu0 %v2376
  %3402 = vmatprep.subr.bf16.mxu0 0
  %3403 = vmatpush1.bf16.msra.mxu0 %v2375
  %3404 = vmatprep.subr.bf16.mxu0 0
  %3405 = vmatpush1.bf16.msra.mxu0 %v2374
  %3406 = vmatprep.subr.bf16.mxu0 0
  %3407 = vmatpush2.bf16.msra.mxu0 %v2389
  %3408 = vmatprep.subr.bf16.mxu0 0
  %3409 = vmatpush2.bf16.msra.mxu0 %v2388
  %3410 = vmatprep.subr.bf16.mxu0 0
  %3411 = vmatpush2.bf16.msra.mxu0 %v2387
  %3412 = vmatprep.subr.bf16.mxu0 0
  %3413 = vmatpush2.bf16.msra.mxu0 %v2386
  %3414 = vmatprep.subr.bf16.mxu0 0
  %3415 = vmatpush2.bf16.msra.mxu0 %v2385
  %3416 = vmatprep.subr.bf16.mxu0 0
  %3417 = vmatpush2.bf16.msra.mxu0 %v2384
  %3418 = vmatprep.subr.bf16.mxu0 0
  %3419 = vmatpush2.bf16.msra.mxu0 %v2383
  %3420 = vmatprep.subr.bf16.mxu0 0
  %3421 = vmatpush2.bf16.msra.mxu0 %v2382
  %3422 = vmatprep.mubr.bf16.mxu0 %v1159
  %3423 = vmatmul.mubr.bf16.gmra.mxu0 %v1158
  %v3424 = vpop.f32.mrf.mxu0
  %v3425 = vadd.f32 %v3328, %v3424
  %v3426 = vpop.f32.mrf.mxu0
  %v3427 = vpop.f32.mrf.mxu0
  %v3428 = vadd.f32 %v3331, %v3427
  %v3429 = vpop.f32.mrf.mxu0
  %3430 = vmatprep.mubr.bf16.mxu0 %v1182
  %3431 = vmatmul.mubr.bf16.gmra.mxu0 %v1181
  %v3432 = vpop.f32.mrf.mxu0
  %v3433 = vadd.f32 %v3336, %v3432
  %v3434 = vpop.f32.mrf.mxu0
  %v3435 = vpop.f32.mrf.mxu0
  %v3436 = vadd.f32 %v3339, %v3435
  %v3437 = vpop.f32.mrf.mxu0
  %3438 = vmatprep.mubr.bf16.mxu0 %v1205
  %3439 = vmatmul.mubr.bf16.gmra.mxu0 %v1204
  %v3440 = vpop.f32.mrf.mxu0
  %v3441 = vadd.f32 %v3344, %v3440
  %v3442 = vpop.f32.mrf.mxu0
  %v3443 = vpop.f32.mrf.mxu0
  %v3444 = vadd.f32 %v3347, %v3443
  %v3445 = vpop.f32.mrf.mxu0
  %3446 = vmatprep.mubr.bf16.mxu0 %v1228
  %3447 = vmatmul.mubr.bf16.gmra.mxu0 %v1227
  %v3448 = vpop.f32.mrf.mxu0
  %v3449 = vadd.f32 %v3352, %v3448
  %v3450 = vpop.f32.mrf.mxu0
  %v3451 = vpop.f32.mrf.mxu0
  %v3452 = vadd.f32 %v3355, %v3451
  %v3453 = vpop.f32.mrf.mxu0
  %3454 = vmatprep.mubr.bf16.mxu0 %v1251
  %3455 = vmatmul.mubr.bf16.gmra.mxu0 %v1250
  %v3456 = vpop.f32.mrf.mxu0
  %v3457 = vadd.f32 %v3360, %v3456
  %v3458 = vpop.f32.mrf.mxu0
  %v3459 = vpop.f32.mrf.mxu0
  %v3460 = vadd.f32 %v3363, %v3459
  %v3461 = vpop.f32.mrf.mxu0
  %3462 = vmatprep.mubr.bf16.mxu0 %v1274
  %3463 = vmatmul.mubr.bf16.gmra.mxu0 %v1273
  %v3464 = vpop.f32.mrf.mxu0
  %v3465 = vadd.f32 %v3368, %v3464
  %v3466 = vpop.f32.mrf.mxu0
  %v3467 = vpop.f32.mrf.mxu0
  %v3468 = vadd.f32 %v3371, %v3467
  %v3469 = vpop.f32.mrf.mxu0
  %3470 = vmatprep.mubr.bf16.mxu0 %v1297
  %3471 = vmatmul.mubr.bf16.gmra.mxu0 %v1296
  %v3472 = vpop.f32.mrf.mxu0
  %v3473 = vadd.f32 %v3376, %v3472
  %v3474 = vpop.f32.mrf.mxu0
  %v3475 = vpop.f32.mrf.mxu0
  %v3476 = vadd.f32 %v3379, %v3475
  %v3477 = vpop.f32.mrf.mxu0
  %3478 = vmatprep.mubr.bf16.mxu0 %v1320
  %3479 = vmatmul.mubr.bf16.gmra.mxu0 %v1319
  %v3480 = vpop.f32.mrf.mxu0
  %v3481 = vadd.f32 %v3384, %v3480
  %v3482 = vpop.f32.mrf.mxu0
  %v3483 = vpop.f32.mrf.mxu0
  %v3484 = vadd.f32 %v3387, %v3483
  %v3485 = vpop.f32.mrf.mxu0
  %3486 = vdwg.mxu0
  %3487 = vmatprep.subr.bf16.mxu0 0
  %3488 = vmatpush1.bf16.msra.mxu0 %v2397
  %3489 = vmatprep.subr.bf16.mxu0 0
  %3490 = vmatpush1.bf16.msra.mxu0 %v2396
  %3491 = vmatprep.subr.bf16.mxu0 0
  %3492 = vmatpush1.bf16.msra.mxu0 %v2395
  %3493 = vmatprep.subr.bf16.mxu0 0
  %3494 = vmatpush1.bf16.msra.mxu0 %v2394
  %3495 = vmatprep.subr.bf16.mxu0 0
  %3496 = vmatpush1.bf16.msra.mxu0 %v2393
  %3497 = vmatprep.subr.bf16.mxu0 0
  %3498 = vmatpush1.bf16.msra.mxu0 %v2392
  %3499 = vmatprep.subr.bf16.mxu0 0
  %3500 = vmatpush1.bf16.msra.mxu0 %v2391
  %3501 = vmatprep.subr.bf16.mxu0 0
  %3502 = vmatpush1.bf16.msra.mxu0 %v2390
  %3503 = vmatprep.subr.bf16.mxu0 0
  %3504 = vmatpush2.bf16.msra.mxu0 %v2405
  %3505 = vmatprep.subr.bf16.mxu0 0
  %3506 = vmatpush2.bf16.msra.mxu0 %v2404
  %3507 = vmatprep.subr.bf16.mxu0 0
  %3508 = vmatpush2.bf16.msra.mxu0 %v2403
  %3509 = vmatprep.subr.bf16.mxu0 0
  %3510 = vmatpush2.bf16.msra.mxu0 %v2402
  %3511 = vmatprep.subr.bf16.mxu0 0
  %3512 = vmatpush2.bf16.msra.mxu0 %v2401
  %3513 = vmatprep.subr.bf16.mxu0 0
  %3514 = vmatpush2.bf16.msra.mxu0 %v2400
  %3515 = vmatprep.subr.bf16.mxu0 0
  %3516 = vmatpush2.bf16.msra.mxu0 %v2399
  %3517 = vmatprep.subr.bf16.mxu0 0
  %3518 = vmatpush2.bf16.msra.mxu0 %v2398
  %3519 = vmatprep.mubr.bf16.mxu0 %v1161
  %3520 = vmatmul.mubr.bf16.gmra.mxu0 %v1160
  %v3521 = vpop.f32.mrf.mxu0
  %v3522 = vadd.f32 %v3425, %v3521
  %v3523 = vpop.f32.mrf.mxu0
  %v3524 = vpop.f32.mrf.mxu0
  %v3525 = vadd.f32 %v3428, %v3524
  %v3526 = vpop.f32.mrf.mxu0
  %3527 = vmatprep.mubr.bf16.mxu0 %v1184
  %3528 = vmatmul.mubr.bf16.gmra.mxu0 %v1183
  %v3529 = vpop.f32.mrf.mxu0
  %v3530 = vadd.f32 %v3433, %v3529
  %v3531 = vpop.f32.mrf.mxu0
  %v3532 = vpop.f32.mrf.mxu0
  %v3533 = vadd.f32 %v3436, %v3532
  %v3534 = vpop.f32.mrf.mxu0
  %3535 = vmatprep.mubr.bf16.mxu0 %v1207
  %3536 = vmatmul.mubr.bf16.gmra.mxu0 %v1206
  %v3537 = vpop.f32.mrf.mxu0
  %v3538 = vadd.f32 %v3441, %v3537
  %v3539 = vpop.f32.mrf.mxu0
  %v3540 = vpop.f32.mrf.mxu0
  %v3541 = vadd.f32 %v3444, %v3540
  %v3542 = vpop.f32.mrf.mxu0
  %3543 = vmatprep.mubr.bf16.mxu0 %v1230
  %3544 = vmatmul.mubr.bf16.gmra.mxu0 %v1229
  %v3545 = vpop.f32.mrf.mxu0
  %v3546 = vadd.f32 %v3449, %v3545
  %v3547 = vpop.f32.mrf.mxu0
  %v3548 = vpop.f32.mrf.mxu0
  %v3549 = vadd.f32 %v3452, %v3548
  %v3550 = vpop.f32.mrf.mxu0
  %3551 = vmatprep.mubr.bf16.mxu0 %v1253
  %3552 = vmatmul.mubr.bf16.gmra.mxu0 %v1252
  %v3553 = vpop.f32.mrf.mxu0
  %v3554 = vadd.f32 %v3457, %v3553
  %v3555 = vpop.f32.mrf.mxu0
  %v3556 = vpop.f32.mrf.mxu0
  %v3557 = vadd.f32 %v3460, %v3556
  %v3558 = vpop.f32.mrf.mxu0
  %3559 = vmatprep.mubr.bf16.mxu0 %v1276
  %3560 = vmatmul.mubr.bf16.gmra.mxu0 %v1275
  %v3561 = vpop.f32.mrf.mxu0
  %v3562 = vadd.f32 %v3465, %v3561
  %v3563 = vpop.f32.mrf.mxu0
  %v3564 = vpop.f32.mrf.mxu0
  %v3565 = vadd.f32 %v3468, %v3564
  %v3566 = vpop.f32.mrf.mxu0
  %3567 = vmatprep.mubr.bf16.mxu0 %v1299
  %3568 = vmatmul.mubr.bf16.gmra.mxu0 %v1298
  %v3569 = vpop.f32.mrf.mxu0
  %v3570 = vadd.f32 %v3473, %v3569
  %v3571 = vpop.f32.mrf.mxu0
  %v3572 = vpop.f32.mrf.mxu0
  %v3573 = vadd.f32 %v3476, %v3572
  %v3574 = vpop.f32.mrf.mxu0
  %3575 = vmatprep.mubr.bf16.mxu0 %v1322
  %3576 = vmatmul.mubr.bf16.gmra.mxu0 %v1321
  %v3577 = vpop.f32.mrf.mxu0
  %v3578 = vadd.f32 %v3481, %v3577
  %v3579 = vpop.f32.mrf.mxu0
  %v3580 = vpop.f32.mrf.mxu0
  %v3581 = vadd.f32 %v3484, %v3580
  %v3582 = vpop.f32.mrf.mxu0
  %3583 = vdwg.mxu0
  %3584 = vmatprep.subr.bf16.mxu0 0
  %3585 = vmatpush1.bf16.msra.mxu0 %v2413
  %3586 = vmatprep.subr.bf16.mxu0 0
  %3587 = vmatpush1.bf16.msra.mxu0 %v2412
  %3588 = vmatprep.subr.bf16.mxu0 0
  %3589 = vmatpush1.bf16.msra.mxu0 %v2411
  %3590 = vmatprep.subr.bf16.mxu0 0
  %3591 = vmatpush1.bf16.msra.mxu0 %v2410
  %3592 = vmatprep.subr.bf16.mxu0 0
  %3593 = vmatpush1.bf16.msra.mxu0 %v2409
  %3594 = vmatprep.subr.bf16.mxu0 0
  %3595 = vmatpush1.bf16.msra.mxu0 %v2408
  %3596 = vmatprep.subr.bf16.mxu0 0
  %3597 = vmatpush1.bf16.msra.mxu0 %v2407
  %3598 = vmatprep.subr.bf16.mxu0 0
  %3599 = vmatpush1.bf16.msra.mxu0 %v2406
  %3600 = vmatprep.subr.bf16.mxu0 0
  %3601 = vmatpush2.bf16.msra.mxu0 %v2421
  %3602 = vmatprep.subr.bf16.mxu0 0
  %3603 = vmatpush2.bf16.msra.mxu0 %v2420
  %3604 = vmatprep.subr.bf16.mxu0 0
  %3605 = vmatpush2.bf16.msra.mxu0 %v2419
  %3606 = vmatprep.subr.bf16.mxu0 0
  %3607 = vmatpush2.bf16.msra.mxu0 %v2418
  %3608 = vmatprep.subr.bf16.mxu0 0
  %3609 = vmatpush2.bf16.msra.mxu0 %v2417
  %3610 = vmatprep.subr.bf16.mxu0 0
  %3611 = vmatpush2.bf16.msra.mxu0 %v2416
  %3612 = vmatprep.subr.bf16.mxu0 0
  %3613 = vmatpush2.bf16.msra.mxu0 %v2415
  %3614 = vmatprep.subr.bf16.mxu0 0
  %3615 = vmatpush2.bf16.msra.mxu0 %v2414
  %3616 = vmatprep.mubr.bf16.mxu0 %v1163
  %3617 = vmatmul.mubr.bf16.gmra.mxu0 %v1162
  %v3618 = vpop.f32.mrf.mxu0
  %v3619 = vadd.f32 %v3522, %v3618
  %v3620 = vpop.f32.mrf.mxu0
  %v3621 = vpop.f32.mrf.mxu0
  %v3622 = vadd.f32 %v3525, %v3621
  %v3623 = vpop.f32.mrf.mxu0
  %3624 = vmatprep.mubr.bf16.mxu0 %v1186
  %3625 = vmatmul.mubr.bf16.gmra.mxu0 %v1185
  %v3626 = vpop.f32.mrf.mxu0
  %v3627 = vadd.f32 %v3530, %v3626
  %v3628 = vpop.f32.mrf.mxu0
  %v3629 = vpop.f32.mrf.mxu0
  %v3630 = vadd.f32 %v3533, %v3629
  %v3631 = vpop.f32.mrf.mxu0
  %3632 = vmatprep.mubr.bf16.mxu0 %v1209
  %3633 = vmatmul.mubr.bf16.gmra.mxu0 %v1208
  %v3634 = vpop.f32.mrf.mxu0
  %v3635 = vadd.f32 %v3538, %v3634
  %v3636 = vpop.f32.mrf.mxu0
  %v3637 = vpop.f32.mrf.mxu0
  %v3638 = vadd.f32 %v3541, %v3637
  %v3639 = vpop.f32.mrf.mxu0
  %3640 = vmatprep.mubr.bf16.mxu0 %v1232
  %3641 = vmatmul.mubr.bf16.gmra.mxu0 %v1231
  %v3642 = vpop.f32.mrf.mxu0
  %v3643 = vadd.f32 %v3546, %v3642
  %v3644 = vpop.f32.mrf.mxu0
  %v3645 = vpop.f32.mrf.mxu0
  %v3646 = vadd.f32 %v3549, %v3645
  %v3647 = vpop.f32.mrf.mxu0
  %3648 = vmatprep.mubr.bf16.mxu0 %v1255
  %3649 = vmatmul.mubr.bf16.gmra.mxu0 %v1254
  %v3650 = vpop.f32.mrf.mxu0
  %v3651 = vadd.f32 %v3554, %v3650
  %v3652 = vpop.f32.mrf.mxu0
  %v3653 = vpop.f32.mrf.mxu0
  %v3654 = vadd.f32 %v3557, %v3653
  %v3655 = vpop.f32.mrf.mxu0
  %3656 = vmatprep.mubr.bf16.mxu0 %v1278
  %3657 = vmatmul.mubr.bf16.gmra.mxu0 %v1277
  %v3658 = vpop.f32.mrf.mxu0
  %v3659 = vadd.f32 %v3562, %v3658
  %v3660 = vpop.f32.mrf.mxu0
  %v3661 = vpop.f32.mrf.mxu0
  %v3662 = vadd.f32 %v3565, %v3661
  %v3663 = vpop.f32.mrf.mxu0
  %3664 = vmatprep.mubr.bf16.mxu0 %v1301
  %3665 = vmatmul.mubr.bf16.gmra.mxu0 %v1300
  %v3666 = vpop.f32.mrf.mxu0
  %v3667 = vadd.f32 %v3570, %v3666
  %v3668 = vpop.f32.mrf.mxu0
  %v3669 = vpop.f32.mrf.mxu0
  %v3670 = vadd.f32 %v3573, %v3669
  %v3671 = vpop.f32.mrf.mxu0
  %3672 = vmatprep.mubr.bf16.mxu0 %v1324
  %3673 = vmatmul.mubr.bf16.gmra.mxu0 %v1323
  %v3674 = vpop.f32.mrf.mxu0
  %v3675 = vadd.f32 %v3578, %v3674
  %v3676 = vpop.f32.mrf.mxu0
  %v3677 = vpop.f32.mrf.mxu0
  %v3678 = vadd.f32 %v3581, %v3677
  %v3679 = vpop.f32.mrf.mxu0
  %3680 = vdwg.mxu0
  %3681 = vmatprep.subr.bf16.mxu0 0
  %3682 = vmatpush1.bf16.msra.mxu0 %v2429
  %3683 = vmatprep.subr.bf16.mxu0 0
  %3684 = vmatpush1.bf16.msra.mxu0 %v2428
  %3685 = vmatprep.subr.bf16.mxu0 0
  %3686 = vmatpush1.bf16.msra.mxu0 %v2427
  %3687 = vmatprep.subr.bf16.mxu0 0
  %3688 = vmatpush1.bf16.msra.mxu0 %v2426
  %3689 = vmatprep.subr.bf16.mxu0 0
  %3690 = vmatpush1.bf16.msra.mxu0 %v2425
  %3691 = vmatprep.subr.bf16.mxu0 0
  %3692 = vmatpush1.bf16.msra.mxu0 %v2424
  %3693 = vmatprep.subr.bf16.mxu0 0
  %3694 = vmatpush1.bf16.msra.mxu0 %v2423
  %3695 = vmatprep.subr.bf16.mxu0 0
  %3696 = vmatpush1.bf16.msra.mxu0 %v2422
  %3697 = vmatprep.subr.bf16.mxu0 0
  %3698 = vmatpush2.bf16.msra.mxu0 0
  %3699 = vmatprep.subr.bf16.mxu0 0
  %3700 = vmatpush2.bf16.msra.mxu0 0
  %3701 = vmatprep.subr.bf16.mxu0 0
  %3702 = vmatpush2.bf16.msra.mxu0 0
  %3703 = vmatprep.subr.bf16.mxu0 0
  %3704 = vmatpush2.bf16.msra.mxu0 0
  %3705 = vmatprep.subr.bf16.mxu0 0
  %3706 = vmatpush2.bf16.msra.mxu0 0
  %3707 = vmatprep.subr.bf16.mxu0 0
  %3708 = vmatpush2.bf16.msra.mxu0 0
  %3709 = vmatprep.subr.bf16.mxu0 0
  %3710 = vmatpush2.bf16.msra.mxu0 0
  %3711 = vmatprep.subr.bf16.mxu0 0
  %3712 = vmatpush2.bf16.msra.mxu0 0
  %3713 = vmatprep.mubr.bf16.mxu0 0
  %3714 = vmatmul.mubr.bf16.gmra.mxu0 %v1164
  %v3715 = vpop.f32.mrf.mxu0
  %v3716 = vadd.f32 %v3619, %v3715
  %v3717 = vpop.f32.mrf.mxu0
  %v3718 = vpop.f32.mrf.mxu0
  %v3719 = vadd.f32 %v3622, %v3718
  %v3720 = vpop.f32.mrf.mxu0
  %3721 = vmatprep.mubr.bf16.mxu0 0
  %3722 = vmatmul.mubr.bf16.gmra.mxu0 %v1187
  %v3723 = vpop.f32.mrf.mxu0
  %v3724 = vadd.f32 %v3627, %v3723
  %v3725 = vpop.f32.mrf.mxu0
  %v3726 = vpop.f32.mrf.mxu0
  %v3727 = vadd.f32 %v3630, %v3726
  %v3728 = vpop.f32.mrf.mxu0
  %3729 = vmatprep.mubr.bf16.mxu0 0
  %3730 = vmatmul.mubr.bf16.gmra.mxu0 %v1210
  %v3731 = vpop.f32.mrf.mxu0
  %v3732 = vadd.f32 %v3635, %v3731
  %v3733 = vpop.f32.mrf.mxu0
  %v3734 = vpop.f32.mrf.mxu0
  %v3735 = vadd.f32 %v3638, %v3734
  %v3736 = vpop.f32.mrf.mxu0
  %3737 = vmatprep.mubr.bf16.mxu0 0
  %3738 = vmatmul.mubr.bf16.gmra.mxu0 %v1233
  %v3739 = vpop.f32.mrf.mxu0
  %v3740 = vadd.f32 %v3643, %v3739
  %v3741 = vpop.f32.mrf.mxu0
  %v3742 = vpop.f32.mrf.mxu0
  %v3743 = vadd.f32 %v3646, %v3742
  %v3744 = vpop.f32.mrf.mxu0
  %3745 = vmatprep.mubr.bf16.mxu0 0
  %3746 = vmatmul.mubr.bf16.gmra.mxu0 %v1256
  %v3747 = vpop.f32.mrf.mxu0
  %v3748 = vadd.f32 %v3651, %v3747
  %v3749 = vpop.f32.mrf.mxu0
  %v3750 = vpop.f32.mrf.mxu0
  %v3751 = vadd.f32 %v3654, %v3750
  %v3752 = vpop.f32.mrf.mxu0
  %3753 = vmatprep.mubr.bf16.mxu0 0
  %3754 = vmatmul.mubr.bf16.gmra.mxu0 %v1279
  %v3755 = vpop.f32.mrf.mxu0
  %v3756 = vadd.f32 %v3659, %v3755
  %v3757 = vpop.f32.mrf.mxu0
  %v3758 = vpop.f32.mrf.mxu0
  %v3759 = vadd.f32 %v3662, %v3758
  %v3760 = vpop.f32.mrf.mxu0
  %3761 = vmatprep.mubr.bf16.mxu0 0
  %3762 = vmatmul.mubr.bf16.gmra.mxu0 %v1302
  %v3763 = vpop.f32.mrf.mxu0
  %v3764 = vadd.f32 %v3667, %v3763
  %v3765 = vpop.f32.mrf.mxu0
  %v3766 = vpop.f32.mrf.mxu0
  %v3767 = vadd.f32 %v3670, %v3766
  %v3768 = vpop.f32.mrf.mxu0
  %3769 = vmatprep.mubr.bf16.mxu0 0
  %3770 = vmatmul.mubr.bf16.gmra.mxu0 %v1325
  %v3771 = vpop.f32.mrf.mxu0
  %v3772 = vadd.f32 %v3675, %v3771
  %v3773 = vpop.f32.mrf.mxu0
  %v3774 = vpop.f32.mrf.mxu0
  %v3775 = vadd.f32 %v3678, %v3774
  %v3776 = vpop.f32.mrf.mxu0
  %3777 = vdwg.mxu0
  %v3778 = vmax.f32 %v3716, 0.0
  %v3779 = vmax.f32 %v3719, 0.0
  %v3780 = vmax.f32 %v3724, 0.0
  %v3781 = vmax.f32 %v3727, 0.0
  %v3782 = vmax.f32 %v3732, 0.0
  %v3783 = vmax.f32 %v3735, 0.0
  %v3784 = vmax.f32 %v3740, 0.0
  %v3785 = vmax.f32 %v3743, 0.0
  %v3786 = vmax.f32 %v3748, 0.0
  %v3787 = vmax.f32 %v3751, 0.0
  %v3788 = vmax.f32 %v3756, 0.0
  %v3789 = vmax.f32 %v3759, 0.0
  %v3790 = vmax.f32 %v3764, 0.0
  %v3791 = vmax.f32 %v3767, 0.0
  %v3792 = vmax.f32 %v3772, 0.0
  %v3793 = vmax.f32 %v3775, 0.0
  %3794 = vst [vmem:[%s3] sm:$0xff] %v3778
  %3795 = vst [vmem:[%s3 + $0x8] sm:$0xff] %v3779
  %3796 = vst [vmem:[%s3 + $0x10] sm:$0xff] %v3780
  %3797 = vst [vmem:[%s3 + $0x18] sm:$0xff] %v3781
  %3798 = vst [vmem:[%s3 + $0x20] sm:$0xff] %v3782
  %3799 = vst [vmem:[%s3 + $0x28] sm:$0xff] %v3783
  %3800 = vst [vmem:[%s3 + $0x30] sm:$0xff] %v3784
  %3801 = vst [vmem:[%s3 + $0x38] sm:$0xff] %v3785
  %3802 = vst [vmem:[%s3 + $0x40] sm:$0xff] %v3786
  %3803 = vst [vmem:[%s3 + $0x48] sm:$0xff] %v3787
  %3804 = vst [vmem:[%s3 + $0x50] sm:$0xff] %v3788
  %3805 = vst [vmem:[%s3 + $0x58] sm:$0xff] %v3789
  %3806 = vst [vmem:[%s3 + $0x60] sm:$0xff] %v3790
  %3807 = vst [vmem:[%s3 + $0x68] sm:$0xff] %v3791
  %3808 = vst [vmem:[%s3 + $0x70] sm:$0xff] %v3792
  %3809 = vst [vmem:[%s3 + $0x78] sm:$0xff] %v3793
  // Predicated region
  $region14: #{crowd_counter_forward.9} parent=0 // pred_check
    _
  $region15: #{crowd_counter_forward.9} parent=0 // pred_check_branch
    %3811 = sbr.rel (0) target = $region17
  $region16: #{crowd_counter_forward.9} parent=0 // pred_region
    _
  $region17: #{crowd_counter_forward.9} parent=0 // pred_fallthru
    _
  // Predicated region
  $region18: #{crowd_counter_forward.9} parent=0 // pred_check
    _
  $region19: #{crowd_counter_forward.9} parent=0 // pred_check_branch
    %3813 = sbr.rel (0) target = $region21
  $region20: #{crowd_counter_forward.9} parent=0 // pred_region
    _
  $region21: #{crowd_counter_forward.9} parent=0 // pred_fallthru
    _

// kernel: crowd_counter_forward.11
$region0: #{crowd_counter_forward.11}
  #allocation0 [shape = 'u32[]', space=smem, size = 0x4, offset = 0x4, fixed_abs, tag = 'smem constant byte address 0x4 - core index']
  #allocation1 [shape = 'u32[144,128]{1,0:T(1,128)}', space=vmem, size = 0x12000, scoped, tag = 'internal scratch']
  %s0 = inlined_call_operand.vmem [shape: bf16[32,5888], index: 0, kind: input, shape index: {}]
  %s1 = inlined_call_operand.vmem [shape: bf16[5888,128], index: 1, kind: input, shape index: {}]
  %s2 = inlined_call_operand.vmem [shape: f32[1,128], index: 2, kind: input, shape index: {}]
  %s3 = inlined_call_operand.vmem [shape: f32[32,128], index: 3, kind: output, shape index: {}]
  %s4 = sld [smem:[#allocation0]]
  $region22: #{crowd_counter_forward.11} parent=0
    _
  %s6 = ssub.s32 1, %s4
  %s7 = scalar_select 0, %s6, %s4
  // Predicated region
  $region2: #{crowd_counter_forward.11} parent=0 // pred_check
    _
  $region3: #{crowd_counter_forward.11} parent=0 // pred_check_branch
    %9 = sbr.rel (0) target = $region5
  $region4: #{crowd_counter_forward.11} parent=0 // pred_region
    _
  $region5: #{crowd_counter_forward.11} parent=0 // pred_fallthru
    _
  // Predicated region
  $region6: #{crowd_counter_forward.11} parent=0 // pred_check
    _
  $region7: #{crowd_counter_forward.11} parent=0 // pred_check_branch
    %11 = sbr.rel (0) target = $region9
  $region8: #{crowd_counter_forward.11} parent=0 // pred_region
    _
  $region9: #{crowd_counter_forward.11} parent=0 // pred_fallthru
    _
  // Predicated region
  $region10: #{crowd_counter_forward.11} parent=0 // pred_check
    _
  $region11: #{crowd_counter_forward.11} parent=0 // pred_check_branch
    %13 = sbr.rel (0) target = $region13
  $region12: #{crowd_counter_forward.11} parent=0 // pred_region
    _
  $region13: #{crowd_counter_forward.11} parent=0 // pred_fallthru
    _
  %v15 = vld [vmem:[%s0] sm:$0xff]
  %v16 = vld [vmem:[%s0 + $0x8] sm:$0xff]
  %v17 = vld [vmem:[%s0 + $0x10] sm:$0xff]
  %v18 = vld [vmem:[%s0 + $0x18] sm:$0xff]
  %v19 = vld [vmem:[%s0 + $0x20] sm:$0xff]
  %v20 = vld [vmem:[%s0 + $0x28] sm:$0xff]
  %v21 = vld [vmem:[%s0 + $0x30] sm:$0xff]
  %v22 = vld [vmem:[%s0 + $0x38] sm:$0xff]
  %v23 = vld [vmem:[%s0 + $0x40] sm:$0xff]
  %v24 = vld [vmem:[%s0 + $0x48] sm:$0xff]
  %v25 = vld [vmem:[%s0 + $0x50] sm:$0xff]
  %v26 = vld [vmem:[%s0 + $0x58] sm:$0xff]
  %v27 = vld [vmem:[%s0 + $0x60] sm:$0xff]
  %v28 = vld [vmem:[%s0 + $0x68] sm:$0xff]
  %v29 = vld [vmem:[%s0 + $0x70] sm:$0xff]
  %v30 = vld [vmem:[%s0 + $0x78] sm:$0xff]
  %v31 = vld [vmem:[%s0 + $0x80] sm:$0xff]
  %v32 = vld [vmem:[%s0 + $0x88] sm:$0xff]
  %v33 = vld [vmem:[%s0 + $0x90] sm:$0xff]
  %v34 = vld [vmem:[%s0 + $0x98] sm:$0xff]
  %v35 = vld [vmem:[%s0 + $0xa0] sm:$0xff]
  %v36 = vld [vmem:[%s0 + $0xa8] sm:$0xff]
  %v37 = vld [vmem:[%s0 + $0xb0] sm:$0xff]
  %v38 = vld [vmem:[%s0 + $0xb8] sm:$0xff]
  %v39 = vld [vmem:[%s0 + $0xc0] sm:$0xff]
  %v40 = vld [vmem:[%s0 + $0xc8] sm:$0xff]
  %v41 = vld [vmem:[%s0 + $0xd0] sm:$0xff]
  %v42 = vld [vmem:[%s0 + $0xd8] sm:$0xff]
  %v43 = vld [vmem:[%s0 + $0xe0] sm:$0xff]
  %v44 = vld [vmem:[%s0 + $0xe8] sm:$0xff]
  %v45 = vld [vmem:[%s0 + $0xf0] sm:$0xff]
  %v46 = vld [vmem:[%s0 + $0xf8] sm:$0xff]
  %v47 = vld [vmem:[%s0 + $0x100] sm:$0xff]
  %v48 = vld [vmem:[%s0 + $0x108] sm:$0xff]
  %v49 = vld [vmem:[%s0 + $0x110] sm:$0xff]
  %v50 = vld [vmem:[%s0 + $0x118] sm:$0xff]
  %v51 = vld [vmem:[%s0 + $0x120] sm:$0xff]
  %v52 = vld [vmem:[%s0 + $0x128] sm:$0xff]
  %v53 = vld [vmem:[%s0 + $0x130] sm:$0xff]
  %v54 = vld [vmem:[%s0 + $0x138] sm:$0xff]
  %v55 = vld [vmem:[%s0 + $0x140] sm:$0xff]
  %v56 = vld [vmem:[%s0 + $0x148] sm:$0xff]
  %v57 = vld [vmem:[%s0 + $0x150] sm:$0xff]
  %v58 = vld [vmem:[%s0 + $0x158] sm:$0xff]
  %v59 = vld [vmem:[%s0 + $0x160] sm:$0xff]
  %v60 = vld [vmem:[%s0 + $0x168] sm:$0xff]
  %v61 = vld [vmem:[%s0 + $0x170] sm:$0xff]
  %v62 = vld [vmem:[%s0 + $0x178] sm:$0xff]
  %v63 = vld [vmem:[%s0 + $0x180] sm:$0xff]
  %v64 = vld [vmem:[%s0 + $0x188] sm:$0xff]
  %v65 = vld [vmem:[%s0 + $0x190] sm:$0xff]
  %v66 = vld [vmem:[%s0 + $0x198] sm:$0xff]
  %v67 = vld [vmem:[%s0 + $0x1a0] sm:$0xff]
  %v68 = vld [vmem:[%s0 + $0x1a8] sm:$0xff]
  %v69 = vld [vmem:[%s0 + $0x1b0] sm:$0xff]
  %v70 = vld [vmem:[%s0 + $0x1b8] sm:$0xff]
  %v71 = vld [vmem:[%s0 + $0x1c0] sm:$0xff]
  %v72 = vld [vmem:[%s0 + $0x1c8] sm:$0xff]
  %v73 = vld [vmem:[%s0 + $0x1d0] sm:$0xff]
  %v74 = vld [vmem:[%s0 + $0x1d8] sm:$0xff]
  %v75 = vld [vmem:[%s0 + $0x1e0] sm:$0xff]
  %v76 = vld [vmem:[%s0 + $0x1e8] sm:$0xff]
  %v77 = vld [vmem:[%s0 + $0x1f0] sm:$0xff]
  %v78 = vld [vmem:[%s0 + $0x1f8] sm:$0xff]
  %v79 = vld [vmem:[%s0 + $0x200] sm:$0xff]
  %v80 = vld [vmem:[%s0 + $0x208] sm:$0xff]
  %v81 = vld [vmem:[%s0 + $0x210] sm:$0xff]
  %v82 = vld [vmem:[%s0 + $0x218] sm:$0xff]
  %v83 = vld [vmem:[%s0 + $0x220] sm:$0xff]
  %v84 = vld [vmem:[%s0 + $0x228] sm:$0xff]
  %v85 = vld [vmem:[%s0 + $0x230] sm:$0xff]
  %v86 = vld [vmem:[%s0 + $0x238] sm:$0xff]
  %v87 = vld [vmem:[%s0 + $0x240] sm:$0xff]
  %v88 = vld [vmem:[%s0 + $0x248] sm:$0xff]
  %v89 = vld [vmem:[%s0 + $0x250] sm:$0xff]
  %v90 = vld [vmem:[%s0 + $0x258] sm:$0xff]
  %v91 = vld [vmem:[%s0 + $0x260] sm:$0xff]
  %v92 = vld [vmem:[%s0 + $0x268] sm:$0xff]
  %v93 = vld [vmem:[%s0 + $0x270] sm:$0xff]
  %v94 = vld [vmem:[%s0 + $0x278] sm:$0xff]
  %v95 = vld [vmem:[%s0 + $0x280] sm:$0xff]
  %v96 = vld [vmem:[%s0 + $0x288] sm:$0xff]
  %v97 = vld [vmem:[%s0 + $0x290] sm:$0xff]
  %v98 = vld [vmem:[%s0 + $0x298] sm:$0xff]
  %v99 = vld [vmem:[%s0 + $0x2a0] sm:$0xff]
  %v100 = vld [vmem:[%s0 + $0x2a8] sm:$0xff]
  %v101 = vld [vmem:[%s0 + $0x2b0] sm:$0xff]
  %v102 = vld [vmem:[%s0 + $0x2b8] sm:$0xff]
  %v103 = vld [vmem:[%s0 + $0x2c0] sm:$0xff]
  %v104 = vld [vmem:[%s0 + $0x2c8] sm:$0xff]
  %v105 = vld [vmem:[%s0 + $0x2d0] sm:$0xff]
  %v106 = vld [vmem:[%s0 + $0x2d8] sm:$0xff]
  %v107 = vld [vmem:[%s1] sm:$0xf]
  %v108 = vld [vmem:[%s1 + $0x4] sm:$0xf]
  %v109 = vld [vmem:[%s1 + $0x8] sm:$0xf]
  %v110 = vld [vmem:[%s1 + $0xc] sm:$0xf]
  %v111 = vld [vmem:[%s1 + $0x10] sm:$0xf]
  %v112 = vld [vmem:[%s1 + $0x14] sm:$0xf]
  %v113 = vld [vmem:[%s1 + $0x18] sm:$0xf]
  %v114 = vld [vmem:[%s1 + $0x1c] sm:$0xf]
  %v115 = vld [vmem:[%s1 + $0x20] sm:$0xf]
  %v116 = vld [vmem:[%s1 + $0x24] sm:$0xf]
  %v117 = vld [vmem:[%s1 + $0x28] sm:$0xf]
  %v118 = vld [vmem:[%s1 + $0x2c] sm:$0xf]
  %v119 = vld [vmem:[%s1 + $0x30] sm:$0xf]
  %v120 = vld [vmem:[%s1 + $0x34] sm:$0xf]
  %v121 = vld [vmem:[%s1 + $0x38] sm:$0xf]
  %v122 = vld [vmem:[%s1 + $0x3c] sm:$0xf]
  %v123 = vld [vmem:[%s1 + $0x40] sm:$0xf]
  %v124 = vld [vmem:[%s1 + $0x44] sm:$0xf]
  %v125 = vld [vmem:[%s1 + $0x48] sm:$0xf]
  %v126 = vld [vmem:[%s1 + $0x4c] sm:$0xf]
  %v127 = vld [vmem:[%s1 + $0x50] sm:$0xf]
  %v128 = vld [vmem:[%s1 + $0x54] sm:$0xf]
  %v129 = vld [vmem:[%s1 + $0x58] sm:$0xf]
  %v130 = vld [vmem:[%s1 + $0x5c] sm:$0xf]
  %v131 = vld [vmem:[%s1 + $0x60] sm:$0xf]
  %v132 = vld [vmem:[%s1 + $0x64] sm:$0xf]
  %v133 = vld [vmem:[%s1 + $0x68] sm:$0xf]
  %v134 = vld [vmem:[%s1 + $0x6c] sm:$0xf]
  %v135 = vld [vmem:[%s1 + $0x70] sm:$0xf]
  %v136 = vld [vmem:[%s1 + $0x74] sm:$0xf]
  %v137 = vld [vmem:[%s1 + $0x78] sm:$0xf]
  %v138 = vld [vmem:[%s1 + $0x7c] sm:$0xf]
  %v139 = vld [vmem:[%s1 + $0x80] sm:$0xf]
  %v140 = vld [vmem:[%s1 + $0x84] sm:$0xf]
  %v141 = vld [vmem:[%s1 + $0x88] sm:$0xf]
  %v142 = vld [vmem:[%s1 + $0x8c] sm:$0xf]
  %v143 = vld [vmem:[%s1 + $0x90] sm:$0xf]
  %v144 = vld [vmem:[%s1 + $0x94] sm:$0xf]
  %v145 = vld [vmem:[%s1 + $0x98] sm:$0xf]
  %v146 = vld [vmem:[%s1 + $0x9c] sm:$0xf]
  %v147 = vld [vmem:[%s1 + $0xa0] sm:$0xf]
  %v148 = vld [vmem:[%s1 + $0xa4] sm:$0xf]
  %v149 = vld [vmem:[%s1 + $0xa8] sm:$0xf]
  %v150 = vld [vmem:[%s1 + $0xac] sm:$0xf]
  %v151 = vld [vmem:[%s1 + $0xb0] sm:$0xf]
  %v152 = vld [vmem:[%s1 + $0xb4] sm:$0xf]
  %v153 = vld [vmem:[%s1 + $0xb8] sm:$0xf]
  %v154 = vld [vmem:[%s1 + $0xbc] sm:$0xf]
  %v155 = vld [vmem:[%s1 + $0xc0] sm:$0xf]
  %v156 = vld [vmem:[%s1 + $0xc4] sm:$0xf]
  %v157 = vld [vmem:[%s1 + $0xc8] sm:$0xf]
  %v158 = vld [vmem:[%s1 + $0xcc] sm:$0xf]
  %v159 = vld [vmem:[%s1 + $0xd0] sm:$0xf]
  %v160 = vld [vmem:[%s1 + $0xd4] sm:$0xf]
  %v161 = vld [vmem:[%s1 + $0xd8] sm:$0xf]
  %v162 = vld [vmem:[%s1 + $0xdc] sm:$0xf]
  %v163 = vld [vmem:[%s1 + $0xe0] sm:$0xf]
  %v164 = vld [vmem:[%s1 + $0xe4] sm:$0xf]
  %v165 = vld [vmem:[%s1 + $0xe8] sm:$0xf]
  %v166 = vld [vmem:[%s1 + $0xec] sm:$0xf]
  %v167 = vld [vmem:[%s1 + $0xf0] sm:$0xf]
  %v168 = vld [vmem:[%s1 + $0xf4] sm:$0xf]
  %v169 = vld [vmem:[%s1 + $0xf8] sm:$0xf]
  %v170 = vld [vmem:[%s1 + $0xfc] sm:$0xf]
  %v171 = vld [vmem:[%s1 + $0x100] sm:$0xf]
  %v172 = vld [vmem:[%s1 + $0x104] sm:$0xf]
  %v173 = vld [vmem:[%s1 + $0x108] sm:$0xf]
  %v174 = vld [vmem:[%s1 + $0x10c] sm:$0xf]
  %v175 = vld [vmem:[%s1 + $0x110] sm:$0xf]
  %v176 = vld [vmem:[%s1 + $0x114] sm:$0xf]
  %v177 = vld [vmem:[%s1 + $0x118] sm:$0xf]
  %v178 = vld [vmem:[%s1 + $0x11c] sm:$0xf]
  %v179 = vld [vmem:[%s1 + $0x120] sm:$0xf]
  %v180 = vld [vmem:[%s1 + $0x124] sm:$0xf]
  %v181 = vld [vmem:[%s1 + $0x128] sm:$0xf]
  %v182 = vld [vmem:[%s1 + $0x12c] sm:$0xf]
  %v183 = vld [vmem:[%s1 + $0x130] sm:$0xf]
  %v184 = vld [vmem:[%s1 + $0x134] sm:$0xf]
  %v185 = vld [vmem:[%s1 + $0x138] sm:$0xf]
  %v186 = vld [vmem:[%s1 + $0x13c] sm:$0xf]
  %v187 = vld [vmem:[%s1 + $0x140] sm:$0xf]
  %v188 = vld [vmem:[%s1 + $0x144] sm:$0xf]
  %v189 = vld [vmem:[%s1 + $0x148] sm:$0xf]
  %v190 = vld [vmem:[%s1 + $0x14c] sm:$0xf]
  %v191 = vld [vmem:[%s1 + $0x150] sm:$0xf]
  %v192 = vld [vmem:[%s1 + $0x154] sm:$0xf]
  %v193 = vld [vmem:[%s1 + $0x158] sm:$0xf]
  %v194 = vld [vmem:[%s1 + $0x15c] sm:$0xf]
  %v195 = vld [vmem:[%s1 + $0x160] sm:$0xf]
  %v196 = vld [vmem:[%s1 + $0x164] sm:$0xf]
  %v197 = vld [vmem:[%s1 + $0x168] sm:$0xf]
  %v198 = vld [vmem:[%s1 + $0x16c] sm:$0xf]
  %v199 = vld [vmem:[%s1 + $0x170] sm:$0xf]
  %v200 = vld [vmem:[%s1 + $0x174] sm:$0xf]
  %v201 = vld [vmem:[%s1 + $0x178] sm:$0xf]
  %v202 = vld [vmem:[%s1 + $0x17c] sm:$0xf]
  %v203 = vld [vmem:[%s1 + $0x180] sm:$0xf]
  %v204 = vld [vmem:[%s1 + $0x184] sm:$0xf]
  %v205 = vld [vmem:[%s1 + $0x188] sm:$0xf]
  %v206 = vld [vmem:[%s1 + $0x18c] sm:$0xf]
  %v207 = vld [vmem:[%s1 + $0x190] sm:$0xf]
  %v208 = vld [vmem:[%s1 + $0x194] sm:$0xf]
  %v209 = vld [vmem:[%s1 + $0x198] sm:$0xf]
  %v210 = vld [vmem:[%s1 + $0x19c] sm:$0xf]
  %v211 = vld [vmem:[%s1 + $0x1a0] sm:$0xf]
  %v212 = vld [vmem:[%s1 + $0x1a4] sm:$0xf]
  %v213 = vld [vmem:[%s1 + $0x1a8] sm:$0xf]
  %v214 = vld [vmem:[%s1 + $0x1ac] sm:$0xf]
  %v215 = vld [vmem:[%s1 + $0x1b0] sm:$0xf]
  %v216 = vld [vmem:[%s1 + $0x1b4] sm:$0xf]
  %v217 = vld [vmem:[%s1 + $0x1b8] sm:$0xf]
  %v218 = vld [vmem:[%s1 + $0x1bc] sm:$0xf]
  %v219 = vld [vmem:[%s1 + $0x1c0] sm:$0xf]
  %v220 = vld [vmem:[%s1 + $0x1c4] sm:$0xf]
  %v221 = vld [vmem:[%s1 + $0x1c8] sm:$0xf]
  %v222 = vld [vmem:[%s1 + $0x1cc] sm:$0xf]
  %v223 = vld [vmem:[%s1 + $0x1d0] sm:$0xf]
  %v224 = vld [vmem:[%s1 + $0x1d4] sm:$0xf]
  %v225 = vld [vmem:[%s1 + $0x1d8] sm:$0xf]
  %v226 = vld [vmem:[%s1 + $0x1dc] sm:$0xf]
  %v227 = vld [vmem:[%s1 + $0x1e0] sm:$0xf]
  %v228 = vld [vmem:[%s1 + $0x1e4] sm:$0xf]
  %v229 = vld [vmem:[%s1 + $0x1e8] sm:$0xf]
  %v230 = vld [vmem:[%s1 + $0x1ec] sm:$0xf]
  %v231 = vld [vmem:[%s1 + $0x1f0] sm:$0xf]
  %v232 = vld [vmem:[%s1 + $0x1f4] sm:$0xf]
  %v233 = vld [vmem:[%s1 + $0x1f8] sm:$0xf]
  %v234 = vld [vmem:[%s1 + $0x1fc] sm:$0xf]
  %v235 = vld [vmem:[%s1 + $0x200] sm:$0xf]
  %v236 = vld [vmem:[%s1 + $0x204] sm:$0xf]
  %v237 = vld [vmem:[%s1 + $0x208] sm:$0xf]
  %v238 = vld [vmem:[%s1 + $0x20c] sm:$0xf]
  %v239 = vld [vmem:[%s1 + $0x210] sm:$0xf]
  %v240 = vld [vmem:[%s1 + $0x214] sm:$0xf]
  %v241 = vld [vmem:[%s1 + $0x218] sm:$0xf]
  %v242 = vld [vmem:[%s1 + $0x21c] sm:$0xf]
  %v243 = vld [vmem:[%s1 + $0x220] sm:$0xf]
  %v244 = vld [vmem:[%s1 + $0x224] sm:$0xf]
  %v245 = vld [vmem:[%s1 + $0x228] sm:$0xf]
  %v246 = vld [vmem:[%s1 + $0x22c] sm:$0xf]
  %v247 = vld [vmem:[%s1 + $0x230] sm:$0xf]
  %v248 = vld [vmem:[%s1 + $0x234] sm:$0xf]
  %v249 = vld [vmem:[%s1 + $0x238] sm:$0xf]
  %v250 = vld [vmem:[%s1 + $0x23c] sm:$0xf]
  %v251 = vld [vmem:[%s1 + $0x240] sm:$0xf]
  %v252 = vld [vmem:[%s1 + $0x244] sm:$0xf]
  %v253 = vld [vmem:[%s1 + $0x248] sm:$0xf]
  %v254 = vld [vmem:[%s1 + $0x24c] sm:$0xf]
  %v255 = vld [vmem:[%s1 + $0x250] sm:$0xf]
  %v256 = vld [vmem:[%s1 + $0x254] sm:$0xf]
  %v257 = vld [vmem:[%s1 + $0x258] sm:$0xf]
  %v258 = vld [vmem:[%s1 + $0x25c] sm:$0xf]
  %v259 = vld [vmem:[%s1 + $0x260] sm:$0xf]
  %v260 = vld [vmem:[%s1 + $0x264] sm:$0xf]
  %v261 = vld [vmem:[%s1 + $0x268] sm:$0xf]
  %v262 = vld [vmem:[%s1 + $0x26c] sm:$0xf]
  %v263 = vld [vmem:[%s1 + $0x270] sm:$0xf]
  %v264 = vld [vmem:[%s1 + $0x274] sm:$0xf]
  %v265 = vld [vmem:[%s1 + $0x278] sm:$0xf]
  %v266 = vld [vmem:[%s1 + $0x27c] sm:$0xf]
  %v267 = vld [vmem:[%s1 + $0x280] sm:$0xf]
  %v268 = vld [vmem:[%s1 + $0x284] sm:$0xf]
  %v269 = vld [vmem:[%s1 + $0x288] sm:$0xf]
  %v270 = vld [vmem:[%s1 + $0x28c] sm:$0xf]
  %v271 = vld [vmem:[%s1 + $0x290] sm:$0xf]
  %v272 = vld [vmem:[%s1 + $0x294] sm:$0xf]
  %v273 = vld [vmem:[%s1 + $0x298] sm:$0xf]
  %v274 = vld [vmem:[%s1 + $0x29c] sm:$0xf]
  %v275 = vld [vmem:[%s1 + $0x2a0] sm:$0xf]
  %v276 = vld [vmem:[%s1 + $0x2a4] sm:$0xf]
  %v277 = vld [vmem:[%s1 + $0x2a8] sm:$0xf]
  %v278 = vld [vmem:[%s1 + $0x2ac] sm:$0xf]
  %v279 = vld [vmem:[%s1 + $0x2b0] sm:$0xf]
  %v280 = vld [vmem:[%s1 + $0x2b4] sm:$0xf]
  %v281 = vld [vmem:[%s1 + $0x2b8] sm:$0xf]
  %v282 = vld [vmem:[%s1 + $0x2bc] sm:$0xf]
  %v283 = vld [vmem:[%s1 + $0x2c0] sm:$0xf]
  %v284 = vld [vmem:[%s1 + $0x2c4] sm:$0xf]
  %v285 = vld [vmem:[%s1 + $0x2c8] sm:$0xf]
  %v286 = vld [vmem:[%s1 + $0x2cc] sm:$0xf]
  %v287 = vld [vmem:[%s1 + $0x2d0] sm:$0xf]
  %v288 = vld [vmem:[%s1 + $0x2d4] sm:$0xf]
  %v289 = vld [vmem:[%s1 + $0x2d8] sm:$0xf]
  %v290 = vld [vmem:[%s1 + $0x2dc] sm:$0xf]
  %v291 = vld [vmem:[%s1 + $0x2e0] sm:$0xf]
  %v292 = vld [vmem:[%s1 + $0x2e4] sm:$0xf]
  %v293 = vld [vmem:[%s1 + $0x2e8] sm:$0xf]
  %v294 = vld [vmem:[%s1 + $0x2ec] sm:$0xf]
  %v295 = vld [vmem:[%s1 + $0x2f0] sm:$0xf]
  %v296 = vld [vmem:[%s1 + $0x2f4] sm:$0xf]
  %v297 = vld [vmem:[%s1 + $0x2f8] sm:$0xf]
  %v298 = vld [vmem:[%s1 + $0x2fc] sm:$0xf]
  %v299 = vld [vmem:[%s1 + $0x300] sm:$0xf]
  %v300 = vld [vmem:[%s1 + $0x304] sm:$0xf]
  %v301 = vld [vmem:[%s1 + $0x308] sm:$0xf]
  %v302 = vld [vmem:[%s1 + $0x30c] sm:$0xf]
  %v303 = vld [vmem:[%s1 + $0x310] sm:$0xf]
  %v304 = vld [vmem:[%s1 + $0x314] sm:$0xf]
  %v305 = vld [vmem:[%s1 + $0x318] sm:$0xf]
  %v306 = vld [vmem:[%s1 + $0x31c] sm:$0xf]
  %v307 = vld [vmem:[%s1 + $0x320] sm:$0xf]
  %v308 = vld [vmem:[%s1 + $0x324] sm:$0xf]
  %v309 = vld [vmem:[%s1 + $0x328] sm:$0xf]
  %v310 = vld [vmem:[%s1 + $0x32c] sm:$0xf]
  %v311 = vld [vmem:[%s1 + $0x330] sm:$0xf]
  %v312 = vld [vmem:[%s1 + $0x334] sm:$0xf]
  %v313 = vld [vmem:[%s1 + $0x338] sm:$0xf]
  %v314 = vld [vmem:[%s1 + $0x33c] sm:$0xf]
  %v315 = vld [vmem:[%s1 + $0x340] sm:$0xf]
  %v316 = vld [vmem:[%s1 + $0x344] sm:$0xf]
  %v317 = vld [vmem:[%s1 + $0x348] sm:$0xf]
  %v318 = vld [vmem:[%s1 + $0x34c] sm:$0xf]
  %v319 = vld [vmem:[%s1 + $0x350] sm:$0xf]
  %v320 = vld [vmem:[%s1 + $0x354] sm:$0xf]
  %v321 = vld [vmem:[%s1 + $0x358] sm:$0xf]
  %v322 = vld [vmem:[%s1 + $0x35c] sm:$0xf]
  %v323 = vld [vmem:[%s1 + $0x360] sm:$0xf]
  %v324 = vld [vmem:[%s1 + $0x364] sm:$0xf]
  %v325 = vld [vmem:[%s1 + $0x368] sm:$0xf]
  %v326 = vld [vmem:[%s1 + $0x36c] sm:$0xf]
  %v327 = vld [vmem:[%s1 + $0x370] sm:$0xf]
  %v328 = vld [vmem:[%s1 + $0x374] sm:$0xf]
  %v329 = vld [vmem:[%s1 + $0x378] sm:$0xf]
  %v330 = vld [vmem:[%s1 + $0x37c] sm:$0xf]
  %v331 = vld [vmem:[%s1 + $0x380] sm:$0xf]
  %v332 = vld [vmem:[%s1 + $0x384] sm:$0xf]
  %v333 = vld [vmem:[%s1 + $0x388] sm:$0xf]
  %v334 = vld [vmem:[%s1 + $0x38c] sm:$0xf]
  %v335 = vld [vmem:[%s1 + $0x390] sm:$0xf]
  %v336 = vld [vmem:[%s1 + $0x394] sm:$0xf]
  %v337 = vld [vmem:[%s1 + $0x398] sm:$0xf]
  %v338 = vld [vmem:[%s1 + $0x39c] sm:$0xf]
  %v339 = vld [vmem:[%s1 + $0x3a0] sm:$0xf]
  %v340 = vld [vmem:[%s1 + $0x3a4] sm:$0xf]
  %v341 = vld [vmem:[%s1 + $0x3a8] sm:$0xf]
  %v342 = vld [vmem:[%s1 + $0x3ac] sm:$0xf]
  %v343 = vld [vmem:[%s1 + $0x3b0] sm:$0xf]
  %v344 = vld [vmem:[%s1 + $0x3b4] sm:$0xf]
  %v345 = vld [vmem:[%s1 + $0x3b8] sm:$0xf]
  %v346 = vld [vmem:[%s1 + $0x3bc] sm:$0xf]
  %v347 = vld [vmem:[%s1 + $0x3c0] sm:$0xf]
  %v348 = vld [vmem:[%s1 + $0x3c4] sm:$0xf]
  %v349 = vld [vmem:[%s1 + $0x3c8] sm:$0xf]
  %v350 = vld [vmem:[%s1 + $0x3cc] sm:$0xf]
  %v351 = vld [vmem:[%s1 + $0x3d0] sm:$0xf]
  %v352 = vld [vmem:[%s1 + $0x3d4] sm:$0xf]
  %v353 = vld [vmem:[%s1 + $0x3d8] sm:$0xf]
  %v354 = vld [vmem:[%s1 + $0x3dc] sm:$0xf]
  %v355 = vld [vmem:[%s1 + $0x3e0] sm:$0xf]
  %v356 = vld [vmem:[%s1 + $0x3e4] sm:$0xf]
  %v357 = vld [vmem:[%s1 + $0x3e8] sm:$0xf]
  %v358 = vld [vmem:[%s1 + $0x3ec] sm:$0xf]
  %v359 = vld [vmem:[%s1 + $0x3f0] sm:$0xf]
  %v360 = vld [vmem:[%s1 + $0x3f4] sm:$0xf]
  %v361 = vld [vmem:[%s1 + $0x3f8] sm:$0xf]
  %v362 = vld [vmem:[%s1 + $0x3fc] sm:$0xf]
  %v363 = vld [vmem:[%s1 + $0x400] sm:$0xf]
  %v364 = vld [vmem:[%s1 + $0x404] sm:$0xf]
  %v365 = vld [vmem:[%s1 + $0x408] sm:$0xf]
  %v366 = vld [vmem:[%s1 + $0x40c] sm:$0xf]
  %v367 = vld [vmem:[%s1 + $0x410] sm:$0xf]
  %v368 = vld [vmem:[%s1 + $0x414] sm:$0xf]
  %v369 = vld [vmem:[%s1 + $0x418] sm:$0xf]
  %v370 = vld [vmem:[%s1 + $0x41c] sm:$0xf]
  %v371 = vld [vmem:[%s1 + $0x420] sm:$0xf]
  %v372 = vld [vmem:[%s1 + $0x424] sm:$0xf]
  %v373 = vld [vmem:[%s1 + $0x428] sm:$0xf]
  %v374 = vld [vmem:[%s1 + $0x42c] sm:$0xf]
  %v375 = vld [vmem:[%s1 + $0x430] sm:$0xf]
  %v376 = vld [vmem:[%s1 + $0x434] sm:$0xf]
  %v377 = vld [vmem:[%s1 + $0x438] sm:$0xf]
  %v378 = vld [vmem:[%s1 + $0x43c] sm:$0xf]
  %v379 = vld [vmem:[%s1 + $0x440] sm:$0xf]
  %v380 = vld [vmem:[%s1 + $0x444] sm:$0xf]
  %v381 = vld [vmem:[%s1 + $0x448] sm:$0xf]
  %v382 = vld [vmem:[%s1 + $0x44c] sm:$0xf]
  %v383 = vld [vmem:[%s1 + $0x450] sm:$0xf]
  %v384 = vld [vmem:[%s1 + $0x454] sm:$0xf]
  %v385 = vld [vmem:[%s1 + $0x458] sm:$0xf]
  %v386 = vld [vmem:[%s1 + $0x45c] sm:$0xf]
  %v387 = vld [vmem:[%s1 + $0x460] sm:$0xf]
  %v388 = vld [vmem:[%s1 + $0x464] sm:$0xf]
  %v389 = vld [vmem:[%s1 + $0x468] sm:$0xf]
  %v390 = vld [vmem:[%s1 + $0x46c] sm:$0xf]
  %v391 = vld [vmem:[%s1 + $0x470] sm:$0xf]
  %v392 = vld [vmem:[%s1 + $0x474] sm:$0xf]
  %v393 = vld [vmem:[%s1 + $0x478] sm:$0xf]
  %v394 = vld [vmem:[%s1 + $0x47c] sm:$0xf]
  %v395 = vld [vmem:[%s1 + $0x480] sm:$0xf]
  %v396 = vld [vmem:[%s1 + $0x484] sm:$0xf]
  %v397 = vld [vmem:[%s1 + $0x488] sm:$0xf]
  %v398 = vld [vmem:[%s1 + $0x48c] sm:$0xf]
  %v399 = vld [vmem:[%s1 + $0x490] sm:$0xf]
  %v400 = vld [vmem:[%s1 + $0x494] sm:$0xf]
  %v401 = vld [vmem:[%s1 + $0x498] sm:$0xf]
  %v402 = vld [vmem:[%s1 + $0x49c] sm:$0xf]
  %v403 = vld [vmem:[%s1 + $0x4a0] sm:$0xf]
  %v404 = vld [vmem:[%s1 + $0x4a4] sm:$0xf]
  %v405 = vld [vmem:[%s1 + $0x4a8] sm:$0xf]
  %v406 = vld [vmem:[%s1 + $0x4ac] sm:$0xf]
  %v407 = vld [vmem:[%s1 + $0x4b0] sm:$0xf]
  %v408 = vld [vmem:[%s1 + $0x4b4] sm:$0xf]
  %v409 = vld [vmem:[%s1 + $0x4b8] sm:$0xf]
  %v410 = vld [vmem:[%s1 + $0x4bc] sm:$0xf]
  %v411 = vld [vmem:[%s1 + $0x4c0] sm:$0xf]
  %v412 = vld [vmem:[%s1 + $0x4c4] sm:$0xf]
  %v413 = vld [vmem:[%s1 + $0x4c8] sm:$0xf]
  %v414 = vld [vmem:[%s1 + $0x4cc] sm:$0xf]
  %v415 = vld [vmem:[%s1 + $0x4d0] sm:$0xf]
  %v416 = vld [vmem:[%s1 + $0x4d4] sm:$0xf]
  %v417 = vld [vmem:[%s1 + $0x4d8] sm:$0xf]
  %v418 = vld [vmem:[%s1 + $0x4dc] sm:$0xf]
  %v419 = vld [vmem:[%s1 + $0x4e0] sm:$0xf]
  %v420 = vld [vmem:[%s1 + $0x4e4] sm:$0xf]
  %v421 = vld [vmem:[%s1 + $0x4e8] sm:$0xf]
  %v422 = vld [vmem:[%s1 + $0x4ec] sm:$0xf]
  %v423 = vld [vmem:[%s1 + $0x4f0] sm:$0xf]
  %v424 = vld [vmem:[%s1 + $0x4f4] sm:$0xf]
  %v425 = vld [vmem:[%s1 + $0x4f8] sm:$0xf]
  %v426 = vld [vmem:[%s1 + $0x4fc] sm:$0xf]
  %v427 = vld [vmem:[%s1 + $0x500] sm:$0xf]
  %v428 = vld [vmem:[%s1 + $0x504] sm:$0xf]
  %v429 = vld [vmem:[%s1 + $0x508] sm:$0xf]
  %v430 = vld [vmem:[%s1 + $0x50c] sm:$0xf]
  %v431 = vld [vmem:[%s1 + $0x510] sm:$0xf]
  %v432 = vld [vmem:[%s1 + $0x514] sm:$0xf]
  %v433 = vld [vmem:[%s1 + $0x518] sm:$0xf]
  %v434 = vld [vmem:[%s1 + $0x51c] sm:$0xf]
  %v435 = vld [vmem:[%s1 + $0x520] sm:$0xf]
  %v436 = vld [vmem:[%s1 + $0x524] sm:$0xf]
  %v437 = vld [vmem:[%s1 + $0x528] sm:$0xf]
  %v438 = vld [vmem:[%s1 + $0x52c] sm:$0xf]
  %v439 = vld [vmem:[%s1 + $0x530] sm:$0xf]
  %v440 = vld [vmem:[%s1 + $0x534] sm:$0xf]
  %v441 = vld [vmem:[%s1 + $0x538] sm:$0xf]
  %v442 = vld [vmem:[%s1 + $0x53c] sm:$0xf]
  %v443 = vld [vmem:[%s1 + $0x540] sm:$0xf]
  %v444 = vld [vmem:[%s1 + $0x544] sm:$0xf]
  %v445 = vld [vmem:[%s1 + $0x548] sm:$0xf]
  %v446 = vld [vmem:[%s1 + $0x54c] sm:$0xf]
  %v447 = vld [vmem:[%s1 + $0x550] sm:$0xf]
  %v448 = vld [vmem:[%s1 + $0x554] sm:$0xf]
  %v449 = vld [vmem:[%s1 + $0x558] sm:$0xf]
  %v450 = vld [vmem:[%s1 + $0x55c] sm:$0xf]
  %v451 = vld [vmem:[%s1 + $0x560] sm:$0xf]
  %v452 = vld [vmem:[%s1 + $0x564] sm:$0xf]
  %v453 = vld [vmem:[%s1 + $0x568] sm:$0xf]
  %v454 = vld [vmem:[%s1 + $0x56c] sm:$0xf]
  %v455 = vld [vmem:[%s1 + $0x570] sm:$0xf]
  %v456 = vld [vmem:[%s1 + $0x574] sm:$0xf]
  %v457 = vld [vmem:[%s1 + $0x578] sm:$0xf]
  %v458 = vld [vmem:[%s1 + $0x57c] sm:$0xf]
  %v459 = vld [vmem:[%s1 + $0x580] sm:$0xf]
  %v460 = vld [vmem:[%s1 + $0x584] sm:$0xf]
  %v461 = vld [vmem:[%s1 + $0x588] sm:$0xf]
  %v462 = vld [vmem:[%s1 + $0x58c] sm:$0xf]
  %v463 = vld [vmem:[%s1 + $0x590] sm:$0xf]
  %v464 = vld [vmem:[%s1 + $0x594] sm:$0xf]
  %v465 = vld [vmem:[%s1 + $0x598] sm:$0xf]
  %v466 = vld [vmem:[%s1 + $0x59c] sm:$0xf]
  %v467 = vld [vmem:[%s1 + $0x5a0] sm:$0xf]
  %v468 = vld [vmem:[%s1 + $0x5a4] sm:$0xf]
  %v469 = vld [vmem:[%s1 + $0x5a8] sm:$0xf]
  %v470 = vld [vmem:[%s1 + $0x5ac] sm:$0xf]
  %v471 = vld [vmem:[%s1 + $0x5b0] sm:$0xf]
  %v472 = vld [vmem:[%s1 + $0x5b4] sm:$0xf]
  %v473 = vld [vmem:[%s1 + $0x5b8] sm:$0xf]
  %v474 = vld [vmem:[%s1 + $0x5bc] sm:$0xf]
  %v475 = vld [vmem:[%s1 + $0x5c0] sm:$0xf]
  %v476 = vld [vmem:[%s1 + $0x5c4] sm:$0xf]
  %v477 = vld [vmem:[%s1 + $0x5c8] sm:$0xf]
  %v478 = vld [vmem:[%s1 + $0x5cc] sm:$0xf]
  %v479 = vld [vmem:[%s1 + $0x5d0] sm:$0xf]
  %v480 = vld [vmem:[%s1 + $0x5d4] sm:$0xf]
  %v481 = vld [vmem:[%s1 + $0x5d8] sm:$0xf]
  %v482 = vld [vmem:[%s1 + $0x5dc] sm:$0xf]
  %v483 = vld [vmem:[%s1 + $0x5e0] sm:$0xf]
  %v484 = vld [vmem:[%s1 + $0x5e4] sm:$0xf]
  %v485 = vld [vmem:[%s1 + $0x5e8] sm:$0xf]
  %v486 = vld [vmem:[%s1 + $0x5ec] sm:$0xf]
  %v487 = vld [vmem:[%s1 + $0x5f0] sm:$0xf]
  %v488 = vld [vmem:[%s1 + $0x5f4] sm:$0xf]
  %v489 = vld [vmem:[%s1 + $0x5f8] sm:$0xf]
  %v490 = vld [vmem:[%s1 + $0x5fc] sm:$0xf]
  %v491 = vld [vmem:[%s1 + $0x600] sm:$0xf]
  %v492 = vld [vmem:[%s1 + $0x604] sm:$0xf]
  %v493 = vld [vmem:[%s1 + $0x608] sm:$0xf]
  %v494 = vld [vmem:[%s1 + $0x60c] sm:$0xf]
  %v495 = vld [vmem:[%s1 + $0x610] sm:$0xf]
  %v496 = vld [vmem:[%s1 + $0x614] sm:$0xf]
  %v497 = vld [vmem:[%s1 + $0x618] sm:$0xf]
  %v498 = vld [vmem:[%s1 + $0x61c] sm:$0xf]
  %v499 = vld [vmem:[%s1 + $0x620] sm:$0xf]
  %v500 = vld [vmem:[%s1 + $0x624] sm:$0xf]
  %v501 = vld [vmem:[%s1 + $0x628] sm:$0xf]
  %v502 = vld [vmem:[%s1 + $0x62c] sm:$0xf]
  %v503 = vld [vmem:[%s1 + $0x630] sm:$0xf]
  %v504 = vld [vmem:[%s1 + $0x634] sm:$0xf]
  %v505 = vld [vmem:[%s1 + $0x638] sm:$0xf]
  %v506 = vld [vmem:[%s1 + $0x63c] sm:$0xf]
  %v507 = vld [vmem:[%s1 + $0x640] sm:$0xf]
  %v508 = vld [vmem:[%s1 + $0x644] sm:$0xf]
  %v509 = vld [vmem:[%s1 + $0x648] sm:$0xf]
  %v510 = vld [vmem:[%s1 + $0x64c] sm:$0xf]
  %v511 = vld [vmem:[%s1 + $0x650] sm:$0xf]
  %v512 = vld [vmem:[%s1 + $0x654] sm:$0xf]
  %v513 = vld [vmem:[%s1 + $0x658] sm:$0xf]
  %v514 = vld [vmem:[%s1 + $0x65c] sm:$0xf]
  %v515 = vld [vmem:[%s1 + $0x660] sm:$0xf]
  %v516 = vld [vmem:[%s1 + $0x664] sm:$0xf]
  %v517 = vld [vmem:[%s1 + $0x668] sm:$0xf]
  %v518 = vld [vmem:[%s1 + $0x66c] sm:$0xf]
  %v519 = vld [vmem:[%s1 + $0x670] sm:$0xf]
  %v520 = vld [vmem:[%s1 + $0x674] sm:$0xf]
  %v521 = vld [vmem:[%s1 + $0x678] sm:$0xf]
  %v522 = vld [vmem:[%s1 + $0x67c] sm:$0xf]
  %v523 = vld [vmem:[%s1 + $0x680] sm:$0xf]
  %v524 = vld [vmem:[%s1 + $0x684] sm:$0xf]
  %v525 = vld [vmem:[%s1 + $0x688] sm:$0xf]
  %v526 = vld [vmem:[%s1 + $0x68c] sm:$0xf]
  %v527 = vld [vmem:[%s1 + $0x690] sm:$0xf]
  %v528 = vld [vmem:[%s1 + $0x694] sm:$0xf]
  %v529 = vld [vmem:[%s1 + $0x698] sm:$0xf]
  %v530 = vld [vmem:[%s1 + $0x69c] sm:$0xf]
  %v531 = vld [vmem:[%s1 + $0x6a0] sm:$0xf]
  %v532 = vld [vmem:[%s1 + $0x6a4] sm:$0xf]
  %v533 = vld [vmem:[%s1 + $0x6a8] sm:$0xf]
  %v534 = vld [vmem:[%s1 + $0x6ac] sm:$0xf]
  %v535 = vld [vmem:[%s1 + $0x6b0] sm:$0xf]
  %v536 = vld [vmem:[%s1 + $0x6b4] sm:$0xf]
  %v537 = vld [vmem:[%s1 + $0x6b8] sm:$0xf]
  %v538 = vld [vmem:[%s1 + $0x6bc] sm:$0xf]
  %v539 = vld [vmem:[%s1 + $0x6c0] sm:$0xf]
  %v540 = vld [vmem:[%s1 + $0x6c4] sm:$0xf]
  %v541 = vld [vmem:[%s1 + $0x6c8] sm:$0xf]
  %v542 = vld [vmem:[%s1 + $0x6cc] sm:$0xf]
  %v543 = vld [vmem:[%s1 + $0x6d0] sm:$0xf]
  %v544 = vld [vmem:[%s1 + $0x6d4] sm:$0xf]
  %v545 = vld [vmem:[%s1 + $0x6d8] sm:$0xf]
  %v546 = vld [vmem:[%s1 + $0x6dc] sm:$0xf]
  %v547 = vld [vmem:[%s1 + $0x6e0] sm:$0xf]
  %v548 = vld [vmem:[%s1 + $0x6e4] sm:$0xf]
  %v549 = vld [vmem:[%s1 + $0x6e8] sm:$0xf]
  %v550 = vld [vmem:[%s1 + $0x6ec] sm:$0xf]
  %v551 = vld [vmem:[%s1 + $0x6f0] sm:$0xf]
  %v552 = vld [vmem:[%s1 + $0x6f4] sm:$0xf]
  %v553 = vld [vmem:[%s1 + $0x6f8] sm:$0xf]
  %v554 = vld [vmem:[%s1 + $0x6fc] sm:$0xf]
  %v555 = vld [vmem:[%s1 + $0x700] sm:$0xf]
  %v556 = vld [vmem:[%s1 + $0x704] sm:$0xf]
  %v557 = vld [vmem:[%s1 + $0x708] sm:$0xf]
  %v558 = vld [vmem:[%s1 + $0x70c] sm:$0xf]
  %v559 = vld [vmem:[%s1 + $0x710] sm:$0xf]
  %v560 = vld [vmem:[%s1 + $0x714] sm:$0xf]
  %v561 = vld [vmem:[%s1 + $0x718] sm:$0xf]
  %v562 = vld [vmem:[%s1 + $0x71c] sm:$0xf]
  %v563 = vld [vmem:[%s1 + $0x720] sm:$0xf]
  %v564 = vld [vmem:[%s1 + $0x724] sm:$0xf]
  %v565 = vld [vmem:[%s1 + $0x728] sm:$0xf]
  %v566 = vld [vmem:[%s1 + $0x72c] sm:$0xf]
  %v567 = vld [vmem:[%s1 + $0x730] sm:$0xf]
  %v568 = vld [vmem:[%s1 + $0x734] sm:$0xf]
  %v569 = vld [vmem:[%s1 + $0x738] sm:$0xf]
  %v570 = vld [vmem:[%s1 + $0x73c] sm:$0xf]
  %v571 = vld [vmem:[%s1 + $0x740] sm:$0xf]
  %v572 = vld [vmem:[%s1 + $0x744] sm:$0xf]
  %v573 = vld [vmem:[%s1 + $0x748] sm:$0xf]
  %v574 = vld [vmem:[%s1 + $0x74c] sm:$0xf]
  %v575 = vld [vmem:[%s1 + $0x750] sm:$0xf]
  %v576 = vld [vmem:[%s1 + $0x754] sm:$0xf]
  %v577 = vld [vmem:[%s1 + $0x758] sm:$0xf]
  %v578 = vld [vmem:[%s1 + $0x75c] sm:$0xf]
  %v579 = vld [vmem:[%s1 + $0x760] sm:$0xf]
  %v580 = vld [vmem:[%s1 + $0x764] sm:$0xf]
  %v581 = vld [vmem:[%s1 + $0x768] sm:$0xf]
  %v582 = vld [vmem:[%s1 + $0x76c] sm:$0xf]
  %v583 = vld [vmem:[%s1 + $0x770] sm:$0xf]
  %v584 = vld [vmem:[%s1 + $0x774] sm:$0xf]
  %v585 = vld [vmem:[%s1 + $0x778] sm:$0xf]
  %v586 = vld [vmem:[%s1 + $0x77c] sm:$0xf]
  %v587 = vld [vmem:[%s1 + $0x780] sm:$0xf]
  %v588 = vld [vmem:[%s1 + $0x784] sm:$0xf]
  %v589 = vld [vmem:[%s1 + $0x788] sm:$0xf]
  %v590 = vld [vmem:[%s1 + $0x78c] sm:$0xf]
  %v591 = vld [vmem:[%s1 + $0x790] sm:$0xf]
  %v592 = vld [vmem:[%s1 + $0x794] sm:$0xf]
  %v593 = vld [vmem:[%s1 + $0x798] sm:$0xf]
  %v594 = vld [vmem:[%s1 + $0x79c] sm:$0xf]
  %v595 = vld [vmem:[%s1 + $0x7a0] sm:$0xf]
  %v596 = vld [vmem:[%s1 + $0x7a4] sm:$0xf]
  %v597 = vld [vmem:[%s1 + $0x7a8] sm:$0xf]
  %v598 = vld [vmem:[%s1 + $0x7ac] sm:$0xf]
  %v599 = vld [vmem:[%s1 + $0x7b0] sm:$0xf]
  %v600 = vld [vmem:[%s1 + $0x7b4] sm:$0xf]
  %v601 = vld [vmem:[%s1 + $0x7b8] sm:$0xf]
  %v602 = vld [vmem:[%s1 + $0x7bc] sm:$0xf]
  %v603 = vld [vmem:[%s1 + $0x7c0] sm:$0xf]
  %v604 = vld [vmem:[%s1 + $0x7c4] sm:$0xf]
  %v605 = vld [vmem:[%s1 + $0x7c8] sm:$0xf]
  %v606 = vld [vmem:[%s1 + $0x7cc] sm:$0xf]
  %v607 = vld [vmem:[%s1 + $0x7d0] sm:$0xf]
  %v608 = vld [vmem:[%s1 + $0x7d4] sm:$0xf]
  %v609 = vld [vmem:[%s1 + $0x7d8] sm:$0xf]
  %v610 = vld [vmem:[%s1 + $0x7dc] sm:$0xf]
  %v611 = vld [vmem:[%s1 + $0x7e0] sm:$0xf]
  %v612 = vld [vmem:[%s1 + $0x7e4] sm:$0xf]
  %v613 = vld [vmem:[%s1 + $0x7e8] sm:$0xf]
  %v614 = vld [vmem:[%s1 + $0x7ec] sm:$0xf]
  %v615 = vld [vmem:[%s1 + $0x7f0] sm:$0xf]
  %v616 = vld [vmem:[%s1 + $0x7f4] sm:$0xf]
  %v617 = vld [vmem:[%s1 + $0x7f8] sm:$0xf]
  %v618 = vld [vmem:[%s1 + $0x7fc] sm:$0xf]
  %v619 = vld [vmem:[%s1 + $0x800] sm:$0xf]
  %v620 = vld [vmem:[%s1 + $0x804] sm:$0xf]
  %v621 = vld [vmem:[%s1 + $0x808] sm:$0xf]
  %v622 = vld [vmem:[%s1 + $0x80c] sm:$0xf]
  %v623 = vld [vmem:[%s1 + $0x810] sm:$0xf]
  %v624 = vld [vmem:[%s1 + $0x814] sm:$0xf]
  %v625 = vld [vmem:[%s1 + $0x818] sm:$0xf]
  %v626 = vld [vmem:[%s1 + $0x81c] sm:$0xf]
  %v627 = vld [vmem:[%s1 + $0x820] sm:$0xf]
  %v628 = vld [vmem:[%s1 + $0x824] sm:$0xf]
  %v629 = vld [vmem:[%s1 + $0x828] sm:$0xf]
  %v630 = vld [vmem:[%s1 + $0x82c] sm:$0xf]
  %v631 = vld [vmem:[%s1 + $0x830] sm:$0xf]
  %v632 = vld [vmem:[%s1 + $0x834] sm:$0xf]
  %v633 = vld [vmem:[%s1 + $0x838] sm:$0xf]
  %v634 = vld [vmem:[%s1 + $0x83c] sm:$0xf]
  %v635 = vld [vmem:[%s1 + $0x840] sm:$0xf]
  %v636 = vld [vmem:[%s1 + $0x844] sm:$0xf]
  %v637 = vld [vmem:[%s1 + $0x848] sm:$0xf]
  %v638 = vld [vmem:[%s1 + $0x84c] sm:$0xf]
  %v639 = vld [vmem:[%s1 + $0x850] sm:$0xf]
  %v640 = vld [vmem:[%s1 + $0x854] sm:$0xf]
  %v641 = vld [vmem:[%s1 + $0x858] sm:$0xf]
  %v642 = vld [vmem:[%s1 + $0x85c] sm:$0xf]
  %v643 = vld [vmem:[%s1 + $0x860] sm:$0xf]
  %v644 = vld [vmem:[%s1 + $0x864] sm:$0xf]
  %v645 = vld [vmem:[%s1 + $0x868] sm:$0xf]
  %v646 = vld [vmem:[%s1 + $0x86c] sm:$0xf]
  %v647 = vld [vmem:[%s1 + $0x870] sm:$0xf]
  %v648 = vld [vmem:[%s1 + $0x874] sm:$0xf]
  %v649 = vld [vmem:[%s1 + $0x878] sm:$0xf]
  %v650 = vld [vmem:[%s1 + $0x87c] sm:$0xf]
  %v651 = vld [vmem:[%s1 + $0x880] sm:$0xf]
  %v652 = vld [vmem:[%s1 + $0x884] sm:$0xf]
  %v653 = vld [vmem:[%s1 + $0x888] sm:$0xf]
  %v654 = vld [vmem:[%s1 + $0x88c] sm:$0xf]
  %v655 = vld [vmem:[%s1 + $0x890] sm:$0xf]
  %v656 = vld [vmem:[%s1 + $0x894] sm:$0xf]
  %v657 = vld [vmem:[%s1 + $0x898] sm:$0xf]
  %v658 = vld [vmem:[%s1 + $0x89c] sm:$0xf]
  %v659 = vld [vmem:[%s1 + $0x8a0] sm:$0xf]
  %v660 = vld [vmem:[%s1 + $0x8a4] sm:$0xf]
  %v661 = vld [vmem:[%s1 + $0x8a8] sm:$0xf]
  %v662 = vld [vmem:[%s1 + $0x8ac] sm:$0xf]
  %v663 = vld [vmem:[%s1 + $0x8b0] sm:$0xf]
  %v664 = vld [vmem:[%s1 + $0x8b4] sm:$0xf]
  %v665 = vld [vmem:[%s1 + $0x8b8] sm:$0xf]
  %v666 = vld [vmem:[%s1 + $0x8bc] sm:$0xf]
  %v667 = vld [vmem:[%s1 + $0x8c0] sm:$0xf]
  %v668 = vld [vmem:[%s1 + $0x8c4] sm:$0xf]
  %v669 = vld [vmem:[%s1 + $0x8c8] sm:$0xf]
  %v670 = vld [vmem:[%s1 + $0x8cc] sm:$0xf]
  %v671 = vld [vmem:[%s1 + $0x8d0] sm:$0xf]
  %v672 = vld [vmem:[%s1 + $0x8d4] sm:$0xf]
  %v673 = vld [vmem:[%s1 + $0x8d8] sm:$0xf]
  %v674 = vld [vmem:[%s1 + $0x8dc] sm:$0xf]
  %v675 = vld [vmem:[%s1 + $0x8e0] sm:$0xf]
  %v676 = vld [vmem:[%s1 + $0x8e4] sm:$0xf]
  %v677 = vld [vmem:[%s1 + $0x8e8] sm:$0xf]
  %v678 = vld [vmem:[%s1 + $0x8ec] sm:$0xf]
  %v679 = vld [vmem:[%s1 + $0x8f0] sm:$0xf]
  %v680 = vld [vmem:[%s1 + $0x8f4] sm:$0xf]
  %v681 = vld [vmem:[%s1 + $0x8f8] sm:$0xf]
  %v682 = vld [vmem:[%s1 + $0x8fc] sm:$0xf]
  %v683 = vld [vmem:[%s1 + $0x900] sm:$0xf]
  %v684 = vld [vmem:[%s1 + $0x904] sm:$0xf]
  %v685 = vld [vmem:[%s1 + $0x908] sm:$0xf]
  %v686 = vld [vmem:[%s1 + $0x90c] sm:$0xf]
  %v687 = vld [vmem:[%s1 + $0x910] sm:$0xf]
  %v688 = vld [vmem:[%s1 + $0x914] sm:$0xf]
  %v689 = vld [vmem:[%s1 + $0x918] sm:$0xf]
  %v690 = vld [vmem:[%s1 + $0x91c] sm:$0xf]
  %v691 = vld [vmem:[%s1 + $0x920] sm:$0xf]
  %v692 = vld [vmem:[%s1 + $0x924] sm:$0xf]
  %v693 = vld [vmem:[%s1 + $0x928] sm:$0xf]
  %v694 = vld [vmem:[%s1 + $0x92c] sm:$0xf]
  %v695 = vld [vmem:[%s1 + $0x930] sm:$0xf]
  %v696 = vld [vmem:[%s1 + $0x934] sm:$0xf]
  %v697 = vld [vmem:[%s1 + $0x938] sm:$0xf]
  %v698 = vld [vmem:[%s1 + $0x93c] sm:$0xf]
  %v699 = vld [vmem:[%s1 + $0x940] sm:$0xf]
  %v700 = vld [vmem:[%s1 + $0x944] sm:$0xf]
  %v701 = vld [vmem:[%s1 + $0x948] sm:$0xf]
  %v702 = vld [vmem:[%s1 + $0x94c] sm:$0xf]
  %v703 = vld [vmem:[%s1 + $0x950] sm:$0xf]
  %v704 = vld [vmem:[%s1 + $0x954] sm:$0xf]
  %v705 = vld [vmem:[%s1 + $0x958] sm:$0xf]
  %v706 = vld [vmem:[%s1 + $0x95c] sm:$0xf]
  %v707 = vld [vmem:[%s1 + $0x960] sm:$0xf]
  %v708 = vld [vmem:[%s1 + $0x964] sm:$0xf]
  %v709 = vld [vmem:[%s1 + $0x968] sm:$0xf]
  %v710 = vld [vmem:[%s1 + $0x96c] sm:$0xf]
  %v711 = vld [vmem:[%s1 + $0x970] sm:$0xf]
  %v712 = vld [vmem:[%s1 + $0x974] sm:$0xf]
  %v713 = vld [vmem:[%s1 + $0x978] sm:$0xf]
  %v714 = vld [vmem:[%s1 + $0x97c] sm:$0xf]
  %v715 = vld [vmem:[%s1 + $0x980] sm:$0xf]
  %v716 = vld [vmem:[%s1 + $0x984] sm:$0xf]
  %v717 = vld [vmem:[%s1 + $0x988] sm:$0xf]
  %v718 = vld [vmem:[%s1 + $0x98c] sm:$0xf]
  %v719 = vld [vmem:[%s1 + $0x990] sm:$0xf]
  %v720 = vld [vmem:[%s1 + $0x994] sm:$0xf]
  %v721 = vld [vmem:[%s1 + $0x998] sm:$0xf]
  %v722 = vld [vmem:[%s1 + $0x99c] sm:$0xf]
  %v723 = vld [vmem:[%s1 + $0x9a0] sm:$0xf]
  %v724 = vld [vmem:[%s1 + $0x9a4] sm:$0xf]
  %v725 = vld [vmem:[%s1 + $0x9a8] sm:$0xf]
  %v726 = vld [vmem:[%s1 + $0x9ac] sm:$0xf]
  %v727 = vld [vmem:[%s1 + $0x9b0] sm:$0xf]
  %v728 = vld [vmem:[%s1 + $0x9b4] sm:$0xf]
  %v729 = vld [vmem:[%s1 + $0x9b8] sm:$0xf]
  %v730 = vld [vmem:[%s1 + $0x9bc] sm:$0xf]
  %v731 = vld [vmem:[%s1 + $0x9c0] sm:$0xf]
  %v732 = vld [vmem:[%s1 + $0x9c4] sm:$0xf]
  %v733 = vld [vmem:[%s1 + $0x9c8] sm:$0xf]
  %v734 = vld [vmem:[%s1 + $0x9cc] sm:$0xf]
  %v735 = vld [vmem:[%s1 + $0x9d0] sm:$0xf]
  %v736 = vld [vmem:[%s1 + $0x9d4] sm:$0xf]
  %v737 = vld [vmem:[%s1 + $0x9d8] sm:$0xf]
  %v738 = vld [vmem:[%s1 + $0x9dc] sm:$0xf]
  %v739 = vld [vmem:[%s1 + $0x9e0] sm:$0xf]
  %v740 = vld [vmem:[%s1 + $0x9e4] sm:$0xf]
  %v741 = vld [vmem:[%s1 + $0x9e8] sm:$0xf]
  %v742 = vld [vmem:[%s1 + $0x9ec] sm:$0xf]
  %v743 = vld [vmem:[%s1 + $0x9f0] sm:$0xf]
  %v744 = vld [vmem:[%s1 + $0x9f4] sm:$0xf]
  %v745 = vld [vmem:[%s1 + $0x9f8] sm:$0xf]
  %v746 = vld [vmem:[%s1 + $0x9fc] sm:$0xf]
  %v747 = vld [vmem:[%s1 + $0xa00] sm:$0xf]
  %v748 = vld [vmem:[%s1 + $0xa04] sm:$0xf]
  %v749 = vld [vmem:[%s1 + $0xa08] sm:$0xf]
  %v750 = vld [vmem:[%s1 + $0xa0c] sm:$0xf]
  %v751 = vld [vmem:[%s1 + $0xa10] sm:$0xf]
  %v752 = vld [vmem:[%s1 + $0xa14] sm:$0xf]
  %v753 = vld [vmem:[%s1 + $0xa18] sm:$0xf]
  %v754 = vld [vmem:[%s1 + $0xa1c] sm:$0xf]
  %v755 = vld [vmem:[%s1 + $0xa20] sm:$0xf]
  %v756 = vld [vmem:[%s1 + $0xa24] sm:$0xf]
  %v757 = vld [vmem:[%s1 + $0xa28] sm:$0xf]
  %v758 = vld [vmem:[%s1 + $0xa2c] sm:$0xf]
  %v759 = vld [vmem:[%s1 + $0xa30] sm:$0xf]
  %v760 = vld [vmem:[%s1 + $0xa34] sm:$0xf]
  %v761 = vld [vmem:[%s1 + $0xa38] sm:$0xf]
  %v762 = vld [vmem:[%s1 + $0xa3c] sm:$0xf]
  %v763 = vld [vmem:[%s1 + $0xa40] sm:$0xf]
  %v764 = vld [vmem:[%s1 + $0xa44] sm:$0xf]
  %v765 = vld [vmem:[%s1 + $0xa48] sm:$0xf]
  %v766 = vld [vmem:[%s1 + $0xa4c] sm:$0xf]
  %v767 = vld [vmem:[%s1 + $0xa50] sm:$0xf]
  %v768 = vld [vmem:[%s1 + $0xa54] sm:$0xf]
  %v769 = vld [vmem:[%s1 + $0xa58] sm:$0xf]
  %v770 = vld [vmem:[%s1 + $0xa5c] sm:$0xf]
  %v771 = vld [vmem:[%s1 + $0xa60] sm:$0xf]
  %v772 = vld [vmem:[%s1 + $0xa64] sm:$0xf]
  %v773 = vld [vmem:[%s1 + $0xa68] sm:$0xf]
  %v774 = vld [vmem:[%s1 + $0xa6c] sm:$0xf]
  %v775 = vld [vmem:[%s1 + $0xa70] sm:$0xf]
  %v776 = vld [vmem:[%s1 + $0xa74] sm:$0xf]
  %v777 = vld [vmem:[%s1 + $0xa78] sm:$0xf]
  %v778 = vld [vmem:[%s1 + $0xa7c] sm:$0xf]
  %v779 = vld [vmem:[%s1 + $0xa80] sm:$0xf]
  %v780 = vld [vmem:[%s1 + $0xa84] sm:$0xf]
  %v781 = vld [vmem:[%s1 + $0xa88] sm:$0xf]
  %v782 = vld [vmem:[%s1 + $0xa8c] sm:$0xf]
  %v783 = vld [vmem:[%s1 + $0xa90] sm:$0xf]
  %v784 = vld [vmem:[%s1 + $0xa94] sm:$0xf]
  %v785 = vld [vmem:[%s1 + $0xa98] sm:$0xf]
  %v786 = vld [vmem:[%s1 + $0xa9c] sm:$0xf]
  %v787 = vld [vmem:[%s1 + $0xaa0] sm:$0xf]
  %v788 = vld [vmem:[%s1 + $0xaa4] sm:$0xf]
  %v789 = vld [vmem:[%s1 + $0xaa8] sm:$0xf]
  %v790 = vld [vmem:[%s1 + $0xaac] sm:$0xf]
  %v791 = vld [vmem:[%s1 + $0xab0] sm:$0xf]
  %v792 = vld [vmem:[%s1 + $0xab4] sm:$0xf]
  %v793 = vld [vmem:[%s1 + $0xab8] sm:$0xf]
  %v794 = vld [vmem:[%s1 + $0xabc] sm:$0xf]
  %v795 = vld [vmem:[%s1 + $0xac0] sm:$0xf]
  %v796 = vld [vmem:[%s1 + $0xac4] sm:$0xf]
  %v797 = vld [vmem:[%s1 + $0xac8] sm:$0xf]
  %v798 = vld [vmem:[%s1 + $0xacc] sm:$0xf]
  %v799 = vld [vmem:[%s1 + $0xad0] sm:$0xf]
  %v800 = vld [vmem:[%s1 + $0xad4] sm:$0xf]
  %v801 = vld [vmem:[%s1 + $0xad8] sm:$0xf]
  %v802 = vld [vmem:[%s1 + $0xadc] sm:$0xf]
  %v803 = vld [vmem:[%s1 + $0xae0] sm:$0xf]
  %v804 = vld [vmem:[%s1 + $0xae4] sm:$0xf]
  %v805 = vld [vmem:[%s1 + $0xae8] sm:$0xf]
  %v806 = vld [vmem:[%s1 + $0xaec] sm:$0xf]
  %v807 = vld [vmem:[%s1 + $0xaf0] sm:$0xf]
  %v808 = vld [vmem:[%s1 + $0xaf4] sm:$0xf]
  %v809 = vld [vmem:[%s1 + $0xaf8] sm:$0xf]
  %v810 = vld [vmem:[%s1 + $0xafc] sm:$0xf]
  %v811 = vld [vmem:[%s1 + $0xb00] sm:$0xf]
  %v812 = vld [vmem:[%s1 + $0xb04] sm:$0xf]
  %v813 = vld [vmem:[%s1 + $0xb08] sm:$0xf]
  %v814 = vld [vmem:[%s1 + $0xb0c] sm:$0xf]
  %v815 = vld [vmem:[%s1 + $0xb10] sm:$0xf]
  %v816 = vld [vmem:[%s1 + $0xb14] sm:$0xf]
  %v817 = vld [vmem:[%s1 + $0xb18] sm:$0xf]
  %v818 = vld [vmem:[%s1 + $0xb1c] sm:$0xf]
  %v819 = vld [vmem:[%s1 + $0xb20] sm:$0xf]
  %v820 = vld [vmem:[%s1 + $0xb24] sm:$0xf]
  %v821 = vld [vmem:[%s1 + $0xb28] sm:$0xf]
  %v822 = vld [vmem:[%s1 + $0xb2c] sm:$0xf]
  %v823 = vld [vmem:[%s1 + $0xb30] sm:$0xf]
  %v824 = vld [vmem:[%s1 + $0xb34] sm:$0xf]
  %v825 = vld [vmem:[%s1 + $0xb38] sm:$0xf]
  %v826 = vld [vmem:[%s1 + $0xb3c] sm:$0xf]
  %v827 = vld [vmem:[%s1 + $0xb40] sm:$0xf]
  %v828 = vld [vmem:[%s1 + $0xb44] sm:$0xf]
  %v829 = vld [vmem:[%s1 + $0xb48] sm:$0xf]
  %v830 = vld [vmem:[%s1 + $0xb4c] sm:$0xf]
  %v831 = vld [vmem:[%s1 + $0xb50] sm:$0xf]
  %v832 = vld [vmem:[%s1 + $0xb54] sm:$0xf]
  %v833 = vld [vmem:[%s1 + $0xb58] sm:$0xf]
  %v834 = vld [vmem:[%s1 + $0xb5c] sm:$0xf]
  %v835 = vld [vmem:[%s1 + $0xb60] sm:$0xf]
  %v836 = vld [vmem:[%s1 + $0xb64] sm:$0xf]
  %v837 = vld [vmem:[%s1 + $0xb68] sm:$0xf]
  %v838 = vld [vmem:[%s1 + $0xb6c] sm:$0xf]
  %v839 = vld [vmem:[%s1 + $0xb70] sm:$0xf]
  %v840 = vld [vmem:[%s1 + $0xb74] sm:$0xf]
  %v841 = vld [vmem:[%s1 + $0xb78] sm:$0xf]
  %v842 = vld [vmem:[%s1 + $0xb7c] sm:$0xf]
  %v843 = vld [vmem:[%s2] sm:$0x1]
  %v845 = vlaneseq
  %v846 = vshrl.u32 %v845, 7
  %v847 = vsub.s32 0, %v846
  %v848 = vrot.slane %v843, %v847
  %v942 = vunpack.c.l.b16 %v15
  %v943 = vunpack.c.h.b16 %v15
  %v944 = vunpack.c.l.b16 %v16
  %v945 = vunpack.c.h.b16 %v16
  %v946 = vunpack.c.l.b16 %v17
  %v947 = vunpack.c.h.b16 %v17
  %v948 = vunpack.c.l.b16 %v18
  %v949 = vunpack.c.h.b16 %v18
  %v950 = vunpack.c.l.b16 %v19
  %v951 = vunpack.c.h.b16 %v19
  %v952 = vunpack.c.l.b16 %v20
  %v953 = vunpack.c.h.b16 %v20
  %v954 = vunpack.c.l.b16 %v21
  %v955 = vunpack.c.h.b16 %v21
  %v956 = vunpack.c.l.b16 %v22
  %v957 = vunpack.c.h.b16 %v22
  %v958 = vunpack.c.l.b16 %v23
  %v959 = vunpack.c.h.b16 %v23
  %v960 = vunpack.c.l.b16 %v24
  %v961 = vunpack.c.h.b16 %v24
  %v962 = vunpack.c.l.b16 %v25
  %v963 = vunpack.c.h.b16 %v25
  %v964 = vunpack.c.l.b16 %v26
  %v965 = vunpack.c.h.b16 %v26
  %v966 = vunpack.c.l.b16 %v27
  %v967 = vunpack.c.h.b16 %v27
  %v968 = vunpack.c.l.b16 %v28
  %v969 = vunpack.c.h.b16 %v28
  %v970 = vunpack.c.l.b16 %v29
  %v971 = vunpack.c.h.b16 %v29
  %v972 = vunpack.c.l.b16 %v30
  %v973 = vunpack.c.h.b16 %v30
  %v974 = vunpack.c.l.b16 %v31
  %v975 = vunpack.c.h.b16 %v31
  %v976 = vunpack.c.l.b16 %v32
  %v977 = vunpack.c.h.b16 %v32
  %v978 = vunpack.c.l.b16 %v33
  %v979 = vunpack.c.h.b16 %v33
  %v980 = vunpack.c.l.b16 %v34
  %v981 = vunpack.c.h.b16 %v34
  %v982 = vunpack.c.l.b16 %v35
  %v983 = vunpack.c.h.b16 %v35
  %v984 = vunpack.c.l.b16 %v36
  %v985 = vunpack.c.h.b16 %v36
  %v986 = vunpack.c.l.b16 %v37
  %v987 = vunpack.c.h.b16 %v37
  %v988 = vunpack.c.l.b16 %v38
  %v989 = vunpack.c.h.b16 %v38
  %v990 = vunpack.c.l.b16 %v39
  %v991 = vunpack.c.h.b16 %v39
  %v992 = vunpack.c.l.b16 %v40
  %v993 = vunpack.c.h.b16 %v40
  %v994 = vunpack.c.l.b16 %v41
  %v995 = vunpack.c.h.b16 %v41
  %v996 = vunpack.c.l.b16 %v42
  %v997 = vunpack.c.h.b16 %v42
  %v998 = vunpack.c.l.b16 %v43
  %v999 = vunpack.c.h.b16 %v43
  %v1000 = vunpack.c.l.b16 %v44
  %v1001 = vunpack.c.h.b16 %v44
  %v1002 = vunpack.c.l.b16 %v45
  %v1003 = vunpack.c.h.b16 %v45
  %v1004 = vunpack.c.l.b16 %v46
  %v1005 = vunpack.c.h.b16 %v46
  %v1006 = vunpack.c.l.b16 %v47
  %v1007 = vunpack.c.h.b16 %v47
  %v1008 = vunpack.c.l.b16 %v48
  %v1009 = vunpack.c.h.b16 %v48
  %v1010 = vunpack.c.l.b16 %v49
  %v1011 = vunpack.c.h.b16 %v49
  %v1012 = vunpack.c.l.b16 %v50
  %v1013 = vunpack.c.h.b16 %v50
  %v1014 = vunpack.c.l.b16 %v51
  %v1015 = vunpack.c.h.b16 %v51
  %v1016 = vunpack.c.l.b16 %v52
  %v1017 = vunpack.c.h.b16 %v52
  %v1018 = vunpack.c.l.b16 %v53
  %v1019 = vunpack.c.h.b16 %v53
  %v1020 = vunpack.c.l.b16 %v54
  %v1021 = vunpack.c.h.b16 %v54
  %v1022 = vunpack.c.l.b16 %v55
  %v1023 = vunpack.c.h.b16 %v55
  %v1024 = vunpack.c.l.b16 %v56
  %v1025 = vunpack.c.h.b16 %v56
  %v1026 = vunpack.c.l.b16 %v57
  %v1027 = vunpack.c.h.b16 %v57
  %v1028 = vunpack.c.l.b16 %v58
  %v1029 = vunpack.c.h.b16 %v58
  %v1030 = vunpack.c.l.b16 %v59
  %v1031 = vunpack.c.h.b16 %v59
  %v1032 = vunpack.c.l.b16 %v60
  %v1033 = vunpack.c.h.b16 %v60
  %v1034 = vunpack.c.l.b16 %v61
  %v1035 = vunpack.c.h.b16 %v61
  %v1036 = vunpack.c.l.b16 %v62
  %v1037 = vunpack.c.h.b16 %v62
  %v1038 = vunpack.c.l.b16 %v63
  %v1039 = vunpack.c.h.b16 %v63
  %v1040 = vunpack.c.l.b16 %v64
  %v1041 = vunpack.c.h.b16 %v64
  %v1042 = vunpack.c.l.b16 %v65
  %v1043 = vunpack.c.h.b16 %v65
  %v1044 = vunpack.c.l.b16 %v66
  %v1045 = vunpack.c.h.b16 %v66
  %v1046 = vunpack.c.l.b16 %v67
  %v1047 = vunpack.c.h.b16 %v67
  %v1048 = vunpack.c.l.b16 %v68
  %v1049 = vunpack.c.h.b16 %v68
  %v1050 = vunpack.c.l.b16 %v69
  %v1051 = vunpack.c.h.b16 %v69
  %v1052 = vunpack.c.l.b16 %v70
  %v1053 = vunpack.c.h.b16 %v70
  %v1054 = vunpack.c.l.b16 %v71
  %v1055 = vunpack.c.h.b16 %v71
  %v1056 = vunpack.c.l.b16 %v72
  %v1057 = vunpack.c.h.b16 %v72
  %v1058 = vunpack.c.l.b16 %v73
  %v1059 = vunpack.c.h.b16 %v73
  %v1060 = vunpack.c.l.b16 %v74
  %v1061 = vunpack.c.h.b16 %v74
  %v1062 = vunpack.c.l.b16 %v75
  %v1063 = vunpack.c.h.b16 %v75
  %v1064 = vunpack.c.l.b16 %v76
  %v1065 = vunpack.c.h.b16 %v76
  %v1066 = vunpack.c.l.b16 %v77
  %v1067 = vunpack.c.h.b16 %v77
  %v1068 = vunpack.c.l.b16 %v78
  %v1069 = vunpack.c.h.b16 %v78
  %v1070 = vunpack.c.l.b16 %v79
  %v1071 = vunpack.c.h.b16 %v79
  %v1072 = vunpack.c.l.b16 %v80
  %v1073 = vunpack.c.h.b16 %v80
  %v1074 = vunpack.c.l.b16 %v81
  %v1075 = vunpack.c.h.b16 %v81
  %v1076 = vunpack.c.l.b16 %v82
  %v1077 = vunpack.c.h.b16 %v82
  %v1078 = vunpack.c.l.b16 %v83
  %v1079 = vunpack.c.h.b16 %v83
  %v1080 = vunpack.c.l.b16 %v84
  %v1081 = vunpack.c.h.b16 %v84
  %v1082 = vunpack.c.l.b16 %v85
  %v1083 = vunpack.c.h.b16 %v85
  %v1084 = vunpack.c.l.b16 %v86
  %v1085 = vunpack.c.h.b16 %v86
  %v1086 = vunpack.c.l.b16 %v87
  %v1087 = vunpack.c.h.b16 %v87
  %v1088 = vunpack.c.l.b16 %v88
  %v1089 = vunpack.c.h.b16 %v88
  %v1090 = vunpack.c.l.b16 %v89
  %v1091 = vunpack.c.h.b16 %v89
  %v1092 = vunpack.c.l.b16 %v90
  %v1093 = vunpack.c.h.b16 %v90
  %v1094 = vunpack.c.l.b16 %v91
  %v1095 = vunpack.c.h.b16 %v91
  %v1096 = vunpack.c.l.b16 %v92
  %v1097 = vunpack.c.h.b16 %v92
  %v1098 = vunpack.c.l.b16 %v93
  %v1099 = vunpack.c.h.b16 %v93
  %v1100 = vunpack.c.l.b16 %v94
  %v1101 = vunpack.c.h.b16 %v94
  %v1102 = vunpack.c.l.b16 %v95
  %v1103 = vunpack.c.h.b16 %v95
  %v1104 = vunpack.c.l.b16 %v96
  %v1105 = vunpack.c.h.b16 %v96
  %v1106 = vunpack.c.l.b16 %v97
  %v1107 = vunpack.c.h.b16 %v97
  %v1108 = vunpack.c.l.b16 %v98
  %v1109 = vunpack.c.h.b16 %v98
  %v1110 = vunpack.c.l.b16 %v99
  %v1111 = vunpack.c.h.b16 %v99
  %v1112 = vunpack.c.l.b16 %v100
  %v1113 = vunpack.c.h.b16 %v100
  %v1114 = vunpack.c.l.b16 %v101
  %v1115 = vunpack.c.h.b16 %v101
  %v1116 = vunpack.c.l.b16 %v102
  %v1117 = vunpack.c.h.b16 %v102
  %v1118 = vunpack.c.l.b16 %v103
  %v1119 = vunpack.c.h.b16 %v103
  %v1120 = vunpack.c.l.b16 %v104
  %v1121 = vunpack.c.h.b16 %v104
  %v1122 = vunpack.c.l.b16 %v105
  %v1123 = vunpack.c.h.b16 %v105
  %v1124 = vunpack.c.l.b16 %v106
  %v1125 = vunpack.c.h.b16 %v106
  %v1126 = vpack.c.b16 %v988, %v942
  %v1127 = vpack.c.b16 %v989, %v943
  %v1128 = vpack.c.b16 %v990, %v944
  %v1129 = vpack.c.b16 %v991, %v945
  %v1130 = vpack.c.b16 %v992, %v946
  %v1131 = vpack.c.b16 %v993, %v947
  %v1132 = vpack.c.b16 %v994, %v948
  %v1133 = vpack.c.b16 %v995, %v949
  %v1134 = vpack.c.b16 %v996, %v950
  %v1135 = vpack.c.b16 %v997, %v951
  %v1136 = vpack.c.b16 %v998, %v952
  %v1137 = vpack.c.b16 %v999, %v953
  %v1138 = vpack.c.b16 %v1000, %v954
  %v1139 = vpack.c.b16 %v1001, %v955
  %v1140 = vpack.c.b16 %v1002, %v956
  %v1141 = vpack.c.b16 %v1003, %v957
  %v1142 = vpack.c.b16 %v1004, %v958
  %v1143 = vpack.c.b16 %v1005, %v959
  %v1144 = vpack.c.b16 %v1006, %v960
  %v1145 = vpack.c.b16 %v1007, %v961
  %v1146 = vpack.c.b16 %v1008, %v962
  %v1147 = vpack.c.b16 %v1009, %v963
  %v1148 = vpack.c.b16 %v1010, %v964
  %v1149 = vpack.c.b16 %v1011, %v965
  %v1150 = vpack.c.b16 %v1012, %v966
  %v1151 = vpack.c.b16 %v1013, %v967
  %v1152 = vpack.c.b16 %v1014, %v968
  %v1153 = vpack.c.b16 %v1015, %v969
  %v1154 = vpack.c.b16 %v1016, %v970
  %v1155 = vpack.c.b16 %v1017, %v971
  %v1156 = vpack.c.b16 %v1018, %v972
  %v1157 = vpack.c.b16 %v1019, %v973
  %v1158 = vpack.c.b16 %v1020, %v974
  %v1159 = vpack.c.b16 %v1021, %v975
  %v1160 = vpack.c.b16 %v1022, %v976
  %v1161 = vpack.c.b16 %v1023, %v977
  %v1162 = vpack.c.b16 %v1024, %v978
  %v1163 = vpack.c.b16 %v1025, %v979
  %v1164 = vpack.c.b16 %v1026, %v980
  %v1165 = vpack.c.b16 %v1027, %v981
  %v1166 = vpack.c.b16 %v1028, %v982
  %v1167 = vpack.c.b16 %v1029, %v983
  %v1168 = vpack.c.b16 %v1030, %v984
  %v1169 = vpack.c.b16 %v1031, %v985
  %v1170 = vpack.c.b16 %v1032, %v986
  %v1171 = vpack.c.b16 %v1033, %v987
  %v1172 = vpack.c.b16 %v1080, %v1034
  %v1173 = vpack.c.b16 %v1081, %v1035
  %v1174 = vpack.c.b16 %v1082, %v1036
  %v1175 = vpack.c.b16 %v1083, %v1037
  %v1176 = vpack.c.b16 %v1084, %v1038
  %v1177 = vpack.c.b16 %v1085, %v1039
  %v1178 = vpack.c.b16 %v1086, %v1040
  %v1179 = vpack.c.b16 %v1087, %v1041
  %v1180 = vpack.c.b16 %v1088, %v1042
  %v1181 = vpack.c.b16 %v1089, %v1043
  %v1182 = vpack.c.b16 %v1090, %v1044
  %v1183 = vpack.c.b16 %v1091, %v1045
  %v1184 = vpack.c.b16 %v1092, %v1046
  %v1185 = vpack.c.b16 %v1093, %v1047
  %v1186 = vpack.c.b16 %v1094, %v1048
  %v1187 = vpack.c.b16 %v1095, %v1049
  %v1188 = vpack.c.b16 %v1096, %v1050
  %v1189 = vpack.c.b16 %v1097, %v1051
  %v1190 = vpack.c.b16 %v1098, %v1052
  %v1191 = vpack.c.b16 %v1099, %v1053
  %v1192 = vpack.c.b16 %v1100, %v1054
  %v1193 = vpack.c.b16 %v1101, %v1055
  %v1194 = vpack.c.b16 %v1102, %v1056
  %v1195 = vpack.c.b16 %v1103, %v1057
  %v1196 = vpack.c.b16 %v1104, %v1058
  %v1197 = vpack.c.b16 %v1105, %v1059
  %v1198 = vpack.c.b16 %v1106, %v1060
  %v1199 = vpack.c.b16 %v1107, %v1061
  %v1200 = vpack.c.b16 %v1108, %v1062
  %v1201 = vpack.c.b16 %v1109, %v1063
  %v1202 = vpack.c.b16 %v1110, %v1064
  %v1203 = vpack.c.b16 %v1111, %v1065
  %v1204 = vpack.c.b16 %v1112, %v1066
  %v1205 = vpack.c.b16 %v1113, %v1067
  %v1206 = vpack.c.b16 %v1114, %v1068
  %v1207 = vpack.c.b16 %v1115, %v1069
  %v1208 = vpack.c.b16 %v1116, %v1070
  %v1209 = vpack.c.b16 %v1117, %v1071
  %v1210 = vpack.c.b16 %v1118, %v1072
  %v1211 = vpack.c.b16 %v1119, %v1073
  %v1212 = vpack.c.b16 %v1120, %v1074
  %v1213 = vpack.c.b16 %v1121, %v1075
  %v1214 = vpack.c.b16 %v1122, %v1076
  %v1215 = vpack.c.b16 %v1123, %v1077
  %v1216 = vpack.c.b16 %v1124, %v1078
  %v1217 = vpack.c.b16 %v1125, %v1079
  %v2046 = vunpack.c.l.b16 %v107
  %v2047 = vunpack.c.l.b16 %v108
  %v2048 = vunpack.c.l.b16 %v109
  %v2049 = vunpack.c.l.b16 %v110
  %v2050 = vunpack.c.l.b16 %v111
  %v2051 = vunpack.c.l.b16 %v112
  %v2052 = vunpack.c.l.b16 %v113
  %v2053 = vunpack.c.l.b16 %v114
  %v2054 = vunpack.c.l.b16 %v115
  %v2055 = vunpack.c.l.b16 %v116
  %v2056 = vunpack.c.l.b16 %v117
  %v2057 = vunpack.c.l.b16 %v118
  %v2058 = vunpack.c.l.b16 %v119
  %v2059 = vunpack.c.l.b16 %v120
  %v2060 = vunpack.c.l.b16 %v121
  %v2061 = vunpack.c.l.b16 %v122
  %v2062 = vunpack.c.l.b16 %v123
  %v2063 = vunpack.c.l.b16 %v124
  %v2064 = vunpack.c.l.b16 %v125
  %v2065 = vunpack.c.l.b16 %v126
  %v2066 = vunpack.c.l.b16 %v127
  %v2067 = vunpack.c.l.b16 %v128
  %v2068 = vunpack.c.l.b16 %v129
  %v2069 = vunpack.c.l.b16 %v130
  %v2070 = vunpack.c.l.b16 %v131
  %v2071 = vunpack.c.l.b16 %v132
  %v2072 = vunpack.c.l.b16 %v133
  %v2073 = vunpack.c.l.b16 %v134
  %v2074 = vunpack.c.l.b16 %v135
  %v2075 = vunpack.c.l.b16 %v136
  %v2076 = vunpack.c.l.b16 %v137
  %v2077 = vunpack.c.l.b16 %v138
  %v2078 = vunpack.c.l.b16 %v139
  %v2079 = vunpack.c.l.b16 %v140
  %v2080 = vunpack.c.l.b16 %v141
  %v2081 = vunpack.c.l.b16 %v142
  %v2082 = vunpack.c.l.b16 %v143
  %v2083 = vunpack.c.l.b16 %v144
  %v2084 = vunpack.c.l.b16 %v145
  %v2085 = vunpack.c.l.b16 %v146
  %v2086 = vunpack.c.l.b16 %v147
  %v2087 = vunpack.c.l.b16 %v148
  %v2088 = vunpack.c.l.b16 %v149
  %v2089 = vunpack.c.l.b16 %v150
  %v2090 = vunpack.c.l.b16 %v151
  %v2091 = vunpack.c.l.b16 %v152
  %v2092 = vunpack.c.l.b16 %v153
  %v2093 = vunpack.c.l.b16 %v154
  %v2094 = vunpack.c.l.b16 %v155
  %v2095 = vunpack.c.l.b16 %v156
  %v2096 = vunpack.c.l.b16 %v157
  %v2097 = vunpack.c.l.b16 %v158
  %v2098 = vunpack.c.l.b16 %v159
  %v2099 = vunpack.c.l.b16 %v160
  %v2100 = vunpack.c.l.b16 %v161
  %v2101 = vunpack.c.l.b16 %v162
  %v2102 = vunpack.c.l.b16 %v163
  %v2103 = vunpack.c.l.b16 %v164
  %v2104 = vunpack.c.l.b16 %v165
  %v2105 = vunpack.c.l.b16 %v166
  %v2106 = vunpack.c.l.b16 %v167
  %v2107 = vunpack.c.l.b16 %v168
  %v2108 = vunpack.c.l.b16 %v169
  %v2109 = vunpack.c.l.b16 %v170
  %v2110 = vunpack.c.l.b16 %v171
  %v2111 = vunpack.c.l.b16 %v172
  %v2112 = vunpack.c.l.b16 %v173
  %v2113 = vunpack.c.l.b16 %v174
  %v2114 = vunpack.c.l.b16 %v175
  %v2115 = vunpack.c.l.b16 %v176
  %v2116 = vunpack.c.l.b16 %v177
  %v2117 = vunpack.c.l.b16 %v178
  %v2118 = vunpack.c.l.b16 %v179
  %v2119 = vunpack.c.l.b16 %v180
  %v2120 = vunpack.c.l.b16 %v181
  %v2121 = vunpack.c.l.b16 %v182
  %v2122 = vunpack.c.l.b16 %v183
  %v2123 = vunpack.c.l.b16 %v184
  %v2124 = vunpack.c.l.b16 %v185
  %v2125 = vunpack.c.l.b16 %v186
  %v2126 = vunpack.c.l.b16 %v187
  %v2127 = vunpack.c.l.b16 %v188
  %v2128 = vunpack.c.l.b16 %v189
  %v2129 = vunpack.c.l.b16 %v190
  %v2130 = vunpack.c.l.b16 %v191
  %v2131 = vunpack.c.l.b16 %v192
  %v2132 = vunpack.c.l.b16 %v193
  %v2133 = vunpack.c.l.b16 %v194
  %v2134 = vunpack.c.l.b16 %v195
  %v2135 = vunpack.c.l.b16 %v196
  %v2136 = vunpack.c.l.b16 %v197
  %v2137 = vunpack.c.l.b16 %v198
  %v2138 = vunpack.c.l.b16 %v199
  %v2139 = vunpack.c.l.b16 %v200
  %v2140 = vunpack.c.l.b16 %v201
  %v2141 = vunpack.c.l.b16 %v202
  %v2142 = vunpack.c.l.b16 %v203
  %v2143 = vunpack.c.l.b16 %v204
  %v2144 = vunpack.c.l.b16 %v205
  %v2145 = vunpack.c.l.b16 %v206
  %v2146 = vunpack.c.l.b16 %v207
  %v2147 = vunpack.c.l.b16 %v208
  %v2148 = vunpack.c.l.b16 %v209
  %v2149 = vunpack.c.l.b16 %v210
  %v2150 = vunpack.c.l.b16 %v211
  %v2151 = vunpack.c.l.b16 %v212
  %v2152 = vunpack.c.l.b16 %v213
  %v2153 = vunpack.c.l.b16 %v214
  %v2154 = vunpack.c.l.b16 %v215
  %v2155 = vunpack.c.l.b16 %v216
  %v2156 = vunpack.c.l.b16 %v217
  %v2157 = vunpack.c.l.b16 %v218
  %v2158 = vunpack.c.l.b16 %v219
  %v2159 = vunpack.c.l.b16 %v220
  %v2160 = vunpack.c.l.b16 %v221
  %v2161 = vunpack.c.l.b16 %v222
  %v2162 = vunpack.c.l.b16 %v223
  %v2163 = vunpack.c.l.b16 %v224
  %v2164 = vunpack.c.l.b16 %v225
  %v2165 = vunpack.c.l.b16 %v226
  %v2166 = vunpack.c.l.b16 %v227
  %v2167 = vunpack.c.l.b16 %v228
  %v2168 = vunpack.c.l.b16 %v229
  %v2169 = vunpack.c.l.b16 %v230
  %v2170 = vunpack.c.l.b16 %v231
  %v2171 = vunpack.c.l.b16 %v232
  %v2172 = vunpack.c.l.b16 %v233
  %v2173 = vunpack.c.l.b16 %v234
  %v2174 = vunpack.c.l.b16 %v235
  %v2175 = vunpack.c.l.b16 %v236
  %v2176 = vunpack.c.l.b16 %v237
  %v2177 = vunpack.c.l.b16 %v238
  %v2178 = vunpack.c.l.b16 %v239
  %v2179 = vunpack.c.l.b16 %v240
  %v2180 = vunpack.c.l.b16 %v241
  %v2181 = vunpack.c.l.b16 %v242
  %v2182 = vunpack.c.l.b16 %v243
  %v2183 = vunpack.c.l.b16 %v244
  %v2184 = vunpack.c.l.b16 %v245
  %v2185 = vunpack.c.l.b16 %v246
  %v2186 = vunpack.c.l.b16 %v247
  %v2187 = vunpack.c.l.b16 %v248
  %v2188 = vunpack.c.l.b16 %v249
  %v2189 = vunpack.c.l.b16 %v250
  %v2190 = vunpack.c.l.b16 %v251
  %v2191 = vunpack.c.l.b16 %v252
  %v2192 = vunpack.c.l.b16 %v253
  %v2193 = vunpack.c.l.b16 %v254
  %v2194 = vunpack.c.l.b16 %v255
  %v2195 = vunpack.c.l.b16 %v256
  %v2196 = vunpack.c.l.b16 %v257
  %v2197 = vunpack.c.l.b16 %v258
  %v2198 = vunpack.c.l.b16 %v259
  %v2199 = vunpack.c.l.b16 %v260
  %v2200 = vunpack.c.l.b16 %v261
  %v2201 = vunpack.c.l.b16 %v262
  %v2202 = vunpack.c.l.b16 %v263
  %v2203 = vunpack.c.l.b16 %v264
  %v2204 = vunpack.c.l.b16 %v265
  %v2205 = vunpack.c.l.b16 %v266
  %v2206 = vunpack.c.l.b16 %v267
  %v2207 = vunpack.c.l.b16 %v268
  %v2208 = vunpack.c.l.b16 %v269
  %v2209 = vunpack.c.l.b16 %v270
  %v2210 = vunpack.c.l.b16 %v271
  %v2211 = vunpack.c.l.b16 %v272
  %v2212 = vunpack.c.l.b16 %v273
  %v2213 = vunpack.c.l.b16 %v274
  %v2214 = vunpack.c.l.b16 %v275
  %v2215 = vunpack.c.l.b16 %v276
  %v2216 = vunpack.c.l.b16 %v277
  %v2217 = vunpack.c.l.b16 %v278
  %v2218 = vunpack.c.l.b16 %v279
  %v2219 = vunpack.c.l.b16 %v280
  %v2220 = vunpack.c.l.b16 %v281
  %v2221 = vunpack.c.l.b16 %v282
  %v2222 = vunpack.c.l.b16 %v283
  %v2223 = vunpack.c.l.b16 %v284
  %v2224 = vunpack.c.l.b16 %v285
  %v2225 = vunpack.c.l.b16 %v286
  %v2226 = vunpack.c.l.b16 %v287
  %v2227 = vunpack.c.l.b16 %v288
  %v2228 = vunpack.c.l.b16 %v289
  %v2229 = vunpack.c.l.b16 %v290
  %v2230 = vunpack.c.l.b16 %v291
  %v2231 = vunpack.c.l.b16 %v292
  %v2232 = vunpack.c.l.b16 %v293
  %v2233 = vunpack.c.l.b16 %v294
  %v2234 = vunpack.c.l.b16 %v295
  %v2235 = vunpack.c.l.b16 %v296
  %v2236 = vunpack.c.l.b16 %v297
  %v2237 = vunpack.c.l.b16 %v298
  %v2238 = vunpack.c.l.b16 %v299
  %v2239 = vunpack.c.l.b16 %v300
  %v2240 = vunpack.c.l.b16 %v301
  %v2241 = vunpack.c.l.b16 %v302
  %v2242 = vunpack.c.l.b16 %v303
  %v2243 = vunpack.c.l.b16 %v304
  %v2244 = vunpack.c.l.b16 %v305
  %v2245 = vunpack.c.l.b16 %v306
  %v2246 = vunpack.c.l.b16 %v307
  %v2247 = vunpack.c.l.b16 %v308
  %v2248 = vunpack.c.l.b16 %v309
  %v2249 = vunpack.c.l.b16 %v310
  %v2250 = vunpack.c.l.b16 %v311
  %v2251 = vunpack.c.l.b16 %v312
  %v2252 = vunpack.c.l.b16 %v313
  %v2253 = vunpack.c.l.b16 %v314
  %v2254 = vunpack.c.l.b16 %v315
  %v2255 = vunpack.c.l.b16 %v316
  %v2256 = vunpack.c.l.b16 %v317
  %v2257 = vunpack.c.l.b16 %v318
  %v2258 = vunpack.c.l.b16 %v319
  %v2259 = vunpack.c.l.b16 %v320
  %v2260 = vunpack.c.l.b16 %v321
  %v2261 = vunpack.c.l.b16 %v322
  %v2262 = vunpack.c.l.b16 %v323
  %v2263 = vunpack.c.l.b16 %v324
  %v2264 = vunpack.c.l.b16 %v325
  %v2265 = vunpack.c.l.b16 %v326
  %v2266 = vunpack.c.l.b16 %v327
  %v2267 = vunpack.c.l.b16 %v328
  %v2268 = vunpack.c.l.b16 %v329
  %v2269 = vunpack.c.l.b16 %v330
  %v2270 = vunpack.c.l.b16 %v331
  %v2271 = vunpack.c.l.b16 %v332
  %v2272 = vunpack.c.l.b16 %v333
  %v2273 = vunpack.c.l.b16 %v334
  %v2274 = vunpack.c.l.b16 %v335
  %v2275 = vunpack.c.l.b16 %v336
  %v2276 = vunpack.c.l.b16 %v337
  %v2277 = vunpack.c.l.b16 %v338
  %v2278 = vunpack.c.l.b16 %v339
  %v2279 = vunpack.c.l.b16 %v340
  %v2280 = vunpack.c.l.b16 %v341
  %v2281 = vunpack.c.l.b16 %v342
  %v2282 = vunpack.c.l.b16 %v343
  %v2283 = vunpack.c.l.b16 %v344
  %v2284 = vunpack.c.l.b16 %v345
  %v2285 = vunpack.c.l.b16 %v346
  %v2286 = vunpack.c.l.b16 %v347
  %v2287 = vunpack.c.l.b16 %v348
  %v2288 = vunpack.c.l.b16 %v349
  %v2289 = vunpack.c.l.b16 %v350
  %v2290 = vunpack.c.l.b16 %v351
  %v2291 = vunpack.c.l.b16 %v352
  %v2292 = vunpack.c.l.b16 %v353
  %v2293 = vunpack.c.l.b16 %v354
  %v2294 = vunpack.c.l.b16 %v355
  %v2295 = vunpack.c.l.b16 %v356
  %v2296 = vunpack.c.l.b16 %v357
  %v2297 = vunpack.c.l.b16 %v358
  %v2298 = vunpack.c.l.b16 %v359
  %v2299 = vunpack.c.l.b16 %v360
  %v2300 = vunpack.c.l.b16 %v361
  %v2301 = vunpack.c.l.b16 %v362
  %v2302 = vunpack.c.l.b16 %v363
  %v2303 = vunpack.c.l.b16 %v364
  %v2304 = vunpack.c.l.b16 %v365
  %v2305 = vunpack.c.l.b16 %v366
  %v2306 = vunpack.c.l.b16 %v367
  %v2307 = vunpack.c.l.b16 %v368
  %v2308 = vunpack.c.l.b16 %v369
  %v2309 = vunpack.c.l.b16 %v370
  %v2310 = vunpack.c.l.b16 %v371
  %v2311 = vunpack.c.l.b16 %v372
  %v2312 = vunpack.c.l.b16 %v373
  %v2313 = vunpack.c.l.b16 %v374
  %v2314 = vunpack.c.l.b16 %v375
  %v2315 = vunpack.c.l.b16 %v376
  %v2316 = vunpack.c.l.b16 %v377
  %v2317 = vunpack.c.l.b16 %v378
  %v2318 = vunpack.c.l.b16 %v379
  %v2319 = vunpack.c.l.b16 %v380
  %v2320 = vunpack.c.l.b16 %v381
  %v2321 = vunpack.c.l.b16 %v382
  %v2322 = vunpack.c.l.b16 %v383
  %v2323 = vunpack.c.l.b16 %v384
  %v2324 = vunpack.c.l.b16 %v385
  %v2325 = vunpack.c.l.b16 %v386
  %v2326 = vunpack.c.l.b16 %v387
  %v2327 = vunpack.c.l.b16 %v388
  %v2328 = vunpack.c.l.b16 %v389
  %v2329 = vunpack.c.l.b16 %v390
  %v2330 = vunpack.c.l.b16 %v391
  %v2331 = vunpack.c.l.b16 %v392
  %v2332 = vunpack.c.l.b16 %v393
  %v2333 = vunpack.c.l.b16 %v394
  %v2334 = vunpack.c.l.b16 %v395
  %v2335 = vunpack.c.l.b16 %v396
  %v2336 = vunpack.c.l.b16 %v397
  %v2337 = vunpack.c.l.b16 %v398
  %v2338 = vunpack.c.l.b16 %v399
  %v2339 = vunpack.c.l.b16 %v400
  %v2340 = vunpack.c.l.b16 %v401
  %v2341 = vunpack.c.l.b16 %v402
  %v2342 = vunpack.c.l.b16 %v403
  %v2343 = vunpack.c.l.b16 %v404
  %v2344 = vunpack.c.l.b16 %v405
  %v2345 = vunpack.c.l.b16 %v406
  %v2346 = vunpack.c.l.b16 %v407
  %v2347 = vunpack.c.l.b16 %v408
  %v2348 = vunpack.c.l.b16 %v409
  %v2349 = vunpack.c.l.b16 %v410
  %v2350 = vunpack.c.l.b16 %v411
  %v2351 = vunpack.c.l.b16 %v412
  %v2352 = vunpack.c.l.b16 %v413
  %v2353 = vunpack.c.l.b16 %v414
  %v2354 = vunpack.c.l.b16 %v415
  %v2355 = vunpack.c.l.b16 %v416
  %v2356 = vunpack.c.l.b16 %v417
  %v2357 = vunpack.c.l.b16 %v418
  %v2358 = vunpack.c.l.b16 %v419
  %v2359 = vunpack.c.l.b16 %v420
  %v2360 = vunpack.c.l.b16 %v421
  %v2361 = vunpack.c.l.b16 %v422
  %v2362 = vunpack.c.l.b16 %v423
  %v2363 = vunpack.c.l.b16 %v424
  %v2364 = vunpack.c.l.b16 %v425
  %v2365 = vunpack.c.l.b16 %v426
  %v2366 = vunpack.c.l.b16 %v427
  %v2367 = vunpack.c.l.b16 %v428
  %v2368 = vunpack.c.l.b16 %v429
  %v2369 = vunpack.c.l.b16 %v430
  %v2370 = vunpack.c.l.b16 %v431
  %v2371 = vunpack.c.l.b16 %v432
  %v2372 = vunpack.c.l.b16 %v433
  %v2373 = vunpack.c.l.b16 %v434
  %v2374 = vunpack.c.l.b16 %v435
  %v2375 = vunpack.c.l.b16 %v436
  %v2376 = vunpack.c.l.b16 %v437
  %v2377 = vunpack.c.l.b16 %v438
  %v2378 = vunpack.c.l.b16 %v439
  %v2379 = vunpack.c.l.b16 %v440
  %v2380 = vunpack.c.l.b16 %v441
  %v2381 = vunpack.c.l.b16 %v442
  %v2382 = vunpack.c.l.b16 %v443
  %v2383 = vunpack.c.l.b16 %v444
  %v2384 = vunpack.c.l.b16 %v445
  %v2385 = vunpack.c.l.b16 %v446
  %v2386 = vunpack.c.l.b16 %v447
  %v2387 = vunpack.c.l.b16 %v448
  %v2388 = vunpack.c.l.b16 %v449
  %v2389 = vunpack.c.l.b16 %v450
  %v2390 = vunpack.c.l.b16 %v451
  %v2391 = vunpack.c.l.b16 %v452
  %v2392 = vunpack.c.l.b16 %v453
  %v2393 = vunpack.c.l.b16 %v454
  %v2394 = vunpack.c.l.b16 %v455
  %v2395 = vunpack.c.l.b16 %v456
  %v2396 = vunpack.c.l.b16 %v457
  %v2397 = vunpack.c.l.b16 %v458
  %v2398 = vunpack.c.l.b16 %v459
  %v2399 = vunpack.c.l.b16 %v460
  %v2400 = vunpack.c.l.b16 %v461
  %v2401 = vunpack.c.l.b16 %v462
  %v2402 = vunpack.c.l.b16 %v463
  %v2403 = vunpack.c.l.b16 %v464
  %v2404 = vunpack.c.l.b16 %v465
  %v2405 = vunpack.c.l.b16 %v466
  %v2406 = vunpack.c.l.b16 %v467
  %v2407 = vunpack.c.l.b16 %v468
  %v2408 = vunpack.c.l.b16 %v469
  %v2409 = vunpack.c.l.b16 %v470
  %v2410 = vunpack.c.l.b16 %v471
  %v2411 = vunpack.c.l.b16 %v472
  %v2412 = vunpack.c.l.b16 %v473
  %v2413 = vunpack.c.l.b16 %v474
  %v2414 = vunpack.c.l.b16 %v475
  %v2415 = vunpack.c.l.b16 %v476
  %v2416 = vunpack.c.l.b16 %v477
  %v2417 = vunpack.c.l.b16 %v478
  %v2418 = vunpack.c.l.b16 %v479
  %v2419 = vunpack.c.l.b16 %v480
  %v2420 = vunpack.c.l.b16 %v481
  %v2421 = vunpack.c.l.b16 %v482
  %v2422 = vunpack.c.l.b16 %v483
  %v2423 = vunpack.c.l.b16 %v484
  %v2424 = vunpack.c.l.b16 %v485
  %v2425 = vunpack.c.l.b16 %v486
  %v2426 = vunpack.c.l.b16 %v487
  %v2427 = vunpack.c.l.b16 %v488
  %v2428 = vunpack.c.l.b16 %v489
  %v2429 = vunpack.c.l.b16 %v490
  %v2430 = vunpack.c.l.b16 %v491
  %v2431 = vunpack.c.l.b16 %v492
  %v2432 = vunpack.c.l.b16 %v493
  %v2433 = vunpack.c.l.b16 %v494
  %v2434 = vunpack.c.l.b16 %v495
  %v2435 = vunpack.c.l.b16 %v496
  %v2436 = vunpack.c.l.b16 %v497
  %v2437 = vunpack.c.l.b16 %v498
  %v2438 = vunpack.c.l.b16 %v499
  %v2439 = vunpack.c.l.b16 %v500
  %v2440 = vunpack.c.l.b16 %v501
  %v2441 = vunpack.c.l.b16 %v502
  %v2442 = vunpack.c.l.b16 %v503
  %v2443 = vunpack.c.l.b16 %v504
  %v2444 = vunpack.c.l.b16 %v505
  %v2445 = vunpack.c.l.b16 %v506
  %v2446 = vunpack.c.l.b16 %v507
  %v2447 = vunpack.c.l.b16 %v508
  %v2448 = vunpack.c.l.b16 %v509
  %v2449 = vunpack.c.l.b16 %v510
  %v2450 = vunpack.c.l.b16 %v511
  %v2451 = vunpack.c.l.b16 %v512
  %v2452 = vunpack.c.l.b16 %v513
  %v2453 = vunpack.c.l.b16 %v514
  %v2454 = vunpack.c.l.b16 %v515
  %v2455 = vunpack.c.l.b16 %v516
  %v2456 = vunpack.c.l.b16 %v517
  %v2457 = vunpack.c.l.b16 %v518
  %v2458 = vunpack.c.l.b16 %v519
  %v2459 = vunpack.c.l.b16 %v520
  %v2460 = vunpack.c.l.b16 %v521
  %v2461 = vunpack.c.l.b16 %v522
  %v2462 = vunpack.c.l.b16 %v523
  %v2463 = vunpack.c.l.b16 %v524
  %v2464 = vunpack.c.l.b16 %v525
  %v2465 = vunpack.c.l.b16 %v526
  %v2466 = vunpack.c.l.b16 %v527
  %v2467 = vunpack.c.l.b16 %v528
  %v2468 = vunpack.c.l.b16 %v529
  %v2469 = vunpack.c.l.b16 %v530
  %v2470 = vunpack.c.l.b16 %v531
  %v2471 = vunpack.c.l.b16 %v532
  %v2472 = vunpack.c.l.b16 %v533
  %v2473 = vunpack.c.l.b16 %v534
  %v2474 = vunpack.c.l.b16 %v535
  %v2475 = vunpack.c.l.b16 %v536
  %v2476 = vunpack.c.l.b16 %v537
  %v2477 = vunpack.c.l.b16 %v538
  %v2478 = vunpack.c.l.b16 %v539
  %v2479 = vunpack.c.l.b16 %v540
  %v2480 = vunpack.c.l.b16 %v541
  %v2481 = vunpack.c.l.b16 %v542
  %v2482 = vunpack.c.l.b16 %v543
  %v2483 = vunpack.c.l.b16 %v544
  %v2484 = vunpack.c.l.b16 %v545
  %v2485 = vunpack.c.l.b16 %v546
  %v2486 = vunpack.c.l.b16 %v547
  %v2487 = vunpack.c.l.b16 %v548
  %v2488 = vunpack.c.l.b16 %v549
  %v2489 = vunpack.c.l.b16 %v550
  %v2490 = vunpack.c.l.b16 %v551
  %v2491 = vunpack.c.l.b16 %v552
  %v2492 = vunpack.c.l.b16 %v553
  %v2493 = vunpack.c.l.b16 %v554
  %v2494 = vunpack.c.l.b16 %v555
  %v2495 = vunpack.c.l.b16 %v556
  %v2496 = vunpack.c.l.b16 %v557
  %v2497 = vunpack.c.l.b16 %v558
  %v2498 = vunpack.c.l.b16 %v559
  %v2499 = vunpack.c.l.b16 %v560
  %v2500 = vunpack.c.l.b16 %v561
  %v2501 = vunpack.c.l.b16 %v562
  %v2502 = vunpack.c.l.b16 %v563
  %v2503 = vunpack.c.l.b16 %v564
  %v2504 = vunpack.c.l.b16 %v565
  %v2505 = vunpack.c.l.b16 %v566
  %v2506 = vunpack.c.l.b16 %v567
  %v2507 = vunpack.c.l.b16 %v568
  %v2508 = vunpack.c.l.b16 %v569
  %v2509 = vunpack.c.l.b16 %v570
  %v2510 = vunpack.c.l.b16 %v571
  %v2511 = vunpack.c.l.b16 %v572
  %v2512 = vunpack.c.l.b16 %v573
  %v2513 = vunpack.c.l.b16 %v574
  %v2514 = vunpack.c.l.b16 %v575
  %v2515 = vunpack.c.l.b16 %v576
  %v2516 = vunpack.c.l.b16 %v577
  %v2517 = vunpack.c.l.b16 %v578
  %v2518 = vunpack.c.l.b16 %v579
  %v2519 = vunpack.c.l.b16 %v580
  %v2520 = vunpack.c.l.b16 %v581
  %v2521 = vunpack.c.l.b16 %v582
  %v2522 = vunpack.c.l.b16 %v583
  %v2523 = vunpack.c.l.b16 %v584
  %v2524 = vunpack.c.l.b16 %v585
  %v2525 = vunpack.c.l.b16 %v586
  %v2526 = vunpack.c.l.b16 %v587
  %v2527 = vunpack.c.l.b16 %v588
  %v2528 = vunpack.c.l.b16 %v589
  %v2529 = vunpack.c.l.b16 %v590
  %v2530 = vunpack.c.l.b16 %v591
  %v2531 = vunpack.c.l.b16 %v592
  %v2532 = vunpack.c.l.b16 %v593
  %v2533 = vunpack.c.l.b16 %v594
  %v2534 = vunpack.c.l.b16 %v595
  %v2535 = vunpack.c.l.b16 %v596
  %v2536 = vunpack.c.l.b16 %v597
  %v2537 = vunpack.c.l.b16 %v598
  %v2538 = vunpack.c.l.b16 %v599
  %v2539 = vunpack.c.l.b16 %v600
  %v2540 = vunpack.c.l.b16 %v601
  %v2541 = vunpack.c.l.b16 %v602
  %v2542 = vunpack.c.l.b16 %v603
  %v2543 = vunpack.c.l.b16 %v604
  %v2544 = vunpack.c.l.b16 %v605
  %v2545 = vunpack.c.l.b16 %v606
  %v2546 = vunpack.c.l.b16 %v607
  %v2547 = vunpack.c.l.b16 %v608
  %v2548 = vunpack.c.l.b16 %v609
  %v2549 = vunpack.c.l.b16 %v610
  %v2550 = vunpack.c.l.b16 %v611
  %v2551 = vunpack.c.l.b16 %v612
  %v2552 = vunpack.c.l.b16 %v613
  %v2553 = vunpack.c.l.b16 %v614
  %v2554 = vunpack.c.l.b16 %v615
  %v2555 = vunpack.c.l.b16 %v616
  %v2556 = vunpack.c.l.b16 %v617
  %v2557 = vunpack.c.l.b16 %v618
  %v2558 = vunpack.c.l.b16 %v619
  %v2559 = vunpack.c.l.b16 %v620
  %v2560 = vunpack.c.l.b16 %v621
  %v2561 = vunpack.c.l.b16 %v622
  %v2562 = vunpack.c.l.b16 %v623
  %v2563 = vunpack.c.l.b16 %v624
  %v2564 = vunpack.c.l.b16 %v625
  %v2565 = vunpack.c.l.b16 %v626
  %v2566 = vunpack.c.l.b16 %v627
  %v2567 = vunpack.c.l.b16 %v628
  %v2568 = vunpack.c.l.b16 %v629
  %v2569 = vunpack.c.l.b16 %v630
  %v2570 = vunpack.c.l.b16 %v631
  %v2571 = vunpack.c.l.b16 %v632
  %v2572 = vunpack.c.l.b16 %v633
  %v2573 = vunpack.c.l.b16 %v634
  %v2574 = vunpack.c.l.b16 %v635
  %v2575 = vunpack.c.l.b16 %v636
  %v2576 = vunpack.c.l.b16 %v637
  %v2577 = vunpack.c.l.b16 %v638
  %v2578 = vunpack.c.l.b16 %v639
  %v2579 = vunpack.c.l.b16 %v640
  %v2580 = vunpack.c.l.b16 %v641
  %v2581 = vunpack.c.l.b16 %v642
  %v2582 = vunpack.c.l.b16 %v643
  %v2583 = vunpack.c.l.b16 %v644
  %v2584 = vunpack.c.l.b16 %v645
  %v2585 = vunpack.c.l.b16 %v646
  %v2586 = vunpack.c.l.b16 %v647
  %v2587 = vunpack.c.l.b16 %v648
  %v2588 = vunpack.c.l.b16 %v649
  %v2589 = vunpack.c.l.b16 %v650
  %v2590 = vunpack.c.l.b16 %v651
  %v2591 = vunpack.c.l.b16 %v652
  %v2592 = vunpack.c.l.b16 %v653
  %v2593 = vunpack.c.l.b16 %v654
  %v2594 = vunpack.c.l.b16 %v655
  %v2595 = vunpack.c.l.b16 %v656
  %v2596 = vunpack.c.l.b16 %v657
  %v2597 = vunpack.c.l.b16 %v658
  %v2598 = vunpack.c.l.b16 %v659
  %v2599 = vunpack.c.l.b16 %v660
  %v2600 = vunpack.c.l.b16 %v661
  %v2601 = vunpack.c.l.b16 %v662
  %v2602 = vunpack.c.l.b16 %v663
  %v2603 = vunpack.c.l.b16 %v664
  %v2604 = vunpack.c.l.b16 %v665
  %v2605 = vunpack.c.l.b16 %v666
  %v2606 = vunpack.c.l.b16 %v667
  %v2607 = vunpack.c.l.b16 %v668
  %v2608 = vunpack.c.l.b16 %v669
  %v2609 = vunpack.c.l.b16 %v670
  %v2610 = vunpack.c.l.b16 %v671
  %v2611 = vunpack.c.l.b16 %v672
  %v2612 = vunpack.c.l.b16 %v673
  %v2613 = vunpack.c.l.b16 %v674
  %v2614 = vunpack.c.l.b16 %v675
  %v2615 = vunpack.c.l.b16 %v676
  %v2616 = vunpack.c.l.b16 %v677
  %v2617 = vunpack.c.l.b16 %v678
  %v2618 = vunpack.c.l.b16 %v679
  %v2619 = vunpack.c.l.b16 %v680
  %v2620 = vunpack.c.l.b16 %v681
  %v2621 = vunpack.c.l.b16 %v682
  %v2622 = vunpack.c.l.b16 %v683
  %v2623 = vunpack.c.l.b16 %v684
  %v2624 = vunpack.c.l.b16 %v685
  %v2625 = vunpack.c.l.b16 %v686
  %v2626 = vunpack.c.l.b16 %v687
  %v2627 = vunpack.c.l.b16 %v688
  %v2628 = vunpack.c.l.b16 %v689
  %v2629 = vunpack.c.l.b16 %v690
  %v2630 = vunpack.c.l.b16 %v691
  %v2631 = vunpack.c.l.b16 %v692
  %v2632 = vunpack.c.l.b16 %v693
  %v2633 = vunpack.c.l.b16 %v694
  %v2634 = vunpack.c.l.b16 %v695
  %v2635 = vunpack.c.l.b16 %v696
  %v2636 = vunpack.c.l.b16 %v697
  %v2637 = vunpack.c.l.b16 %v698
  %v2638 = vunpack.c.l.b16 %v699
  %v2639 = vunpack.c.l.b16 %v700
  %v2640 = vunpack.c.l.b16 %v701
  %v2641 = vunpack.c.l.b16 %v702
  %v2642 = vunpack.c.l.b16 %v703
  %v2643 = vunpack.c.l.b16 %v704
  %v2644 = vunpack.c.l.b16 %v705
  %v2645 = vunpack.c.l.b16 %v706
  %v2646 = vunpack.c.l.b16 %v707
  %v2647 = vunpack.c.l.b16 %v708
  %v2648 = vunpack.c.l.b16 %v709
  %v2649 = vunpack.c.l.b16 %v710
  %v2650 = vunpack.c.l.b16 %v711
  %v2651 = vunpack.c.l.b16 %v712
  %v2652 = vunpack.c.l.b16 %v713
  %v2653 = vunpack.c.l.b16 %v714
  %v2654 = vunpack.c.l.b16 %v715
  %v2655 = vunpack.c.l.b16 %v716
  %v2656 = vunpack.c.l.b16 %v717
  %v2657 = vunpack.c.l.b16 %v718
  %v2658 = vunpack.c.l.b16 %v719
  %v2659 = vunpack.c.l.b16 %v720
  %v2660 = vunpack.c.l.b16 %v721
  %v2661 = vunpack.c.l.b16 %v722
  %v2662 = vunpack.c.l.b16 %v723
  %v2663 = vunpack.c.l.b16 %v724
  %v2664 = vunpack.c.l.b16 %v725
  %v2665 = vunpack.c.l.b16 %v726
  %v2666 = vunpack.c.l.b16 %v727
  %v2667 = vunpack.c.l.b16 %v728
  %v2668 = vunpack.c.l.b16 %v729
  %v2669 = vunpack.c.l.b16 %v730
  %v2670 = vunpack.c.l.b16 %v731
  %v2671 = vunpack.c.l.b16 %v732
  %v2672 = vunpack.c.l.b16 %v733
  %v2673 = vunpack.c.l.b16 %v734
  %v2674 = vunpack.c.l.b16 %v735
  %v2675 = vunpack.c.l.b16 %v736
  %v2676 = vunpack.c.l.b16 %v737
  %v2677 = vunpack.c.l.b16 %v738
  %v2678 = vunpack.c.l.b16 %v739
  %v2679 = vunpack.c.l.b16 %v740
  %v2680 = vunpack.c.l.b16 %v741
  %v2681 = vunpack.c.l.b16 %v742
  %v2682 = vunpack.c.l.b16 %v743
  %v2683 = vunpack.c.l.b16 %v744
  %v2684 = vunpack.c.l.b16 %v745
  %v2685 = vunpack.c.l.b16 %v746
  %v2686 = vunpack.c.l.b16 %v747
  %v2687 = vunpack.c.l.b16 %v748
  %v2688 = vunpack.c.l.b16 %v749
  %v2689 = vunpack.c.l.b16 %v750
  %v2690 = vunpack.c.l.b16 %v751
  %v2691 = vunpack.c.l.b16 %v752
  %v2692 = vunpack.c.l.b16 %v753
  %v2693 = vunpack.c.l.b16 %v754
  %v2694 = vunpack.c.l.b16 %v755
  %v2695 = vunpack.c.l.b16 %v756
  %v2696 = vunpack.c.l.b16 %v757
  %v2697 = vunpack.c.l.b16 %v758
  %v2698 = vunpack.c.l.b16 %v759
  %v2699 = vunpack.c.l.b16 %v760
  %v2700 = vunpack.c.l.b16 %v761
  %v2701 = vunpack.c.l.b16 %v762
  %v2702 = vunpack.c.l.b16 %v763
  %v2703 = vunpack.c.l.b16 %v764
  %v2704 = vunpack.c.l.b16 %v765
  %v2705 = vunpack.c.l.b16 %v766
  %v2706 = vunpack.c.l.b16 %v767
  %v2707 = vunpack.c.l.b16 %v768
  %v2708 = vunpack.c.l.b16 %v769
  %v2709 = vunpack.c.l.b16 %v770
  %v2710 = vunpack.c.l.b16 %v771
  %v2711 = vunpack.c.l.b16 %v772
  %v2712 = vunpack.c.l.b16 %v773
  %v2713 = vunpack.c.l.b16 %v774
  %v2714 = vunpack.c.l.b16 %v775
  %v2715 = vunpack.c.l.b16 %v776
  %v2716 = vunpack.c.l.b16 %v777
  %v2717 = vunpack.c.l.b16 %v778
  %v2718 = vunpack.c.l.b16 %v779
  %v2719 = vunpack.c.l.b16 %v780
  %v2720 = vunpack.c.l.b16 %v781
  %v2721 = vunpack.c.l.b16 %v782
  %v2722 = vunpack.c.l.b16 %v783
  %v2723 = vunpack.c.l.b16 %v784
  %v2724 = vunpack.c.l.b16 %v785
  %v2725 = vunpack.c.l.b16 %v786
  %v2726 = vunpack.c.l.b16 %v787
  %v2727 = vunpack.c.l.b16 %v788
  %v2728 = vunpack.c.l.b16 %v789
  %v2729 = vunpack.c.l.b16 %v790
  %v2730 = vunpack.c.l.b16 %v791
  %v2731 = vunpack.c.l.b16 %v792
  %v2732 = vunpack.c.l.b16 %v793
  %v2733 = vunpack.c.l.b16 %v794
  %v2734 = vunpack.c.l.b16 %v795
  %v2735 = vunpack.c.l.b16 %v796
  %v2736 = vunpack.c.l.b16 %v797
  %v2737 = vunpack.c.l.b16 %v798
  %v2738 = vunpack.c.l.b16 %v799
  %v2739 = vunpack.c.l.b16 %v800
  %v2740 = vunpack.c.l.b16 %v801
  %v2741 = vunpack.c.l.b16 %v802
  %v2742 = vunpack.c.l.b16 %v803
  %v2743 = vunpack.c.l.b16 %v804
  %v2744 = vunpack.c.l.b16 %v805
  %v2745 = vunpack.c.l.b16 %v806
  %v2746 = vunpack.c.l.b16 %v807
  %v2747 = vunpack.c.l.b16 %v808
  %v2748 = vunpack.c.l.b16 %v809
  %v2749 = vunpack.c.l.b16 %v810
  %v2750 = vunpack.c.l.b16 %v811
  %v2751 = vunpack.c.l.b16 %v812
  %v2752 = vunpack.c.l.b16 %v813
  %v2753 = vunpack.c.l.b16 %v814
  %v2754 = vunpack.c.l.b16 %v815
  %v2755 = vunpack.c.l.b16 %v816
  %v2756 = vunpack.c.l.b16 %v817
  %v2757 = vunpack.c.l.b16 %v818
  %v2758 = vunpack.c.l.b16 %v819
  %v2759 = vunpack.c.l.b16 %v820
  %v2760 = vunpack.c.l.b16 %v821
  %v2761 = vunpack.c.l.b16 %v822
  %v2762 = vunpack.c.l.b16 %v823
  %v2763 = vunpack.c.l.b16 %v824
  %v2764 = vunpack.c.l.b16 %v825
  %v2765 = vunpack.c.l.b16 %v826
  %v2766 = vunpack.c.l.b16 %v827
  %v2767 = vunpack.c.l.b16 %v828
  %v2768 = vunpack.c.l.b16 %v829
  %v2769 = vunpack.c.l.b16 %v830
  %v2770 = vunpack.c.l.b16 %v831
  %v2771 = vunpack.c.l.b16 %v832
  %v2772 = vunpack.c.l.b16 %v833
  %v2773 = vunpack.c.l.b16 %v834
  %v2774 = vunpack.c.l.b16 %v835
  %v2775 = vunpack.c.l.b16 %v836
  %v2776 = vunpack.c.l.b16 %v837
  %v2777 = vunpack.c.l.b16 %v838
  %v2778 = vunpack.c.l.b16 %v839
  %v2779 = vunpack.c.l.b16 %v840
  %v2780 = vunpack.c.l.b16 %v841
  %v2781 = vunpack.c.l.b16 %v842
  %v2782 = vpack.c.b16 %v2047, %v2046
  %v2783 = vpack.c.b16 %v2049, %v2048
  %v2784 = vpack.c.b16 %v2051, %v2050
  %v2785 = vpack.c.b16 %v2053, %v2052
  %v2786 = vpack.c.b16 %v2055, %v2054
  %v2787 = vpack.c.b16 %v2057, %v2056
  %v2788 = vpack.c.b16 %v2059, %v2058
  %v2789 = vpack.c.b16 %v2061, %v2060
  %v2790 = vpack.c.b16 %v2063, %v2062
  %v2791 = vpack.c.b16 %v2065, %v2064
  %v2792 = vpack.c.b16 %v2067, %v2066
  %v2793 = vpack.c.b16 %v2069, %v2068
  %v2794 = vpack.c.b16 %v2071, %v2070
  %v2795 = vpack.c.b16 %v2073, %v2072
  %v2796 = vpack.c.b16 %v2075, %v2074
  %v2797 = vpack.c.b16 %v2077, %v2076
  %v2798 = vpack.c.b16 %v2079, %v2078
  %v2799 = vpack.c.b16 %v2081, %v2080
  %v2800 = vpack.c.b16 %v2083, %v2082
  %v2801 = vpack.c.b16 %v2085, %v2084
  %v2802 = vpack.c.b16 %v2087, %v2086
  %v2803 = vpack.c.b16 %v2089, %v2088
  %v2804 = vpack.c.b16 %v2091, %v2090
  %v2805 = vpack.c.b16 %v2093, %v2092
  %v2806 = vpack.c.b16 %v2095, %v2094
  %v2807 = vpack.c.b16 %v2097, %v2096
  %v2808 = vpack.c.b16 %v2099, %v2098
  %v2809 = vpack.c.b16 %v2101, %v2100
  %v2810 = vpack.c.b16 %v2103, %v2102
  %v2811 = vpack.c.b16 %v2105, %v2104
  %v2812 = vpack.c.b16 %v2107, %v2106
  %v2813 = vpack.c.b16 %v2109, %v2108
  %v2814 = vpack.c.b16 %v2111, %v2110
  %v2815 = vpack.c.b16 %v2113, %v2112
  %v2816 = vpack.c.b16 %v2115, %v2114
  %v2817 = vpack.c.b16 %v2117, %v2116
  %v2818 = vpack.c.b16 %v2119, %v2118
  %v2819 = vpack.c.b16 %v2121, %v2120
  %v2820 = vpack.c.b16 %v2123, %v2122
  %v2821 = vpack.c.b16 %v2125, %v2124
  %v2822 = vpack.c.b16 %v2127, %v2126
  %v2823 = vpack.c.b16 %v2129, %v2128
  %v2824 = vpack.c.b16 %v2131, %v2130
  %v2825 = vpack.c.b16 %v2133, %v2132
  %v2826 = vpack.c.b16 %v2135, %v2134
  %v2827 = vpack.c.b16 %v2137, %v2136
  %v2828 = vpack.c.b16 %v2139, %v2138
  %v2829 = vpack.c.b16 %v2141, %v2140
  %v2830 = vpack.c.b16 %v2143, %v2142
  %v2831 = vpack.c.b16 %v2145, %v2144
  %v2832 = vpack.c.b16 %v2147, %v2146
  %v2833 = vpack.c.b16 %v2149, %v2148
  %v2834 = vpack.c.b16 %v2151, %v2150
  %v2835 = vpack.c.b16 %v2153, %v2152
  %v2836 = vpack.c.b16 %v2155, %v2154
  %v2837 = vpack.c.b16 %v2157, %v2156
  %v2838 = vpack.c.b16 %v2159, %v2158
  %v2839 = vpack.c.b16 %v2161, %v2160
  %v2840 = vpack.c.b16 %v2163, %v2162
  %v2841 = vpack.c.b16 %v2165, %v2164
  %v2842 = vpack.c.b16 %v2167, %v2166
  %v2843 = vpack.c.b16 %v2169, %v2168
  %v2844 = vpack.c.b16 %v2171, %v2170
  %v2845 = vpack.c.b16 %v2173, %v2172
  %v2846 = vpack.c.b16 %v2175, %v2174
  %v2847 = vpack.c.b16 %v2177, %v2176
  %v2848 = vpack.c.b16 %v2179, %v2178
  %v2849 = vpack.c.b16 %v2181, %v2180
  %v2850 = vpack.c.b16 %v2183, %v2182
  %v2851 = vpack.c.b16 %v2185, %v2184
  %v2852 = vpack.c.b16 %v2187, %v2186
  %v2853 = vpack.c.b16 %v2189, %v2188
  %v2854 = vpack.c.b16 %v2191, %v2190
  %v2855 = vpack.c.b16 %v2193, %v2192
  %v2856 = vpack.c.b16 %v2195, %v2194
  %v2857 = vpack.c.b16 %v2197, %v2196
  %v2858 = vpack.c.b16 %v2199, %v2198
  %v2859 = vpack.c.b16 %v2201, %v2200
  %v2860 = vpack.c.b16 %v2203, %v2202
  %v2861 = vpack.c.b16 %v2205, %v2204
  %v2862 = vpack.c.b16 %v2207, %v2206
  %v2863 = vpack.c.b16 %v2209, %v2208
  %v2864 = vpack.c.b16 %v2211, %v2210
  %v2865 = vpack.c.b16 %v2213, %v2212
  %v2866 = vpack.c.b16 %v2215, %v2214
  %v2867 = vpack.c.b16 %v2217, %v2216
  %v2868 = vpack.c.b16 %v2219, %v2218
  %v2869 = vpack.c.b16 %v2221, %v2220
  %v2870 = vpack.c.b16 %v2223, %v2222
  %v2871 = vpack.c.b16 %v2225, %v2224
  %v2872 = vpack.c.b16 %v2227, %v2226
  %v2873 = vpack.c.b16 %v2229, %v2228
  %v2874 = vpack.c.b16 %v2231, %v2230
  %v2875 = vpack.c.b16 %v2233, %v2232
  %v2876 = vpack.c.b16 %v2235, %v2234
  %v2877 = vpack.c.b16 %v2237, %v2236
  %v2878 = vpack.c.b16 %v2239, %v2238
  %v2879 = vpack.c.b16 %v2241, %v2240
  %v2880 = vpack.c.b16 %v2243, %v2242
  %v2881 = vpack.c.b16 %v2245, %v2244
  %v2882 = vpack.c.b16 %v2247, %v2246
  %v2883 = vpack.c.b16 %v2249, %v2248
  %v2884 = vpack.c.b16 %v2251, %v2250
  %v2885 = vpack.c.b16 %v2253, %v2252
  %v2886 = vpack.c.b16 %v2255, %v2254
  %v2887 = vpack.c.b16 %v2257, %v2256
  %v2888 = vpack.c.b16 %v2259, %v2258
  %v2889 = vpack.c.b16 %v2261, %v2260
  %v2890 = vpack.c.b16 %v2263, %v2262
  %v2891 = vpack.c.b16 %v2265, %v2264
  %v2892 = vpack.c.b16 %v2267, %v2266
  %v2893 = vpack.c.b16 %v2269, %v2268
  %v2894 = vpack.c.b16 %v2271, %v2270
  %v2895 = vpack.c.b16 %v2273, %v2272
  %v2896 = vpack.c.b16 %v2275, %v2274
  %v2897 = vpack.c.b16 %v2277, %v2276
  %v2898 = vpack.c.b16 %v2279, %v2278
  %v2899 = vpack.c.b16 %v2281, %v2280
  %v2900 = vpack.c.b16 %v2283, %v2282
  %v2901 = vpack.c.b16 %v2285, %v2284
  %v2902 = vpack.c.b16 %v2287, %v2286
  %v2903 = vpack.c.b16 %v2289, %v2288
  %v2904 = vpack.c.b16 %v2291, %v2290
  %v2905 = vpack.c.b16 %v2293, %v2292
  %v2906 = vpack.c.b16 %v2295, %v2294
  %v2907 = vpack.c.b16 %v2297, %v2296
  %v2908 = vpack.c.b16 %v2299, %v2298
  %v2909 = vpack.c.b16 %v2301, %v2300
  %v2910 = vpack.c.b16 %v2303, %v2302
  %v2911 = vpack.c.b16 %v2305, %v2304
  %v2912 = vpack.c.b16 %v2307, %v2306
  %v2913 = vpack.c.b16 %v2309, %v2308
  %v2914 = vpack.c.b16 %v2311, %v2310
  %v2915 = vpack.c.b16 %v2313, %v2312
  %v2916 = vpack.c.b16 %v2315, %v2314
  %v2917 = vpack.c.b16 %v2317, %v2316
  %v2918 = vpack.c.b16 %v2319, %v2318
  %v2919 = vpack.c.b16 %v2321, %v2320
  %v2920 = vpack.c.b16 %v2323, %v2322
  %v2921 = vpack.c.b16 %v2325, %v2324
  %v2922 = vpack.c.b16 %v2327, %v2326
  %v2923 = vpack.c.b16 %v2329, %v2328
  %v2924 = vpack.c.b16 %v2331, %v2330
  %v2925 = vpack.c.b16 %v2333, %v2332
  %v2926 = vpack.c.b16 %v2335, %v2334
  %v2927 = vpack.c.b16 %v2337, %v2336
  %v2928 = vpack.c.b16 %v2339, %v2338
  %v2929 = vpack.c.b16 %v2341, %v2340
  %v2930 = vpack.c.b16 %v2343, %v2342
  %v2931 = vpack.c.b16 %v2345, %v2344
  %v2932 = vpack.c.b16 %v2347, %v2346
  %v2933 = vpack.c.b16 %v2349, %v2348
  %v2934 = vpack.c.b16 %v2351, %v2350
  %v2935 = vpack.c.b16 %v2353, %v2352
  %v2936 = vpack.c.b16 %v2355, %v2354
  %v2937 = vpack.c.b16 %v2357, %v2356
  %v2938 = vpack.c.b16 %v2359, %v2358
  %v2939 = vpack.c.b16 %v2361, %v2360
  %v2940 = vpack.c.b16 %v2363, %v2362
  %v2941 = vpack.c.b16 %v2365, %v2364
  %v2942 = vpack.c.b16 %v2367, %v2366
  %v2943 = vpack.c.b16 %v2369, %v2368
  %v2944 = vpack.c.b16 %v2371, %v2370
  %v2945 = vpack.c.b16 %v2373, %v2372
  %v2946 = vpack.c.b16 %v2375, %v2374
  %v2947 = vpack.c.b16 %v2377, %v2376
  %v2948 = vpack.c.b16 %v2379, %v2378
  %v2949 = vpack.c.b16 %v2381, %v2380
  %v2950 = vpack.c.b16 %v2383, %v2382
  %v2951 = vpack.c.b16 %v2385, %v2384
  %v2952 = vpack.c.b16 %v2387, %v2386
  %v2953 = vpack.c.b16 %v2389, %v2388
  %v2954 = vpack.c.b16 %v2391, %v2390
  %v2955 = vpack.c.b16 %v2393, %v2392
  %v2956 = vpack.c.b16 %v2395, %v2394
  %v2957 = vpack.c.b16 %v2397, %v2396
  %v2958 = vpack.c.b16 %v2399, %v2398
  %v2959 = vpack.c.b16 %v2401, %v2400
  %v2960 = vpack.c.b16 %v2403, %v2402
  %v2961 = vpack.c.b16 %v2405, %v2404
  %v2962 = vpack.c.b16 %v2407, %v2406
  %v2963 = vpack.c.b16 %v2409, %v2408
  %v2964 = vpack.c.b16 %v2411, %v2410
  %v2965 = vpack.c.b16 %v2413, %v2412
  %v2966 = vpack.c.b16 %v2415, %v2414
  %v2967 = vpack.c.b16 %v2417, %v2416
  %v2968 = vpack.c.b16 %v2419, %v2418
  %v2969 = vpack.c.b16 %v2421, %v2420
  %v2970 = vpack.c.b16 %v2423, %v2422
  %v2971 = vpack.c.b16 %v2425, %v2424
  %v2972 = vpack.c.b16 %v2427, %v2426
  %v2973 = vpack.c.b16 %v2429, %v2428
  %v2974 = vpack.c.b16 %v2431, %v2430
  %v2975 = vpack.c.b16 %v2433, %v2432
  %v2976 = vpack.c.b16 %v2435, %v2434
  %v2977 = vpack.c.b16 %v2437, %v2436
  %v2978 = vpack.c.b16 %v2439, %v2438
  %v2979 = vpack.c.b16 %v2441, %v2440
  %v2980 = vpack.c.b16 %v2443, %v2442
  %v2981 = vpack.c.b16 %v2445, %v2444
  %v2982 = vpack.c.b16 %v2447, %v2446
  %v2983 = vpack.c.b16 %v2449, %v2448
  %v2984 = vpack.c.b16 %v2451, %v2450
  %v2985 = vpack.c.b16 %v2453, %v2452
  %v2986 = vpack.c.b16 %v2455, %v2454
  %v2987 = vpack.c.b16 %v2457, %v2456
  %v2988 = vpack.c.b16 %v2459, %v2458
  %v2989 = vpack.c.b16 %v2461, %v2460
  %v2990 = vpack.c.b16 %v2463, %v2462
  %v2991 = vpack.c.b16 %v2465, %v2464
  %v2992 = vpack.c.b16 %v2467, %v2466
  %v2993 = vpack.c.b16 %v2469, %v2468
  %v2994 = vpack.c.b16 %v2471, %v2470
  %v2995 = vpack.c.b16 %v2473, %v2472
  %v2996 = vpack.c.b16 %v2475, %v2474
  %v2997 = vpack.c.b16 %v2477, %v2476
  %v2998 = vpack.c.b16 %v2479, %v2478
  %v2999 = vpack.c.b16 %v2481, %v2480
  %v3000 = vpack.c.b16 %v2483, %v2482
  %v3001 = vpack.c.b16 %v2485, %v2484
  %v3002 = vpack.c.b16 %v2487, %v2486
  %v3003 = vpack.c.b16 %v2489, %v2488
  %v3004 = vpack.c.b16 %v2491, %v2490
  %v3005 = vpack.c.b16 %v2493, %v2492
  %v3006 = vpack.c.b16 %v2495, %v2494
  %v3007 = vpack.c.b16 %v2497, %v2496
  %v3008 = vpack.c.b16 %v2499, %v2498
  %v3009 = vpack.c.b16 %v2501, %v2500
  %v3010 = vpack.c.b16 %v2503, %v2502
  %v3011 = vpack.c.b16 %v2505, %v2504
  %v3012 = vpack.c.b16 %v2507, %v2506
  %v3013 = vpack.c.b16 %v2509, %v2508
  %v3014 = vpack.c.b16 %v2511, %v2510
  %v3015 = vpack.c.b16 %v2513, %v2512
  %v3016 = vpack.c.b16 %v2515, %v2514
  %v3017 = vpack.c.b16 %v2517, %v2516
  %v3018 = vpack.c.b16 %v2519, %v2518
  %v3019 = vpack.c.b16 %v2521, %v2520
  %v3020 = vpack.c.b16 %v2523, %v2522
  %v3021 = vpack.c.b16 %v2525, %v2524
  %v3022 = vpack.c.b16 %v2527, %v2526
  %v3023 = vpack.c.b16 %v2529, %v2528
  %v3024 = vpack.c.b16 %v2531, %v2530
  %v3025 = vpack.c.b16 %v2533, %v2532
  %v3026 = vpack.c.b16 %v2535, %v2534
  %v3027 = vpack.c.b16 %v2537, %v2536
  %v3028 = vpack.c.b16 %v2539, %v2538
  %v3029 = vpack.c.b16 %v2541, %v2540
  %v3030 = vpack.c.b16 %v2543, %v2542
  %v3031 = vpack.c.b16 %v2545, %v2544
  %v3032 = vpack.c.b16 %v2547, %v2546
  %v3033 = vpack.c.b16 %v2549, %v2548
  %v3034 = vpack.c.b16 %v2551, %v2550
  %v3035 = vpack.c.b16 %v2553, %v2552
  %v3036 = vpack.c.b16 %v2555, %v2554
  %v3037 = vpack.c.b16 %v2557, %v2556
  %v3038 = vpack.c.b16 %v2559, %v2558
  %v3039 = vpack.c.b16 %v2561, %v2560
  %v3040 = vpack.c.b16 %v2563, %v2562
  %v3041 = vpack.c.b16 %v2565, %v2564
  %v3042 = vpack.c.b16 %v2567, %v2566
  %v3043 = vpack.c.b16 %v2569, %v2568
  %v3044 = vpack.c.b16 %v2571, %v2570
  %v3045 = vpack.c.b16 %v2573, %v2572
  %v3046 = vpack.c.b16 %v2575, %v2574
  %v3047 = vpack.c.b16 %v2577, %v2576
  %v3048 = vpack.c.b16 %v2579, %v2578
  %v3049 = vpack.c.b16 %v2581, %v2580
  %v3050 = vpack.c.b16 %v2583, %v2582
  %v3051 = vpack.c.b16 %v2585, %v2584
  %v3052 = vpack.c.b16 %v2587, %v2586
  %v3053 = vpack.c.b16 %v2589, %v2588
  %v3054 = vpack.c.b16 %v2591, %v2590
  %v3055 = vpack.c.b16 %v2593, %v2592
  %v3056 = vpack.c.b16 %v2595, %v2594
  %v3057 = vpack.c.b16 %v2597, %v2596
  %v3058 = vpack.c.b16 %v2599, %v2598
  %v3059 = vpack.c.b16 %v2601, %v2600
  %v3060 = vpack.c.b16 %v2603, %v2602
  %v3061 = vpack.c.b16 %v2605, %v2604
  %v3062 = vpack.c.b16 %v2607, %v2606
  %v3063 = vpack.c.b16 %v2609, %v2608
  %v3064 = vpack.c.b16 %v2611, %v2610
  %v3065 = vpack.c.b16 %v2613, %v2612
  %v3066 = vpack.c.b16 %v2615, %v2614
  %v3067 = vpack.c.b16 %v2617, %v2616
  %v3068 = vpack.c.b16 %v2619, %v2618
  %v3069 = vpack.c.b16 %v2621, %v2620
  %v3070 = vpack.c.b16 %v2623, %v2622
  %v3071 = vpack.c.b16 %v2625, %v2624
  %v3072 = vpack.c.b16 %v2627, %v2626
  %v3073 = vpack.c.b16 %v2629, %v2628
  %v3074 = vpack.c.b16 %v2631, %v2630
  %v3075 = vpack.c.b16 %v2633, %v2632
  %v3076 = vpack.c.b16 %v2635, %v2634
  %v3077 = vpack.c.b16 %v2637, %v2636
  %v3078 = vpack.c.b16 %v2639, %v2638
  %v3079 = vpack.c.b16 %v2641, %v2640
  %v3080 = vpack.c.b16 %v2643, %v2642
  %v3081 = vpack.c.b16 %v2645, %v2644
  %v3082 = vpack.c.b16 %v2647, %v2646
  %v3083 = vpack.c.b16 %v2649, %v2648
  %v3084 = vpack.c.b16 %v2651, %v2650
  %v3085 = vpack.c.b16 %v2653, %v2652
  %v3086 = vpack.c.b16 %v2655, %v2654
  %v3087 = vpack.c.b16 %v2657, %v2656
  %v3088 = vpack.c.b16 %v2659, %v2658
  %v3089 = vpack.c.b16 %v2661, %v2660
  %v3090 = vpack.c.b16 %v2663, %v2662
  %v3091 = vpack.c.b16 %v2665, %v2664
  %v3092 = vpack.c.b16 %v2667, %v2666
  %v3093 = vpack.c.b16 %v2669, %v2668
  %v3094 = vpack.c.b16 %v2671, %v2670
  %v3095 = vpack.c.b16 %v2673, %v2672
  %v3096 = vpack.c.b16 %v2675, %v2674
  %v3097 = vpack.c.b16 %v2677, %v2676
  %v3098 = vpack.c.b16 %v2679, %v2678
  %v3099 = vpack.c.b16 %v2681, %v2680
  %v3100 = vpack.c.b16 %v2683, %v2682
  %v3101 = vpack.c.b16 %v2685, %v2684
  %v3102 = vpack.c.b16 %v2687, %v2686
  %v3103 = vpack.c.b16 %v2689, %v2688
  %v3104 = vpack.c.b16 %v2691, %v2690
  %v3105 = vpack.c.b16 %v2693, %v2692
  %v3106 = vpack.c.b16 %v2695, %v2694
  %v3107 = vpack.c.b16 %v2697, %v2696
  %v3108 = vpack.c.b16 %v2699, %v2698
  %v3109 = vpack.c.b16 %v2701, %v2700
  %v3110 = vpack.c.b16 %v2703, %v2702
  %v3111 = vpack.c.b16 %v2705, %v2704
  %v3112 = vpack.c.b16 %v2707, %v2706
  %v3113 = vpack.c.b16 %v2709, %v2708
  %v3114 = vpack.c.b16 %v2711, %v2710
  %v3115 = vpack.c.b16 %v2713, %v2712
  %v3116 = vpack.c.b16 %v2715, %v2714
  %v3117 = vpack.c.b16 %v2717, %v2716
  %v3118 = vpack.c.b16 %v2719, %v2718
  %v3119 = vpack.c.b16 %v2721, %v2720
  %v3120 = vpack.c.b16 %v2723, %v2722
  %v3121 = vpack.c.b16 %v2725, %v2724
  %v3122 = vpack.c.b16 %v2727, %v2726
  %v3123 = vpack.c.b16 %v2729, %v2728
  %v3124 = vpack.c.b16 %v2731, %v2730
  %v3125 = vpack.c.b16 %v2733, %v2732
  %v3126 = vpack.c.b16 %v2735, %v2734
  %v3127 = vpack.c.b16 %v2737, %v2736
  %v3128 = vpack.c.b16 %v2739, %v2738
  %v3129 = vpack.c.b16 %v2741, %v2740
  %v3130 = vpack.c.b16 %v2743, %v2742
  %v3131 = vpack.c.b16 %v2745, %v2744
  %v3132 = vpack.c.b16 %v2747, %v2746
  %v3133 = vpack.c.b16 %v2749, %v2748
  %v3134 = vpack.c.b16 %v2751, %v2750
  %v3135 = vpack.c.b16 %v2753, %v2752
  %v3136 = vpack.c.b16 %v2755, %v2754
  %v3137 = vpack.c.b16 %v2757, %v2756
  %v3138 = vpack.c.b16 %v2759, %v2758
  %v3139 = vpack.c.b16 %v2761, %v2760
  %v3140 = vpack.c.b16 %v2763, %v2762
  %v3141 = vpack.c.b16 %v2765, %v2764
  %v3142 = vpack.c.b16 %v2767, %v2766
  %v3143 = vpack.c.b16 %v2769, %v2768
  %v3144 = vpack.c.b16 %v2771, %v2770
  %v3145 = vpack.c.b16 %v2773, %v2772
  %v3146 = vpack.c.b16 %v2775, %v2774
  %v3147 = vpack.c.b16 %v2777, %v2776
  %v3148 = vpack.c.b16 %v2779, %v2778
  %v3149 = vpack.c.b16 %v2781, %v2780
  %3518 = vmatprep.subr.bf16.mxu0 0
  %3519 = vmatpush1.bf16.msra.mxu0 %v2789
  %3520 = vmatprep.subr.bf16.mxu0 0
  %3521 = vmatpush1.bf16.msra.mxu0 %v2788
  %3522 = vmatprep.subr.bf16.mxu0 0
  %3523 = vmatpush1.bf16.msra.mxu0 %v2787
  %3524 = vmatprep.subr.bf16.mxu0 0
  %3525 = vmatpush1.bf16.msra.mxu0 %v2786
  %3526 = vmatprep.subr.bf16.mxu0 0
  %3527 = vmatpush1.bf16.msra.mxu0 %v2785
  %3528 = vmatprep.subr.bf16.mxu0 0
  %3529 = vmatpush1.bf16.msra.mxu0 %v2784
  %3530 = vmatprep.subr.bf16.mxu0 0
  %3531 = vmatpush1.bf16.msra.mxu0 %v2783
  %3532 = vmatprep.subr.bf16.mxu0 0
  %3533 = vmatpush1.bf16.msra.mxu0 %v2782
  %3534 = vmatprep.subr.bf16.mxu0 0
  %3535 = vmatpush2.bf16.msra.mxu0 %v2797
  %3536 = vmatprep.subr.bf16.mxu0 0
  %3537 = vmatpush2.bf16.msra.mxu0 %v2796
  %3538 = vmatprep.subr.bf16.mxu0 0
  %3539 = vmatpush2.bf16.msra.mxu0 %v2795
  %3540 = vmatprep.subr.bf16.mxu0 0
  %3541 = vmatpush2.bf16.msra.mxu0 %v2794
  %3542 = vmatprep.subr.bf16.mxu0 0
  %3543 = vmatpush2.bf16.msra.mxu0 %v2793
  %3544 = vmatprep.subr.bf16.mxu0 0
  %3545 = vmatpush2.bf16.msra.mxu0 %v2792
  %3546 = vmatprep.subr.bf16.mxu0 0
  %3547 = vmatpush2.bf16.msra.mxu0 %v2791
  %3548 = vmatprep.subr.bf16.mxu0 0
  %3549 = vmatpush2.bf16.msra.mxu0 %v2790
  %3550 = vmatprep.mubr.bf16.mxu0 %v1127
  %3551 = vmatmul.mubr.bf16.gmra.mxu0 %v1126
  %v3552 = vpop.f32.mrf.mxu0
  %v3553 = vadd.f32 %v848, %v3552
  %v3554 = vpop.f32.mrf.mxu0
  %v3555 = vpop.f32.mrf.mxu0
  %v3556 = vadd.f32 %v848, %v3555
  %v3557 = vpop.f32.mrf.mxu0
  %3558 = vmatprep.mubr.bf16.mxu0 %v1173
  %3559 = vmatmul.mubr.bf16.gmra.mxu0 %v1172
  %v3560 = vpop.f32.mrf.mxu0
  %v3561 = vadd.f32 %v848, %v3560
  %v3562 = vpop.f32.mrf.mxu0
  %v3563 = vpop.f32.mrf.mxu0
  %v3564 = vadd.f32 %v848, %v3563
  %v3565 = vpop.f32.mrf.mxu0
  %3566 = vdwg.mxu0
  %3567 = vmatprep.subr.bf16.mxu0 0
  %3568 = vmatpush1.bf16.msra.mxu0 %v2805
  %3569 = vmatprep.subr.bf16.mxu0 0
  %3570 = vmatpush1.bf16.msra.mxu0 %v2804
  %3571 = vmatprep.subr.bf16.mxu0 0
  %3572 = vmatpush1.bf16.msra.mxu0 %v2803
  %3573 = vmatprep.subr.bf16.mxu0 0
  %3574 = vmatpush1.bf16.msra.mxu0 %v2802
  %3575 = vmatprep.subr.bf16.mxu0 0
  %3576 = vmatpush1.bf16.msra.mxu0 %v2801
  %3577 = vmatprep.subr.bf16.mxu0 0
  %3578 = vmatpush1.bf16.msra.mxu0 %v2800
  %3579 = vmatprep.subr.bf16.mxu0 0
  %3580 = vmatpush1.bf16.msra.mxu0 %v2799
  %3581 = vmatprep.subr.bf16.mxu0 0
  %3582 = vmatpush1.bf16.msra.mxu0 %v2798
  %3583 = vmatprep.subr.bf16.mxu0 0
  %3584 = vmatpush2.bf16.msra.mxu0 %v2813
  %3585 = vmatprep.subr.bf16.mxu0 0
  %3586 = vmatpush2.bf16.msra.mxu0 %v2812
  %3587 = vmatprep.subr.bf16.mxu0 0
  %3588 = vmatpush2.bf16.msra.mxu0 %v2811
  %3589 = vmatprep.subr.bf16.mxu0 0
  %3590 = vmatpush2.bf16.msra.mxu0 %v2810
  %3591 = vmatprep.subr.bf16.mxu0 0
  %3592 = vmatpush2.bf16.msra.mxu0 %v2809
  %3593 = vmatprep.subr.bf16.mxu0 0
  %3594 = vmatpush2.bf16.msra.mxu0 %v2808
  %3595 = vmatprep.subr.bf16.mxu0 0
  %3596 = vmatpush2.bf16.msra.mxu0 %v2807
  %3597 = vmatprep.subr.bf16.mxu0 0
  %3598 = vmatpush2.bf16.msra.mxu0 %v2806
  %3599 = vmatprep.mubr.bf16.mxu0 %v1129
  %3600 = vmatmul.mubr.bf16.gmra.mxu0 %v1128
  %v3601 = vpop.f32.mrf.mxu0
  %v3602 = vadd.f32 %v3553, %v3601
  %v3603 = vpop.f32.mrf.mxu0
  %v3604 = vpop.f32.mrf.mxu0
  %v3605 = vadd.f32 %v3556, %v3604
  %v3606 = vpop.f32.mrf.mxu0
  %3607 = vmatprep.mubr.bf16.mxu0 %v1175
  %3608 = vmatmul.mubr.bf16.gmra.mxu0 %v1174
  %v3609 = vpop.f32.mrf.mxu0
  %v3610 = vadd.f32 %v3561, %v3609
  %v3611 = vpop.f32.mrf.mxu0
  %v3612 = vpop.f32.mrf.mxu0
  %v3613 = vadd.f32 %v3564, %v3612
  %v3614 = vpop.f32.mrf.mxu0
  %3615 = vdwg.mxu0
  %3616 = vmatprep.subr.bf16.mxu0 0
  %3617 = vmatpush1.bf16.msra.mxu0 %v2821
  %3618 = vmatprep.subr.bf16.mxu0 0
  %3619 = vmatpush1.bf16.msra.mxu0 %v2820
  %3620 = vmatprep.subr.bf16.mxu0 0
  %3621 = vmatpush1.bf16.msra.mxu0 %v2819
  %3622 = vmatprep.subr.bf16.mxu0 0
  %3623 = vmatpush1.bf16.msra.mxu0 %v2818
  %3624 = vmatprep.subr.bf16.mxu0 0
  %3625 = vmatpush1.bf16.msra.mxu0 %v2817
  %3626 = vmatprep.subr.bf16.mxu0 0
  %3627 = vmatpush1.bf16.msra.mxu0 %v2816
  %3628 = vmatprep.subr.bf16.mxu0 0
  %3629 = vmatpush1.bf16.msra.mxu0 %v2815
  %3630 = vmatprep.subr.bf16.mxu0 0
  %3631 = vmatpush1.bf16.msra.mxu0 %v2814
  %3632 = vmatprep.subr.bf16.mxu0 0
  %3633 = vmatpush2.bf16.msra.mxu0 %v2829
  %3634 = vmatprep.subr.bf16.mxu0 0
  %3635 = vmatpush2.bf16.msra.mxu0 %v2828
  %3636 = vmatprep.subr.bf16.mxu0 0
  %3637 = vmatpush2.bf16.msra.mxu0 %v2827
  %3638 = vmatprep.subr.bf16.mxu0 0
  %3639 = vmatpush2.bf16.msra.mxu0 %v2826
  %3640 = vmatprep.subr.bf16.mxu0 0
  %3641 = vmatpush2.bf16.msra.mxu0 %v2825
  %3642 = vmatprep.subr.bf16.mxu0 0
  %3643 = vmatpush2.bf16.msra.mxu0 %v2824
  %3644 = vmatprep.subr.bf16.mxu0 0
  %3645 = vmatpush2.bf16.msra.mxu0 %v2823
  %3646 = vmatprep.subr.bf16.mxu0 0
  %3647 = vmatpush2.bf16.msra.mxu0 %v2822
  %3648 = vmatprep.mubr.bf16.mxu0 %v1131
  %3649 = vmatmul.mubr.bf16.gmra.mxu0 %v1130
  %v3650 = vpop.f32.mrf.mxu0
  %v3651 = vadd.f32 %v3602, %v3650
  %v3652 = vpop.f32.mrf.mxu0
  %v3653 = vpop.f32.mrf.mxu0
  %v3654 = vadd.f32 %v3605, %v3653
  %v3655 = vpop.f32.mrf.mxu0
  %3656 = vmatprep.mubr.bf16.mxu0 %v1177
  %3657 = vmatmul.mubr.bf16.gmra.mxu0 %v1176
  %v3658 = vpop.f32.mrf.mxu0
  %v3659 = vadd.f32 %v3610, %v3658
  %v3660 = vpop.f32.mrf.mxu0
  %v3661 = vpop.f32.mrf.mxu0
  %v3662 = vadd.f32 %v3613, %v3661
  %v3663 = vpop.f32.mrf.mxu0
  %3664 = vdwg.mxu0
  %3665 = vmatprep.subr.bf16.mxu0 0
  %3666 = vmatpush1.bf16.msra.mxu0 %v2837
  %3667 = vmatprep.subr.bf16.mxu0 0
  %3668 = vmatpush1.bf16.msra.mxu0 %v2836
  %3669 = vmatprep.subr.bf16.mxu0 0
  %3670 = vmatpush1.bf16.msra.mxu0 %v2835
  %3671 = vmatprep.subr.bf16.mxu0 0
  %3672 = vmatpush1.bf16.msra.mxu0 %v2834
  %3673 = vmatprep.subr.bf16.mxu0 0
  %3674 = vmatpush1.bf16.msra.mxu0 %v2833
  %3675 = vmatprep.subr.bf16.mxu0 0
  %3676 = vmatpush1.bf16.msra.mxu0 %v2832
  %3677 = vmatprep.subr.bf16.mxu0 0
  %3678 = vmatpush1.bf16.msra.mxu0 %v2831
  %3679 = vmatprep.subr.bf16.mxu0 0
  %3680 = vmatpush1.bf16.msra.mxu0 %v2830
  %3681 = vmatprep.subr.bf16.mxu0 0
  %3682 = vmatpush2.bf16.msra.mxu0 %v2845
  %3683 = vmatprep.subr.bf16.mxu0 0
  %3684 = vmatpush2.bf16.msra.mxu0 %v2844
  %3685 = vmatprep.subr.bf16.mxu0 0
  %3686 = vmatpush2.bf16.msra.mxu0 %v2843
  %3687 = vmatprep.subr.bf16.mxu0 0
  %3688 = vmatpush2.bf16.msra.mxu0 %v2842
  %3689 = vmatprep.subr.bf16.mxu0 0
  %3690 = vmatpush2.bf16.msra.mxu0 %v2841
  %3691 = vmatprep.subr.bf16.mxu0 0
  %3692 = vmatpush2.bf16.msra.mxu0 %v2840
  %3693 = vmatprep.subr.bf16.mxu0 0
  %3694 = vmatpush2.bf16.msra.mxu0 %v2839
  %3695 = vmatprep.subr.bf16.mxu0 0
  %3696 = vmatpush2.bf16.msra.mxu0 %v2838
  %3697 = vmatprep.mubr.bf16.mxu0 %v1133
  %3698 = vmatmul.mubr.bf16.gmra.mxu0 %v1132
  %v3699 = vpop.f32.mrf.mxu0
  %v3700 = vadd.f32 %v3651, %v3699
  %v3701 = vpop.f32.mrf.mxu0
  %v3702 = vpop.f32.mrf.mxu0
  %v3703 = vadd.f32 %v3654, %v3702
  %v3704 = vpop.f32.mrf.mxu0
  %3705 = vmatprep.mubr.bf16.mxu0 %v1179
  %3706 = vmatmul.mubr.bf16.gmra.mxu0 %v1178
  %v3707 = vpop.f32.mrf.mxu0
  %v3708 = vadd.f32 %v3659, %v3707
  %v3709 = vpop.f32.mrf.mxu0
  %v3710 = vpop.f32.mrf.mxu0
  %v3711 = vadd.f32 %v3662, %v3710
  %v3712 = vpop.f32.mrf.mxu0
  %3713 = vdwg.mxu0
  %3714 = vmatprep.subr.bf16.mxu0 0
  %3715 = vmatpush1.bf16.msra.mxu0 %v2853
  %3716 = vmatprep.subr.bf16.mxu0 0
  %3717 = vmatpush1.bf16.msra.mxu0 %v2852
  %3718 = vmatprep.subr.bf16.mxu0 0
  %3719 = vmatpush1.bf16.msra.mxu0 %v2851
  %3720 = vmatprep.subr.bf16.mxu0 0
  %3721 = vmatpush1.bf16.msra.mxu0 %v2850
  %3722 = vmatprep.subr.bf16.mxu0 0
  %3723 = vmatpush1.bf16.msra.mxu0 %v2849
  %3724 = vmatprep.subr.bf16.mxu0 0
  %3725 = vmatpush1.bf16.msra.mxu0 %v2848
  %3726 = vmatprep.subr.bf16.mxu0 0
  %3727 = vmatpush1.bf16.msra.mxu0 %v2847
  %3728 = vmatprep.subr.bf16.mxu0 0
  %3729 = vmatpush1.bf16.msra.mxu0 %v2846
  %3730 = vmatprep.subr.bf16.mxu0 0
  %3731 = vmatpush2.bf16.msra.mxu0 %v2861
  %3732 = vmatprep.subr.bf16.mxu0 0
  %3733 = vmatpush2.bf16.msra.mxu0 %v2860
  %3734 = vmatprep.subr.bf16.mxu0 0
  %3735 = vmatpush2.bf16.msra.mxu0 %v2859
  %3736 = vmatprep.subr.bf16.mxu0 0
  %3737 = vmatpush2.bf16.msra.mxu0 %v2858
  %3738 = vmatprep.subr.bf16.mxu0 0
  %3739 = vmatpush2.bf16.msra.mxu0 %v2857
  %3740 = vmatprep.subr.bf16.mxu0 0
  %3741 = vmatpush2.bf16.msra.mxu0 %v2856
  %3742 = vmatprep.subr.bf16.mxu0 0
  %3743 = vmatpush2.bf16.msra.mxu0 %v2855
  %3744 = vmatprep.subr.bf16.mxu0 0
  %3745 = vmatpush2.bf16.msra.mxu0 %v2854
  %3746 = vmatprep.mubr.bf16.mxu0 %v1135
  %3747 = vmatmul.mubr.bf16.gmra.mxu0 %v1134
  %v3748 = vpop.f32.mrf.mxu0
  %v3749 = vadd.f32 %v3700, %v3748
  %v3750 = vpop.f32.mrf.mxu0
  %v3751 = vpop.f32.mrf.mxu0
  %v3752 = vadd.f32 %v3703, %v3751
  %v3753 = vpop.f32.mrf.mxu0
  %3754 = vmatprep.mubr.bf16.mxu0 %v1181
  %3755 = vmatmul.mubr.bf16.gmra.mxu0 %v1180
  %v3756 = vpop.f32.mrf.mxu0
  %v3757 = vadd.f32 %v3708, %v3756
  %v3758 = vpop.f32.mrf.mxu0
  %v3759 = vpop.f32.mrf.mxu0
  %v3760 = vadd.f32 %v3711, %v3759
  %v3761 = vpop.f32.mrf.mxu0
  %3762 = vdwg.mxu0
  %3763 = vmatprep.subr.bf16.mxu0 0
  %3764 = vmatpush1.bf16.msra.mxu0 %v2869
  %3765 = vmatprep.subr.bf16.mxu0 0
  %3766 = vmatpush1.bf16.msra.mxu0 %v2868
  %3767 = vmatprep.subr.bf16.mxu0 0
  %3768 = vmatpush1.bf16.msra.mxu0 %v2867
  %3769 = vmatprep.subr.bf16.mxu0 0
  %3770 = vmatpush1.bf16.msra.mxu0 %v2866
  %3771 = vmatprep.subr.bf16.mxu0 0
  %3772 = vmatpush1.bf16.msra.mxu0 %v2865
  %3773 = vmatprep.subr.bf16.mxu0 0
  %3774 = vmatpush1.bf16.msra.mxu0 %v2864
  %3775 = vmatprep.subr.bf16.mxu0 0
  %3776 = vmatpush1.bf16.msra.mxu0 %v2863
  %3777 = vmatprep.subr.bf16.mxu0 0
  %3778 = vmatpush1.bf16.msra.mxu0 %v2862
  %3779 = vmatprep.subr.bf16.mxu0 0
  %3780 = vmatpush2.bf16.msra.mxu0 %v2877
  %3781 = vmatprep.subr.bf16.mxu0 0
  %3782 = vmatpush2.bf16.msra.mxu0 %v2876
  %3783 = vmatprep.subr.bf16.mxu0 0
  %3784 = vmatpush2.bf16.msra.mxu0 %v2875
  %3785 = vmatprep.subr.bf16.mxu0 0
  %3786 = vmatpush2.bf16.msra.mxu0 %v2874
  %3787 = vmatprep.subr.bf16.mxu0 0
  %3788 = vmatpush2.bf16.msra.mxu0 %v2873
  %3789 = vmatprep.subr.bf16.mxu0 0
  %3790 = vmatpush2.bf16.msra.mxu0 %v2872
  %3791 = vmatprep.subr.bf16.mxu0 0
  %3792 = vmatpush2.bf16.msra.mxu0 %v2871
  %3793 = vmatprep.subr.bf16.mxu0 0
  %3794 = vmatpush2.bf16.msra.mxu0 %v2870
  %3795 = vmatprep.mubr.bf16.mxu0 %v1137
  %3796 = vmatmul.mubr.bf16.gmra.mxu0 %v1136
  %v3797 = vpop.f32.mrf.mxu0
  %v3798 = vadd.f32 %v3749, %v3797
  %v3799 = vpop.f32.mrf.mxu0
  %v3800 = vpop.f32.mrf.mxu0
  %v3801 = vadd.f32 %v3752, %v3800
  %v3802 = vpop.f32.mrf.mxu0
  %3803 = vmatprep.mubr.bf16.mxu0 %v1183
  %3804 = vmatmul.mubr.bf16.gmra.mxu0 %v1182
  %v3805 = vpop.f32.mrf.mxu0
  %v3806 = vadd.f32 %v3757, %v3805
  %v3807 = vpop.f32.mrf.mxu0
  %v3808 = vpop.f32.mrf.mxu0
  %v3809 = vadd.f32 %v3760, %v3808
  %v3810 = vpop.f32.mrf.mxu0
  %3811 = vdwg.mxu0
  %3812 = vmatprep.subr.bf16.mxu0 0
  %3813 = vmatpush1.bf16.msra.mxu0 %v2885
  %3814 = vmatprep.subr.bf16.mxu0 0
  %3815 = vmatpush1.bf16.msra.mxu0 %v2884
  %3816 = vmatprep.subr.bf16.mxu0 0
  %3817 = vmatpush1.bf16.msra.mxu0 %v2883
  %3818 = vmatprep.subr.bf16.mxu0 0
  %3819 = vmatpush1.bf16.msra.mxu0 %v2882
  %3820 = vmatprep.subr.bf16.mxu0 0
  %3821 = vmatpush1.bf16.msra.mxu0 %v2881
  %3822 = vmatprep.subr.bf16.mxu0 0
  %3823 = vmatpush1.bf16.msra.mxu0 %v2880
  %3824 = vmatprep.subr.bf16.mxu0 0
  %3825 = vmatpush1.bf16.msra.mxu0 %v2879
  %3826 = vmatprep.subr.bf16.mxu0 0
  %3827 = vmatpush1.bf16.msra.mxu0 %v2878
  %3828 = vmatprep.subr.bf16.mxu0 0
  %3829 = vmatpush2.bf16.msra.mxu0 %v2893
  %3830 = vmatprep.subr.bf16.mxu0 0
  %3831 = vmatpush2.bf16.msra.mxu0 %v2892
  %3832 = vmatprep.subr.bf16.mxu0 0
  %3833 = vmatpush2.bf16.msra.mxu0 %v2891
  %3834 = vmatprep.subr.bf16.mxu0 0
  %3835 = vmatpush2.bf16.msra.mxu0 %v2890
  %3836 = vmatprep.subr.bf16.mxu0 0
  %3837 = vmatpush2.bf16.msra.mxu0 %v2889
  %3838 = vmatprep.subr.bf16.mxu0 0
  %3839 = vmatpush2.bf16.msra.mxu0 %v2888
  %3840 = vmatprep.subr.bf16.mxu0 0
  %3841 = vmatpush2.bf16.msra.mxu0 %v2887
  %3842 = vmatprep.subr.bf16.mxu0 0
  %3843 = vmatpush2.bf16.msra.mxu0 %v2886
  %3844 = vmatprep.mubr.bf16.mxu0 %v1139
  %3845 = vmatmul.mubr.bf16.gmra.mxu0 %v1138
  %v3846 = vpop.f32.mrf.mxu0
  %v3847 = vadd.f32 %v3798, %v3846
  %v3848 = vpop.f32.mrf.mxu0
  %v3849 = vpop.f32.mrf.mxu0
  %v3850 = vadd.f32 %v3801, %v3849
  %v3851 = vpop.f32.mrf.mxu0
  %3852 = vmatprep.mubr.bf16.mxu0 %v1185
  %3853 = vmatmul.mubr.bf16.gmra.mxu0 %v1184
  %v3854 = vpop.f32.mrf.mxu0
  %v3855 = vadd.f32 %v3806, %v3854
  %v3856 = vpop.f32.mrf.mxu0
  %v3857 = vpop.f32.mrf.mxu0
  %v3858 = vadd.f32 %v3809, %v3857
  %v3859 = vpop.f32.mrf.mxu0
  %3860 = vdwg.mxu0
  %3861 = vmatprep.subr.bf16.mxu0 0
  %3862 = vmatpush1.bf16.msra.mxu0 %v2901
  %3863 = vmatprep.subr.bf16.mxu0 0
  %3864 = vmatpush1.bf16.msra.mxu0 %v2900
  %3865 = vmatprep.subr.bf16.mxu0 0
  %3866 = vmatpush1.bf16.msra.mxu0 %v2899
  %3867 = vmatprep.subr.bf16.mxu0 0
  %3868 = vmatpush1.bf16.msra.mxu0 %v2898
  %3869 = vmatprep.subr.bf16.mxu0 0
  %3870 = vmatpush1.bf16.msra.mxu0 %v2897
  %3871 = vmatprep.subr.bf16.mxu0 0
  %3872 = vmatpush1.bf16.msra.mxu0 %v2896
  %3873 = vmatprep.subr.bf16.mxu0 0
  %3874 = vmatpush1.bf16.msra.mxu0 %v2895
  %3875 = vmatprep.subr.bf16.mxu0 0
  %3876 = vmatpush1.bf16.msra.mxu0 %v2894
  %3877 = vmatprep.subr.bf16.mxu0 0
  %3878 = vmatpush2.bf16.msra.mxu0 %v2909
  %3879 = vmatprep.subr.bf16.mxu0 0
  %3880 = vmatpush2.bf16.msra.mxu0 %v2908
  %3881 = vmatprep.subr.bf16.mxu0 0
  %3882 = vmatpush2.bf16.msra.mxu0 %v2907
  %3883 = vmatprep.subr.bf16.mxu0 0
  %3884 = vmatpush2.bf16.msra.mxu0 %v2906
  %3885 = vmatprep.subr.bf16.mxu0 0
  %3886 = vmatpush2.bf16.msra.mxu0 %v2905
  %3887 = vmatprep.subr.bf16.mxu0 0
  %3888 = vmatpush2.bf16.msra.mxu0 %v2904
  %3889 = vmatprep.subr.bf16.mxu0 0
  %3890 = vmatpush2.bf16.msra.mxu0 %v2903
  %3891 = vmatprep.subr.bf16.mxu0 0
  %3892 = vmatpush2.bf16.msra.mxu0 %v2902
  %3893 = vmatprep.mubr.bf16.mxu0 %v1141
  %3894 = vmatmul.mubr.bf16.gmra.mxu0 %v1140
  %v3895 = vpop.f32.mrf.mxu0
  %v3896 = vadd.f32 %v3847, %v3895
  %v3897 = vpop.f32.mrf.mxu0
  %v3898 = vpop.f32.mrf.mxu0
  %v3899 = vadd.f32 %v3850, %v3898
  %v3900 = vpop.f32.mrf.mxu0
  %3901 = vmatprep.mubr.bf16.mxu0 %v1187
  %3902 = vmatmul.mubr.bf16.gmra.mxu0 %v1186
  %v3903 = vpop.f32.mrf.mxu0
  %v3904 = vadd.f32 %v3855, %v3903
  %v3905 = vpop.f32.mrf.mxu0
  %v3906 = vpop.f32.mrf.mxu0
  %v3907 = vadd.f32 %v3858, %v3906
  %v3908 = vpop.f32.mrf.mxu0
  %3909 = vdwg.mxu0
  %3910 = vmatprep.subr.bf16.mxu0 0
  %3911 = vmatpush1.bf16.msra.mxu0 %v2917
  %3912 = vmatprep.subr.bf16.mxu0 0
  %3913 = vmatpush1.bf16.msra.mxu0 %v2916
  %3914 = vmatprep.subr.bf16.mxu0 0
  %3915 = vmatpush1.bf16.msra.mxu0 %v2915
  %3916 = vmatprep.subr.bf16.mxu0 0
  %3917 = vmatpush1.bf16.msra.mxu0 %v2914
  %3918 = vmatprep.subr.bf16.mxu0 0
  %3919 = vmatpush1.bf16.msra.mxu0 %v2913
  %3920 = vmatprep.subr.bf16.mxu0 0
  %3921 = vmatpush1.bf16.msra.mxu0 %v2912
  %3922 = vmatprep.subr.bf16.mxu0 0
  %3923 = vmatpush1.bf16.msra.mxu0 %v2911
  %3924 = vmatprep.subr.bf16.mxu0 0
  %3925 = vmatpush1.bf16.msra.mxu0 %v2910
  %3926 = vmatprep.subr.bf16.mxu0 0
  %3927 = vmatpush2.bf16.msra.mxu0 %v2925
  %3928 = vmatprep.subr.bf16.mxu0 0
  %3929 = vmatpush2.bf16.msra.mxu0 %v2924
  %3930 = vmatprep.subr.bf16.mxu0 0
  %3931 = vmatpush2.bf16.msra.mxu0 %v2923
  %3932 = vmatprep.subr.bf16.mxu0 0
  %3933 = vmatpush2.bf16.msra.mxu0 %v2922
  %3934 = vmatprep.subr.bf16.mxu0 0
  %3935 = vmatpush2.bf16.msra.mxu0 %v2921
  %3936 = vmatprep.subr.bf16.mxu0 0
  %3937 = vmatpush2.bf16.msra.mxu0 %v2920
  %3938 = vmatprep.subr.bf16.mxu0 0
  %3939 = vmatpush2.bf16.msra.mxu0 %v2919
  %3940 = vmatprep.subr.bf16.mxu0 0
  %3941 = vmatpush2.bf16.msra.mxu0 %v2918
  %3942 = vmatprep.mubr.bf16.mxu0 %v1143
  %3943 = vmatmul.mubr.bf16.gmra.mxu0 %v1142
  %v3944 = vpop.f32.mrf.mxu0
  %v3945 = vadd.f32 %v3896, %v3944
  %v3946 = vpop.f32.mrf.mxu0
  %v3947 = vpop.f32.mrf.mxu0
  %v3948 = vadd.f32 %v3899, %v3947
  %v3949 = vpop.f32.mrf.mxu0
  %3950 = vmatprep.mubr.bf16.mxu0 %v1189
  %3951 = vmatmul.mubr.bf16.gmra.mxu0 %v1188
  %v3952 = vpop.f32.mrf.mxu0
  %v3953 = vadd.f32 %v3904, %v3952
  %v3954 = vpop.f32.mrf.mxu0
  %v3955 = vpop.f32.mrf.mxu0
  %v3956 = vadd.f32 %v3907, %v3955
  %v3957 = vpop.f32.mrf.mxu0
  %3958 = vdwg.mxu0
  %3959 = vmatprep.subr.bf16.mxu0 0
  %3960 = vmatpush1.bf16.msra.mxu0 %v2933
  %3961 = vmatprep.subr.bf16.mxu0 0
  %3962 = vmatpush1.bf16.msra.mxu0 %v2932
  %3963 = vmatprep.subr.bf16.mxu0 0
  %3964 = vmatpush1.bf16.msra.mxu0 %v2931
  %3965 = vmatprep.subr.bf16.mxu0 0
  %3966 = vmatpush1.bf16.msra.mxu0 %v2930
  %3967 = vmatprep.subr.bf16.mxu0 0
  %3968 = vmatpush1.bf16.msra.mxu0 %v2929
  %3969 = vmatprep.subr.bf16.mxu0 0
  %3970 = vmatpush1.bf16.msra.mxu0 %v2928
  %3971 = vmatprep.subr.bf16.mxu0 0
  %3972 = vmatpush1.bf16.msra.mxu0 %v2927
  %3973 = vmatprep.subr.bf16.mxu0 0
  %3974 = vmatpush1.bf16.msra.mxu0 %v2926
  %3975 = vmatprep.subr.bf16.mxu0 0
  %3976 = vmatpush2.bf16.msra.mxu0 %v2941
  %3977 = vmatprep.subr.bf16.mxu0 0
  %3978 = vmatpush2.bf16.msra.mxu0 %v2940
  %3979 = vmatprep.subr.bf16.mxu0 0
  %3980 = vmatpush2.bf16.msra.mxu0 %v2939
  %3981 = vmatprep.subr.bf16.mxu0 0
  %3982 = vmatpush2.bf16.msra.mxu0 %v2938
  %3983 = vmatprep.subr.bf16.mxu0 0
  %3984 = vmatpush2.bf16.msra.mxu0 %v2937
  %3985 = vmatprep.subr.bf16.mxu0 0
  %3986 = vmatpush2.bf16.msra.mxu0 %v2936
  %3987 = vmatprep.subr.bf16.mxu0 0
  %3988 = vmatpush2.bf16.msra.mxu0 %v2935
  %3989 = vmatprep.subr.bf16.mxu0 0
  %3990 = vmatpush2.bf16.msra.mxu0 %v2934
  %3991 = vmatprep.mubr.bf16.mxu0 %v1145
  %3992 = vmatmul.mubr.bf16.gmra.mxu0 %v1144
  %v3993 = vpop.f32.mrf.mxu0
  %v3994 = vadd.f32 %v3945, %v3993
  %v3995 = vpop.f32.mrf.mxu0
  %v3996 = vpop.f32.mrf.mxu0
  %v3997 = vadd.f32 %v3948, %v3996
  %v3998 = vpop.f32.mrf.mxu0
  %3999 = vmatprep.mubr.bf16.mxu0 %v1191
  %4000 = vmatmul.mubr.bf16.gmra.mxu0 %v1190
  %v4001 = vpop.f32.mrf.mxu0
  %v4002 = vadd.f32 %v3953, %v4001
  %v4003 = vpop.f32.mrf.mxu0
  %v4004 = vpop.f32.mrf.mxu0
  %v4005 = vadd.f32 %v3956, %v4004
  %v4006 = vpop.f32.mrf.mxu0
  %4007 = vdwg.mxu0
  %4008 = vmatprep.subr.bf16.mxu0 0
  %4009 = vmatpush1.bf16.msra.mxu0 %v2949
  %4010 = vmatprep.subr.bf16.mxu0 0
  %4011 = vmatpush1.bf16.msra.mxu0 %v2948
  %4012 = vmatprep.subr.bf16.mxu0 0
  %4013 = vmatpush1.bf16.msra.mxu0 %v2947
  %4014 = vmatprep.subr.bf16.mxu0 0
  %4015 = vmatpush1.bf16.msra.mxu0 %v2946
  %4016 = vmatprep.subr.bf16.mxu0 0
  %4017 = vmatpush1.bf16.msra.mxu0 %v2945
  %4018 = vmatprep.subr.bf16.mxu0 0
  %4019 = vmatpush1.bf16.msra.mxu0 %v2944
  %4020 = vmatprep.subr.bf16.mxu0 0
  %4021 = vmatpush1.bf16.msra.mxu0 %v2943
  %4022 = vmatprep.subr.bf16.mxu0 0
  %4023 = vmatpush1.bf16.msra.mxu0 %v2942
  %4024 = vmatprep.subr.bf16.mxu0 0
  %4025 = vmatpush2.bf16.msra.mxu0 %v2957
  %4026 = vmatprep.subr.bf16.mxu0 0
  %4027 = vmatpush2.bf16.msra.mxu0 %v2956
  %4028 = vmatprep.subr.bf16.mxu0 0
  %4029 = vmatpush2.bf16.msra.mxu0 %v2955
  %4030 = vmatprep.subr.bf16.mxu0 0
  %4031 = vmatpush2.bf16.msra.mxu0 %v2954
  %4032 = vmatprep.subr.bf16.mxu0 0
  %4033 = vmatpush2.bf16.msra.mxu0 %v2953
  %4034 = vmatprep.subr.bf16.mxu0 0
  %4035 = vmatpush2.bf16.msra.mxu0 %v2952
  %4036 = vmatprep.subr.bf16.mxu0 0
  %4037 = vmatpush2.bf16.msra.mxu0 %v2951
  %4038 = vmatprep.subr.bf16.mxu0 0
  %4039 = vmatpush2.bf16.msra.mxu0 %v2950
  %4040 = vmatprep.mubr.bf16.mxu0 %v1147
  %4041 = vmatmul.mubr.bf16.gmra.mxu0 %v1146
  %v4042 = vpop.f32.mrf.mxu0
  %v4043 = vadd.f32 %v3994, %v4042
  %v4044 = vpop.f32.mrf.mxu0
  %v4045 = vpop.f32.mrf.mxu0
  %v4046 = vadd.f32 %v3997, %v4045
  %v4047 = vpop.f32.mrf.mxu0
  %4048 = vmatprep.mubr.bf16.mxu0 %v1193
  %4049 = vmatmul.mubr.bf16.gmra.mxu0 %v1192
  %v4050 = vpop.f32.mrf.mxu0
  %v4051 = vadd.f32 %v4002, %v4050
  %v4052 = vpop.f32.mrf.mxu0
  %v4053 = vpop.f32.mrf.mxu0
  %v4054 = vadd.f32 %v4005, %v4053
  %v4055 = vpop.f32.mrf.mxu0
  %4056 = vdwg.mxu0
  %4057 = vmatprep.subr.bf16.mxu0 0
  %4058 = vmatpush1.bf16.msra.mxu0 %v2965
  %4059 = vmatprep.subr.bf16.mxu0 0
  %4060 = vmatpush1.bf16.msra.mxu0 %v2964
  %4061 = vmatprep.subr.bf16.mxu0 0
  %4062 = vmatpush1.bf16.msra.mxu0 %v2963
  %4063 = vmatprep.subr.bf16.mxu0 0
  %4064 = vmatpush1.bf16.msra.mxu0 %v2962
  %4065 = vmatprep.subr.bf16.mxu0 0
  %4066 = vmatpush1.bf16.msra.mxu0 %v2961
  %4067 = vmatprep.subr.bf16.mxu0 0
  %4068 = vmatpush1.bf16.msra.mxu0 %v2960
  %4069 = vmatprep.subr.bf16.mxu0 0
  %4070 = vmatpush1.bf16.msra.mxu0 %v2959
  %4071 = vmatprep.subr.bf16.mxu0 0
  %4072 = vmatpush1.bf16.msra.mxu0 %v2958
  %4073 = vmatprep.subr.bf16.mxu0 0
  %4074 = vmatpush2.bf16.msra.mxu0 %v2973
  %4075 = vmatprep.subr.bf16.mxu0 0
  %4076 = vmatpush2.bf16.msra.mxu0 %v2972
  %4077 = vmatprep.subr.bf16.mxu0 0
  %4078 = vmatpush2.bf16.msra.mxu0 %v2971
  %4079 = vmatprep.subr.bf16.mxu0 0
  %4080 = vmatpush2.bf16.msra.mxu0 %v2970
  %4081 = vmatprep.subr.bf16.mxu0 0
  %4082 = vmatpush2.bf16.msra.mxu0 %v2969
  %4083 = vmatprep.subr.bf16.mxu0 0
  %4084 = vmatpush2.bf16.msra.mxu0 %v2968
  %4085 = vmatprep.subr.bf16.mxu0 0
  %4086 = vmatpush2.bf16.msra.mxu0 %v2967
  %4087 = vmatprep.subr.bf16.mxu0 0
  %4088 = vmatpush2.bf16.msra.mxu0 %v2966
  %4089 = vmatprep.mubr.bf16.mxu0 %v1149
  %4090 = vmatmul.mubr.bf16.gmra.mxu0 %v1148
  %v4091 = vpop.f32.mrf.mxu0
  %v4092 = vadd.f32 %v4043, %v4091
  %v4093 = vpop.f32.mrf.mxu0
  %v4094 = vpop.f32.mrf.mxu0
  %v4095 = vadd.f32 %v4046, %v4094
  %v4096 = vpop.f32.mrf.mxu0
  %4097 = vmatprep.mubr.bf16.mxu0 %v1195
  %4098 = vmatmul.mubr.bf16.gmra.mxu0 %v1194
  %v4099 = vpop.f32.mrf.mxu0
  %v4100 = vadd.f32 %v4051, %v4099
  %v4101 = vpop.f32.mrf.mxu0
  %v4102 = vpop.f32.mrf.mxu0
  %v4103 = vadd.f32 %v4054, %v4102
  %v4104 = vpop.f32.mrf.mxu0
  %4105 = vdwg.mxu0
  %4106 = vmatprep.subr.bf16.mxu0 0
  %4107 = vmatpush1.bf16.msra.mxu0 %v2981
  %4108 = vmatprep.subr.bf16.mxu0 0
  %4109 = vmatpush1.bf16.msra.mxu0 %v2980
  %4110 = vmatprep.subr.bf16.mxu0 0
  %4111 = vmatpush1.bf16.msra.mxu0 %v2979
  %4112 = vmatprep.subr.bf16.mxu0 0
  %4113 = vmatpush1.bf16.msra.mxu0 %v2978
  %4114 = vmatprep.subr.bf16.mxu0 0
  %4115 = vmatpush1.bf16.msra.mxu0 %v2977
  %4116 = vmatprep.subr.bf16.mxu0 0
  %4117 = vmatpush1.bf16.msra.mxu0 %v2976
  %4118 = vmatprep.subr.bf16.mxu0 0
  %4119 = vmatpush1.bf16.msra.mxu0 %v2975
  %4120 = vmatprep.subr.bf16.mxu0 0
  %4121 = vmatpush1.bf16.msra.mxu0 %v2974
  %4122 = vmatprep.subr.bf16.mxu0 0
  %4123 = vmatpush2.bf16.msra.mxu0 %v2989
  %4124 = vmatprep.subr.bf16.mxu0 0
  %4125 = vmatpush2.bf16.msra.mxu0 %v2988
  %4126 = vmatprep.subr.bf16.mxu0 0
  %4127 = vmatpush2.bf16.msra.mxu0 %v2987
  %4128 = vmatprep.subr.bf16.mxu0 0
  %4129 = vmatpush2.bf16.msra.mxu0 %v2986
  %4130 = vmatprep.subr.bf16.mxu0 0
  %4131 = vmatpush2.bf16.msra.mxu0 %v2985
  %4132 = vmatprep.subr.bf16.mxu0 0
  %4133 = vmatpush2.bf16.msra.mxu0 %v2984
  %4134 = vmatprep.subr.bf16.mxu0 0
  %4135 = vmatpush2.bf16.msra.mxu0 %v2983
  %4136 = vmatprep.subr.bf16.mxu0 0
  %4137 = vmatpush2.bf16.msra.mxu0 %v2982
  %4138 = vmatprep.mubr.bf16.mxu0 %v1151
  %4139 = vmatmul.mubr.bf16.gmra.mxu0 %v1150
  %v4140 = vpop.f32.mrf.mxu0
  %v4141 = vadd.f32 %v4092, %v4140
  %v4142 = vpop.f32.mrf.mxu0
  %v4143 = vpop.f32.mrf.mxu0
  %v4144 = vadd.f32 %v4095, %v4143
  %v4145 = vpop.f32.mrf.mxu0
  %4146 = vmatprep.mubr.bf16.mxu0 %v1197
  %4147 = vmatmul.mubr.bf16.gmra.mxu0 %v1196
  %v4148 = vpop.f32.mrf.mxu0
  %v4149 = vadd.f32 %v4100, %v4148
  %v4150 = vpop.f32.mrf.mxu0
  %v4151 = vpop.f32.mrf.mxu0
  %v4152 = vadd.f32 %v4103, %v4151
  %v4153 = vpop.f32.mrf.mxu0
  %4154 = vdwg.mxu0
  %4155 = vmatprep.subr.bf16.mxu0 0
  %4156 = vmatpush1.bf16.msra.mxu0 %v2997
  %4157 = vmatprep.subr.bf16.mxu0 0
  %4158 = vmatpush1.bf16.msra.mxu0 %v2996
  %4159 = vmatprep.subr.bf16.mxu0 0
  %4160 = vmatpush1.bf16.msra.mxu0 %v2995
  %4161 = vmatprep.subr.bf16.mxu0 0
  %4162 = vmatpush1.bf16.msra.mxu0 %v2994
  %4163 = vmatprep.subr.bf16.mxu0 0
  %4164 = vmatpush1.bf16.msra.mxu0 %v2993
  %4165 = vmatprep.subr.bf16.mxu0 0
  %4166 = vmatpush1.bf16.msra.mxu0 %v2992
  %4167 = vmatprep.subr.bf16.mxu0 0
  %4168 = vmatpush1.bf16.msra.mxu0 %v2991
  %4169 = vmatprep.subr.bf16.mxu0 0
  %4170 = vmatpush1.bf16.msra.mxu0 %v2990
  %4171 = vmatprep.subr.bf16.mxu0 0
  %4172 = vmatpush2.bf16.msra.mxu0 %v3005
  %4173 = vmatprep.subr.bf16.mxu0 0
  %4174 = vmatpush2.bf16.msra.mxu0 %v3004
  %4175 = vmatprep.subr.bf16.mxu0 0
  %4176 = vmatpush2.bf16.msra.mxu0 %v3003
  %4177 = vmatprep.subr.bf16.mxu0 0
  %4178 = vmatpush2.bf16.msra.mxu0 %v3002
  %4179 = vmatprep.subr.bf16.mxu0 0
  %4180 = vmatpush2.bf16.msra.mxu0 %v3001
  %4181 = vmatprep.subr.bf16.mxu0 0
  %4182 = vmatpush2.bf16.msra.mxu0 %v3000
  %4183 = vmatprep.subr.bf16.mxu0 0
  %4184 = vmatpush2.bf16.msra.mxu0 %v2999
  %4185 = vmatprep.subr.bf16.mxu0 0
  %4186 = vmatpush2.bf16.msra.mxu0 %v2998
  %4187 = vmatprep.mubr.bf16.mxu0 %v1153
  %4188 = vmatmul.mubr.bf16.gmra.mxu0 %v1152
  %v4189 = vpop.f32.mrf.mxu0
  %v4190 = vadd.f32 %v4141, %v4189
  %v4191 = vpop.f32.mrf.mxu0
  %v4192 = vpop.f32.mrf.mxu0
  %v4193 = vadd.f32 %v4144, %v4192
  %v4194 = vpop.f32.mrf.mxu0
  %4195 = vmatprep.mubr.bf16.mxu0 %v1199
  %4196 = vmatmul.mubr.bf16.gmra.mxu0 %v1198
  %v4197 = vpop.f32.mrf.mxu0
  %v4198 = vadd.f32 %v4149, %v4197
  %v4199 = vpop.f32.mrf.mxu0
  %v4200 = vpop.f32.mrf.mxu0
  %v4201 = vadd.f32 %v4152, %v4200
  %v4202 = vpop.f32.mrf.mxu0
  %4203 = vdwg.mxu0
  %4204 = vmatprep.subr.bf16.mxu0 0
  %4205 = vmatpush1.bf16.msra.mxu0 %v3013
  %4206 = vmatprep.subr.bf16.mxu0 0
  %4207 = vmatpush1.bf16.msra.mxu0 %v3012
  %4208 = vmatprep.subr.bf16.mxu0 0
  %4209 = vmatpush1.bf16.msra.mxu0 %v3011
  %4210 = vmatprep.subr.bf16.mxu0 0
  %4211 = vmatpush1.bf16.msra.mxu0 %v3010
  %4212 = vmatprep.subr.bf16.mxu0 0
  %4213 = vmatpush1.bf16.msra.mxu0 %v3009
  %4214 = vmatprep.subr.bf16.mxu0 0
  %4215 = vmatpush1.bf16.msra.mxu0 %v3008
  %4216 = vmatprep.subr.bf16.mxu0 0
  %4217 = vmatpush1.bf16.msra.mxu0 %v3007
  %4218 = vmatprep.subr.bf16.mxu0 0
  %4219 = vmatpush1.bf16.msra.mxu0 %v3006
  %4220 = vmatprep.subr.bf16.mxu0 0
  %4221 = vmatpush2.bf16.msra.mxu0 %v3021
  %4222 = vmatprep.subr.bf16.mxu0 0
  %4223 = vmatpush2.bf16.msra.mxu0 %v3020
  %4224 = vmatprep.subr.bf16.mxu0 0
  %4225 = vmatpush2.bf16.msra.mxu0 %v3019
  %4226 = vmatprep.subr.bf16.mxu0 0
  %4227 = vmatpush2.bf16.msra.mxu0 %v3018
  %4228 = vmatprep.subr.bf16.mxu0 0
  %4229 = vmatpush2.bf16.msra.mxu0 %v3017
  %4230 = vmatprep.subr.bf16.mxu0 0
  %4231 = vmatpush2.bf16.msra.mxu0 %v3016
  %4232 = vmatprep.subr.bf16.mxu0 0
  %4233 = vmatpush2.bf16.msra.mxu0 %v3015
  %4234 = vmatprep.subr.bf16.mxu0 0
  %4235 = vmatpush2.bf16.msra.mxu0 %v3014
  %4236 = vmatprep.mubr.bf16.mxu0 %v1155
  %4237 = vmatmul.mubr.bf16.gmra.mxu0 %v1154
  %v4238 = vpop.f32.mrf.mxu0
  %v4239 = vadd.f32 %v4190, %v4238
  %v4240 = vpop.f32.mrf.mxu0
  %v4241 = vpop.f32.mrf.mxu0
  %v4242 = vadd.f32 %v4193, %v4241
  %v4243 = vpop.f32.mrf.mxu0
  %4244 = vmatprep.mubr.bf16.mxu0 %v1201
  %4245 = vmatmul.mubr.bf16.gmra.mxu0 %v1200
  %v4246 = vpop.f32.mrf.mxu0
  %v4247 = vadd.f32 %v4198, %v4246
  %v4248 = vpop.f32.mrf.mxu0
  %v4249 = vpop.f32.mrf.mxu0
  %v4250 = vadd.f32 %v4201, %v4249
  %v4251 = vpop.f32.mrf.mxu0
  %4252 = vdwg.mxu0
  %4253 = vmatprep.subr.bf16.mxu0 0
  %4254 = vmatpush1.bf16.msra.mxu0 %v3029
  %4255 = vmatprep.subr.bf16.mxu0 0
  %4256 = vmatpush1.bf16.msra.mxu0 %v3028
  %4257 = vmatprep.subr.bf16.mxu0 0
  %4258 = vmatpush1.bf16.msra.mxu0 %v3027
  %4259 = vmatprep.subr.bf16.mxu0 0
  %4260 = vmatpush1.bf16.msra.mxu0 %v3026
  %4261 = vmatprep.subr.bf16.mxu0 0
  %4262 = vmatpush1.bf16.msra.mxu0 %v3025
  %4263 = vmatprep.subr.bf16.mxu0 0
  %4264 = vmatpush1.bf16.msra.mxu0 %v3024
  %4265 = vmatprep.subr.bf16.mxu0 0
  %4266 = vmatpush1.bf16.msra.mxu0 %v3023
  %4267 = vmatprep.subr.bf16.mxu0 0
  %4268 = vmatpush1.bf16.msra.mxu0 %v3022
  %4269 = vmatprep.subr.bf16.mxu0 0
  %4270 = vmatpush2.bf16.msra.mxu0 %v3037
  %4271 = vmatprep.subr.bf16.mxu0 0
  %4272 = vmatpush2.bf16.msra.mxu0 %v3036
  %4273 = vmatprep.subr.bf16.mxu0 0
  %4274 = vmatpush2.bf16.msra.mxu0 %v3035
  %4275 = vmatprep.subr.bf16.mxu0 0
  %4276 = vmatpush2.bf16.msra.mxu0 %v3034
  %4277 = vmatprep.subr.bf16.mxu0 0
  %4278 = vmatpush2.bf16.msra.mxu0 %v3033
  %4279 = vmatprep.subr.bf16.mxu0 0
  %4280 = vmatpush2.bf16.msra.mxu0 %v3032
  %4281 = vmatprep.subr.bf16.mxu0 0
  %4282 = vmatpush2.bf16.msra.mxu0 %v3031
  %4283 = vmatprep.subr.bf16.mxu0 0
  %4284 = vmatpush2.bf16.msra.mxu0 %v3030
  %4285 = vmatprep.mubr.bf16.mxu0 %v1157
  %4286 = vmatmul.mubr.bf16.gmra.mxu0 %v1156
  %v4287 = vpop.f32.mrf.mxu0
  %v4288 = vadd.f32 %v4239, %v4287
  %v4289 = vpop.f32.mrf.mxu0
  %v4290 = vpop.f32.mrf.mxu0
  %v4291 = vadd.f32 %v4242, %v4290
  %v4292 = vpop.f32.mrf.mxu0
  %4293 = vmatprep.mubr.bf16.mxu0 %v1203
  %4294 = vmatmul.mubr.bf16.gmra.mxu0 %v1202
  %v4295 = vpop.f32.mrf.mxu0
  %v4296 = vadd.f32 %v4247, %v4295
  %v4297 = vpop.f32.mrf.mxu0
  %v4298 = vpop.f32.mrf.mxu0
  %v4299 = vadd.f32 %v4250, %v4298
  %v4300 = vpop.f32.mrf.mxu0
  %4301 = vdwg.mxu0
  %4302 = vmatprep.subr.bf16.mxu0 0
  %4303 = vmatpush1.bf16.msra.mxu0 %v3045
  %4304 = vmatprep.subr.bf16.mxu0 0
  %4305 = vmatpush1.bf16.msra.mxu0 %v3044
  %4306 = vmatprep.subr.bf16.mxu0 0
  %4307 = vmatpush1.bf16.msra.mxu0 %v3043
  %4308 = vmatprep.subr.bf16.mxu0 0
  %4309 = vmatpush1.bf16.msra.mxu0 %v3042
  %4310 = vmatprep.subr.bf16.mxu0 0
  %4311 = vmatpush1.bf16.msra.mxu0 %v3041
  %4312 = vmatprep.subr.bf16.mxu0 0
  %4313 = vmatpush1.bf16.msra.mxu0 %v3040
  %4314 = vmatprep.subr.bf16.mxu0 0
  %4315 = vmatpush1.bf16.msra.mxu0 %v3039
  %4316 = vmatprep.subr.bf16.mxu0 0
  %4317 = vmatpush1.bf16.msra.mxu0 %v3038
  %4318 = vmatprep.subr.bf16.mxu0 0
  %4319 = vmatpush2.bf16.msra.mxu0 %v3053
  %4320 = vmatprep.subr.bf16.mxu0 0
  %4321 = vmatpush2.bf16.msra.mxu0 %v3052
  %4322 = vmatprep.subr.bf16.mxu0 0
  %4323 = vmatpush2.bf16.msra.mxu0 %v3051
  %4324 = vmatprep.subr.bf16.mxu0 0
  %4325 = vmatpush2.bf16.msra.mxu0 %v3050
  %4326 = vmatprep.subr.bf16.mxu0 0
  %4327 = vmatpush2.bf16.msra.mxu0 %v3049
  %4328 = vmatprep.subr.bf16.mxu0 0
  %4329 = vmatpush2.bf16.msra.mxu0 %v3048
  %4330 = vmatprep.subr.bf16.mxu0 0
  %4331 = vmatpush2.bf16.msra.mxu0 %v3047
  %4332 = vmatprep.subr.bf16.mxu0 0
  %4333 = vmatpush2.bf16.msra.mxu0 %v3046
  %4334 = vmatprep.mubr.bf16.mxu0 %v1159
  %4335 = vmatmul.mubr.bf16.gmra.mxu0 %v1158
  %v4336 = vpop.f32.mrf.mxu0
  %v4337 = vadd.f32 %v4288, %v4336
  %v4338 = vpop.f32.mrf.mxu0
  %v4339 = vpop.f32.mrf.mxu0
  %v4340 = vadd.f32 %v4291, %v4339
  %v4341 = vpop.f32.mrf.mxu0
  %4342 = vmatprep.mubr.bf16.mxu0 %v1205
  %4343 = vmatmul.mubr.bf16.gmra.mxu0 %v1204
  %v4344 = vpop.f32.mrf.mxu0
  %v4345 = vadd.f32 %v4296, %v4344
  %v4346 = vpop.f32.mrf.mxu0
  %v4347 = vpop.f32.mrf.mxu0
  %v4348 = vadd.f32 %v4299, %v4347
  %v4349 = vpop.f32.mrf.mxu0
  %4350 = vdwg.mxu0
  %4351 = vmatprep.subr.bf16.mxu0 0
  %4352 = vmatpush1.bf16.msra.mxu0 %v3061
  %4353 = vmatprep.subr.bf16.mxu0 0
  %4354 = vmatpush1.bf16.msra.mxu0 %v3060
  %4355 = vmatprep.subr.bf16.mxu0 0
  %4356 = vmatpush1.bf16.msra.mxu0 %v3059
  %4357 = vmatprep.subr.bf16.mxu0 0
  %4358 = vmatpush1.bf16.msra.mxu0 %v3058
  %4359 = vmatprep.subr.bf16.mxu0 0
  %4360 = vmatpush1.bf16.msra.mxu0 %v3057
  %4361 = vmatprep.subr.bf16.mxu0 0
  %4362 = vmatpush1.bf16.msra.mxu0 %v3056
  %4363 = vmatprep.subr.bf16.mxu0 0
  %4364 = vmatpush1.bf16.msra.mxu0 %v3055
  %4365 = vmatprep.subr.bf16.mxu0 0
  %4366 = vmatpush1.bf16.msra.mxu0 %v3054
  %4367 = vmatprep.subr.bf16.mxu0 0
  %4368 = vmatpush2.bf16.msra.mxu0 %v3069
  %4369 = vmatprep.subr.bf16.mxu0 0
  %4370 = vmatpush2.bf16.msra.mxu0 %v3068
  %4371 = vmatprep.subr.bf16.mxu0 0
  %4372 = vmatpush2.bf16.msra.mxu0 %v3067
  %4373 = vmatprep.subr.bf16.mxu0 0
  %4374 = vmatpush2.bf16.msra.mxu0 %v3066
  %4375 = vmatprep.subr.bf16.mxu0 0
  %4376 = vmatpush2.bf16.msra.mxu0 %v3065
  %4377 = vmatprep.subr.bf16.mxu0 0
  %4378 = vmatpush2.bf16.msra.mxu0 %v3064
  %4379 = vmatprep.subr.bf16.mxu0 0
  %4380 = vmatpush2.bf16.msra.mxu0 %v3063
  %4381 = vmatprep.subr.bf16.mxu0 0
  %4382 = vmatpush2.bf16.msra.mxu0 %v3062
  %4383 = vmatprep.mubr.bf16.mxu0 %v1161
  %4384 = vmatmul.mubr.bf16.gmra.mxu0 %v1160
  %v4385 = vpop.f32.mrf.mxu0
  %v4386 = vadd.f32 %v4337, %v4385
  %v4387 = vpop.f32.mrf.mxu0
  %v4388 = vpop.f32.mrf.mxu0
  %v4389 = vadd.f32 %v4340, %v4388
  %v4390 = vpop.f32.mrf.mxu0
  %4391 = vmatprep.mubr.bf16.mxu0 %v1207
  %4392 = vmatmul.mubr.bf16.gmra.mxu0 %v1206
  %v4393 = vpop.f32.mrf.mxu0
  %v4394 = vadd.f32 %v4345, %v4393
  %v4395 = vpop.f32.mrf.mxu0
  %v4396 = vpop.f32.mrf.mxu0
  %v4397 = vadd.f32 %v4348, %v4396
  %v4398 = vpop.f32.mrf.mxu0
  %4399 = vdwg.mxu0
  %4400 = vmatprep.subr.bf16.mxu0 0
  %4401 = vmatpush1.bf16.msra.mxu0 %v3077
  %4402 = vmatprep.subr.bf16.mxu0 0
  %4403 = vmatpush1.bf16.msra.mxu0 %v3076
  %4404 = vmatprep.subr.bf16.mxu0 0
  %4405 = vmatpush1.bf16.msra.mxu0 %v3075
  %4406 = vmatprep.subr.bf16.mxu0 0
  %4407 = vmatpush1.bf16.msra.mxu0 %v3074
  %4408 = vmatprep.subr.bf16.mxu0 0
  %4409 = vmatpush1.bf16.msra.mxu0 %v3073
  %4410 = vmatprep.subr.bf16.mxu0 0
  %4411 = vmatpush1.bf16.msra.mxu0 %v3072
  %4412 = vmatprep.subr.bf16.mxu0 0
  %4413 = vmatpush1.bf16.msra.mxu0 %v3071
  %4414 = vmatprep.subr.bf16.mxu0 0
  %4415 = vmatpush1.bf16.msra.mxu0 %v3070
  %4416 = vmatprep.subr.bf16.mxu0 0
  %4417 = vmatpush2.bf16.msra.mxu0 %v3085
  %4418 = vmatprep.subr.bf16.mxu0 0
  %4419 = vmatpush2.bf16.msra.mxu0 %v3084
  %4420 = vmatprep.subr.bf16.mxu0 0
  %4421 = vmatpush2.bf16.msra.mxu0 %v3083
  %4422 = vmatprep.subr.bf16.mxu0 0
  %4423 = vmatpush2.bf16.msra.mxu0 %v3082
  %4424 = vmatprep.subr.bf16.mxu0 0
  %4425 = vmatpush2.bf16.msra.mxu0 %v3081
  %4426 = vmatprep.subr.bf16.mxu0 0
  %4427 = vmatpush2.bf16.msra.mxu0 %v3080
  %4428 = vmatprep.subr.bf16.mxu0 0
  %4429 = vmatpush2.bf16.msra.mxu0 %v3079
  %4430 = vmatprep.subr.bf16.mxu0 0
  %4431 = vmatpush2.bf16.msra.mxu0 %v3078
  %4432 = vmatprep.mubr.bf16.mxu0 %v1163
  %4433 = vmatmul.mubr.bf16.gmra.mxu0 %v1162
  %v4434 = vpop.f32.mrf.mxu0
  %v4435 = vadd.f32 %v4386, %v4434
  %v4436 = vpop.f32.mrf.mxu0
  %v4437 = vpop.f32.mrf.mxu0
  %v4438 = vadd.f32 %v4389, %v4437
  %v4439 = vpop.f32.mrf.mxu0
  %4440 = vmatprep.mubr.bf16.mxu0 %v1209
  %4441 = vmatmul.mubr.bf16.gmra.mxu0 %v1208
  %v4442 = vpop.f32.mrf.mxu0
  %v4443 = vadd.f32 %v4394, %v4442
  %v4444 = vpop.f32.mrf.mxu0
  %v4445 = vpop.f32.mrf.mxu0
  %v4446 = vadd.f32 %v4397, %v4445
  %v4447 = vpop.f32.mrf.mxu0
  %4448 = vdwg.mxu0
  %4449 = vmatprep.subr.bf16.mxu0 0
  %4450 = vmatpush1.bf16.msra.mxu0 %v3093
  %4451 = vmatprep.subr.bf16.mxu0 0
  %4452 = vmatpush1.bf16.msra.mxu0 %v3092
  %4453 = vmatprep.subr.bf16.mxu0 0
  %4454 = vmatpush1.bf16.msra.mxu0 %v3091
  %4455 = vmatprep.subr.bf16.mxu0 0
  %4456 = vmatpush1.bf16.msra.mxu0 %v3090
  %4457 = vmatprep.subr.bf16.mxu0 0
  %4458 = vmatpush1.bf16.msra.mxu0 %v3089
  %4459 = vmatprep.subr.bf16.mxu0 0
  %4460 = vmatpush1.bf16.msra.mxu0 %v3088
  %4461 = vmatprep.subr.bf16.mxu0 0
  %4462 = vmatpush1.bf16.msra.mxu0 %v3087
  %4463 = vmatprep.subr.bf16.mxu0 0
  %4464 = vmatpush1.bf16.msra.mxu0 %v3086
  %4465 = vmatprep.subr.bf16.mxu0 0
  %4466 = vmatpush2.bf16.msra.mxu0 %v3101
  %4467 = vmatprep.subr.bf16.mxu0 0
  %4468 = vmatpush2.bf16.msra.mxu0 %v3100
  %4469 = vmatprep.subr.bf16.mxu0 0
  %4470 = vmatpush2.bf16.msra.mxu0 %v3099
  %4471 = vmatprep.subr.bf16.mxu0 0
  %4472 = vmatpush2.bf16.msra.mxu0 %v3098
  %4473 = vmatprep.subr.bf16.mxu0 0
  %4474 = vmatpush2.bf16.msra.mxu0 %v3097
  %4475 = vmatprep.subr.bf16.mxu0 0
  %4476 = vmatpush2.bf16.msra.mxu0 %v3096
  %4477 = vmatprep.subr.bf16.mxu0 0
  %4478 = vmatpush2.bf16.msra.mxu0 %v3095
  %4479 = vmatprep.subr.bf16.mxu0 0
  %4480 = vmatpush2.bf16.msra.mxu0 %v3094
  %4481 = vmatprep.mubr.bf16.mxu0 %v1165
  %4482 = vmatmul.mubr.bf16.gmra.mxu0 %v1164
  %v4483 = vpop.f32.mrf.mxu0
  %v4484 = vadd.f32 %v4435, %v4483
  %v4485 = vpop.f32.mrf.mxu0
  %v4486 = vpop.f32.mrf.mxu0
  %v4487 = vadd.f32 %v4438, %v4486
  %v4488 = vpop.f32.mrf.mxu0
  %4489 = vmatprep.mubr.bf16.mxu0 %v1211
  %4490 = vmatmul.mubr.bf16.gmra.mxu0 %v1210
  %v4491 = vpop.f32.mrf.mxu0
  %v4492 = vadd.f32 %v4443, %v4491
  %v4493 = vpop.f32.mrf.mxu0
  %v4494 = vpop.f32.mrf.mxu0
  %v4495 = vadd.f32 %v4446, %v4494
  %v4496 = vpop.f32.mrf.mxu0
  %4497 = vdwg.mxu0
  %4498 = vmatprep.subr.bf16.mxu0 0
  %4499 = vmatpush1.bf16.msra.mxu0 %v3109
  %4500 = vmatprep.subr.bf16.mxu0 0
  %4501 = vmatpush1.bf16.msra.mxu0 %v3108
  %4502 = vmatprep.subr.bf16.mxu0 0
  %4503 = vmatpush1.bf16.msra.mxu0 %v3107
  %4504 = vmatprep.subr.bf16.mxu0 0
  %4505 = vmatpush1.bf16.msra.mxu0 %v3106
  %4506 = vmatprep.subr.bf16.mxu0 0
  %4507 = vmatpush1.bf16.msra.mxu0 %v3105
  %4508 = vmatprep.subr.bf16.mxu0 0
  %4509 = vmatpush1.bf16.msra.mxu0 %v3104
  %4510 = vmatprep.subr.bf16.mxu0 0
  %4511 = vmatpush1.bf16.msra.mxu0 %v3103
  %4512 = vmatprep.subr.bf16.mxu0 0
  %4513 = vmatpush1.bf16.msra.mxu0 %v3102
  %4514 = vmatprep.subr.bf16.mxu0 0
  %4515 = vmatpush2.bf16.msra.mxu0 %v3117
  %4516 = vmatprep.subr.bf16.mxu0 0
  %4517 = vmatpush2.bf16.msra.mxu0 %v3116
  %4518 = vmatprep.subr.bf16.mxu0 0
  %4519 = vmatpush2.bf16.msra.mxu0 %v3115
  %4520 = vmatprep.subr.bf16.mxu0 0
  %4521 = vmatpush2.bf16.msra.mxu0 %v3114
  %4522 = vmatprep.subr.bf16.mxu0 0
  %4523 = vmatpush2.bf16.msra.mxu0 %v3113
  %4524 = vmatprep.subr.bf16.mxu0 0
  %4525 = vmatpush2.bf16.msra.mxu0 %v3112
  %4526 = vmatprep.subr.bf16.mxu0 0
  %4527 = vmatpush2.bf16.msra.mxu0 %v3111
  %4528 = vmatprep.subr.bf16.mxu0 0
  %4529 = vmatpush2.bf16.msra.mxu0 %v3110
  %4530 = vmatprep.mubr.bf16.mxu0 %v1167
  %4531 = vmatmul.mubr.bf16.gmra.mxu0 %v1166
  %v4532 = vpop.f32.mrf.mxu0
  %v4533 = vadd.f32 %v4484, %v4532
  %v4534 = vpop.f32.mrf.mxu0
  %v4535 = vpop.f32.mrf.mxu0
  %v4536 = vadd.f32 %v4487, %v4535
  %v4537 = vpop.f32.mrf.mxu0
  %4538 = vmatprep.mubr.bf16.mxu0 %v1213
  %4539 = vmatmul.mubr.bf16.gmra.mxu0 %v1212
  %v4540 = vpop.f32.mrf.mxu0
  %v4541 = vadd.f32 %v4492, %v4540
  %v4542 = vpop.f32.mrf.mxu0
  %v4543 = vpop.f32.mrf.mxu0
  %v4544 = vadd.f32 %v4495, %v4543
  %v4545 = vpop.f32.mrf.mxu0
  %4546 = vdwg.mxu0
  %4547 = vmatprep.subr.bf16.mxu0 0
  %4548 = vmatpush1.bf16.msra.mxu0 %v3125
  %4549 = vmatprep.subr.bf16.mxu0 0
  %4550 = vmatpush1.bf16.msra.mxu0 %v3124
  %4551 = vmatprep.subr.bf16.mxu0 0
  %4552 = vmatpush1.bf16.msra.mxu0 %v3123
  %4553 = vmatprep.subr.bf16.mxu0 0
  %4554 = vmatpush1.bf16.msra.mxu0 %v3122
  %4555 = vmatprep.subr.bf16.mxu0 0
  %4556 = vmatpush1.bf16.msra.mxu0 %v3121
  %4557 = vmatprep.subr.bf16.mxu0 0
  %4558 = vmatpush1.bf16.msra.mxu0 %v3120
  %4559 = vmatprep.subr.bf16.mxu0 0
  %4560 = vmatpush1.bf16.msra.mxu0 %v3119
  %4561 = vmatprep.subr.bf16.mxu0 0
  %4562 = vmatpush1.bf16.msra.mxu0 %v3118
  %4563 = vmatprep.subr.bf16.mxu0 0
  %4564 = vmatpush2.bf16.msra.mxu0 %v3133
  %4565 = vmatprep.subr.bf16.mxu0 0
  %4566 = vmatpush2.bf16.msra.mxu0 %v3132
  %4567 = vmatprep.subr.bf16.mxu0 0
  %4568 = vmatpush2.bf16.msra.mxu0 %v3131
  %4569 = vmatprep.subr.bf16.mxu0 0
  %4570 = vmatpush2.bf16.msra.mxu0 %v3130
  %4571 = vmatprep.subr.bf16.mxu0 0
  %4572 = vmatpush2.bf16.msra.mxu0 %v3129
  %4573 = vmatprep.subr.bf16.mxu0 0
  %4574 = vmatpush2.bf16.msra.mxu0 %v3128
  %4575 = vmatprep.subr.bf16.mxu0 0
  %4576 = vmatpush2.bf16.msra.mxu0 %v3127
  %4577 = vmatprep.subr.bf16.mxu0 0
  %4578 = vmatpush2.bf16.msra.mxu0 %v3126
  %4579 = vmatprep.mubr.bf16.mxu0 %v1169
  %4580 = vmatmul.mubr.bf16.gmra.mxu0 %v1168
  %v4581 = vpop.f32.mrf.mxu0
  %v4582 = vadd.f32 %v4533, %v4581
  %v4583 = vpop.f32.mrf.mxu0
  %v4584 = vpop.f32.mrf.mxu0
  %v4585 = vadd.f32 %v4536, %v4584
  %v4586 = vpop.f32.mrf.mxu0
  %4587 = vmatprep.mubr.bf16.mxu0 %v1215
  %4588 = vmatmul.mubr.bf16.gmra.mxu0 %v1214
  %v4589 = vpop.f32.mrf.mxu0
  %v4590 = vadd.f32 %v4541, %v4589
  %v4591 = vpop.f32.mrf.mxu0
  %v4592 = vpop.f32.mrf.mxu0
  %v4593 = vadd.f32 %v4544, %v4592
  %v4594 = vpop.f32.mrf.mxu0
  %4595 = vdwg.mxu0
  %4596 = vmatprep.subr.bf16.mxu0 0
  %4597 = vmatpush1.bf16.msra.mxu0 %v3141
  %4598 = vmatprep.subr.bf16.mxu0 0
  %4599 = vmatpush1.bf16.msra.mxu0 %v3140
  %4600 = vmatprep.subr.bf16.mxu0 0
  %4601 = vmatpush1.bf16.msra.mxu0 %v3139
  %4602 = vmatprep.subr.bf16.mxu0 0
  %4603 = vmatpush1.bf16.msra.mxu0 %v3138
  %4604 = vmatprep.subr.bf16.mxu0 0
  %4605 = vmatpush1.bf16.msra.mxu0 %v3137
  %4606 = vmatprep.subr.bf16.mxu0 0
  %4607 = vmatpush1.bf16.msra.mxu0 %v3136
  %4608 = vmatprep.subr.bf16.mxu0 0
  %4609 = vmatpush1.bf16.msra.mxu0 %v3135
  %4610 = vmatprep.subr.bf16.mxu0 0
  %4611 = vmatpush1.bf16.msra.mxu0 %v3134
  %4612 = vmatprep.subr.bf16.mxu0 0
  %4613 = vmatpush2.bf16.msra.mxu0 %v3149
  %4614 = vmatprep.subr.bf16.mxu0 0
  %4615 = vmatpush2.bf16.msra.mxu0 %v3148
  %4616 = vmatprep.subr.bf16.mxu0 0
  %4617 = vmatpush2.bf16.msra.mxu0 %v3147
  %4618 = vmatprep.subr.bf16.mxu0 0
  %4619 = vmatpush2.bf16.msra.mxu0 %v3146
  %4620 = vmatprep.subr.bf16.mxu0 0
  %4621 = vmatpush2.bf16.msra.mxu0 %v3145
  %4622 = vmatprep.subr.bf16.mxu0 0
  %4623 = vmatpush2.bf16.msra.mxu0 %v3144
  %4624 = vmatprep.subr.bf16.mxu0 0
  %4625 = vmatpush2.bf16.msra.mxu0 %v3143
  %4626 = vmatprep.subr.bf16.mxu0 0
  %4627 = vmatpush2.bf16.msra.mxu0 %v3142
  %4628 = vmatprep.mubr.bf16.mxu0 %v1171
  %4629 = vmatmul.mubr.bf16.gmra.mxu0 %v1170
  %v4630 = vpop.f32.mrf.mxu0
  %v4631 = vadd.f32 %v4582, %v4630
  %v4632 = vpop.f32.mrf.mxu0
  %v4633 = vpop.f32.mrf.mxu0
  %v4634 = vadd.f32 %v4585, %v4633
  %v4635 = vpop.f32.mrf.mxu0
  %4636 = vmatprep.mubr.bf16.mxu0 %v1217
  %4637 = vmatmul.mubr.bf16.gmra.mxu0 %v1216
  %v4638 = vpop.f32.mrf.mxu0
  %v4639 = vadd.f32 %v4590, %v4638
  %v4640 = vpop.f32.mrf.mxu0
  %v4641 = vpop.f32.mrf.mxu0
  %v4642 = vadd.f32 %v4593, %v4641
  %v4643 = vpop.f32.mrf.mxu0
  %4644 = vdwg.mxu0
  %v4645 = vmax.f32 %v4631, 0.0
  %v4646 = vmax.f32 %v4634, 0.0
  %v4647 = vmax.f32 %v4639, 0.0
  %v4648 = vmax.f32 %v4642, 0.0
  %4649 = vst [vmem:[%s3] sm:$0xff] %v4645
  %4650 = vst [vmem:[%s3 + $0x8] sm:$0xff] %v4646
  %4651 = vst [vmem:[%s3 + $0x10] sm:$0xff] %v4647
  %4652 = vst [vmem:[%s3 + $0x18] sm:$0xff] %v4648
  // Predicated region
  $region14: #{crowd_counter_forward.11} parent=0 // pred_check
    _
  $region15: #{crowd_counter_forward.11} parent=0 // pred_check_branch
    %4654 = sbr.rel (0) target = $region17
  $region16: #{crowd_counter_forward.11} parent=0 // pred_region
    _
  $region17: #{crowd_counter_forward.11} parent=0 // pred_fallthru
    _
  // Predicated region
  $region18: #{crowd_counter_forward.11} parent=0 // pred_check
    _
  $region19: #{crowd_counter_forward.11} parent=0 // pred_check_branch
    %4656 = sbr.rel (0) target = $region21
  $region20: #{crowd_counter_forward.11} parent=0 // pred_region
    _
  $region21: #{crowd_counter_forward.11} parent=0 // pred_fallthru
    _

// kernel: crowd_counter_forward.13
$region0: #{crowd_counter_forward.13}
  #allocation0 [shape = 'u32[]', space=smem, size = 0x4, offset = 0x4, fixed_abs, tag = 'smem constant byte address 0x4 - core index']
  #allocation1 [shape = 'u32[144,128]{1,0:T(1,128)}', space=vmem, size = 0x12000, scoped, tag = 'internal scratch']
  #allocation2 [shape = 'f32[1,1]{1,0:T(1,128)}', space=vmem, size = 0x200, scoped, tag = 'scratch operand']
  %s0 = inlined_call_operand.vmem [shape: f32[8,128], index: 0, kind: input, shape index: {}]
  %s1 = inlined_call_operand.vmem [shape: f32[8,128], index: 1, kind: input, shape index: {}]
  %s2 = inlined_call_operand.hbm [shape: f32[1,1], index: 2, kind: output, shape index: {}]
  %s3 = sld [smem:[#allocation0]]
  $region26: #{crowd_counter_forward.13} parent=0
    _
  %s5 = ssub.s32 1, %s3
  %s6 = scalar_select 0, %s5, %s3
  $region1: #{crowd_counter_forward.13} parent=0
    #allocation3 [shape = 'u8[512]{0}', space=vmem, size = 0x400, scoped, tag = 'output window, operand 0, single buffered']
    #allocation4 [shape = 's32[1]{0}', space=sflag, size = 0x4, scoped, tag = 'scoped memory for crowd_counter_forward.13']
    %7 = vsyncpa [#allocation4], 0
    // Predicated region
    $region2: #{crowd_counter_forward.13} parent=1 // pred_check
      _
    $region3: #{crowd_counter_forward.13} parent=1 // pred_check_branch
      %9 = sbr.rel (0) target = $region5
    $region4: #{crowd_counter_forward.13} parent=1 // pred_region
      _
    $region5: #{crowd_counter_forward.13} parent=1 // pred_fallthru
      _
    // Predicated region
    $region6: #{crowd_counter_forward.13} parent=1 // pred_check
      _
    $region7: #{crowd_counter_forward.13} parent=1 // pred_check_branch
      %11 = sbr.rel (0) target = $region9
    $region8: #{crowd_counter_forward.13} parent=1 // pred_region
      _
    $region9: #{crowd_counter_forward.13} parent=1 // pred_fallthru
      _
    %p12 = scmp.eq.s32.totalorder 0, 0
    // Predicated region
    $region10: #{crowd_counter_forward.13} parent=1 // pred_check
      %p13 = pneg %p12
    $region11: #{crowd_counter_forward.13} parent=1 // pred_check_branch
      %15 = sbr.rel (%p13) target = $region13
    $region12: #{crowd_counter_forward.13} parent=1 // pred_region
      %vm16 = vcmask 0
      %17 = vst.msk [vmem:[#allocation2] sm:$0x1] %vm16, 0.0
    $region13: #{crowd_counter_forward.13} parent=1 // pred_fallthru
      _
    %v18 = vld [vmem:[%s0] sm:$0xff]
    %v19 = vld [vmem:[%s1] sm:$0xff]
    %v20 = vsub.f32 %v18, %v19
    %v21 = vmul.f32 %v20, %v20
    %22 = vadd.xlane.f32.xlu0 %v21
    %v23 = vpop.xlane.xlu0 %22
    %v24 = vrot.slane %v23, 4
    %v25 = vadd.f32 %v23, %v24
    %v26 = vrot.slane %v25, 2
    %v27 = vadd.f32 %v25, %v26
    %v28 = vrot.slane %v27, 1
    %v29 = vadd.f32 %v27, %v28
    %v30 = vand.u32 2147483647, %v20
    %31 = vadd.xlane.f32.xlu0 %v30
    %v32 = vpop.xlane.xlu0 %31
    %v33 = vrot.slane %v32, 4
    %v34 = vadd.f32 %v32, %v33
    %v35 = vrot.slane %v34, 2
    %v36 = vadd.f32 %v34, %v35
    %v37 = vrot.slane %v36, 1
    %v38 = vadd.f32 %v36, %v37
    %v39 = vld [vmem:[#allocation2] sm:$0x1]
    %v40 = vmul.f32 %v29, 0.5
    %v41 = vmul.f32 %v38, 0.0001
    %v42 = vadd.f32 %v40, %v41
    %v43 = vadd.f32 %v39, %v42
    %vm44 = vcmask 0
    %45 = vst.msk [vmem:[#allocation2] sm:$0x1] %vm44, %v43
    // Predicated region
    $region14: #{crowd_counter_forward.13} parent=1 // pred_check
      %p46 = pneg %p12
    $region15: #{crowd_counter_forward.13} parent=1 // pred_check_branch
      %48 = sbr.rel (%p46) target = $region17
    $region16: #{crowd_counter_forward.13} parent=1 // pred_region
      %v49 = vld [vmem:[#allocation2] sm:$0x1]
      %50 = vst.msk [vmem:[#allocation3] sm:$0x1] %vm44, %v49
    $region17: #{crowd_counter_forward.13} parent=1 // pred_fallthru
      _
    // Predicated region
    $region18: #{crowd_counter_forward.13} parent=1 // pred_check
      _
    $region19: #{crowd_counter_forward.13} parent=1 // pred_check_branch
      %52 = sbr.rel (0) target = $region21
    $region20: #{crowd_counter_forward.13} parent=1 // pred_region
      %s54 = ssub.s32 16, 16
      %55 = vsyncadd [#allocation4], %s54
      %s57 = sshll.u32 [#allocation3], 4
      %s58 = int_to_ptr.vmem [resolvable:$true] %s57
      %60 = dma.vmem_to_hbm [thread:$0]  %s58, 16, %s2, [#allocation4]
    $region21: #{crowd_counter_forward.13} parent=1 // pred_fallthru
      _
    // Predicated region
    $region22: #{crowd_counter_forward.13} parent=1 // pred_check
      _
    $region23: #{crowd_counter_forward.13} parent=1 // pred_check_branch
      %62 = sbr.rel (0) target = $region25
    $region24: #{crowd_counter_forward.13} parent=1 // pred_region
      %63 = dma.done [#allocation4], 16
    $region25: #{crowd_counter_forward.13} parent=1 // pred_fallthru
      _
    %64 = vsyncpa [#allocation4], 1

// kernel: crowd_counter_forward.12
$region0: #{crowd_counter_forward.12}
  #allocation0 [shape = 'u32[]', space=smem, size = 0x4, offset = 0x4, fixed_abs, tag = 'smem constant byte address 0x4 - core index']
  #allocation1 [shape = 'u32[144,128]{1,0:T(1,128)}', space=vmem, size = 0x12000, scoped, tag = 'internal scratch']
  #allocation2 [shape = 'f32[1,1]{1,0:T(1,128)S(1)}', space=vmem, size = 0x200, scoped, tag = 'scoped memory for crowd_counter_forward.12']
  %s0 = inlined_call_operand.vmem [shape: bf16[32,2944], index: 0, kind: input, shape index: {}]
  %s1 = inlined_call_operand.vmem [shape: bf16[2944,128], index: 1, kind: input, shape index: {}]
  %s2 = inlined_call_operand.vmem [shape: f32[1,128], index: 2, kind: input, shape index: {}]
  %s3 = inlined_call_operand.vmem [shape: f32[1,128], index: 3, kind: input, shape index: {}]
  %s4 = inlined_call_operand.<no memory space> [shape: f32[1,1], index: 4, kind: input, shape index: {}]
  %s5 = inlined_call_operand.vmem [shape: f32[32,1], index: 5, kind: output, shape index: {}]
  %s6 = sld [smem:[#allocation0]]
  $region30: #{crowd_counter_forward.12} parent=0
    _
  %s8 = ssub.s32 1, %s6
  %s9 = scalar_select 0, %s8, %s6
  %v10 = vstv %s4
  %11 = vst [vmem:[#allocation2] sm:$0x1] %v10
  // Predicated region
  $region2: #{crowd_counter_forward.12} parent=0 // pred_check
    _
  $region3: #{crowd_counter_forward.12} parent=0 // pred_check_branch
    %13 = sbr.rel (0) target = $region5
  $region4: #{crowd_counter_forward.12} parent=0 // pred_region
    _
  $region5: #{crowd_counter_forward.12} parent=0 // pred_fallthru
    _
  // Predicated region
  $region6: #{crowd_counter_forward.12} parent=0 // pred_check
    _
  $region7: #{crowd_counter_forward.12} parent=0 // pred_check_branch
    %15 = sbr.rel (0) target = $region9
  $region8: #{crowd_counter_forward.12} parent=0 // pred_region
    _
  $region9: #{crowd_counter_forward.12} parent=0 // pred_fallthru
    _
  // Predicated region
  $region10: #{crowd_counter_forward.12} parent=0 // pred_check
    _
  $region11: #{crowd_counter_forward.12} parent=0 // pred_check_branch
    %17 = sbr.rel (0) target = $region13
  $region12: #{crowd_counter_forward.12} parent=0 // pred_region
    _
  $region13: #{crowd_counter_forward.12} parent=0 // pred_fallthru
    _
  // Predicated region
  $region14: #{crowd_counter_forward.12} parent=0 // pred_check
    _
  $region15: #{crowd_counter_forward.12} parent=0 // pred_check_branch
    %19 = sbr.rel (0) target = $region17
  $region16: #{crowd_counter_forward.12} parent=0 // pred_region
    _
  $region17: #{crowd_counter_forward.12} parent=0 // pred_fallthru
    _
  // Predicated region
  $region18: #{crowd_counter_forward.12} parent=0 // pred_check
    _
  $region19: #{crowd_counter_forward.12} parent=0 // pred_check_branch
    %21 = sbr.rel (0) target = $region21
  $region20: #{crowd_counter_forward.12} parent=0 // pred_region
    _
  $region21: #{crowd_counter_forward.12} parent=0 // pred_fallthru
    _
  %v23 = vld [vmem:[%s0] sm:$0xff]
  %v24 = vld [vmem:[%s0 + $0x8] sm:$0xff]
  %v25 = vld [vmem:[%s0 + $0x10] sm:$0xff]
  %v26 = vld [vmem:[%s0 + $0x18] sm:$0xff]
  %v27 = vld [vmem:[%s0 + $0x20] sm:$0xff]
  %v28 = vld [vmem:[%s0 + $0x28] sm:$0xff]
  %v29 = vld [vmem:[%s0 + $0x30] sm:$0xff]
  %v30 = vld [vmem:[%s0 + $0x38] sm:$0xff]
  %v31 = vld [vmem:[%s0 + $0x40] sm:$0xff]
  %v32 = vld [vmem:[%s0 + $0x48] sm:$0xff]
  %v33 = vld [vmem:[%s0 + $0x50] sm:$0xff]
  %v34 = vld [vmem:[%s0 + $0x58] sm:$0xf]
  %v35 = vld [vmem:[%s0 + $0x5c] sm:$0xff]
  %v36 = vld [vmem:[%s0 + $0x64] sm:$0xff]
  %v37 = vld [vmem:[%s0 + $0x6c] sm:$0xff]
  %v38 = vld [vmem:[%s0 + $0x74] sm:$0xff]
  %v39 = vld [vmem:[%s0 + $0x7c] sm:$0xff]
  %v40 = vld [vmem:[%s0 + $0x84] sm:$0xff]
  %v41 = vld [vmem:[%s0 + $0x8c] sm:$0xff]
  %v42 = vld [vmem:[%s0 + $0x94] sm:$0xff]
  %v43 = vld [vmem:[%s0 + $0x9c] sm:$0xff]
  %v44 = vld [vmem:[%s0 + $0xa4] sm:$0xff]
  %v45 = vld [vmem:[%s0 + $0xac] sm:$0xff]
  %v46 = vld [vmem:[%s0 + $0xb4] sm:$0xf]
  %v47 = vld [vmem:[%s0 + $0xb8] sm:$0xff]
  %v48 = vld [vmem:[%s0 + $0xc0] sm:$0xff]
  %v49 = vld [vmem:[%s0 + $0xc8] sm:$0xff]
  %v50 = vld [vmem:[%s0 + $0xd0] sm:$0xff]
  %v51 = vld [vmem:[%s0 + $0xd8] sm:$0xff]
  %v52 = vld [vmem:[%s0 + $0xe0] sm:$0xff]
  %v53 = vld [vmem:[%s0 + $0xe8] sm:$0xff]
  %v54 = vld [vmem:[%s0 + $0xf0] sm:$0xff]
  %v55 = vld [vmem:[%s0 + $0xf8] sm:$0xff]
  %v56 = vld [vmem:[%s0 + $0x100] sm:$0xff]
  %v57 = vld [vmem:[%s0 + $0x108] sm:$0xff]
  %v58 = vld [vmem:[%s0 + $0x110] sm:$0xf]
  %v59 = vld [vmem:[%s0 + $0x114] sm:$0xff]
  %v60 = vld [vmem:[%s0 + $0x11c] sm:$0xff]
  %v61 = vld [vmem:[%s0 + $0x124] sm:$0xff]
  %v62 = vld [vmem:[%s0 + $0x12c] sm:$0xff]
  %v63 = vld [vmem:[%s0 + $0x134] sm:$0xff]
  %v64 = vld [vmem:[%s0 + $0x13c] sm:$0xff]
  %v65 = vld [vmem:[%s0 + $0x144] sm:$0xff]
  %v66 = vld [vmem:[%s0 + $0x14c] sm:$0xff]
  %v67 = vld [vmem:[%s0 + $0x154] sm:$0xff]
  %v68 = vld [vmem:[%s0 + $0x15c] sm:$0xff]
  %v69 = vld [vmem:[%s0 + $0x164] sm:$0xff]
  %v70 = vld [vmem:[%s0 + $0x16c] sm:$0xf]
  %v71 = vld [vmem:[%s1] sm:$0xf]
  %v72 = vld [vmem:[%s1 + $0x4] sm:$0xf]
  %v73 = vld [vmem:[%s1 + $0x8] sm:$0xf]
  %v74 = vld [vmem:[%s1 + $0xc] sm:$0xf]
  %v75 = vld [vmem:[%s1 + $0x10] sm:$0xf]
  %v76 = vld [vmem:[%s1 + $0x14] sm:$0xf]
  %v77 = vld [vmem:[%s1 + $0x18] sm:$0xf]
  %v78 = vld [vmem:[%s1 + $0x1c] sm:$0xf]
  %v79 = vld [vmem:[%s1 + $0x20] sm:$0xf]
  %v80 = vld [vmem:[%s1 + $0x24] sm:$0xf]
  %v81 = vld [vmem:[%s1 + $0x28] sm:$0xf]
  %v82 = vld [vmem:[%s1 + $0x2c] sm:$0xf]
  %v83 = vld [vmem:[%s1 + $0x30] sm:$0xf]
  %v84 = vld [vmem:[%s1 + $0x34] sm:$0xf]
  %v85 = vld [vmem:[%s1 + $0x38] sm:$0xf]
  %v86 = vld [vmem:[%s1 + $0x3c] sm:$0xf]
  %v87 = vld [vmem:[%s1 + $0x40] sm:$0xf]
  %v88 = vld [vmem:[%s1 + $0x44] sm:$0xf]
  %v89 = vld [vmem:[%s1 + $0x48] sm:$0xf]
  %v90 = vld [vmem:[%s1 + $0x4c] sm:$0xf]
  %v91 = vld [vmem:[%s1 + $0x50] sm:$0xf]
  %v92 = vld [vmem:[%s1 + $0x54] sm:$0xf]
  %v93 = vld [vmem:[%s1 + $0x58] sm:$0xf]
  %v94 = vld [vmem:[%s1 + $0x5c] sm:$0xf]
  %v95 = vld [vmem:[%s1 + $0x60] sm:$0xf]
  %v96 = vld [vmem:[%s1 + $0x64] sm:$0xf]
  %v97 = vld [vmem:[%s1 + $0x68] sm:$0xf]
  %v98 = vld [vmem:[%s1 + $0x6c] sm:$0xf]
  %v99 = vld [vmem:[%s1 + $0x70] sm:$0xf]
  %v100 = vld [vmem:[%s1 + $0x74] sm:$0xf]
  %v101 = vld [vmem:[%s1 + $0x78] sm:$0xf]
  %v102 = vld [vmem:[%s1 + $0x7c] sm:$0xf]
  %v103 = vld [vmem:[%s1 + $0x80] sm:$0xf]
  %v104 = vld [vmem:[%s1 + $0x84] sm:$0xf]
  %v105 = vld [vmem:[%s1 + $0x88] sm:$0xf]
  %v106 = vld [vmem:[%s1 + $0x8c] sm:$0xf]
  %v107 = vld [vmem:[%s1 + $0x90] sm:$0xf]
  %v108 = vld [vmem:[%s1 + $0x94] sm:$0xf]
  %v109 = vld [vmem:[%s1 + $0x98] sm:$0xf]
  %v110 = vld [vmem:[%s1 + $0x9c] sm:$0xf]
  %v111 = vld [vmem:[%s1 + $0xa0] sm:$0xf]
  %v112 = vld [vmem:[%s1 + $0xa4] sm:$0xf]
  %v113 = vld [vmem:[%s1 + $0xa8] sm:$0xf]
  %v114 = vld [vmem:[%s1 + $0xac] sm:$0xf]
  %v115 = vld [vmem:[%s1 + $0xb0] sm:$0xf]
  %v116 = vld [vmem:[%s1 + $0xb4] sm:$0xf]
  %v117 = vld [vmem:[%s1 + $0xb8] sm:$0xf]
  %v118 = vld [vmem:[%s1 + $0xbc] sm:$0xf]
  %v119 = vld [vmem:[%s1 + $0xc0] sm:$0xf]
  %v120 = vld [vmem:[%s1 + $0xc4] sm:$0xf]
  %v121 = vld [vmem:[%s1 + $0xc8] sm:$0xf]
  %v122 = vld [vmem:[%s1 + $0xcc] sm:$0xf]
  %v123 = vld [vmem:[%s1 + $0xd0] sm:$0xf]
  %v124 = vld [vmem:[%s1 + $0xd4] sm:$0xf]
  %v125 = vld [vmem:[%s1 + $0xd8] sm:$0xf]
  %v126 = vld [vmem:[%s1 + $0xdc] sm:$0xf]
  %v127 = vld [vmem:[%s1 + $0xe0] sm:$0xf]
  %v128 = vld [vmem:[%s1 + $0xe4] sm:$0xf]
  %v129 = vld [vmem:[%s1 + $0xe8] sm:$0xf]
  %v130 = vld [vmem:[%s1 + $0xec] sm:$0xf]
  %v131 = vld [vmem:[%s1 + $0xf0] sm:$0xf]
  %v132 = vld [vmem:[%s1 + $0xf4] sm:$0xf]
  %v133 = vld [vmem:[%s1 + $0xf8] sm:$0xf]
  %v134 = vld [vmem:[%s1 + $0xfc] sm:$0xf]
  %v135 = vld [vmem:[%s1 + $0x100] sm:$0xf]
  %v136 = vld [vmem:[%s1 + $0x104] sm:$0xf]
  %v137 = vld [vmem:[%s1 + $0x108] sm:$0xf]
  %v138 = vld [vmem:[%s1 + $0x10c] sm:$0xf]
  %v139 = vld [vmem:[%s1 + $0x110] sm:$0xf]
  %v140 = vld [vmem:[%s1 + $0x114] sm:$0xf]
  %v141 = vld [vmem:[%s1 + $0x118] sm:$0xf]
  %v142 = vld [vmem:[%s1 + $0x11c] sm:$0xf]
  %v143 = vld [vmem:[%s1 + $0x120] sm:$0xf]
  %v144 = vld [vmem:[%s1 + $0x124] sm:$0xf]
  %v145 = vld [vmem:[%s1 + $0x128] sm:$0xf]
  %v146 = vld [vmem:[%s1 + $0x12c] sm:$0xf]
  %v147 = vld [vmem:[%s1 + $0x130] sm:$0xf]
  %v148 = vld [vmem:[%s1 + $0x134] sm:$0xf]
  %v149 = vld [vmem:[%s1 + $0x138] sm:$0xf]
  %v150 = vld [vmem:[%s1 + $0x13c] sm:$0xf]
  %v151 = vld [vmem:[%s1 + $0x140] sm:$0xf]
  %v152 = vld [vmem:[%s1 + $0x144] sm:$0xf]
  %v153 = vld [vmem:[%s1 + $0x148] sm:$0xf]
  %v154 = vld [vmem:[%s1 + $0x14c] sm:$0xf]
  %v155 = vld [vmem:[%s1 + $0x150] sm:$0xf]
  %v156 = vld [vmem:[%s1 + $0x154] sm:$0xf]
  %v157 = vld [vmem:[%s1 + $0x158] sm:$0xf]
  %v158 = vld [vmem:[%s1 + $0x15c] sm:$0xf]
  %v159 = vld [vmem:[%s1 + $0x160] sm:$0xf]
  %v160 = vld [vmem:[%s1 + $0x164] sm:$0xf]
  %v161 = vld [vmem:[%s1 + $0x168] sm:$0xf]
  %v162 = vld [vmem:[%s1 + $0x16c] sm:$0xf]
  %v163 = vld [vmem:[%s1 + $0x170] sm:$0xf]
  %v164 = vld [vmem:[%s1 + $0x174] sm:$0xf]
  %v165 = vld [vmem:[%s1 + $0x178] sm:$0xf]
  %v166 = vld [vmem:[%s1 + $0x17c] sm:$0xf]
  %v167 = vld [vmem:[%s1 + $0x180] sm:$0xf]
  %v168 = vld [vmem:[%s1 + $0x184] sm:$0xf]
  %v169 = vld [vmem:[%s1 + $0x188] sm:$0xf]
  %v170 = vld [vmem:[%s1 + $0x18c] sm:$0xf]
  %v171 = vld [vmem:[%s1 + $0x190] sm:$0xf]
  %v172 = vld [vmem:[%s1 + $0x194] sm:$0xf]
  %v173 = vld [vmem:[%s1 + $0x198] sm:$0xf]
  %v174 = vld [vmem:[%s1 + $0x19c] sm:$0xf]
  %v175 = vld [vmem:[%s1 + $0x1a0] sm:$0xf]
  %v176 = vld [vmem:[%s1 + $0x1a4] sm:$0xf]
  %v177 = vld [vmem:[%s1 + $0x1a8] sm:$0xf]
  %v178 = vld [vmem:[%s1 + $0x1ac] sm:$0xf]
  %v179 = vld [vmem:[%s1 + $0x1b0] sm:$0xf]
  %v180 = vld [vmem:[%s1 + $0x1b4] sm:$0xf]
  %v181 = vld [vmem:[%s1 + $0x1b8] sm:$0xf]
  %v182 = vld [vmem:[%s1 + $0x1bc] sm:$0xf]
  %v183 = vld [vmem:[%s1 + $0x1c0] sm:$0xf]
  %v184 = vld [vmem:[%s1 + $0x1c4] sm:$0xf]
  %v185 = vld [vmem:[%s1 + $0x1c8] sm:$0xf]
  %v186 = vld [vmem:[%s1 + $0x1cc] sm:$0xf]
  %v187 = vld [vmem:[%s1 + $0x1d0] sm:$0xf]
  %v188 = vld [vmem:[%s1 + $0x1d4] sm:$0xf]
  %v189 = vld [vmem:[%s1 + $0x1d8] sm:$0xf]
  %v190 = vld [vmem:[%s1 + $0x1dc] sm:$0xf]
  %v191 = vld [vmem:[%s1 + $0x1e0] sm:$0xf]
  %v192 = vld [vmem:[%s1 + $0x1e4] sm:$0xf]
  %v193 = vld [vmem:[%s1 + $0x1e8] sm:$0xf]
  %v194 = vld [vmem:[%s1 + $0x1ec] sm:$0xf]
  %v195 = vld [vmem:[%s1 + $0x1f0] sm:$0xf]
  %v196 = vld [vmem:[%s1 + $0x1f4] sm:$0xf]
  %v197 = vld [vmem:[%s1 + $0x1f8] sm:$0xf]
  %v198 = vld [vmem:[%s1 + $0x1fc] sm:$0xf]
  %v199 = vld [vmem:[%s1 + $0x200] sm:$0xf]
  %v200 = vld [vmem:[%s1 + $0x204] sm:$0xf]
  %v201 = vld [vmem:[%s1 + $0x208] sm:$0xf]
  %v202 = vld [vmem:[%s1 + $0x20c] sm:$0xf]
  %v203 = vld [vmem:[%s1 + $0x210] sm:$0xf]
  %v204 = vld [vmem:[%s1 + $0x214] sm:$0xf]
  %v205 = vld [vmem:[%s1 + $0x218] sm:$0xf]
  %v206 = vld [vmem:[%s1 + $0x21c] sm:$0xf]
  %v207 = vld [vmem:[%s1 + $0x220] sm:$0xf]
  %v208 = vld [vmem:[%s1 + $0x224] sm:$0xf]
  %v209 = vld [vmem:[%s1 + $0x228] sm:$0xf]
  %v210 = vld [vmem:[%s1 + $0x22c] sm:$0xf]
  %v211 = vld [vmem:[%s1 + $0x230] sm:$0xf]
  %v212 = vld [vmem:[%s1 + $0x234] sm:$0xf]
  %v213 = vld [vmem:[%s1 + $0x238] sm:$0xf]
  %v214 = vld [vmem:[%s1 + $0x23c] sm:$0xf]
  %v215 = vld [vmem:[%s1 + $0x240] sm:$0xf]
  %v216 = vld [vmem:[%s1 + $0x244] sm:$0xf]
  %v217 = vld [vmem:[%s1 + $0x248] sm:$0xf]
  %v218 = vld [vmem:[%s1 + $0x24c] sm:$0xf]
  %v219 = vld [vmem:[%s1 + $0x250] sm:$0xf]
  %v220 = vld [vmem:[%s1 + $0x254] sm:$0xf]
  %v221 = vld [vmem:[%s1 + $0x258] sm:$0xf]
  %v222 = vld [vmem:[%s1 + $0x25c] sm:$0xf]
  %v223 = vld [vmem:[%s1 + $0x260] sm:$0xf]
  %v224 = vld [vmem:[%s1 + $0x264] sm:$0xf]
  %v225 = vld [vmem:[%s1 + $0x268] sm:$0xf]
  %v226 = vld [vmem:[%s1 + $0x26c] sm:$0xf]
  %v227 = vld [vmem:[%s1 + $0x270] sm:$0xf]
  %v228 = vld [vmem:[%s1 + $0x274] sm:$0xf]
  %v229 = vld [vmem:[%s1 + $0x278] sm:$0xf]
  %v230 = vld [vmem:[%s1 + $0x27c] sm:$0xf]
  %v231 = vld [vmem:[%s1 + $0x280] sm:$0xf]
  %v232 = vld [vmem:[%s1 + $0x284] sm:$0xf]
  %v233 = vld [vmem:[%s1 + $0x288] sm:$0xf]
  %v234 = vld [vmem:[%s1 + $0x28c] sm:$0xf]
  %v235 = vld [vmem:[%s1 + $0x290] sm:$0xf]
  %v236 = vld [vmem:[%s1 + $0x294] sm:$0xf]
  %v237 = vld [vmem:[%s1 + $0x298] sm:$0xf]
  %v238 = vld [vmem:[%s1 + $0x29c] sm:$0xf]
  %v239 = vld [vmem:[%s1 + $0x2a0] sm:$0xf]
  %v240 = vld [vmem:[%s1 + $0x2a4] sm:$0xf]
  %v241 = vld [vmem:[%s1 + $0x2a8] sm:$0xf]
  %v242 = vld [vmem:[%s1 + $0x2ac] sm:$0xf]
  %v243 = vld [vmem:[%s1 + $0x2b0] sm:$0xf]
  %v244 = vld [vmem:[%s1 + $0x2b4] sm:$0xf]
  %v245 = vld [vmem:[%s1 + $0x2b8] sm:$0xf]
  %v246 = vld [vmem:[%s1 + $0x2bc] sm:$0xf]
  %v247 = vld [vmem:[%s1 + $0x2c0] sm:$0xf]
  %v248 = vld [vmem:[%s1 + $0x2c4] sm:$0xf]
  %v249 = vld [vmem:[%s1 + $0x2c8] sm:$0xf]
  %v250 = vld [vmem:[%s1 + $0x2cc] sm:$0xf]
  %v251 = vld [vmem:[%s1 + $0x2d0] sm:$0xf]
  %v252 = vld [vmem:[%s1 + $0x2d4] sm:$0xf]
  %v253 = vld [vmem:[%s1 + $0x2d8] sm:$0xf]
  %v254 = vld [vmem:[%s1 + $0x2dc] sm:$0xf]
  %v255 = vld [vmem:[%s1 + $0x2e0] sm:$0xf]
  %v256 = vld [vmem:[%s1 + $0x2e4] sm:$0xf]
  %v257 = vld [vmem:[%s1 + $0x2e8] sm:$0xf]
  %v258 = vld [vmem:[%s1 + $0x2ec] sm:$0xf]
  %v259 = vld [vmem:[%s1 + $0x2f0] sm:$0xf]
  %v260 = vld [vmem:[%s1 + $0x2f4] sm:$0xf]
  %v261 = vld [vmem:[%s1 + $0x2f8] sm:$0xf]
  %v262 = vld [vmem:[%s1 + $0x2fc] sm:$0xf]
  %v263 = vld [vmem:[%s1 + $0x300] sm:$0xf]
  %v264 = vld [vmem:[%s1 + $0x304] sm:$0xf]
  %v265 = vld [vmem:[%s1 + $0x308] sm:$0xf]
  %v266 = vld [vmem:[%s1 + $0x30c] sm:$0xf]
  %v267 = vld [vmem:[%s1 + $0x310] sm:$0xf]
  %v268 = vld [vmem:[%s1 + $0x314] sm:$0xf]
  %v269 = vld [vmem:[%s1 + $0x318] sm:$0xf]
  %v270 = vld [vmem:[%s1 + $0x31c] sm:$0xf]
  %v271 = vld [vmem:[%s1 + $0x320] sm:$0xf]
  %v272 = vld [vmem:[%s1 + $0x324] sm:$0xf]
  %v273 = vld [vmem:[%s1 + $0x328] sm:$0xf]
  %v274 = vld [vmem:[%s1 + $0x32c] sm:$0xf]
  %v275 = vld [vmem:[%s1 + $0x330] sm:$0xf]
  %v276 = vld [vmem:[%s1 + $0x334] sm:$0xf]
  %v277 = vld [vmem:[%s1 + $0x338] sm:$0xf]
  %v278 = vld [vmem:[%s1 + $0x33c] sm:$0xf]
  %v279 = vld [vmem:[%s1 + $0x340] sm:$0xf]
  %v280 = vld [vmem:[%s1 + $0x344] sm:$0xf]
  %v281 = vld [vmem:[%s1 + $0x348] sm:$0xf]
  %v282 = vld [vmem:[%s1 + $0x34c] sm:$0xf]
  %v283 = vld [vmem:[%s1 + $0x350] sm:$0xf]
  %v284 = vld [vmem:[%s1 + $0x354] sm:$0xf]
  %v285 = vld [vmem:[%s1 + $0x358] sm:$0xf]
  %v286 = vld [vmem:[%s1 + $0x35c] sm:$0xf]
  %v287 = vld [vmem:[%s1 + $0x360] sm:$0xf]
  %v288 = vld [vmem:[%s1 + $0x364] sm:$0xf]
  %v289 = vld [vmem:[%s1 + $0x368] sm:$0xf]
  %v290 = vld [vmem:[%s1 + $0x36c] sm:$0xf]
  %v291 = vld [vmem:[%s1 + $0x370] sm:$0xf]
  %v292 = vld [vmem:[%s1 + $0x374] sm:$0xf]
  %v293 = vld [vmem:[%s1 + $0x378] sm:$0xf]
  %v294 = vld [vmem:[%s1 + $0x37c] sm:$0xf]
  %v295 = vld [vmem:[%s1 + $0x380] sm:$0xf]
  %v296 = vld [vmem:[%s1 + $0x384] sm:$0xf]
  %v297 = vld [vmem:[%s1 + $0x388] sm:$0xf]
  %v298 = vld [vmem:[%s1 + $0x38c] sm:$0xf]
  %v299 = vld [vmem:[%s1 + $0x390] sm:$0xf]
  %v300 = vld [vmem:[%s1 + $0x394] sm:$0xf]
  %v301 = vld [vmem:[%s1 + $0x398] sm:$0xf]
  %v302 = vld [vmem:[%s1 + $0x39c] sm:$0xf]
  %v303 = vld [vmem:[%s1 + $0x3a0] sm:$0xf]
  %v304 = vld [vmem:[%s1 + $0x3a4] sm:$0xf]
  %v305 = vld [vmem:[%s1 + $0x3a8] sm:$0xf]
  %v306 = vld [vmem:[%s1 + $0x3ac] sm:$0xf]
  %v307 = vld [vmem:[%s1 + $0x3b0] sm:$0xf]
  %v308 = vld [vmem:[%s1 + $0x3b4] sm:$0xf]
  %v309 = vld [vmem:[%s1 + $0x3b8] sm:$0xf]
  %v310 = vld [vmem:[%s1 + $0x3bc] sm:$0xf]
  %v311 = vld [vmem:[%s1 + $0x3c0] sm:$0xf]
  %v312 = vld [vmem:[%s1 + $0x3c4] sm:$0xf]
  %v313 = vld [vmem:[%s1 + $0x3c8] sm:$0xf]
  %v314 = vld [vmem:[%s1 + $0x3cc] sm:$0xf]
  %v315 = vld [vmem:[%s1 + $0x3d0] sm:$0xf]
  %v316 = vld [vmem:[%s1 + $0x3d4] sm:$0xf]
  %v317 = vld [vmem:[%s1 + $0x3d8] sm:$0xf]
  %v318 = vld [vmem:[%s1 + $0x3dc] sm:$0xf]
  %v319 = vld [vmem:[%s1 + $0x3e0] sm:$0xf]
  %v320 = vld [vmem:[%s1 + $0x3e4] sm:$0xf]
  %v321 = vld [vmem:[%s1 + $0x3e8] sm:$0xf]
  %v322 = vld [vmem:[%s1 + $0x3ec] sm:$0xf]
  %v323 = vld [vmem:[%s1 + $0x3f0] sm:$0xf]
  %v324 = vld [vmem:[%s1 + $0x3f4] sm:$0xf]
  %v325 = vld [vmem:[%s1 + $0x3f8] sm:$0xf]
  %v326 = vld [vmem:[%s1 + $0x3fc] sm:$0xf]
  %v327 = vld [vmem:[%s1 + $0x400] sm:$0xf]
  %v328 = vld [vmem:[%s1 + $0x404] sm:$0xf]
  %v329 = vld [vmem:[%s1 + $0x408] sm:$0xf]
  %v330 = vld [vmem:[%s1 + $0x40c] sm:$0xf]
  %v331 = vld [vmem:[%s1 + $0x410] sm:$0xf]
  %v332 = vld [vmem:[%s1 + $0x414] sm:$0xf]
  %v333 = vld [vmem:[%s1 + $0x418] sm:$0xf]
  %v334 = vld [vmem:[%s1 + $0x41c] sm:$0xf]
  %v335 = vld [vmem:[%s1 + $0x420] sm:$0xf]
  %v336 = vld [vmem:[%s1 + $0x424] sm:$0xf]
  %v337 = vld [vmem:[%s1 + $0x428] sm:$0xf]
  %v338 = vld [vmem:[%s1 + $0x42c] sm:$0xf]
  %v339 = vld [vmem:[%s1 + $0x430] sm:$0xf]
  %v340 = vld [vmem:[%s1 + $0x434] sm:$0xf]
  %v341 = vld [vmem:[%s1 + $0x438] sm:$0xf]
  %v342 = vld [vmem:[%s1 + $0x43c] sm:$0xf]
  %v343 = vld [vmem:[%s1 + $0x440] sm:$0xf]
  %v344 = vld [vmem:[%s1 + $0x444] sm:$0xf]
  %v345 = vld [vmem:[%s1 + $0x448] sm:$0xf]
  %v346 = vld [vmem:[%s1 + $0x44c] sm:$0xf]
  %v347 = vld [vmem:[%s1 + $0x450] sm:$0xf]
  %v348 = vld [vmem:[%s1 + $0x454] sm:$0xf]
  %v349 = vld [vmem:[%s1 + $0x458] sm:$0xf]
  %v350 = vld [vmem:[%s1 + $0x45c] sm:$0xf]
  %v351 = vld [vmem:[%s1 + $0x460] sm:$0xf]
  %v352 = vld [vmem:[%s1 + $0x464] sm:$0xf]
  %v353 = vld [vmem:[%s1 + $0x468] sm:$0xf]
  %v354 = vld [vmem:[%s1 + $0x46c] sm:$0xf]
  %v355 = vld [vmem:[%s1 + $0x470] sm:$0xf]
  %v356 = vld [vmem:[%s1 + $0x474] sm:$0xf]
  %v357 = vld [vmem:[%s1 + $0x478] sm:$0xf]
  %v358 = vld [vmem:[%s1 + $0x47c] sm:$0xf]
  %v359 = vld [vmem:[%s1 + $0x480] sm:$0xf]
  %v360 = vld [vmem:[%s1 + $0x484] sm:$0xf]
  %v361 = vld [vmem:[%s1 + $0x488] sm:$0xf]
  %v362 = vld [vmem:[%s1 + $0x48c] sm:$0xf]
  %v363 = vld [vmem:[%s1 + $0x490] sm:$0xf]
  %v364 = vld [vmem:[%s1 + $0x494] sm:$0xf]
  %v365 = vld [vmem:[%s1 + $0x498] sm:$0xf]
  %v366 = vld [vmem:[%s1 + $0x49c] sm:$0xf]
  %v367 = vld [vmem:[%s1 + $0x4a0] sm:$0xf]
  %v368 = vld [vmem:[%s1 + $0x4a4] sm:$0xf]
  %v369 = vld [vmem:[%s1 + $0x4a8] sm:$0xf]
  %v370 = vld [vmem:[%s1 + $0x4ac] sm:$0xf]
  %v371 = vld [vmem:[%s1 + $0x4b0] sm:$0xf]
  %v372 = vld [vmem:[%s1 + $0x4b4] sm:$0xf]
  %v373 = vld [vmem:[%s1 + $0x4b8] sm:$0xf]
  %v374 = vld [vmem:[%s1 + $0x4bc] sm:$0xf]
  %v375 = vld [vmem:[%s1 + $0x4c0] sm:$0xf]
  %v376 = vld [vmem:[%s1 + $0x4c4] sm:$0xf]
  %v377 = vld [vmem:[%s1 + $0x4c8] sm:$0xf]
  %v378 = vld [vmem:[%s1 + $0x4cc] sm:$0xf]
  %v379 = vld [vmem:[%s1 + $0x4d0] sm:$0xf]
  %v380 = vld [vmem:[%s1 + $0x4d4] sm:$0xf]
  %v381 = vld [vmem:[%s1 + $0x4d8] sm:$0xf]
  %v382 = vld [vmem:[%s1 + $0x4dc] sm:$0xf]
  %v383 = vld [vmem:[%s1 + $0x4e0] sm:$0xf]
  %v384 = vld [vmem:[%s1 + $0x4e4] sm:$0xf]
  %v385 = vld [vmem:[%s1 + $0x4e8] sm:$0xf]
  %v386 = vld [vmem:[%s1 + $0x4ec] sm:$0xf]
  %v387 = vld [vmem:[%s1 + $0x4f0] sm:$0xf]
  %v388 = vld [vmem:[%s1 + $0x4f4] sm:$0xf]
  %v389 = vld [vmem:[%s1 + $0x4f8] sm:$0xf]
  %v390 = vld [vmem:[%s1 + $0x4fc] sm:$0xf]
  %v391 = vld [vmem:[%s1 + $0x500] sm:$0xf]
  %v392 = vld [vmem:[%s1 + $0x504] sm:$0xf]
  %v393 = vld [vmem:[%s1 + $0x508] sm:$0xf]
  %v394 = vld [vmem:[%s1 + $0x50c] sm:$0xf]
  %v395 = vld [vmem:[%s1 + $0x510] sm:$0xf]
  %v396 = vld [vmem:[%s1 + $0x514] sm:$0xf]
  %v397 = vld [vmem:[%s1 + $0x518] sm:$0xf]
  %v398 = vld [vmem:[%s1 + $0x51c] sm:$0xf]
  %v399 = vld [vmem:[%s1 + $0x520] sm:$0xf]
  %v400 = vld [vmem:[%s1 + $0x524] sm:$0xf]
  %v401 = vld [vmem:[%s1 + $0x528] sm:$0xf]
  %v402 = vld [vmem:[%s1 + $0x52c] sm:$0xf]
  %v403 = vld [vmem:[%s1 + $0x530] sm:$0xf]
  %v404 = vld [vmem:[%s1 + $0x534] sm:$0xf]
  %v405 = vld [vmem:[%s1 + $0x538] sm:$0xf]
  %v406 = vld [vmem:[%s1 + $0x53c] sm:$0xf]
  %v407 = vld [vmem:[%s1 + $0x540] sm:$0xf]
  %v408 = vld [vmem:[%s1 + $0x544] sm:$0xf]
  %v409 = vld [vmem:[%s1 + $0x548] sm:$0xf]
  %v410 = vld [vmem:[%s1 + $0x54c] sm:$0xf]
  %v411 = vld [vmem:[%s1 + $0x550] sm:$0xf]
  %v412 = vld [vmem:[%s1 + $0x554] sm:$0xf]
  %v413 = vld [vmem:[%s1 + $0x558] sm:$0xf]
  %v414 = vld [vmem:[%s1 + $0x55c] sm:$0xf]
  %v415 = vld [vmem:[%s1 + $0x560] sm:$0xf]
  %v416 = vld [vmem:[%s1 + $0x564] sm:$0xf]
  %v417 = vld [vmem:[%s1 + $0x568] sm:$0xf]
  %v418 = vld [vmem:[%s1 + $0x56c] sm:$0xf]
  %v419 = vld [vmem:[%s1 + $0x570] sm:$0xf]
  %v420 = vld [vmem:[%s1 + $0x574] sm:$0xf]
  %v421 = vld [vmem:[%s1 + $0x578] sm:$0xf]
  %v422 = vld [vmem:[%s1 + $0x57c] sm:$0xf]
  %v423 = vld [vmem:[%s1 + $0x580] sm:$0xf]
  %v424 = vld [vmem:[%s1 + $0x584] sm:$0xf]
  %v425 = vld [vmem:[%s1 + $0x588] sm:$0xf]
  %v426 = vld [vmem:[%s1 + $0x58c] sm:$0xf]
  %v427 = vld [vmem:[%s1 + $0x590] sm:$0xf]
  %v428 = vld [vmem:[%s1 + $0x594] sm:$0xf]
  %v429 = vld [vmem:[%s1 + $0x598] sm:$0xf]
  %v430 = vld [vmem:[%s1 + $0x59c] sm:$0xf]
  %v431 = vld [vmem:[%s1 + $0x5a0] sm:$0xf]
  %v432 = vld [vmem:[%s1 + $0x5a4] sm:$0xf]
  %v433 = vld [vmem:[%s1 + $0x5a8] sm:$0xf]
  %v434 = vld [vmem:[%s1 + $0x5ac] sm:$0xf]
  %v435 = vld [vmem:[%s1 + $0x5b0] sm:$0xf]
  %v436 = vld [vmem:[%s1 + $0x5b4] sm:$0xf]
  %v437 = vld [vmem:[%s1 + $0x5b8] sm:$0xf]
  %v438 = vld [vmem:[%s1 + $0x5bc] sm:$0xf]
  %v439 = vld [vmem:[%s2] sm:$0x1]
  %v441 = vlaneseq
  %v442 = vshrl.u32 %v441, 7
  %v443 = vsub.s32 0, %v442
  %v444 = vrot.slane %v439, %v443
  %v494 = vunpack.c.l.b16 %v23
  %v495 = vunpack.c.h.b16 %v23
  %v496 = vunpack.c.l.b16 %v24
  %v497 = vunpack.c.h.b16 %v24
  %v498 = vunpack.c.l.b16 %v25
  %v499 = vunpack.c.h.b16 %v25
  %v500 = vunpack.c.l.b16 %v26
  %v501 = vunpack.c.h.b16 %v26
  %v502 = vunpack.c.l.b16 %v27
  %v503 = vunpack.c.h.b16 %v27
  %v504 = vunpack.c.l.b16 %v28
  %v505 = vunpack.c.h.b16 %v28
  %v506 = vunpack.c.l.b16 %v29
  %v507 = vunpack.c.h.b16 %v29
  %v508 = vunpack.c.l.b16 %v30
  %v509 = vunpack.c.h.b16 %v30
  %v510 = vunpack.c.l.b16 %v31
  %v511 = vunpack.c.h.b16 %v31
  %v512 = vunpack.c.l.b16 %v32
  %v513 = vunpack.c.h.b16 %v32
  %v514 = vunpack.c.l.b16 %v33
  %v515 = vunpack.c.h.b16 %v33
  %v516 = vunpack.c.l.b16 %v34
  %v517 = vunpack.c.l.b16 %v35
  %v518 = vunpack.c.h.b16 %v35
  %v519 = vunpack.c.l.b16 %v36
  %v520 = vunpack.c.h.b16 %v36
  %v521 = vunpack.c.l.b16 %v37
  %v522 = vunpack.c.h.b16 %v37
  %v523 = vunpack.c.l.b16 %v38
  %v524 = vunpack.c.h.b16 %v38
  %v525 = vunpack.c.l.b16 %v39
  %v526 = vunpack.c.h.b16 %v39
  %v527 = vunpack.c.l.b16 %v40
  %v528 = vunpack.c.h.b16 %v40
  %v529 = vunpack.c.l.b16 %v41
  %v530 = vunpack.c.h.b16 %v41
  %v531 = vunpack.c.l.b16 %v42
  %v532 = vunpack.c.h.b16 %v42
  %v533 = vunpack.c.l.b16 %v43
  %v534 = vunpack.c.h.b16 %v43
  %v535 = vunpack.c.l.b16 %v44
  %v536 = vunpack.c.h.b16 %v44
  %v537 = vunpack.c.l.b16 %v45
  %v538 = vunpack.c.h.b16 %v45
  %v539 = vunpack.c.l.b16 %v46
  %v540 = vunpack.c.l.b16 %v47
  %v541 = vunpack.c.h.b16 %v47
  %v542 = vunpack.c.l.b16 %v48
  %v543 = vunpack.c.h.b16 %v48
  %v544 = vunpack.c.l.b16 %v49
  %v545 = vunpack.c.h.b16 %v49
  %v546 = vunpack.c.l.b16 %v50
  %v547 = vunpack.c.h.b16 %v50
  %v548 = vunpack.c.l.b16 %v51
  %v549 = vunpack.c.h.b16 %v51
  %v550 = vunpack.c.l.b16 %v52
  %v551 = vunpack.c.h.b16 %v52
  %v552 = vunpack.c.l.b16 %v53
  %v553 = vunpack.c.h.b16 %v53
  %v554 = vunpack.c.l.b16 %v54
  %v555 = vunpack.c.h.b16 %v54
  %v556 = vunpack.c.l.b16 %v55
  %v557 = vunpack.c.h.b16 %v55
  %v558 = vunpack.c.l.b16 %v56
  %v559 = vunpack.c.h.b16 %v56
  %v560 = vunpack.c.l.b16 %v57
  %v561 = vunpack.c.h.b16 %v57
  %v562 = vunpack.c.l.b16 %v58
  %v563 = vunpack.c.l.b16 %v59
  %v564 = vunpack.c.h.b16 %v59
  %v565 = vunpack.c.l.b16 %v60
  %v566 = vunpack.c.h.b16 %v60
  %v567 = vunpack.c.l.b16 %v61
  %v568 = vunpack.c.h.b16 %v61
  %v569 = vunpack.c.l.b16 %v62
  %v570 = vunpack.c.h.b16 %v62
  %v571 = vunpack.c.l.b16 %v63
  %v572 = vunpack.c.h.b16 %v63
  %v573 = vunpack.c.l.b16 %v64
  %v574 = vunpack.c.h.b16 %v64
  %v575 = vunpack.c.l.b16 %v65
  %v576 = vunpack.c.h.b16 %v65
  %v577 = vunpack.c.l.b16 %v66
  %v578 = vunpack.c.h.b16 %v66
  %v579 = vunpack.c.l.b16 %v67
  %v580 = vunpack.c.h.b16 %v67
  %v581 = vunpack.c.l.b16 %v68
  %v582 = vunpack.c.h.b16 %v68
  %v583 = vunpack.c.l.b16 %v69
  %v584 = vunpack.c.h.b16 %v69
  %v585 = vunpack.c.l.b16 %v70
  %v586 = vpack.c.b16 %v517, %v494
  %v587 = vpack.c.b16 %v518, %v495
  %v588 = vpack.c.b16 %v519, %v496
  %v589 = vpack.c.b16 %v520, %v497
  %v590 = vpack.c.b16 %v521, %v498
  %v591 = vpack.c.b16 %v522, %v499
  %v592 = vpack.c.b16 %v523, %v500
  %v593 = vpack.c.b16 %v524, %v501
  %v594 = vpack.c.b16 %v525, %v502
  %v595 = vpack.c.b16 %v526, %v503
  %v596 = vpack.c.b16 %v527, %v504
  %v597 = vpack.c.b16 %v528, %v505
  %v598 = vpack.c.b16 %v529, %v506
  %v599 = vpack.c.b16 %v530, %v507
  %v600 = vpack.c.b16 %v531, %v508
  %v601 = vpack.c.b16 %v532, %v509
  %v602 = vpack.c.b16 %v533, %v510
  %v603 = vpack.c.b16 %v534, %v511
  %v604 = vpack.c.b16 %v535, %v512
  %v605 = vpack.c.b16 %v536, %v513
  %v606 = vpack.c.b16 %v537, %v514
  %v607 = vpack.c.b16 %v538, %v515
  %v608 = vpack.c.b16 %v539, %v516
  %v609 = vpack.c.b16 %v563, %v540
  %v610 = vpack.c.b16 %v564, %v541
  %v611 = vpack.c.b16 %v565, %v542
  %v612 = vpack.c.b16 %v566, %v543
  %v613 = vpack.c.b16 %v567, %v544
  %v614 = vpack.c.b16 %v568, %v545
  %v615 = vpack.c.b16 %v569, %v546
  %v616 = vpack.c.b16 %v570, %v547
  %v617 = vpack.c.b16 %v571, %v548
  %v618 = vpack.c.b16 %v572, %v549
  %v619 = vpack.c.b16 %v573, %v550
  %v620 = vpack.c.b16 %v574, %v551
  %v621 = vpack.c.b16 %v575, %v552
  %v622 = vpack.c.b16 %v576, %v553
  %v623 = vpack.c.b16 %v577, %v554
  %v624 = vpack.c.b16 %v578, %v555
  %v625 = vpack.c.b16 %v579, %v556
  %v626 = vpack.c.b16 %v580, %v557
  %v627 = vpack.c.b16 %v581, %v558
  %v628 = vpack.c.b16 %v582, %v559
  %v629 = vpack.c.b16 %v583, %v560
  %v630 = vpack.c.b16 %v584, %v561
  %v631 = vpack.c.b16 %v585, %v562
  %v1046 = vunpack.c.l.b16 %v71
  %v1047 = vunpack.c.l.b16 %v72
  %v1048 = vunpack.c.l.b16 %v73
  %v1049 = vunpack.c.l.b16 %v74
  %v1050 = vunpack.c.l.b16 %v75
  %v1051 = vunpack.c.l.b16 %v76
  %v1052 = vunpack.c.l.b16 %v77
  %v1053 = vunpack.c.l.b16 %v78
  %v1054 = vunpack.c.l.b16 %v79
  %v1055 = vunpack.c.l.b16 %v80
  %v1056 = vunpack.c.l.b16 %v81
  %v1057 = vunpack.c.l.b16 %v82
  %v1058 = vunpack.c.l.b16 %v83
  %v1059 = vunpack.c.l.b16 %v84
  %v1060 = vunpack.c.l.b16 %v85
  %v1061 = vunpack.c.l.b16 %v86
  %v1062 = vunpack.c.l.b16 %v87
  %v1063 = vunpack.c.l.b16 %v88
  %v1064 = vunpack.c.l.b16 %v89
  %v1065 = vunpack.c.l.b16 %v90
  %v1066 = vunpack.c.l.b16 %v91
  %v1067 = vunpack.c.l.b16 %v92
  %v1068 = vunpack.c.l.b16 %v93
  %v1069 = vunpack.c.l.b16 %v94
  %v1070 = vunpack.c.l.b16 %v95
  %v1071 = vunpack.c.l.b16 %v96
  %v1072 = vunpack.c.l.b16 %v97
  %v1073 = vunpack.c.l.b16 %v98
  %v1074 = vunpack.c.l.b16 %v99
  %v1075 = vunpack.c.l.b16 %v100
  %v1076 = vunpack.c.l.b16 %v101
  %v1077 = vunpack.c.l.b16 %v102
  %v1078 = vunpack.c.l.b16 %v103
  %v1079 = vunpack.c.l.b16 %v104
  %v1080 = vunpack.c.l.b16 %v105
  %v1081 = vunpack.c.l.b16 %v106
  %v1082 = vunpack.c.l.b16 %v107
  %v1083 = vunpack.c.l.b16 %v108
  %v1084 = vunpack.c.l.b16 %v109
  %v1085 = vunpack.c.l.b16 %v110
  %v1086 = vunpack.c.l.b16 %v111
  %v1087 = vunpack.c.l.b16 %v112
  %v1088 = vunpack.c.l.b16 %v113
  %v1089 = vunpack.c.l.b16 %v114
  %v1090 = vunpack.c.l.b16 %v115
  %v1091 = vunpack.c.l.b16 %v116
  %v1092 = vunpack.c.l.b16 %v117
  %v1093 = vunpack.c.l.b16 %v118
  %v1094 = vunpack.c.l.b16 %v119
  %v1095 = vunpack.c.l.b16 %v120
  %v1096 = vunpack.c.l.b16 %v121
  %v1097 = vunpack.c.l.b16 %v122
  %v1098 = vunpack.c.l.b16 %v123
  %v1099 = vunpack.c.l.b16 %v124
  %v1100 = vunpack.c.l.b16 %v125
  %v1101 = vunpack.c.l.b16 %v126
  %v1102 = vunpack.c.l.b16 %v127
  %v1103 = vunpack.c.l.b16 %v128
  %v1104 = vunpack.c.l.b16 %v129
  %v1105 = vunpack.c.l.b16 %v130
  %v1106 = vunpack.c.l.b16 %v131
  %v1107 = vunpack.c.l.b16 %v132
  %v1108 = vunpack.c.l.b16 %v133
  %v1109 = vunpack.c.l.b16 %v134
  %v1110 = vunpack.c.l.b16 %v135
  %v1111 = vunpack.c.l.b16 %v136
  %v1112 = vunpack.c.l.b16 %v137
  %v1113 = vunpack.c.l.b16 %v138
  %v1114 = vunpack.c.l.b16 %v139
  %v1115 = vunpack.c.l.b16 %v140
  %v1116 = vunpack.c.l.b16 %v141
  %v1117 = vunpack.c.l.b16 %v142
  %v1118 = vunpack.c.l.b16 %v143
  %v1119 = vunpack.c.l.b16 %v144
  %v1120 = vunpack.c.l.b16 %v145
  %v1121 = vunpack.c.l.b16 %v146
  %v1122 = vunpack.c.l.b16 %v147
  %v1123 = vunpack.c.l.b16 %v148
  %v1124 = vunpack.c.l.b16 %v149
  %v1125 = vunpack.c.l.b16 %v150
  %v1126 = vunpack.c.l.b16 %v151
  %v1127 = vunpack.c.l.b16 %v152
  %v1128 = vunpack.c.l.b16 %v153
  %v1129 = vunpack.c.l.b16 %v154
  %v1130 = vunpack.c.l.b16 %v155
  %v1131 = vunpack.c.l.b16 %v156
  %v1132 = vunpack.c.l.b16 %v157
  %v1133 = vunpack.c.l.b16 %v158
  %v1134 = vunpack.c.l.b16 %v159
  %v1135 = vunpack.c.l.b16 %v160
  %v1136 = vunpack.c.l.b16 %v161
  %v1137 = vunpack.c.l.b16 %v162
  %v1138 = vunpack.c.l.b16 %v163
  %v1139 = vunpack.c.l.b16 %v164
  %v1140 = vunpack.c.l.b16 %v165
  %v1141 = vunpack.c.l.b16 %v166
  %v1142 = vunpack.c.l.b16 %v167
  %v1143 = vunpack.c.l.b16 %v168
  %v1144 = vunpack.c.l.b16 %v169
  %v1145 = vunpack.c.l.b16 %v170
  %v1146 = vunpack.c.l.b16 %v171
  %v1147 = vunpack.c.l.b16 %v172
  %v1148 = vunpack.c.l.b16 %v173
  %v1149 = vunpack.c.l.b16 %v174
  %v1150 = vunpack.c.l.b16 %v175
  %v1151 = vunpack.c.l.b16 %v176
  %v1152 = vunpack.c.l.b16 %v177
  %v1153 = vunpack.c.l.b16 %v178
  %v1154 = vunpack.c.l.b16 %v179
  %v1155 = vunpack.c.l.b16 %v180
  %v1156 = vunpack.c.l.b16 %v181
  %v1157 = vunpack.c.l.b16 %v182
  %v1158 = vunpack.c.l.b16 %v183
  %v1159 = vunpack.c.l.b16 %v184
  %v1160 = vunpack.c.l.b16 %v185
  %v1161 = vunpack.c.l.b16 %v186
  %v1162 = vunpack.c.l.b16 %v187
  %v1163 = vunpack.c.l.b16 %v188
  %v1164 = vunpack.c.l.b16 %v189
  %v1165 = vunpack.c.l.b16 %v190
  %v1166 = vunpack.c.l.b16 %v191
  %v1167 = vunpack.c.l.b16 %v192
  %v1168 = vunpack.c.l.b16 %v193
  %v1169 = vunpack.c.l.b16 %v194
  %v1170 = vunpack.c.l.b16 %v195
  %v1171 = vunpack.c.l.b16 %v196
  %v1172 = vunpack.c.l.b16 %v197
  %v1173 = vunpack.c.l.b16 %v198
  %v1174 = vunpack.c.l.b16 %v199
  %v1175 = vunpack.c.l.b16 %v200
  %v1176 = vunpack.c.l.b16 %v201
  %v1177 = vunpack.c.l.b16 %v202
  %v1178 = vunpack.c.l.b16 %v203
  %v1179 = vunpack.c.l.b16 %v204
  %v1180 = vunpack.c.l.b16 %v205
  %v1181 = vunpack.c.l.b16 %v206
  %v1182 = vunpack.c.l.b16 %v207
  %v1183 = vunpack.c.l.b16 %v208
  %v1184 = vunpack.c.l.b16 %v209
  %v1185 = vunpack.c.l.b16 %v210
  %v1186 = vunpack.c.l.b16 %v211
  %v1187 = vunpack.c.l.b16 %v212
  %v1188 = vunpack.c.l.b16 %v213
  %v1189 = vunpack.c.l.b16 %v214
  %v1190 = vunpack.c.l.b16 %v215
  %v1191 = vunpack.c.l.b16 %v216
  %v1192 = vunpack.c.l.b16 %v217
  %v1193 = vunpack.c.l.b16 %v218
  %v1194 = vunpack.c.l.b16 %v219
  %v1195 = vunpack.c.l.b16 %v220
  %v1196 = vunpack.c.l.b16 %v221
  %v1197 = vunpack.c.l.b16 %v222
  %v1198 = vunpack.c.l.b16 %v223
  %v1199 = vunpack.c.l.b16 %v224
  %v1200 = vunpack.c.l.b16 %v225
  %v1201 = vunpack.c.l.b16 %v226
  %v1202 = vunpack.c.l.b16 %v227
  %v1203 = vunpack.c.l.b16 %v228
  %v1204 = vunpack.c.l.b16 %v229
  %v1205 = vunpack.c.l.b16 %v230
  %v1206 = vunpack.c.l.b16 %v231
  %v1207 = vunpack.c.l.b16 %v232
  %v1208 = vunpack.c.l.b16 %v233
  %v1209 = vunpack.c.l.b16 %v234
  %v1210 = vunpack.c.l.b16 %v235
  %v1211 = vunpack.c.l.b16 %v236
  %v1212 = vunpack.c.l.b16 %v237
  %v1213 = vunpack.c.l.b16 %v238
  %v1214 = vunpack.c.l.b16 %v239
  %v1215 = vunpack.c.l.b16 %v240
  %v1216 = vunpack.c.l.b16 %v241
  %v1217 = vunpack.c.l.b16 %v242
  %v1218 = vunpack.c.l.b16 %v243
  %v1219 = vunpack.c.l.b16 %v244
  %v1220 = vunpack.c.l.b16 %v245
  %v1221 = vunpack.c.l.b16 %v246
  %v1222 = vunpack.c.l.b16 %v247
  %v1223 = vunpack.c.l.b16 %v248
  %v1224 = vunpack.c.l.b16 %v249
  %v1225 = vunpack.c.l.b16 %v250
  %v1226 = vunpack.c.l.b16 %v251
  %v1227 = vunpack.c.l.b16 %v252
  %v1228 = vunpack.c.l.b16 %v253
  %v1229 = vunpack.c.l.b16 %v254
  %v1230 = vunpack.c.l.b16 %v255
  %v1231 = vunpack.c.l.b16 %v256
  %v1232 = vunpack.c.l.b16 %v257
  %v1233 = vunpack.c.l.b16 %v258
  %v1234 = vunpack.c.l.b16 %v259
  %v1235 = vunpack.c.l.b16 %v260
  %v1236 = vunpack.c.l.b16 %v261
  %v1237 = vunpack.c.l.b16 %v262
  %v1238 = vunpack.c.l.b16 %v263
  %v1239 = vunpack.c.l.b16 %v264
  %v1240 = vunpack.c.l.b16 %v265
  %v1241 = vunpack.c.l.b16 %v266
  %v1242 = vunpack.c.l.b16 %v267
  %v1243 = vunpack.c.l.b16 %v268
  %v1244 = vunpack.c.l.b16 %v269
  %v1245 = vunpack.c.l.b16 %v270
  %v1246 = vunpack.c.l.b16 %v271
  %v1247 = vunpack.c.l.b16 %v272
  %v1248 = vunpack.c.l.b16 %v273
  %v1249 = vunpack.c.l.b16 %v274
  %v1250 = vunpack.c.l.b16 %v275
  %v1251 = vunpack.c.l.b16 %v276
  %v1252 = vunpack.c.l.b16 %v277
  %v1253 = vunpack.c.l.b16 %v278
  %v1254 = vunpack.c.l.b16 %v279
  %v1255 = vunpack.c.l.b16 %v280
  %v1256 = vunpack.c.l.b16 %v281
  %v1257 = vunpack.c.l.b16 %v282
  %v1258 = vunpack.c.l.b16 %v283
  %v1259 = vunpack.c.l.b16 %v284
  %v1260 = vunpack.c.l.b16 %v285
  %v1261 = vunpack.c.l.b16 %v286
  %v1262 = vunpack.c.l.b16 %v287
  %v1263 = vunpack.c.l.b16 %v288
  %v1264 = vunpack.c.l.b16 %v289
  %v1265 = vunpack.c.l.b16 %v290
  %v1266 = vunpack.c.l.b16 %v291
  %v1267 = vunpack.c.l.b16 %v292
  %v1268 = vunpack.c.l.b16 %v293
  %v1269 = vunpack.c.l.b16 %v294
  %v1270 = vunpack.c.l.b16 %v295
  %v1271 = vunpack.c.l.b16 %v296
  %v1272 = vunpack.c.l.b16 %v297
  %v1273 = vunpack.c.l.b16 %v298
  %v1274 = vunpack.c.l.b16 %v299
  %v1275 = vunpack.c.l.b16 %v300
  %v1276 = vunpack.c.l.b16 %v301
  %v1277 = vunpack.c.l.b16 %v302
  %v1278 = vunpack.c.l.b16 %v303
  %v1279 = vunpack.c.l.b16 %v304
  %v1280 = vunpack.c.l.b16 %v305
  %v1281 = vunpack.c.l.b16 %v306
  %v1282 = vunpack.c.l.b16 %v307
  %v1283 = vunpack.c.l.b16 %v308
  %v1284 = vunpack.c.l.b16 %v309
  %v1285 = vunpack.c.l.b16 %v310
  %v1286 = vunpack.c.l.b16 %v311
  %v1287 = vunpack.c.l.b16 %v312
  %v1288 = vunpack.c.l.b16 %v313
  %v1289 = vunpack.c.l.b16 %v314
  %v1290 = vunpack.c.l.b16 %v315
  %v1291 = vunpack.c.l.b16 %v316
  %v1292 = vunpack.c.l.b16 %v317
  %v1293 = vunpack.c.l.b16 %v318
  %v1294 = vunpack.c.l.b16 %v319
  %v1295 = vunpack.c.l.b16 %v320
  %v1296 = vunpack.c.l.b16 %v321
  %v1297 = vunpack.c.l.b16 %v322
  %v1298 = vunpack.c.l.b16 %v323
  %v1299 = vunpack.c.l.b16 %v324
  %v1300 = vunpack.c.l.b16 %v325
  %v1301 = vunpack.c.l.b16 %v326
  %v1302 = vunpack.c.l.b16 %v327
  %v1303 = vunpack.c.l.b16 %v328
  %v1304 = vunpack.c.l.b16 %v329
  %v1305 = vunpack.c.l.b16 %v330
  %v1306 = vunpack.c.l.b16 %v331
  %v1307 = vunpack.c.l.b16 %v332
  %v1308 = vunpack.c.l.b16 %v333
  %v1309 = vunpack.c.l.b16 %v334
  %v1310 = vunpack.c.l.b16 %v335
  %v1311 = vunpack.c.l.b16 %v336
  %v1312 = vunpack.c.l.b16 %v337
  %v1313 = vunpack.c.l.b16 %v338
  %v1314 = vunpack.c.l.b16 %v339
  %v1315 = vunpack.c.l.b16 %v340
  %v1316 = vunpack.c.l.b16 %v341
  %v1317 = vunpack.c.l.b16 %v342
  %v1318 = vunpack.c.l.b16 %v343
  %v1319 = vunpack.c.l.b16 %v344
  %v1320 = vunpack.c.l.b16 %v345
  %v1321 = vunpack.c.l.b16 %v346
  %v1322 = vunpack.c.l.b16 %v347
  %v1323 = vunpack.c.l.b16 %v348
  %v1324 = vunpack.c.l.b16 %v349
  %v1325 = vunpack.c.l.b16 %v350
  %v1326 = vunpack.c.l.b16 %v351
  %v1327 = vunpack.c.l.b16 %v352
  %v1328 = vunpack.c.l.b16 %v353
  %v1329 = vunpack.c.l.b16 %v354
  %v1330 = vunpack.c.l.b16 %v355
  %v1331 = vunpack.c.l.b16 %v356
  %v1332 = vunpack.c.l.b16 %v357
  %v1333 = vunpack.c.l.b16 %v358
  %v1334 = vunpack.c.l.b16 %v359
  %v1335 = vunpack.c.l.b16 %v360
  %v1336 = vunpack.c.l.b16 %v361
  %v1337 = vunpack.c.l.b16 %v362
  %v1338 = vunpack.c.l.b16 %v363
  %v1339 = vunpack.c.l.b16 %v364
  %v1340 = vunpack.c.l.b16 %v365
  %v1341 = vunpack.c.l.b16 %v366
  %v1342 = vunpack.c.l.b16 %v367
  %v1343 = vunpack.c.l.b16 %v368
  %v1344 = vunpack.c.l.b16 %v369
  %v1345 = vunpack.c.l.b16 %v370
  %v1346 = vunpack.c.l.b16 %v371
  %v1347 = vunpack.c.l.b16 %v372
  %v1348 = vunpack.c.l.b16 %v373
  %v1349 = vunpack.c.l.b16 %v374
  %v1350 = vunpack.c.l.b16 %v375
  %v1351 = vunpack.c.l.b16 %v376
  %v1352 = vunpack.c.l.b16 %v377
  %v1353 = vunpack.c.l.b16 %v378
  %v1354 = vunpack.c.l.b16 %v379
  %v1355 = vunpack.c.l.b16 %v380
  %v1356 = vunpack.c.l.b16 %v381
  %v1357 = vunpack.c.l.b16 %v382
  %v1358 = vunpack.c.l.b16 %v383
  %v1359 = vunpack.c.l.b16 %v384
  %v1360 = vunpack.c.l.b16 %v385
  %v1361 = vunpack.c.l.b16 %v386
  %v1362 = vunpack.c.l.b16 %v387
  %v1363 = vunpack.c.l.b16 %v388
  %v1364 = vunpack.c.l.b16 %v389
  %v1365 = vunpack.c.l.b16 %v390
  %v1366 = vunpack.c.l.b16 %v391
  %v1367 = vunpack.c.l.b16 %v392
  %v1368 = vunpack.c.l.b16 %v393
  %v1369 = vunpack.c.l.b16 %v394
  %v1370 = vunpack.c.l.b16 %v395
  %v1371 = vunpack.c.l.b16 %v396
  %v1372 = vunpack.c.l.b16 %v397
  %v1373 = vunpack.c.l.b16 %v398
  %v1374 = vunpack.c.l.b16 %v399
  %v1375 = vunpack.c.l.b16 %v400
  %v1376 = vunpack.c.l.b16 %v401
  %v1377 = vunpack.c.l.b16 %v402
  %v1378 = vunpack.c.l.b16 %v403
  %v1379 = vunpack.c.l.b16 %v404
  %v1380 = vunpack.c.l.b16 %v405
  %v1381 = vunpack.c.l.b16 %v406
  %v1382 = vunpack.c.l.b16 %v407
  %v1383 = vunpack.c.l.b16 %v408
  %v1384 = vunpack.c.l.b16 %v409
  %v1385 = vunpack.c.l.b16 %v410
  %v1386 = vunpack.c.l.b16 %v411
  %v1387 = vunpack.c.l.b16 %v412
  %v1388 = vunpack.c.l.b16 %v413
  %v1389 = vunpack.c.l.b16 %v414
  %v1390 = vunpack.c.l.b16 %v415
  %v1391 = vunpack.c.l.b16 %v416
  %v1392 = vunpack.c.l.b16 %v417
  %v1393 = vunpack.c.l.b16 %v418
  %v1394 = vunpack.c.l.b16 %v419
  %v1395 = vunpack.c.l.b16 %v420
  %v1396 = vunpack.c.l.b16 %v421
  %v1397 = vunpack.c.l.b16 %v422
  %v1398 = vunpack.c.l.b16 %v423
  %v1399 = vunpack.c.l.b16 %v424
  %v1400 = vunpack.c.l.b16 %v425
  %v1401 = vunpack.c.l.b16 %v426
  %v1402 = vunpack.c.l.b16 %v427
  %v1403 = vunpack.c.l.b16 %v428
  %v1404 = vunpack.c.l.b16 %v429
  %v1405 = vunpack.c.l.b16 %v430
  %v1406 = vunpack.c.l.b16 %v431
  %v1407 = vunpack.c.l.b16 %v432
  %v1408 = vunpack.c.l.b16 %v433
  %v1409 = vunpack.c.l.b16 %v434
  %v1410 = vunpack.c.l.b16 %v435
  %v1411 = vunpack.c.l.b16 %v436
  %v1412 = vunpack.c.l.b16 %v437
  %v1413 = vunpack.c.l.b16 %v438
  %v1414 = vpack.c.b16 %v1047, %v1046
  %v1415 = vpack.c.b16 %v1049, %v1048
  %v1416 = vpack.c.b16 %v1051, %v1050
  %v1417 = vpack.c.b16 %v1053, %v1052
  %v1418 = vpack.c.b16 %v1055, %v1054
  %v1419 = vpack.c.b16 %v1057, %v1056
  %v1420 = vpack.c.b16 %v1059, %v1058
  %v1421 = vpack.c.b16 %v1061, %v1060
  %v1422 = vpack.c.b16 %v1063, %v1062
  %v1423 = vpack.c.b16 %v1065, %v1064
  %v1424 = vpack.c.b16 %v1067, %v1066
  %v1425 = vpack.c.b16 %v1069, %v1068
  %v1426 = vpack.c.b16 %v1071, %v1070
  %v1427 = vpack.c.b16 %v1073, %v1072
  %v1428 = vpack.c.b16 %v1075, %v1074
  %v1429 = vpack.c.b16 %v1077, %v1076
  %v1430 = vpack.c.b16 %v1079, %v1078
  %v1431 = vpack.c.b16 %v1081, %v1080
  %v1432 = vpack.c.b16 %v1083, %v1082
  %v1433 = vpack.c.b16 %v1085, %v1084
  %v1434 = vpack.c.b16 %v1087, %v1086
  %v1435 = vpack.c.b16 %v1089, %v1088
  %v1436 = vpack.c.b16 %v1091, %v1090
  %v1437 = vpack.c.b16 %v1093, %v1092
  %v1438 = vpack.c.b16 %v1095, %v1094
  %v1439 = vpack.c.b16 %v1097, %v1096
  %v1440 = vpack.c.b16 %v1099, %v1098
  %v1441 = vpack.c.b16 %v1101, %v1100
  %v1442 = vpack.c.b16 %v1103, %v1102
  %v1443 = vpack.c.b16 %v1105, %v1104
  %v1444 = vpack.c.b16 %v1107, %v1106
  %v1445 = vpack.c.b16 %v1109, %v1108
  %v1446 = vpack.c.b16 %v1111, %v1110
  %v1447 = vpack.c.b16 %v1113, %v1112
  %v1448 = vpack.c.b16 %v1115, %v1114
  %v1449 = vpack.c.b16 %v1117, %v1116
  %v1450 = vpack.c.b16 %v1119, %v1118
  %v1451 = vpack.c.b16 %v1121, %v1120
  %v1452 = vpack.c.b16 %v1123, %v1122
  %v1453 = vpack.c.b16 %v1125, %v1124
  %v1454 = vpack.c.b16 %v1127, %v1126
  %v1455 = vpack.c.b16 %v1129, %v1128
  %v1456 = vpack.c.b16 %v1131, %v1130
  %v1457 = vpack.c.b16 %v1133, %v1132
  %v1458 = vpack.c.b16 %v1135, %v1134
  %v1459 = vpack.c.b16 %v1137, %v1136
  %v1460 = vpack.c.b16 %v1139, %v1138
  %v1461 = vpack.c.b16 %v1141, %v1140
  %v1462 = vpack.c.b16 %v1143, %v1142
  %v1463 = vpack.c.b16 %v1145, %v1144
  %v1464 = vpack.c.b16 %v1147, %v1146
  %v1465 = vpack.c.b16 %v1149, %v1148
  %v1466 = vpack.c.b16 %v1151, %v1150
  %v1467 = vpack.c.b16 %v1153, %v1152
  %v1468 = vpack.c.b16 %v1155, %v1154
  %v1469 = vpack.c.b16 %v1157, %v1156
  %v1470 = vpack.c.b16 %v1159, %v1158
  %v1471 = vpack.c.b16 %v1161, %v1160
  %v1472 = vpack.c.b16 %v1163, %v1162
  %v1473 = vpack.c.b16 %v1165, %v1164
  %v1474 = vpack.c.b16 %v1167, %v1166
  %v1475 = vpack.c.b16 %v1169, %v1168
  %v1476 = vpack.c.b16 %v1171, %v1170
  %v1477 = vpack.c.b16 %v1173, %v1172
  %v1478 = vpack.c.b16 %v1175, %v1174
  %v1479 = vpack.c.b16 %v1177, %v1176
  %v1480 = vpack.c.b16 %v1179, %v1178
  %v1481 = vpack.c.b16 %v1181, %v1180
  %v1482 = vpack.c.b16 %v1183, %v1182
  %v1483 = vpack.c.b16 %v1185, %v1184
  %v1484 = vpack.c.b16 %v1187, %v1186
  %v1485 = vpack.c.b16 %v1189, %v1188
  %v1486 = vpack.c.b16 %v1191, %v1190
  %v1487 = vpack.c.b16 %v1193, %v1192
  %v1488 = vpack.c.b16 %v1195, %v1194
  %v1489 = vpack.c.b16 %v1197, %v1196
  %v1490 = vpack.c.b16 %v1199, %v1198
  %v1491 = vpack.c.b16 %v1201, %v1200
  %v1492 = vpack.c.b16 %v1203, %v1202
  %v1493 = vpack.c.b16 %v1205, %v1204
  %v1494 = vpack.c.b16 %v1207, %v1206
  %v1495 = vpack.c.b16 %v1209, %v1208
  %v1496 = vpack.c.b16 %v1211, %v1210
  %v1497 = vpack.c.b16 %v1213, %v1212
  %v1498 = vpack.c.b16 %v1215, %v1214
  %v1499 = vpack.c.b16 %v1217, %v1216
  %v1500 = vpack.c.b16 %v1219, %v1218
  %v1501 = vpack.c.b16 %v1221, %v1220
  %v1502 = vpack.c.b16 %v1223, %v1222
  %v1503 = vpack.c.b16 %v1225, %v1224
  %v1504 = vpack.c.b16 %v1227, %v1226
  %v1505 = vpack.c.b16 %v1229, %v1228
  %v1506 = vpack.c.b16 %v1231, %v1230
  %v1507 = vpack.c.b16 %v1233, %v1232
  %v1508 = vpack.c.b16 %v1235, %v1234
  %v1509 = vpack.c.b16 %v1237, %v1236
  %v1510 = vpack.c.b16 %v1239, %v1238
  %v1511 = vpack.c.b16 %v1241, %v1240
  %v1512 = vpack.c.b16 %v1243, %v1242
  %v1513 = vpack.c.b16 %v1245, %v1244
  %v1514 = vpack.c.b16 %v1247, %v1246
  %v1515 = vpack.c.b16 %v1249, %v1248
  %v1516 = vpack.c.b16 %v1251, %v1250
  %v1517 = vpack.c.b16 %v1253, %v1252
  %v1518 = vpack.c.b16 %v1255, %v1254
  %v1519 = vpack.c.b16 %v1257, %v1256
  %v1520 = vpack.c.b16 %v1259, %v1258
  %v1521 = vpack.c.b16 %v1261, %v1260
  %v1522 = vpack.c.b16 %v1263, %v1262
  %v1523 = vpack.c.b16 %v1265, %v1264
  %v1524 = vpack.c.b16 %v1267, %v1266
  %v1525 = vpack.c.b16 %v1269, %v1268
  %v1526 = vpack.c.b16 %v1271, %v1270
  %v1527 = vpack.c.b16 %v1273, %v1272
  %v1528 = vpack.c.b16 %v1275, %v1274
  %v1529 = vpack.c.b16 %v1277, %v1276
  %v1530 = vpack.c.b16 %v1279, %v1278
  %v1531 = vpack.c.b16 %v1281, %v1280
  %v1532 = vpack.c.b16 %v1283, %v1282
  %v1533 = vpack.c.b16 %v1285, %v1284
  %v1534 = vpack.c.b16 %v1287, %v1286
  %v1535 = vpack.c.b16 %v1289, %v1288
  %v1536 = vpack.c.b16 %v1291, %v1290
  %v1537 = vpack.c.b16 %v1293, %v1292
  %v1538 = vpack.c.b16 %v1295, %v1294
  %v1539 = vpack.c.b16 %v1297, %v1296
  %v1540 = vpack.c.b16 %v1299, %v1298
  %v1541 = vpack.c.b16 %v1301, %v1300
  %v1542 = vpack.c.b16 %v1303, %v1302
  %v1543 = vpack.c.b16 %v1305, %v1304
  %v1544 = vpack.c.b16 %v1307, %v1306
  %v1545 = vpack.c.b16 %v1309, %v1308
  %v1546 = vpack.c.b16 %v1311, %v1310
  %v1547 = vpack.c.b16 %v1313, %v1312
  %v1548 = vpack.c.b16 %v1315, %v1314
  %v1549 = vpack.c.b16 %v1317, %v1316
  %v1550 = vpack.c.b16 %v1319, %v1318
  %v1551 = vpack.c.b16 %v1321, %v1320
  %v1552 = vpack.c.b16 %v1323, %v1322
  %v1553 = vpack.c.b16 %v1325, %v1324
  %v1554 = vpack.c.b16 %v1327, %v1326
  %v1555 = vpack.c.b16 %v1329, %v1328
  %v1556 = vpack.c.b16 %v1331, %v1330
  %v1557 = vpack.c.b16 %v1333, %v1332
  %v1558 = vpack.c.b16 %v1335, %v1334
  %v1559 = vpack.c.b16 %v1337, %v1336
  %v1560 = vpack.c.b16 %v1339, %v1338
  %v1561 = vpack.c.b16 %v1341, %v1340
  %v1562 = vpack.c.b16 %v1343, %v1342
  %v1563 = vpack.c.b16 %v1345, %v1344
  %v1564 = vpack.c.b16 %v1347, %v1346
  %v1565 = vpack.c.b16 %v1349, %v1348
  %v1566 = vpack.c.b16 %v1351, %v1350
  %v1567 = vpack.c.b16 %v1353, %v1352
  %v1568 = vpack.c.b16 %v1355, %v1354
  %v1569 = vpack.c.b16 %v1357, %v1356
  %v1570 = vpack.c.b16 %v1359, %v1358
  %v1571 = vpack.c.b16 %v1361, %v1360
  %v1572 = vpack.c.b16 %v1363, %v1362
  %v1573 = vpack.c.b16 %v1365, %v1364
  %v1574 = vpack.c.b16 %v1367, %v1366
  %v1575 = vpack.c.b16 %v1369, %v1368
  %v1576 = vpack.c.b16 %v1371, %v1370
  %v1577 = vpack.c.b16 %v1373, %v1372
  %v1578 = vpack.c.b16 %v1375, %v1374
  %v1579 = vpack.c.b16 %v1377, %v1376
  %v1580 = vpack.c.b16 %v1379, %v1378
  %v1581 = vpack.c.b16 %v1381, %v1380
  %v1582 = vpack.c.b16 %v1383, %v1382
  %v1583 = vpack.c.b16 %v1385, %v1384
  %v1584 = vpack.c.b16 %v1387, %v1386
  %v1585 = vpack.c.b16 %v1389, %v1388
  %v1586 = vpack.c.b16 %v1391, %v1390
  %v1587 = vpack.c.b16 %v1393, %v1392
  %v1588 = vpack.c.b16 %v1395, %v1394
  %v1589 = vpack.c.b16 %v1397, %v1396
  %v1590 = vpack.c.b16 %v1399, %v1398
  %v1591 = vpack.c.b16 %v1401, %v1400
  %v1592 = vpack.c.b16 %v1403, %v1402
  %v1593 = vpack.c.b16 %v1405, %v1404
  %v1594 = vpack.c.b16 %v1407, %v1406
  %v1595 = vpack.c.b16 %v1409, %v1408
  %v1596 = vpack.c.b16 %v1411, %v1410
  %v1597 = vpack.c.b16 %v1413, %v1412
  %1782 = vmatprep.subr.bf16.mxu0 0
  %1783 = vmatpush1.bf16.msra.mxu0 %v1421
  %1784 = vmatprep.subr.bf16.mxu0 0
  %1785 = vmatpush1.bf16.msra.mxu0 %v1420
  %1786 = vmatprep.subr.bf16.mxu0 0
  %1787 = vmatpush1.bf16.msra.mxu0 %v1419
  %1788 = vmatprep.subr.bf16.mxu0 0
  %1789 = vmatpush1.bf16.msra.mxu0 %v1418
  %1790 = vmatprep.subr.bf16.mxu0 0
  %1791 = vmatpush1.bf16.msra.mxu0 %v1417
  %1792 = vmatprep.subr.bf16.mxu0 0
  %1793 = vmatpush1.bf16.msra.mxu0 %v1416
  %1794 = vmatprep.subr.bf16.mxu0 0
  %1795 = vmatpush1.bf16.msra.mxu0 %v1415
  %1796 = vmatprep.subr.bf16.mxu0 0
  %1797 = vmatpush1.bf16.msra.mxu0 %v1414
  %1798 = vmatprep.subr.bf16.mxu0 0
  %1799 = vmatpush2.bf16.msra.mxu0 %v1429
  %1800 = vmatprep.subr.bf16.mxu0 0
  %1801 = vmatpush2.bf16.msra.mxu0 %v1428
  %1802 = vmatprep.subr.bf16.mxu0 0
  %1803 = vmatpush2.bf16.msra.mxu0 %v1427
  %1804 = vmatprep.subr.bf16.mxu0 0
  %1805 = vmatpush2.bf16.msra.mxu0 %v1426
  %1806 = vmatprep.subr.bf16.mxu0 0
  %1807 = vmatpush2.bf16.msra.mxu0 %v1425
  %1808 = vmatprep.subr.bf16.mxu0 0
  %1809 = vmatpush2.bf16.msra.mxu0 %v1424
  %1810 = vmatprep.subr.bf16.mxu0 0
  %1811 = vmatpush2.bf16.msra.mxu0 %v1423
  %1812 = vmatprep.subr.bf16.mxu0 0
  %1813 = vmatpush2.bf16.msra.mxu0 %v1422
  %1814 = vmatprep.mubr.bf16.mxu0 %v587
  %1815 = vmatmul.mubr.bf16.gmra.mxu0 %v586
  %v1816 = vpop.f32.mrf.mxu0
  %v1817 = vadd.f32 %v444, %v1816
  %v1818 = vpop.f32.mrf.mxu0
  %v1819 = vpop.f32.mrf.mxu0
  %v1820 = vadd.f32 %v444, %v1819
  %v1821 = vpop.f32.mrf.mxu0
  %1822 = vmatprep.mubr.bf16.mxu0 %v610
  %1823 = vmatmul.mubr.bf16.gmra.mxu0 %v609
  %v1824 = vpop.f32.mrf.mxu0
  %v1825 = vadd.f32 %v444, %v1824
  %v1826 = vpop.f32.mrf.mxu0
  %v1827 = vpop.f32.mrf.mxu0
  %v1828 = vadd.f32 %v444, %v1827
  %v1829 = vpop.f32.mrf.mxu0
  %1830 = vdwg.mxu0
  %1831 = vmatprep.subr.bf16.mxu0 0
  %1832 = vmatpush1.bf16.msra.mxu0 %v1437
  %1833 = vmatprep.subr.bf16.mxu0 0
  %1834 = vmatpush1.bf16.msra.mxu0 %v1436
  %1835 = vmatprep.subr.bf16.mxu0 0
  %1836 = vmatpush1.bf16.msra.mxu0 %v1435
  %1837 = vmatprep.subr.bf16.mxu0 0
  %1838 = vmatpush1.bf16.msra.mxu0 %v1434
  %1839 = vmatprep.subr.bf16.mxu0 0
  %1840 = vmatpush1.bf16.msra.mxu0 %v1433
  %1841 = vmatprep.subr.bf16.mxu0 0
  %1842 = vmatpush1.bf16.msra.mxu0 %v1432
  %1843 = vmatprep.subr.bf16.mxu0 0
  %1844 = vmatpush1.bf16.msra.mxu0 %v1431
  %1845 = vmatprep.subr.bf16.mxu0 0
  %1846 = vmatpush1.bf16.msra.mxu0 %v1430
  %1847 = vmatprep.subr.bf16.mxu0 0
  %1848 = vmatpush2.bf16.msra.mxu0 %v1445
  %1849 = vmatprep.subr.bf16.mxu0 0
  %1850 = vmatpush2.bf16.msra.mxu0 %v1444
  %1851 = vmatprep.subr.bf16.mxu0 0
  %1852 = vmatpush2.bf16.msra.mxu0 %v1443
  %1853 = vmatprep.subr.bf16.mxu0 0
  %1854 = vmatpush2.bf16.msra.mxu0 %v1442
  %1855 = vmatprep.subr.bf16.mxu0 0
  %1856 = vmatpush2.bf16.msra.mxu0 %v1441
  %1857 = vmatprep.subr.bf16.mxu0 0
  %1858 = vmatpush2.bf16.msra.mxu0 %v1440
  %1859 = vmatprep.subr.bf16.mxu0 0
  %1860 = vmatpush2.bf16.msra.mxu0 %v1439
  %1861 = vmatprep.subr.bf16.mxu0 0
  %1862 = vmatpush2.bf16.msra.mxu0 %v1438
  %1863 = vmatprep.mubr.bf16.mxu0 %v589
  %1864 = vmatmul.mubr.bf16.gmra.mxu0 %v588
  %v1865 = vpop.f32.mrf.mxu0
  %v1866 = vadd.f32 %v1817, %v1865
  %v1867 = vpop.f32.mrf.mxu0
  %v1868 = vpop.f32.mrf.mxu0
  %v1869 = vadd.f32 %v1820, %v1868
  %v1870 = vpop.f32.mrf.mxu0
  %1871 = vmatprep.mubr.bf16.mxu0 %v612
  %1872 = vmatmul.mubr.bf16.gmra.mxu0 %v611
  %v1873 = vpop.f32.mrf.mxu0
  %v1874 = vadd.f32 %v1825, %v1873
  %v1875 = vpop.f32.mrf.mxu0
  %v1876 = vpop.f32.mrf.mxu0
  %v1877 = vadd.f32 %v1828, %v1876
  %v1878 = vpop.f32.mrf.mxu0
  %1879 = vdwg.mxu0
  %1880 = vmatprep.subr.bf16.mxu0 0
  %1881 = vmatpush1.bf16.msra.mxu0 %v1453
  %1882 = vmatprep.subr.bf16.mxu0 0
  %1883 = vmatpush1.bf16.msra.mxu0 %v1452
  %1884 = vmatprep.subr.bf16.mxu0 0
  %1885 = vmatpush1.bf16.msra.mxu0 %v1451
  %1886 = vmatprep.subr.bf16.mxu0 0
  %1887 = vmatpush1.bf16.msra.mxu0 %v1450
  %1888 = vmatprep.subr.bf16.mxu0 0
  %1889 = vmatpush1.bf16.msra.mxu0 %v1449
  %1890 = vmatprep.subr.bf16.mxu0 0
  %1891 = vmatpush1.bf16.msra.mxu0 %v1448
  %1892 = vmatprep.subr.bf16.mxu0 0
  %1893 = vmatpush1.bf16.msra.mxu0 %v1447
  %1894 = vmatprep.subr.bf16.mxu0 0
  %1895 = vmatpush1.bf16.msra.mxu0 %v1446
  %1896 = vmatprep.subr.bf16.mxu0 0
  %1897 = vmatpush2.bf16.msra.mxu0 %v1461
  %1898 = vmatprep.subr.bf16.mxu0 0
  %1899 = vmatpush2.bf16.msra.mxu0 %v1460
  %1900 = vmatprep.subr.bf16.mxu0 0
  %1901 = vmatpush2.bf16.msra.mxu0 %v1459
  %1902 = vmatprep.subr.bf16.mxu0 0
  %1903 = vmatpush2.bf16.msra.mxu0 %v1458
  %1904 = vmatprep.subr.bf16.mxu0 0
  %1905 = vmatpush2.bf16.msra.mxu0 %v1457
  %1906 = vmatprep.subr.bf16.mxu0 0
  %1907 = vmatpush2.bf16.msra.mxu0 %v1456
  %1908 = vmatprep.subr.bf16.mxu0 0
  %1909 = vmatpush2.bf16.msra.mxu0 %v1455
  %1910 = vmatprep.subr.bf16.mxu0 0
  %1911 = vmatpush2.bf16.msra.mxu0 %v1454
  %1912 = vmatprep.mubr.bf16.mxu0 %v591
  %1913 = vmatmul.mubr.bf16.gmra.mxu0 %v590
  %v1914 = vpop.f32.mrf.mxu0
  %v1915 = vadd.f32 %v1866, %v1914
  %v1916 = vpop.f32.mrf.mxu0
  %v1917 = vpop.f32.mrf.mxu0
  %v1918 = vadd.f32 %v1869, %v1917
  %v1919 = vpop.f32.mrf.mxu0
  %1920 = vmatprep.mubr.bf16.mxu0 %v614
  %1921 = vmatmul.mubr.bf16.gmra.mxu0 %v613
  %v1922 = vpop.f32.mrf.mxu0
  %v1923 = vadd.f32 %v1874, %v1922
  %v1924 = vpop.f32.mrf.mxu0
  %v1925 = vpop.f32.mrf.mxu0
  %v1926 = vadd.f32 %v1877, %v1925
  %v1927 = vpop.f32.mrf.mxu0
  %1928 = vdwg.mxu0
  %1929 = vmatprep.subr.bf16.mxu0 0
  %1930 = vmatpush1.bf16.msra.mxu0 %v1469
  %1931 = vmatprep.subr.bf16.mxu0 0
  %1932 = vmatpush1.bf16.msra.mxu0 %v1468
  %1933 = vmatprep.subr.bf16.mxu0 0
  %1934 = vmatpush1.bf16.msra.mxu0 %v1467
  %1935 = vmatprep.subr.bf16.mxu0 0
  %1936 = vmatpush1.bf16.msra.mxu0 %v1466
  %1937 = vmatprep.subr.bf16.mxu0 0
  %1938 = vmatpush1.bf16.msra.mxu0 %v1465
  %1939 = vmatprep.subr.bf16.mxu0 0
  %1940 = vmatpush1.bf16.msra.mxu0 %v1464
  %1941 = vmatprep.subr.bf16.mxu0 0
  %1942 = vmatpush1.bf16.msra.mxu0 %v1463
  %1943 = vmatprep.subr.bf16.mxu0 0
  %1944 = vmatpush1.bf16.msra.mxu0 %v1462
  %1945 = vmatprep.subr.bf16.mxu0 0
  %1946 = vmatpush2.bf16.msra.mxu0 %v1477
  %1947 = vmatprep.subr.bf16.mxu0 0
  %1948 = vmatpush2.bf16.msra.mxu0 %v1476
  %1949 = vmatprep.subr.bf16.mxu0 0
  %1950 = vmatpush2.bf16.msra.mxu0 %v1475
  %1951 = vmatprep.subr.bf16.mxu0 0
  %1952 = vmatpush2.bf16.msra.mxu0 %v1474
  %1953 = vmatprep.subr.bf16.mxu0 0
  %1954 = vmatpush2.bf16.msra.mxu0 %v1473
  %1955 = vmatprep.subr.bf16.mxu0 0
  %1956 = vmatpush2.bf16.msra.mxu0 %v1472
  %1957 = vmatprep.subr.bf16.mxu0 0
  %1958 = vmatpush2.bf16.msra.mxu0 %v1471
  %1959 = vmatprep.subr.bf16.mxu0 0
  %1960 = vmatpush2.bf16.msra.mxu0 %v1470
  %1961 = vmatprep.mubr.bf16.mxu0 %v593
  %1962 = vmatmul.mubr.bf16.gmra.mxu0 %v592
  %v1963 = vpop.f32.mrf.mxu0
  %v1964 = vadd.f32 %v1915, %v1963
  %v1965 = vpop.f32.mrf.mxu0
  %v1966 = vpop.f32.mrf.mxu0
  %v1967 = vadd.f32 %v1918, %v1966
  %v1968 = vpop.f32.mrf.mxu0
  %1969 = vmatprep.mubr.bf16.mxu0 %v616
  %1970 = vmatmul.mubr.bf16.gmra.mxu0 %v615
  %v1971 = vpop.f32.mrf.mxu0
  %v1972 = vadd.f32 %v1923, %v1971
  %v1973 = vpop.f32.mrf.mxu0
  %v1974 = vpop.f32.mrf.mxu0
  %v1975 = vadd.f32 %v1926, %v1974
  %v1976 = vpop.f32.mrf.mxu0
  %1977 = vdwg.mxu0
  %1978 = vmatprep.subr.bf16.mxu0 0
  %1979 = vmatpush1.bf16.msra.mxu0 %v1485
  %1980 = vmatprep.subr.bf16.mxu0 0
  %1981 = vmatpush1.bf16.msra.mxu0 %v1484
  %1982 = vmatprep.subr.bf16.mxu0 0
  %1983 = vmatpush1.bf16.msra.mxu0 %v1483
  %1984 = vmatprep.subr.bf16.mxu0 0
  %1985 = vmatpush1.bf16.msra.mxu0 %v1482
  %1986 = vmatprep.subr.bf16.mxu0 0
  %1987 = vmatpush1.bf16.msra.mxu0 %v1481
  %1988 = vmatprep.subr.bf16.mxu0 0
  %1989 = vmatpush1.bf16.msra.mxu0 %v1480
  %1990 = vmatprep.subr.bf16.mxu0 0
  %1991 = vmatpush1.bf16.msra.mxu0 %v1479
  %1992 = vmatprep.subr.bf16.mxu0 0
  %1993 = vmatpush1.bf16.msra.mxu0 %v1478
  %1994 = vmatprep.subr.bf16.mxu0 0
  %1995 = vmatpush2.bf16.msra.mxu0 %v1493
  %1996 = vmatprep.subr.bf16.mxu0 0
  %1997 = vmatpush2.bf16.msra.mxu0 %v1492
  %1998 = vmatprep.subr.bf16.mxu0 0
  %1999 = vmatpush2.bf16.msra.mxu0 %v1491
  %2000 = vmatprep.subr.bf16.mxu0 0
  %2001 = vmatpush2.bf16.msra.mxu0 %v1490
  %2002 = vmatprep.subr.bf16.mxu0 0
  %2003 = vmatpush2.bf16.msra.mxu0 %v1489
  %2004 = vmatprep.subr.bf16.mxu0 0
  %2005 = vmatpush2.bf16.msra.mxu0 %v1488
  %2006 = vmatprep.subr.bf16.mxu0 0
  %2007 = vmatpush2.bf16.msra.mxu0 %v1487
  %2008 = vmatprep.subr.bf16.mxu0 0
  %2009 = vmatpush2.bf16.msra.mxu0 %v1486
  %2010 = vmatprep.mubr.bf16.mxu0 %v595
  %2011 = vmatmul.mubr.bf16.gmra.mxu0 %v594
  %v2012 = vpop.f32.mrf.mxu0
  %v2013 = vadd.f32 %v1964, %v2012
  %v2014 = vpop.f32.mrf.mxu0
  %v2015 = vpop.f32.mrf.mxu0
  %v2016 = vadd.f32 %v1967, %v2015
  %v2017 = vpop.f32.mrf.mxu0
  %2018 = vmatprep.mubr.bf16.mxu0 %v618
  %2019 = vmatmul.mubr.bf16.gmra.mxu0 %v617
  %v2020 = vpop.f32.mrf.mxu0
  %v2021 = vadd.f32 %v1972, %v2020
  %v2022 = vpop.f32.mrf.mxu0
  %v2023 = vpop.f32.mrf.mxu0
  %v2024 = vadd.f32 %v1975, %v2023
  %v2025 = vpop.f32.mrf.mxu0
  %2026 = vdwg.mxu0
  %2027 = vmatprep.subr.bf16.mxu0 0
  %2028 = vmatpush1.bf16.msra.mxu0 %v1501
  %2029 = vmatprep.subr.bf16.mxu0 0
  %2030 = vmatpush1.bf16.msra.mxu0 %v1500
  %2031 = vmatprep.subr.bf16.mxu0 0
  %2032 = vmatpush1.bf16.msra.mxu0 %v1499
  %2033 = vmatprep.subr.bf16.mxu0 0
  %2034 = vmatpush1.bf16.msra.mxu0 %v1498
  %2035 = vmatprep.subr.bf16.mxu0 0
  %2036 = vmatpush1.bf16.msra.mxu0 %v1497
  %2037 = vmatprep.subr.bf16.mxu0 0
  %2038 = vmatpush1.bf16.msra.mxu0 %v1496
  %2039 = vmatprep.subr.bf16.mxu0 0
  %2040 = vmatpush1.bf16.msra.mxu0 %v1495
  %2041 = vmatprep.subr.bf16.mxu0 0
  %2042 = vmatpush1.bf16.msra.mxu0 %v1494
  %2043 = vmatprep.subr.bf16.mxu0 0
  %2044 = vmatpush2.bf16.msra.mxu0 %v1509
  %2045 = vmatprep.subr.bf16.mxu0 0
  %2046 = vmatpush2.bf16.msra.mxu0 %v1508
  %2047 = vmatprep.subr.bf16.mxu0 0
  %2048 = vmatpush2.bf16.msra.mxu0 %v1507
  %2049 = vmatprep.subr.bf16.mxu0 0
  %2050 = vmatpush2.bf16.msra.mxu0 %v1506
  %2051 = vmatprep.subr.bf16.mxu0 0
  %2052 = vmatpush2.bf16.msra.mxu0 %v1505
  %2053 = vmatprep.subr.bf16.mxu0 0
  %2054 = vmatpush2.bf16.msra.mxu0 %v1504
  %2055 = vmatprep.subr.bf16.mxu0 0
  %2056 = vmatpush2.bf16.msra.mxu0 %v1503
  %2057 = vmatprep.subr.bf16.mxu0 0
  %2058 = vmatpush2.bf16.msra.mxu0 %v1502
  %2059 = vmatprep.mubr.bf16.mxu0 %v597
  %2060 = vmatmul.mubr.bf16.gmra.mxu0 %v596
  %v2061 = vpop.f32.mrf.mxu0
  %v2062 = vadd.f32 %v2013, %v2061
  %v2063 = vpop.f32.mrf.mxu0
  %v2064 = vpop.f32.mrf.mxu0
  %v2065 = vadd.f32 %v2016, %v2064
  %v2066 = vpop.f32.mrf.mxu0
  %2067 = vmatprep.mubr.bf16.mxu0 %v620
  %2068 = vmatmul.mubr.bf16.gmra.mxu0 %v619
  %v2069 = vpop.f32.mrf.mxu0
  %v2070 = vadd.f32 %v2021, %v2069
  %v2071 = vpop.f32.mrf.mxu0
  %v2072 = vpop.f32.mrf.mxu0
  %v2073 = vadd.f32 %v2024, %v2072
  %v2074 = vpop.f32.mrf.mxu0
  %2075 = vdwg.mxu0
  %2076 = vmatprep.subr.bf16.mxu0 0
  %2077 = vmatpush1.bf16.msra.mxu0 %v1517
  %2078 = vmatprep.subr.bf16.mxu0 0
  %2079 = vmatpush1.bf16.msra.mxu0 %v1516
  %2080 = vmatprep.subr.bf16.mxu0 0
  %2081 = vmatpush1.bf16.msra.mxu0 %v1515
  %2082 = vmatprep.subr.bf16.mxu0 0
  %2083 = vmatpush1.bf16.msra.mxu0 %v1514
  %2084 = vmatprep.subr.bf16.mxu0 0
  %2085 = vmatpush1.bf16.msra.mxu0 %v1513
  %2086 = vmatprep.subr.bf16.mxu0 0
  %2087 = vmatpush1.bf16.msra.mxu0 %v1512
  %2088 = vmatprep.subr.bf16.mxu0 0
  %2089 = vmatpush1.bf16.msra.mxu0 %v1511
  %2090 = vmatprep.subr.bf16.mxu0 0
  %2091 = vmatpush1.bf16.msra.mxu0 %v1510
  %2092 = vmatprep.subr.bf16.mxu0 0
  %2093 = vmatpush2.bf16.msra.mxu0 %v1525
  %2094 = vmatprep.subr.bf16.mxu0 0
  %2095 = vmatpush2.bf16.msra.mxu0 %v1524
  %2096 = vmatprep.subr.bf16.mxu0 0
  %2097 = vmatpush2.bf16.msra.mxu0 %v1523
  %2098 = vmatprep.subr.bf16.mxu0 0
  %2099 = vmatpush2.bf16.msra.mxu0 %v1522
  %2100 = vmatprep.subr.bf16.mxu0 0
  %2101 = vmatpush2.bf16.msra.mxu0 %v1521
  %2102 = vmatprep.subr.bf16.mxu0 0
  %2103 = vmatpush2.bf16.msra.mxu0 %v1520
  %2104 = vmatprep.subr.bf16.mxu0 0
  %2105 = vmatpush2.bf16.msra.mxu0 %v1519
  %2106 = vmatprep.subr.bf16.mxu0 0
  %2107 = vmatpush2.bf16.msra.mxu0 %v1518
  %2108 = vmatprep.mubr.bf16.mxu0 %v599
  %2109 = vmatmul.mubr.bf16.gmra.mxu0 %v598
  %v2110 = vpop.f32.mrf.mxu0
  %v2111 = vadd.f32 %v2062, %v2110
  %v2112 = vpop.f32.mrf.mxu0
  %v2113 = vpop.f32.mrf.mxu0
  %v2114 = vadd.f32 %v2065, %v2113
  %v2115 = vpop.f32.mrf.mxu0
  %2116 = vmatprep.mubr.bf16.mxu0 %v622
  %2117 = vmatmul.mubr.bf16.gmra.mxu0 %v621
  %v2118 = vpop.f32.mrf.mxu0
  %v2119 = vadd.f32 %v2070, %v2118
  %v2120 = vpop.f32.mrf.mxu0
  %v2121 = vpop.f32.mrf.mxu0
  %v2122 = vadd.f32 %v2073, %v2121
  %v2123 = vpop.f32.mrf.mxu0
  %2124 = vdwg.mxu0
  %2125 = vmatprep.subr.bf16.mxu0 0
  %2126 = vmatpush1.bf16.msra.mxu0 %v1533
  %2127 = vmatprep.subr.bf16.mxu0 0
  %2128 = vmatpush1.bf16.msra.mxu0 %v1532
  %2129 = vmatprep.subr.bf16.mxu0 0
  %2130 = vmatpush1.bf16.msra.mxu0 %v1531
  %2131 = vmatprep.subr.bf16.mxu0 0
  %2132 = vmatpush1.bf16.msra.mxu0 %v1530
  %2133 = vmatprep.subr.bf16.mxu0 0
  %2134 = vmatpush1.bf16.msra.mxu0 %v1529
  %2135 = vmatprep.subr.bf16.mxu0 0
  %2136 = vmatpush1.bf16.msra.mxu0 %v1528
  %2137 = vmatprep.subr.bf16.mxu0 0
  %2138 = vmatpush1.bf16.msra.mxu0 %v1527
  %2139 = vmatprep.subr.bf16.mxu0 0
  %2140 = vmatpush1.bf16.msra.mxu0 %v1526
  %2141 = vmatprep.subr.bf16.mxu0 0
  %2142 = vmatpush2.bf16.msra.mxu0 %v1541
  %2143 = vmatprep.subr.bf16.mxu0 0
  %2144 = vmatpush2.bf16.msra.mxu0 %v1540
  %2145 = vmatprep.subr.bf16.mxu0 0
  %2146 = vmatpush2.bf16.msra.mxu0 %v1539
  %2147 = vmatprep.subr.bf16.mxu0 0
  %2148 = vmatpush2.bf16.msra.mxu0 %v1538
  %2149 = vmatprep.subr.bf16.mxu0 0
  %2150 = vmatpush2.bf16.msra.mxu0 %v1537
  %2151 = vmatprep.subr.bf16.mxu0 0
  %2152 = vmatpush2.bf16.msra.mxu0 %v1536
  %2153 = vmatprep.subr.bf16.mxu0 0
  %2154 = vmatpush2.bf16.msra.mxu0 %v1535
  %2155 = vmatprep.subr.bf16.mxu0 0
  %2156 = vmatpush2.bf16.msra.mxu0 %v1534
  %2157 = vmatprep.mubr.bf16.mxu0 %v601
  %2158 = vmatmul.mubr.bf16.gmra.mxu0 %v600
  %v2159 = vpop.f32.mrf.mxu0
  %v2160 = vadd.f32 %v2111, %v2159
  %v2161 = vpop.f32.mrf.mxu0
  %v2162 = vpop.f32.mrf.mxu0
  %v2163 = vadd.f32 %v2114, %v2162
  %v2164 = vpop.f32.mrf.mxu0
  %2165 = vmatprep.mubr.bf16.mxu0 %v624
  %2166 = vmatmul.mubr.bf16.gmra.mxu0 %v623
  %v2167 = vpop.f32.mrf.mxu0
  %v2168 = vadd.f32 %v2119, %v2167
  %v2169 = vpop.f32.mrf.mxu0
  %v2170 = vpop.f32.mrf.mxu0
  %v2171 = vadd.f32 %v2122, %v2170
  %v2172 = vpop.f32.mrf.mxu0
  %2173 = vdwg.mxu0
  %2174 = vmatprep.subr.bf16.mxu0 0
  %2175 = vmatpush1.bf16.msra.mxu0 %v1549
  %2176 = vmatprep.subr.bf16.mxu0 0
  %2177 = vmatpush1.bf16.msra.mxu0 %v1548
  %2178 = vmatprep.subr.bf16.mxu0 0
  %2179 = vmatpush1.bf16.msra.mxu0 %v1547
  %2180 = vmatprep.subr.bf16.mxu0 0
  %2181 = vmatpush1.bf16.msra.mxu0 %v1546
  %2182 = vmatprep.subr.bf16.mxu0 0
  %2183 = vmatpush1.bf16.msra.mxu0 %v1545
  %2184 = vmatprep.subr.bf16.mxu0 0
  %2185 = vmatpush1.bf16.msra.mxu0 %v1544
  %2186 = vmatprep.subr.bf16.mxu0 0
  %2187 = vmatpush1.bf16.msra.mxu0 %v1543
  %2188 = vmatprep.subr.bf16.mxu0 0
  %2189 = vmatpush1.bf16.msra.mxu0 %v1542
  %2190 = vmatprep.subr.bf16.mxu0 0
  %2191 = vmatpush2.bf16.msra.mxu0 %v1557
  %2192 = vmatprep.subr.bf16.mxu0 0
  %2193 = vmatpush2.bf16.msra.mxu0 %v1556
  %2194 = vmatprep.subr.bf16.mxu0 0
  %2195 = vmatpush2.bf16.msra.mxu0 %v1555
  %2196 = vmatprep.subr.bf16.mxu0 0
  %2197 = vmatpush2.bf16.msra.mxu0 %v1554
  %2198 = vmatprep.subr.bf16.mxu0 0
  %2199 = vmatpush2.bf16.msra.mxu0 %v1553
  %2200 = vmatprep.subr.bf16.mxu0 0
  %2201 = vmatpush2.bf16.msra.mxu0 %v1552
  %2202 = vmatprep.subr.bf16.mxu0 0
  %2203 = vmatpush2.bf16.msra.mxu0 %v1551
  %2204 = vmatprep.subr.bf16.mxu0 0
  %2205 = vmatpush2.bf16.msra.mxu0 %v1550
  %2206 = vmatprep.mubr.bf16.mxu0 %v603
  %2207 = vmatmul.mubr.bf16.gmra.mxu0 %v602
  %v2208 = vpop.f32.mrf.mxu0
  %v2209 = vadd.f32 %v2160, %v2208
  %v2210 = vpop.f32.mrf.mxu0
  %v2211 = vpop.f32.mrf.mxu0
  %v2212 = vadd.f32 %v2163, %v2211
  %v2213 = vpop.f32.mrf.mxu0
  %2214 = vmatprep.mubr.bf16.mxu0 %v626
  %2215 = vmatmul.mubr.bf16.gmra.mxu0 %v625
  %v2216 = vpop.f32.mrf.mxu0
  %v2217 = vadd.f32 %v2168, %v2216
  %v2218 = vpop.f32.mrf.mxu0
  %v2219 = vpop.f32.mrf.mxu0
  %v2220 = vadd.f32 %v2171, %v2219
  %v2221 = vpop.f32.mrf.mxu0
  %2222 = vdwg.mxu0
  %2223 = vmatprep.subr.bf16.mxu0 0
  %2224 = vmatpush1.bf16.msra.mxu0 %v1565
  %2225 = vmatprep.subr.bf16.mxu0 0
  %2226 = vmatpush1.bf16.msra.mxu0 %v1564
  %2227 = vmatprep.subr.bf16.mxu0 0
  %2228 = vmatpush1.bf16.msra.mxu0 %v1563
  %2229 = vmatprep.subr.bf16.mxu0 0
  %2230 = vmatpush1.bf16.msra.mxu0 %v1562
  %2231 = vmatprep.subr.bf16.mxu0 0
  %2232 = vmatpush1.bf16.msra.mxu0 %v1561
  %2233 = vmatprep.subr.bf16.mxu0 0
  %2234 = vmatpush1.bf16.msra.mxu0 %v1560
  %2235 = vmatprep.subr.bf16.mxu0 0
  %2236 = vmatpush1.bf16.msra.mxu0 %v1559
  %2237 = vmatprep.subr.bf16.mxu0 0
  %2238 = vmatpush1.bf16.msra.mxu0 %v1558
  %2239 = vmatprep.subr.bf16.mxu0 0
  %2240 = vmatpush2.bf16.msra.mxu0 %v1573
  %2241 = vmatprep.subr.bf16.mxu0 0
  %2242 = vmatpush2.bf16.msra.mxu0 %v1572
  %2243 = vmatprep.subr.bf16.mxu0 0
  %2244 = vmatpush2.bf16.msra.mxu0 %v1571
  %2245 = vmatprep.subr.bf16.mxu0 0
  %2246 = vmatpush2.bf16.msra.mxu0 %v1570
  %2247 = vmatprep.subr.bf16.mxu0 0
  %2248 = vmatpush2.bf16.msra.mxu0 %v1569
  %2249 = vmatprep.subr.bf16.mxu0 0
  %2250 = vmatpush2.bf16.msra.mxu0 %v1568
  %2251 = vmatprep.subr.bf16.mxu0 0
  %2252 = vmatpush2.bf16.msra.mxu0 %v1567
  %2253 = vmatprep.subr.bf16.mxu0 0
  %2254 = vmatpush2.bf16.msra.mxu0 %v1566
  %2255 = vmatprep.mubr.bf16.mxu0 %v605
  %2256 = vmatmul.mubr.bf16.gmra.mxu0 %v604
  %v2257 = vpop.f32.mrf.mxu0
  %v2258 = vadd.f32 %v2209, %v2257
  %v2259 = vpop.f32.mrf.mxu0
  %v2260 = vpop.f32.mrf.mxu0
  %v2261 = vadd.f32 %v2212, %v2260
  %v2262 = vpop.f32.mrf.mxu0
  %2263 = vmatprep.mubr.bf16.mxu0 %v628
  %2264 = vmatmul.mubr.bf16.gmra.mxu0 %v627
  %v2265 = vpop.f32.mrf.mxu0
  %v2266 = vadd.f32 %v2217, %v2265
  %v2267 = vpop.f32.mrf.mxu0
  %v2268 = vpop.f32.mrf.mxu0
  %v2269 = vadd.f32 %v2220, %v2268
  %v2270 = vpop.f32.mrf.mxu0
  %2271 = vdwg.mxu0
  %2272 = vmatprep.subr.bf16.mxu0 0
  %2273 = vmatpush1.bf16.msra.mxu0 %v1581
  %2274 = vmatprep.subr.bf16.mxu0 0
  %2275 = vmatpush1.bf16.msra.mxu0 %v1580
  %2276 = vmatprep.subr.bf16.mxu0 0
  %2277 = vmatpush1.bf16.msra.mxu0 %v1579
  %2278 = vmatprep.subr.bf16.mxu0 0
  %2279 = vmatpush1.bf16.msra.mxu0 %v1578
  %2280 = vmatprep.subr.bf16.mxu0 0
  %2281 = vmatpush1.bf16.msra.mxu0 %v1577
  %2282 = vmatprep.subr.bf16.mxu0 0
  %2283 = vmatpush1.bf16.msra.mxu0 %v1576
  %2284 = vmatprep.subr.bf16.mxu0 0
  %2285 = vmatpush1.bf16.msra.mxu0 %v1575
  %2286 = vmatprep.subr.bf16.mxu0 0
  %2287 = vmatpush1.bf16.msra.mxu0 %v1574
  %2288 = vmatprep.subr.bf16.mxu0 0
  %2289 = vmatpush2.bf16.msra.mxu0 %v1589
  %2290 = vmatprep.subr.bf16.mxu0 0
  %2291 = vmatpush2.bf16.msra.mxu0 %v1588
  %2292 = vmatprep.subr.bf16.mxu0 0
  %2293 = vmatpush2.bf16.msra.mxu0 %v1587
  %2294 = vmatprep.subr.bf16.mxu0 0
  %2295 = vmatpush2.bf16.msra.mxu0 %v1586
  %2296 = vmatprep.subr.bf16.mxu0 0
  %2297 = vmatpush2.bf16.msra.mxu0 %v1585
  %2298 = vmatprep.subr.bf16.mxu0 0
  %2299 = vmatpush2.bf16.msra.mxu0 %v1584
  %2300 = vmatprep.subr.bf16.mxu0 0
  %2301 = vmatpush2.bf16.msra.mxu0 %v1583
  %2302 = vmatprep.subr.bf16.mxu0 0
  %2303 = vmatpush2.bf16.msra.mxu0 %v1582
  %2304 = vmatprep.mubr.bf16.mxu0 %v607
  %2305 = vmatmul.mubr.bf16.gmra.mxu0 %v606
  %v2306 = vpop.f32.mrf.mxu0
  %v2307 = vadd.f32 %v2258, %v2306
  %v2308 = vpop.f32.mrf.mxu0
  %v2309 = vpop.f32.mrf.mxu0
  %v2310 = vadd.f32 %v2261, %v2309
  %v2311 = vpop.f32.mrf.mxu0
  %2312 = vmatprep.mubr.bf16.mxu0 %v630
  %2313 = vmatmul.mubr.bf16.gmra.mxu0 %v629
  %v2314 = vpop.f32.mrf.mxu0
  %v2315 = vadd.f32 %v2266, %v2314
  %v2316 = vpop.f32.mrf.mxu0
  %v2317 = vpop.f32.mrf.mxu0
  %v2318 = vadd.f32 %v2269, %v2317
  %v2319 = vpop.f32.mrf.mxu0
  %2320 = vdwg.mxu0
  %2321 = vmatprep.subr.bf16.mxu0 0
  %2322 = vmatpush1.bf16.msra.mxu0 %v1597
  %2323 = vmatprep.subr.bf16.mxu0 0
  %2324 = vmatpush1.bf16.msra.mxu0 %v1596
  %2325 = vmatprep.subr.bf16.mxu0 0
  %2326 = vmatpush1.bf16.msra.mxu0 %v1595
  %2327 = vmatprep.subr.bf16.mxu0 0
  %2328 = vmatpush1.bf16.msra.mxu0 %v1594
  %2329 = vmatprep.subr.bf16.mxu0 0
  %2330 = vmatpush1.bf16.msra.mxu0 %v1593
  %2331 = vmatprep.subr.bf16.mxu0 0
  %2332 = vmatpush1.bf16.msra.mxu0 %v1592
  %2333 = vmatprep.subr.bf16.mxu0 0
  %2334 = vmatpush1.bf16.msra.mxu0 %v1591
  %2335 = vmatprep.subr.bf16.mxu0 0
  %2336 = vmatpush1.bf16.msra.mxu0 %v1590
  %2337 = vmatprep.subr.bf16.mxu0 0
  %2338 = vmatpush2.bf16.msra.mxu0 0
  %2339 = vmatprep.subr.bf16.mxu0 0
  %2340 = vmatpush2.bf16.msra.mxu0 0
  %2341 = vmatprep.subr.bf16.mxu0 0
  %2342 = vmatpush2.bf16.msra.mxu0 0
  %2343 = vmatprep.subr.bf16.mxu0 0
  %2344 = vmatpush2.bf16.msra.mxu0 0
  %2345 = vmatprep.subr.bf16.mxu0 0
  %2346 = vmatpush2.bf16.msra.mxu0 0
  %2347 = vmatprep.subr.bf16.mxu0 0
  %2348 = vmatpush2.bf16.msra.mxu0 0
  %2349 = vmatprep.subr.bf16.mxu0 0
  %2350 = vmatpush2.bf16.msra.mxu0 0
  %2351 = vmatprep.subr.bf16.mxu0 0
  %2352 = vmatpush2.bf16.msra.mxu0 0
  %2353 = vmatprep.mubr.bf16.mxu0 0
  %2354 = vmatmul.mubr.bf16.gmra.mxu0 %v608
  %v2355 = vpop.f32.mrf.mxu0
  %v2356 = vadd.f32 %v2307, %v2355
  %v2357 = vpop.f32.mrf.mxu0
  %v2358 = vpop.f32.mrf.mxu0
  %v2359 = vadd.f32 %v2310, %v2358
  %v2360 = vpop.f32.mrf.mxu0
  %2361 = vmatprep.mubr.bf16.mxu0 0
  %2362 = vmatmul.mubr.bf16.gmra.mxu0 %v631
  %v2363 = vpop.f32.mrf.mxu0
  %v2364 = vadd.f32 %v2315, %v2363
  %v2365 = vpop.f32.mrf.mxu0
  %v2366 = vpop.f32.mrf.mxu0
  %v2367 = vadd.f32 %v2318, %v2366
  %v2368 = vpop.f32.mrf.mxu0
  %2369 = vdwg.mxu0
  %v2370 = vmax.f32 %v2356, 0.0
  %v2371 = vmax.f32 %v2359, 0.0
  %v2372 = vmax.f32 %v2364, 0.0
  %v2373 = vmax.f32 %v2367, 0.0
  %v2374 = vld [vmem:[%s3] sm:$0x1]
  %v2376 = vlaneseq
  %v2377 = vshrl.u32 %v2376, 7
  %v2378 = vsub.s32 0, %v2377
  %v2379 = vrot.slane %v2374, %v2378
  %v2381 = vmul.f32 %v2370, %v2379
  %v2382 = vmul.f32 %v2371, %v2379
  %v2383 = vmul.f32 %v2372, %v2379
  %v2384 = vmul.f32 %v2373, %v2379
  %2385 = vadd.xlane.f32.xlu0 %v2381
  %v2386 = vpop.xlane.xlu0 %2385
  %2387 = vadd.xlane.f32.xlu0 %v2382
  %v2388 = vpop.xlane.xlu0 %2387
  %2389 = vadd.xlane.f32.xlu0 %v2383
  %v2390 = vpop.xlane.xlu0 %2389
  %2391 = vadd.xlane.f32.xlu0 %v2384
  %v2392 = vpop.xlane.xlu0 %2391
  %v2393 = vld [vmem:[#allocation2] sm:$0x1]
  %v2395 = vlaneseq
  %v2396 = vshrl.u32 %v2395, 7
  %v2397 = vsub.s32 0, %v2396
  %v2398 = vrot.slane %v2393, %v2397
  %v2400 = vadd.f32 %v2386, %v2398
  %v2401 = vadd.f32 %v2388, %v2398
  %v2402 = vadd.f32 %v2390, %v2398
  %v2403 = vadd.f32 %v2392, %v2398
  %v2404 = vmax.f32 %v2400, 0.0
  %v2405 = vmax.f32 %v2401, 0.0
  %v2406 = vmax.f32 %v2402, 0.0
  %v2407 = vmax.f32 %v2403, 0.0
  %vm2408 = vcmask 7168
  %2409 = vst.msk [vmem:[%s5] sm:$0xff] %vm2408, %v2404
  %2410 = vst.msk [vmem:[%s5 + $0x8] sm:$0xff] %vm2408, %v2405
  %2411 = vst.msk [vmem:[%s5 + $0x10] sm:$0xff] %vm2408, %v2406
  %2412 = vst.msk [vmem:[%s5 + $0x18] sm:$0xff] %vm2408, %v2407
  // Predicated region
  $region22: #{crowd_counter_forward.12} parent=0 // pred_check
    _
  $region23: #{crowd_counter_forward.12} parent=0 // pred_check_branch
    %2414 = sbr.rel (0) target = $region25
  $region24: #{crowd_counter_forward.12} parent=0 // pred_region
    _
  $region25: #{crowd_counter_forward.12} parent=0 // pred_fallthru
    _
  // Predicated region
  $region26: #{crowd_counter_forward.12} parent=0 // pred_check
    _
  $region27: #{crowd_counter_forward.12} parent=0 // pred_check_branch
    %2416 = sbr.rel (0) target = $region29
  $region28: #{crowd_counter_forward.12} parent=0 // pred_region
    _
  $region29: #{crowd_counter_forward.12} parent=0 // pred_fallthru
    _

</llo_original>
